<compile_context>
chip_gen: v7x
topology: tpu7x:2x2x1
jax: 0.10.0
libtpu: 0.0.40
codegen_flags: <defaults>
</compile_context>

<pallas_src>
import jax
import jax.numpy as jnp
from jax.experimental import pallas as pl
from jax.experimental.pallas import tpu as pltpu

# ---- small, deterministic configuration consistent with RNMN.__init__ ----
B = 2              # batch
VOCAB = 16         # query_lang.num_words
L = 8              # max_query_len
E = 8              # embed_dim
H = 32             # lstm_hidden_dim
T = 16             # text_dim
MAP = 16           # map_dim
C, CH, CW = 64, 6, 6   # context_dim
P = CH * CW
M0 = 2             # num_att_modules = len([And, Find])
M1 = 3             # sum num_attention_maps: And=2, Find=0, Exist=1
DM = M0 * M1
COMP_LEN = 5       # comp_length (comp_stop_type == 1)


def _pack_slab(arrs, lane_width):
    """Pack 2-D f32 arrays into one (rows, lane_width) slab; rows 8-aligned."""
    pieces, offs, r = [], [], 0
    for a in arrs:
        a = a.astype(jnp.float32)
        nr, nc = a.shape
        a = jnp.pad(a, ((0, (-nr) % 8), (0, lane_width - nc)))
        offs.append((r, nr, nc))
        pieces.append(a)
        r += a.shape[0]
    return jnp.concatenate(pieces, axis=0), offs


# ----------------------------------------------------------------------------
# Fused kernel: one grid program runs the full forward for a BT-sized batch tile.
# ----------------------------------------------------------------------------
def _make_kernel(offs, bt):
    f32, bf16 = jnp.float32, jnp.bfloat16

    def kernel(qmask_ref, emb_ref, ctx_ref, wide_ref, narrow_ref, out_ref):
        def w(name, dtype=None):
            slab_idx, r, nr, nc = offs[name]
            slab = wide_ref if slab_idx == 0 else narrow_ref
            v = slab[r:r + nr, 0:nc]
            return v if dtype is None else v.astype(dtype)

        # hoisted weight loads / bf16 casts (each reused across the loops)
        enc_wih = w('enc_wih', bf16)                  # (E, 4H)
        enc_whh = w('enc_whh', bf16)                  # (H, 4H)
        enc_b = w('enc_b')                            # (1, 4H) f32
        dec_w = w('dec_w', bf16)                      # (DM+H, 4H)
        dec_b = w('dec_b')                            # (1, 4H)
        head_w = w('head_w', bf16)                    # (H, DM+1)
        head_b = w('head_b')                          # (1, DM+1)
        wq3 = w('wqct', bf16).reshape(L, E, MAP)      # query_combine folded into find_wt
        b_comb = w('b_comb')                          # (1, MAP)
        w1t = w('w1t', bf16)                          # (C, MAP)
        b1r = w('b1r')                                # (1, MAP)
        w2c = w('w2c', bf16)                          # (MAP, 1)
        b2 = w('b2')                                  # (1, 1)
        we = w('we')                                  # (P, 2)
        be = w('be')                                  # (1, 2)

        qmask = qmask_ref[...]                        # (BT, L) f32 validity mask
        emb_bf = emb_ref[...].astype(bf16)            # (L, BT, E) seq-first embeddings

        # ---------------- query encoder: fused L-step LSTM recurrence --------
        # input->hidden gates for ALL timesteps in one matmul
        xg = jnp.dot(emb_bf.reshape(L * bt, E), enc_wih,
                     preferred_element_type=f32).reshape(L, bt, 4 * H)

        h = jnp.zeros((bt, H), f32)
        c = jnp.zeros((bt, H), f32)
        enc_rows = []
        for l in range(L):                             # PyTorch gate order i,f,g,o
            gates = xg[l] + jnp.dot(h.astype(bf16), enc_whh,
                                    preferred_element_type=f32) + enc_b
            sg = jax.nn.sigmoid(gates)                 # one EUP pass over the full 4H row
            g_g = jnp.tanh(gates[:, 2 * H:3 * H])
            c_new = sg[:, H:2 * H] * c + sg[:, 0:H] * g_g
            h_new = sg[:, 3 * H:4 * H] * jnp.tanh(c_new)
            # packed-sequence semantics: freeze state / zero outputs past query_len
            valid = qmask[:, l:l + 1]                  # (BT, 1)
            h = valid * h_new + (1.0 - valid) * h
            c = valid * c_new + (1.0 - valid) * c
            enc_rows.append(valid * h_new)
        encq = jnp.stack(enc_rows, axis=1).astype(bf16)            # (BT, L, H)

        # ---------------- time-invariant work hoisted out of the decode loop --
        # folded query_combine -> Find text FC projection, per position
        projw = jnp.einsum('lbe,lem->lbm', emb_bf, wq3,
                           preferred_element_type=f32)             # (L, BT, MAP)
        projw = jnp.transpose(projw, (1, 0, 2)).astype(bf16)       # (BT, L, MAP)

        # Find conv1 depends only on the context: compute once, keep resident
        ctx_bf = ctx_ref[...].astype(bf16)                         # (BT, P, C)
        cm = (jnp.dot(ctx_bf.reshape(bt * P, C), w1t,
                      preferred_element_type=f32).reshape(bt, P, MAP) + b1r)

        # ---------------- fused decoder + module COMP_LEN loop ----------------
        h_d, c_d = h, c                                # decoder.hidden = query final state
        m_t = jnp.zeros((bt, DM), f32)                 # flattened M_t = [And row | Find row]
        a_t = jnp.zeros((bt, P, M1), f32)              # attention maps, (batch, spatial, slot)
        stop_list, out_list = [], []
        for _t in range(COMP_LEN):
            # decoder LSTM cell: single merged input matmul over [M_t | h]
            zin = jnp.concatenate([m_t, h_d], axis=1).astype(bf16)          # (BT, DM+H)
            gates = jnp.dot(zin, dec_w, preferred_element_type=f32) + dec_b
            sg = jax.nn.sigmoid(gates)
            g_g = jnp.tanh(gates[:, 2 * H:3 * H])
            c_d = sg[:, H:2 * H] * c_d + sg[:, 0:H] * g_g
            h_d = sg[:, 3 * H:4 * H] * jnp.tanh(c_d)
            h_bf = h_d.astype(bf16)

            # merged heads: M_t logits and stop logit from one matmul (mt_norm=1)
            hm = jnp.dot(h_bf, head_w, preferred_element_type=f32) + head_b  # (BT, DM+1)
            mA = jax.nn.softmax(hm[:, 0:M1], axis=-1)
            mF = jax.nn.softmax(hm[:, M1:DM], axis=-1)
            m_t = jnp.concatenate([mA, mF], axis=1)
            stop_list.append(jax.nn.sigmoid(hm[:, DM:DM + 1]))               # (BT, 1)

            # batched dot-product attention over encoded query positions
            # TODO(synk): pad positions are attended with score 0 (unmasked),
            # mirroring unmasked dot-attention over pad_packed zero outputs.
            scores = jnp.einsum('bqh,blh->bql', h_bf[:, None, :], encq,
                                preferred_element_type=f32)                  # (BT, 1, L)
            attn = jax.nn.softmax(scores, axis=-1).astype(bf16)

            # Find text gate (query_combine already folded in)
            tm = jnp.einsum('bql,blm->bqm', attn, projw,
                            preferred_element_type=f32) + b_comb             # (BT, 1, MAP)

            # -------- forward_1t --------
            # Exist: linear on the flattened map in the last slot (pre-update a_t)
            out_list.append(jnp.sum(a_t[:, :, M1 - 1:M1] * we, axis=1) + be)  # (BT, 2)
            # And: elementwise min of its two input maps (slots 0, 1)
            and_col = jnp.minimum(a_t[:, :, 0:1], a_t[:, :, 1:2])             # (BT, P, 1)
            # Find: hoisted conv1 `cm`, text gate, relu, conv2
            joint = jnp.maximum(cm * tm, 0.0).astype(bf16)                    # (BT, P, MAP)
            find_col = (jnp.dot(joint.reshape(bt * P, MAP), w2c,
                                preferred_element_type=f32)
                        + b2).reshape(bt, P, 1)                               # (BT, P, 1)
            # a_{t+1}[b,p,l] = And[b,p]*mA[b,l] + Find[b,p]*mF[b,l]
            a_t = and_col * mA[:, None, :] + find_col * mF[:, None, :]

        # comp_stop_type == 1: softmax over stop bits, weighted sum of per-step outs
        stop_mask = jax.nn.softmax(jnp.concatenate(stop_list, axis=1), axis=-1)
        out = jnp.zeros((bt, 2), f32)
        for t in range(COMP_LEN):
            out = out + stop_mask[:, t:t + 1] * out_list[t]

        # log_softmax (written out explicitly)
        shifted = out - jnp.max(out, axis=-1, keepdims=True)
        out_ref[...] = shifted - jnp.log(jnp.sum(jnp.exp(shifted), axis=-1, keepdims=True))

    return kernel


# ----------------------------------------------------------------------------
# Wrapper: embedding lookup, layout prep and one-time weight algebra in XLA
# glue; everything else in a single fused pallas_call.
# ----------------------------------------------------------------------------
def rnmn_forward(p, query, query_len, context):
    bsz = query.shape[0]
    bt = min(8, bsz)
    bp = ((bsz + bt - 1) // bt) * bt
    pad = bp - bsz

    # Embedding lookup (gather) stays in XLA glue; seq-first layout for the LSTM.
    emb = jnp.transpose(p['embed'][query].astype(jnp.float32), (1, 0, 2))     # (L, B, E)
    # ContextEncoder is identity; spatial-major layout (B, P, C).
    ctx = context.reshape(bsz, C, P).transpose(0, 2, 1).astype(jnp.float32)   # (B, P, C)
    qmask = (query_len[:, None] >
             jnp.arange(L, dtype=query_len.dtype)[None, :]).astype(jnp.float32)  # (B, L)

    if pad:
        emb = jnp.pad(emb, ((0, 0), (0, pad), (0, 0)))
        ctx = jnp.pad(ctx, ((0, pad), (0, 0), (0, 0)))
        qmask = jnp.pad(qmask, ((0, pad), (0, 0)))

    # ---- one-time algebraic weight merges (pure XLA glue) ----
    dec_w = jnp.concatenate([p['dec_wih'], p['dec_whh']], axis=0)     # (DM+H, 4H)
    head_w = jnp.concatenate([p['wm'], p['wstop']], axis=1)           # (H, DM+1)
    head_b = jnp.concatenate([p['bm'], p['bstop']], axis=1)           # (1, DM+1)
    wtt = p['find_wt'].T                                              # (T, MAP)
    wqct = p['wqc'] @ wtt                                             # (L*E, MAP)
    b_comb = p['bqc'] @ wtt + p['find_bt'].T                          # (1, MAP)

    wide_names = ('enc_wih', 'enc_whh', 'enc_b', 'dec_w', 'dec_b')
    wide_arrs = (p['enc_wih'], p['enc_whh'], p['enc_b'], dec_w, p['dec_b'])
    narrow_names = ('head_w', 'head_b', 'wqct', 'b_comb', 'w1t', 'b1r',
                    'w2c', 'b2', 'we', 'be')
    narrow_arrs = (head_w, head_b, wqct, b_comb, p['find_w1'].T, p['find_b1'].T,
                   p['find_w2'].T, p['find_b2'], p['exist_w'], p['exist_b'])

    wide_slab, wide_offs = _pack_slab(wide_arrs, 4 * H)      # (96, 128) f32
    narrow_slab, narrow_offs = _pack_slab(narrow_arrs, MAP)  # (256, 16) f32
    offs = {n: (0,) + o for n, o in zip(wide_names, wide_offs)}
    offs.update({n: (1,) + o for n, o in zip(narrow_names, narrow_offs)})

    grid_spec = pltpu.PrefetchScalarGridSpec(
        num_scalar_prefetch=0,
        grid=(bp // bt,),
        in_specs=[
            pl.BlockSpec((bt, L), lambda b: (b, 0)),
            pl.BlockSpec((L, bt, E), lambda b: (0, b, 0)),
            pl.BlockSpec((bt, P, C), lambda b: (b, 0, 0)),
            pl.BlockSpec(wide_slab.shape, lambda b: (0, 0)),
            pl.BlockSpec(narrow_slab.shape, lambda b: (0, 0)),
        ],
        out_specs=pl.BlockSpec((bt, 2), lambda b: (b, 0)),
    )

    out = pl.pallas_call(
        _make_kernel(offs, bt),
        out_shape=jax.ShapeDtypeStruct((bp, 2), jnp.float32),
        grid_spec=grid_spec,
        compiler_params=pltpu.CompilerParams(
            dimension_semantics=("parallel",)),
    )(qmask, emb, ctx, wide_slab, narrow_slab)

    return out[:bsz]


if __name__ == "__main__":
    key = jax.random.PRNGKey(0)
    keys = jax.random.split(key, 24)

    def nrm(k, shape, s=0.1):
        return (s * jax.random.normal(k, shape)).astype(jnp.float32)

    params = {
        'embed':   nrm(keys[0], (VOCAB, E)),
        # query encoder LSTM (bias_ih + bias_hh folded into one bias)
        'enc_wih': nrm(keys[1], (E, 4 * H)),
        'enc_whh': nrm(keys[2], (H, 4 * H)),
        'enc_b':   nrm(keys[3], (1, 4 * H)),
        # decoder LSTM over flattened M_t
        'dec_wih': nrm(keys[4], (DM, 4 * H)),
        'dec_whh': nrm(keys[5], (H, 4 * H)),
        'dec_b':   nrm(keys[6], (1, 4 * H)),
        # decoder heads
        'wm':      nrm(keys[7], (H, DM)),
        'bm':      nrm(keys[8], (1, DM)),
        'wstop':   nrm(keys[9], (H, 1)),
        'bstop':   nrm(keys[10], (1, 1)),
        # query_combine: Linear(max_query_len * embed_dim, text_dim)
        'wqc':     nrm(keys[11], (L * E, T)),
        'bqc':     nrm(keys[12], (1, T)),
        # Find module (1x1 convs as channel matmuls + text fc)
        'find_w1': nrm(keys[13], (MAP, C)),
        'find_b1': nrm(keys[14], (MAP, 1)),
        'find_wt': nrm(keys[15], (MAP, T)),
        'find_bt': nrm(keys[16], (MAP, 1)),
        'find_w2': nrm(keys[17], (1, MAP)),
        'find_b2': nrm(keys[18], (1, 1)),
        # Exist module: Linear(6*6, 2)
        'exist_w': nrm(keys[19], (P, 2)),
        'exist_b': nrm(keys[20], (1, 2)),
    }

    query = jax.random.randint(keys[21], (B, L), 0, VOCAB, dtype=jnp.int32)
    query_len = jnp.array([L, L - 2], dtype=jnp.int32)
    context = nrm(keys[22], (B, C, CH, CW), s=1.0)     # NCHW, matches context_dim

    log_probs = jax.jit(rnmn_forward)(params, query, query_len, context)
    jax.block_until_ready(log_probs)
    assert log_probs.shape == (B, 2)
    print("KERNEL_OK")
</pallas_src>

<mosaic_0001>
module attributes {stable_mosaic.version = 11 : i64} {
  func.func @kernel(%arg0: i32, %arg1: memref<2x8xf32, #tpu.memory_space<vmem>>, %arg2: memref<8x2x8xf32, #tpu.memory_space<vmem>>, %arg3: memref<2x36x64xf32, #tpu.memory_space<vmem>>, %arg4: memref<96x128xf32, #tpu.memory_space<vmem>>, %arg5: memref<256x16xf32, #tpu.memory_space<vmem>>, %arg6: memref<2x2xf32, #tpu.memory_space<vmem>>) attributes {dimension_semantics = [#tpu.dimension_semantics<parallel>], iteration_bounds = array<i64: 1>, scalar_prefetch = 0 : i64, scratch_operands = 0 : i64, tpu.core_type = #tpu.core_type<tc>, window_params = [{transform_indices = @transform_0, window_bounds = array<i64: 2, 8>}, {transform_indices = @transform_1, window_bounds = array<i64: 8, 2, 8>}, {transform_indices = @transform_2, window_bounds = array<i64: 2, 36, 64>}, {pipeline_mode = #tpu.pipeline_mode<synchronous>, transform_indices = @transform_3, window_bounds = array<i64: 96, 128>}, {pipeline_mode = #tpu.pipeline_mode<synchronous>, transform_indices = @transform_4, window_bounds = array<i64: 256, 16>}, {transform_indices = @transform_5, window_bounds = array<i64: 2, 2>}]} {
    %c0 = arith.constant 0 : index
    %c0_0 = arith.constant 0 : index
    %0 = vector.load %arg4[%c0, %c0_0] : memref<96x128xf32, #tpu.memory_space<vmem>>, vector<8x128xf32>
    %1 = arith.truncf %0 : vector<8x128xf32> to vector<8x128xbf16>
    %c8 = arith.constant 8 : index
    %c0_1 = arith.constant 0 : index
    %2 = vector.load %arg4[%c8, %c0_1] : memref<96x128xf32, #tpu.memory_space<vmem>>, vector<32x128xf32>
    %3 = arith.truncf %2 : vector<32x128xf32> to vector<32x128xbf16>
    %c40 = arith.constant 40 : index
    %c0_2 = arith.constant 0 : index
    %4 = vector.load %arg4[%c40, %c0_2] : memref<96x128xf32, #tpu.memory_space<vmem>>, vector<1x128xf32>
    %c48 = arith.constant 48 : index
    %c0_3 = arith.constant 0 : index
    %5 = vector.load %arg4[%c48, %c0_3] : memref<96x128xf32, #tpu.memory_space<vmem>>, vector<38x128xf32>
    %6 = arith.truncf %5 : vector<38x128xf32> to vector<38x128xbf16>
    %c88 = arith.constant 88 : index
    %c0_4 = arith.constant 0 : index
    %7 = vector.load %arg4[%c88, %c0_4] : memref<96x128xf32, #tpu.memory_space<vmem>>, vector<1x128xf32>
    %c0_5 = arith.constant 0 : index
    %c0_6 = arith.constant 0 : index
    %8 = vector.load %arg5[%c0_5, %c0_6] : memref<256x16xf32, #tpu.memory_space<vmem>>, vector<32x7xf32>
    %9 = arith.truncf %8 : vector<32x7xf32> to vector<32x7xbf16>
    %c32 = arith.constant 32 : index
    %c0_7 = arith.constant 0 : index
    %10 = vector.load %arg5[%c32, %c0_7] : memref<256x16xf32, #tpu.memory_space<vmem>>, vector<1x7xf32>
    %c40_8 = arith.constant 40 : index
    %c0_9 = arith.constant 0 : index
    %11 = vector.load %arg5[%c40_8, %c0_9] : memref<256x16xf32, #tpu.memory_space<vmem>>, vector<64x16xf32>
    %12 = arith.truncf %11 : vector<64x16xf32> to vector<64x16xbf16>
    %13 = vector.shape_cast %12 : vector<64x16xbf16> to vector<8x8x16xbf16>
    %c104 = arith.constant 104 : index
    %c0_10 = arith.constant 0 : index
    %14 = vector.load %arg5[%c104, %c0_10] : memref<256x16xf32, #tpu.memory_space<vmem>>, vector<1x16xf32>
    %c112 = arith.constant 112 : index
    %c0_11 = arith.constant 0 : index
    %15 = vector.load %arg5[%c112, %c0_11] : memref<256x16xf32, #tpu.memory_space<vmem>>, vector<64x16xf32>
    %16 = arith.truncf %15 : vector<64x16xf32> to vector<64x16xbf16>
    %c176 = arith.constant 176 : index
    %c0_12 = arith.constant 0 : index
    %17 = vector.load %arg5[%c176, %c0_12] : memref<256x16xf32, #tpu.memory_space<vmem>>, vector<1x16xf32>
    %c184 = arith.constant 184 : index
    %c0_13 = arith.constant 0 : index
    %18 = vector.load %arg5[%c184, %c0_13] : memref<256x16xf32, #tpu.memory_space<vmem>>, vector<16x1xf32>
    %19 = arith.truncf %18 : vector<16x1xf32> to vector<16x1xbf16>
    %c200 = arith.constant 200 : index
    %c0_14 = arith.constant 0 : index
    %20 = vector.load %arg5[%c200, %c0_14] : memref<256x16xf32, #tpu.memory_space<vmem>>, vector<1x1xf32>
    %c208 = arith.constant 208 : index
    %c0_15 = arith.constant 0 : index
    %21 = vector.load %arg5[%c208, %c0_15] : memref<256x16xf32, #tpu.memory_space<vmem>>, vector<36x2xf32>
    %c248 = arith.constant 248 : index
    %c0_16 = arith.constant 0 : index
    %22 = vector.load %arg5[%c248, %c0_16] : memref<256x16xf32, #tpu.memory_space<vmem>>, vector<1x2xf32>
    %c0_17 = arith.constant 0 : index
    %c0_18 = arith.constant 0 : index
    %23 = vector.load %arg1[%c0_17, %c0_18] : memref<2x8xf32, #tpu.memory_space<vmem>>, vector<2x8xf32>
    %c0_19 = arith.constant 0 : index
    %c0_20 = arith.constant 0 : index
    %c0_21 = arith.constant 0 : index
    %24 = vector.load %arg2[%c0_19, %c0_20, %c0_21] : memref<8x2x8xf32, #tpu.memory_space<vmem>>, vector<8x2x8xf32>
    %25 = arith.truncf %24 : vector<8x2x8xf32> to vector<8x2x8xbf16>
    %26 = vector.shape_cast %25 : vector<8x2x8xbf16> to vector<16x8xbf16>
    %cst = arith.constant dense<0.000000e+00> : vector<16x128xf32>
    %27 = tpu.matmul %26, %1, %cst {dimension_numbers = #tpu.dot_dimension_numbers<[1], [0], [0], [1], [0, 0, 1, 1], [], []>} : vector<16x8xbf16>, vector<8x128xbf16>, vector<16x128xf32> -> vector<16x128xf32>
    %28 = vector.shape_cast %27 : vector<16x128xf32> to vector<8x2x128xf32>
    %cst_22 = arith.constant 0.000000e+00 : f32
    %29 = vector.broadcast %cst_22 : f32 to vector<2x32xf32>
    %cst_23 = arith.constant 0.000000e+00 : f32
    %30 = vector.broadcast %cst_23 : f32 to vector<2x32xf32>
    %31 = vector.extract_strided_slice %28 {offsets = [0, 0, 0], sizes = [1, 2, 128], strides = [1, 1, 1]} : vector<8x2x128xf32> to vector<1x2x128xf32>
    %32 = vector.shape_cast %31 : vector<1x2x128xf32> to vector<2x128xf32>
    %33 = arith.truncf %29 : vector<2x32xf32> to vector<2x32xbf16>
    %cst_24 = arith.constant dense<0.000000e+00> : vector<2x128xf32>
    %34 = tpu.matmul %33, %3, %cst_24 {dimension_numbers = #tpu.dot_dimension_numbers<[1], [0], [0], [1], [0, 0, 1, 1], [], []>} : vector<2x32xbf16>, vector<32x128xbf16>, vector<2x128xf32> -> vector<2x128xf32>
    %35 = arith.addf %32, %34 : vector<2x128xf32>
    %36 = vector.broadcast %4 : vector<1x128xf32> to vector<2x128xf32>
    %37 = arith.addf %35, %36 : vector<2x128xf32>
    %38 = arith.negf %37 : vector<2x128xf32>
    %39 = math.exp %38 : vector<2x128xf32>
    %cst_25 = arith.constant 1.000000e+00 : f32
    %40 = vector.broadcast %cst_25 : f32 to vector<2x128xf32>
    %41 = arith.addf %40, %39 : vector<2x128xf32>
    %42 = arith.divf %40, %41 : vector<2x128xf32>
    %43 = vector.extract_strided_slice %37 {offsets = [0, 64], sizes = [2, 32], strides = [1, 1]} : vector<2x128xf32> to vector<2x32xf32>
    %44 = math.tanh %43 : vector<2x32xf32>
    %45 = vector.extract_strided_slice %42 {offsets = [0, 32], sizes = [2, 32], strides = [1, 1]} : vector<2x128xf32> to vector<2x32xf32>
    %46 = arith.mulf %45, %30 : vector<2x32xf32>
    %47 = vector.extract_strided_slice %42 {offsets = [0, 0], sizes = [2, 32], strides = [1, 1]} : vector<2x128xf32> to vector<2x32xf32>
    %48 = arith.mulf %47, %44 : vector<2x32xf32>
    %49 = arith.addf %46, %48 : vector<2x32xf32>
    %50 = vector.extract_strided_slice %42 {offsets = [0, 96], sizes = [2, 32], strides = [1, 1]} : vector<2x128xf32> to vector<2x32xf32>
    %51 = math.tanh %49 : vector<2x32xf32>
    %52 = arith.mulf %50, %51 : vector<2x32xf32>
    %53 = vector.extract_strided_slice %23 {offsets = [0, 0], sizes = [2, 1], strides = [1, 1]} : vector<2x8xf32> to vector<2x1xf32>
    %54 = vector.broadcast %53 : vector<2x1xf32> to vector<2x32xf32>
    %55 = arith.mulf %54, %52 : vector<2x32xf32>
    %cst_26 = arith.constant 1.000000e+00 : f32
    %56 = vector.broadcast %cst_26 : f32 to vector<2x1xf32>
    %57 = arith.subf %56, %53 : vector<2x1xf32>
    %58 = vector.broadcast %57 : vector<2x1xf32> to vector<2x32xf32>
    %59 = arith.mulf %58, %29 : vector<2x32xf32>
    %60 = arith.addf %55, %59 : vector<2x32xf32>
    %61 = vector.broadcast %53 : vector<2x1xf32> to vector<2x32xf32>
    %62 = arith.mulf %61, %49 : vector<2x32xf32>
    %cst_27 = arith.constant 1.000000e+00 : f32
    %63 = vector.broadcast %cst_27 : f32 to vector<2x1xf32>
    %64 = arith.subf %63, %53 : vector<2x1xf32>
    %65 = vector.broadcast %64 : vector<2x1xf32> to vector<2x32xf32>
    %66 = arith.mulf %65, %30 : vector<2x32xf32>
    %67 = arith.addf %62, %66 : vector<2x32xf32>
    %68 = vector.broadcast %53 : vector<2x1xf32> to vector<2x32xf32>
    %69 = arith.mulf %68, %52 : vector<2x32xf32>
    %70 = vector.extract_strided_slice %28 {offsets = [1, 0, 0], sizes = [1, 2, 128], strides = [1, 1, 1]} : vector<8x2x128xf32> to vector<1x2x128xf32>
    %71 = vector.shape_cast %70 : vector<1x2x128xf32> to vector<2x128xf32>
    %72 = arith.truncf %60 : vector<2x32xf32> to vector<2x32xbf16>
    %cst_28 = arith.constant dense<0.000000e+00> : vector<2x128xf32>
    %73 = tpu.matmul %72, %3, %cst_28 {dimension_numbers = #tpu.dot_dimension_numbers<[1], [0], [0], [1], [0, 0, 1, 1], [], []>} : vector<2x32xbf16>, vector<32x128xbf16>, vector<2x128xf32> -> vector<2x128xf32>
    %74 = arith.addf %71, %73 : vector<2x128xf32>
    %75 = vector.broadcast %4 : vector<1x128xf32> to vector<2x128xf32>
    %76 = arith.addf %74, %75 : vector<2x128xf32>
    %77 = arith.negf %76 : vector<2x128xf32>
    %78 = math.exp %77 : vector<2x128xf32>
    %cst_29 = arith.constant 1.000000e+00 : f32
    %79 = vector.broadcast %cst_29 : f32 to vector<2x128xf32>
    %80 = arith.addf %79, %78 : vector<2x128xf32>
    %81 = arith.divf %79, %80 : vector<2x128xf32>
    %82 = vector.extract_strided_slice %76 {offsets = [0, 64], sizes = [2, 32], strides = [1, 1]} : vector<2x128xf32> to vector<2x32xf32>
    %83 = math.tanh %82 : vector<2x32xf32>
    %84 = vector.extract_strided_slice %81 {offsets = [0, 32], sizes = [2, 32], strides = [1, 1]} : vector<2x128xf32> to vector<2x32xf32>
    %85 = arith.mulf %84, %67 : vector<2x32xf32>
    %86 = vector.extract_strided_slice %81 {offsets = [0, 0], sizes = [2, 32], strides = [1, 1]} : vector<2x128xf32> to vector<2x32xf32>
    %87 = arith.mulf %86, %83 : vector<2x32xf32>
    %88 = arith.addf %85, %87 : vector<2x32xf32>
    %89 = vector.extract_strided_slice %81 {offsets = [0, 96], sizes = [2, 32], strides = [1, 1]} : vector<2x128xf32> to vector<2x32xf32>
    %90 = math.tanh %88 : vector<2x32xf32>
    %91 = arith.mulf %89, %90 : vector<2x32xf32>
    %92 = vector.extract_strided_slice %23 {offsets = [0, 1], sizes = [2, 1], strides = [1, 1]} : vector<2x8xf32> to vector<2x1xf32>
    %93 = vector.broadcast %92 : vector<2x1xf32> to vector<2x32xf32>
    %94 = arith.mulf %93, %91 : vector<2x32xf32>
    %cst_30 = arith.constant 1.000000e+00 : f32
    %95 = vector.broadcast %cst_30 : f32 to vector<2x1xf32>
    %96 = arith.subf %95, %92 : vector<2x1xf32>
    %97 = vector.broadcast %96 : vector<2x1xf32> to vector<2x32xf32>
    %98 = arith.mulf %97, %60 : vector<2x32xf32>
    %99 = arith.addf %94, %98 : vector<2x32xf32>
    %100 = vector.broadcast %92 : vector<2x1xf32> to vector<2x32xf32>
    %101 = arith.mulf %100, %88 : vector<2x32xf32>
    %cst_31 = arith.constant 1.000000e+00 : f32
    %102 = vector.broadcast %cst_31 : f32 to vector<2x1xf32>
    %103 = arith.subf %102, %92 : vector<2x1xf32>
    %104 = vector.broadcast %103 : vector<2x1xf32> to vector<2x32xf32>
    %105 = arith.mulf %104, %67 : vector<2x32xf32>
    %106 = arith.addf %101, %105 : vector<2x32xf32>
    %107 = vector.broadcast %92 : vector<2x1xf32> to vector<2x32xf32>
    %108 = arith.mulf %107, %91 : vector<2x32xf32>
    %109 = vector.extract_strided_slice %28 {offsets = [2, 0, 0], sizes = [1, 2, 128], strides = [1, 1, 1]} : vector<8x2x128xf32> to vector<1x2x128xf32>
    %110 = vector.shape_cast %109 : vector<1x2x128xf32> to vector<2x128xf32>
    %111 = arith.truncf %99 : vector<2x32xf32> to vector<2x32xbf16>
    %cst_32 = arith.constant dense<0.000000e+00> : vector<2x128xf32>
    %112 = tpu.matmul %111, %3, %cst_32 {dimension_numbers = #tpu.dot_dimension_numbers<[1], [0], [0], [1], [0, 0, 1, 1], [], []>} : vector<2x32xbf16>, vector<32x128xbf16>, vector<2x128xf32> -> vector<2x128xf32>
    %113 = arith.addf %110, %112 : vector<2x128xf32>
    %114 = vector.broadcast %4 : vector<1x128xf32> to vector<2x128xf32>
    %115 = arith.addf %113, %114 : vector<2x128xf32>
    %116 = arith.negf %115 : vector<2x128xf32>
    %117 = math.exp %116 : vector<2x128xf32>
    %cst_33 = arith.constant 1.000000e+00 : f32
    %118 = vector.broadcast %cst_33 : f32 to vector<2x128xf32>
    %119 = arith.addf %118, %117 : vector<2x128xf32>
    %120 = arith.divf %118, %119 : vector<2x128xf32>
    %121 = vector.extract_strided_slice %115 {offsets = [0, 64], sizes = [2, 32], strides = [1, 1]} : vector<2x128xf32> to vector<2x32xf32>
    %122 = math.tanh %121 : vector<2x32xf32>
    %123 = vector.extract_strided_slice %120 {offsets = [0, 32], sizes = [2, 32], strides = [1, 1]} : vector<2x128xf32> to vector<2x32xf32>
    %124 = arith.mulf %123, %106 : vector<2x32xf32>
    %125 = vector.extract_strided_slice %120 {offsets = [0, 0], sizes = [2, 32], strides = [1, 1]} : vector<2x128xf32> to vector<2x32xf32>
    %126 = arith.mulf %125, %122 : vector<2x32xf32>
    %127 = arith.addf %124, %126 : vector<2x32xf32>
    %128 = vector.extract_strided_slice %120 {offsets = [0, 96], sizes = [2, 32], strides = [1, 1]} : vector<2x128xf32> to vector<2x32xf32>
    %129 = math.tanh %127 : vector<2x32xf32>
    %130 = arith.mulf %128, %129 : vector<2x32xf32>
    %131 = vector.extract_strided_slice %23 {offsets = [0, 2], sizes = [2, 1], strides = [1, 1]} : vector<2x8xf32> to vector<2x1xf32>
    %132 = vector.broadcast %131 : vector<2x1xf32> to vector<2x32xf32>
    %133 = arith.mulf %132, %130 : vector<2x32xf32>
    %cst_34 = arith.constant 1.000000e+00 : f32
    %134 = vector.broadcast %cst_34 : f32 to vector<2x1xf32>
    %135 = arith.subf %134, %131 : vector<2x1xf32>
    %136 = vector.broadcast %135 : vector<2x1xf32> to vector<2x32xf32>
    %137 = arith.mulf %136, %99 : vector<2x32xf32>
    %138 = arith.addf %133, %137 : vector<2x32xf32>
    %139 = vector.broadcast %131 : vector<2x1xf32> to vector<2x32xf32>
    %140 = arith.mulf %139, %127 : vector<2x32xf32>
    %cst_35 = arith.constant 1.000000e+00 : f32
    %141 = vector.broadcast %cst_35 : f32 to vector<2x1xf32>
    %142 = arith.subf %141, %131 : vector<2x1xf32>
    %143 = vector.broadcast %142 : vector<2x1xf32> to vector<2x32xf32>
    %144 = arith.mulf %143, %106 : vector<2x32xf32>
    %145 = arith.addf %140, %144 : vector<2x32xf32>
    %146 = vector.broadcast %131 : vector<2x1xf32> to vector<2x32xf32>
    %147 = arith.mulf %146, %130 : vector<2x32xf32>
    %148 = vector.extract_strided_slice %28 {offsets = [3, 0, 0], sizes = [1, 2, 128], strides = [1, 1, 1]} : vector<8x2x128xf32> to vector<1x2x128xf32>
    %149 = vector.shape_cast %148 : vector<1x2x128xf32> to vector<2x128xf32>
    %150 = arith.truncf %138 : vector<2x32xf32> to vector<2x32xbf16>
    %cst_36 = arith.constant dense<0.000000e+00> : vector<2x128xf32>
    %151 = tpu.matmul %150, %3, %cst_36 {dimension_numbers = #tpu.dot_dimension_numbers<[1], [0], [0], [1], [0, 0, 1, 1], [], []>} : vector<2x32xbf16>, vector<32x128xbf16>, vector<2x128xf32> -> vector<2x128xf32>
    %152 = arith.addf %149, %151 : vector<2x128xf32>
    %153 = vector.broadcast %4 : vector<1x128xf32> to vector<2x128xf32>
    %154 = arith.addf %152, %153 : vector<2x128xf32>
    %155 = arith.negf %154 : vector<2x128xf32>
    %156 = math.exp %155 : vector<2x128xf32>
    %cst_37 = arith.constant 1.000000e+00 : f32
    %157 = vector.broadcast %cst_37 : f32 to vector<2x128xf32>
    %158 = arith.addf %157, %156 : vector<2x128xf32>
    %159 = arith.divf %157, %158 : vector<2x128xf32>
    %160 = vector.extract_strided_slice %154 {offsets = [0, 64], sizes = [2, 32], strides = [1, 1]} : vector<2x128xf32> to vector<2x32xf32>
    %161 = math.tanh %160 : vector<2x32xf32>
    %162 = vector.extract_strided_slice %159 {offsets = [0, 32], sizes = [2, 32], strides = [1, 1]} : vector<2x128xf32> to vector<2x32xf32>
    %163 = arith.mulf %162, %145 : vector<2x32xf32>
    %164 = vector.extract_strided_slice %159 {offsets = [0, 0], sizes = [2, 32], strides = [1, 1]} : vector<2x128xf32> to vector<2x32xf32>
    %165 = arith.mulf %164, %161 : vector<2x32xf32>
    %166 = arith.addf %163, %165 : vector<2x32xf32>
    %167 = vector.extract_strided_slice %159 {offsets = [0, 96], sizes = [2, 32], strides = [1, 1]} : vector<2x128xf32> to vector<2x32xf32>
    %168 = math.tanh %166 : vector<2x32xf32>
    %169 = arith.mulf %167, %168 : vector<2x32xf32>
    %170 = vector.extract_strided_slice %23 {offsets = [0, 3], sizes = [2, 1], strides = [1, 1]} : vector<2x8xf32> to vector<2x1xf32>
    %171 = vector.broadcast %170 : vector<2x1xf32> to vector<2x32xf32>
    %172 = arith.mulf %171, %169 : vector<2x32xf32>
    %cst_38 = arith.constant 1.000000e+00 : f32
    %173 = vector.broadcast %cst_38 : f32 to vector<2x1xf32>
    %174 = arith.subf %173, %170 : vector<2x1xf32>
    %175 = vector.broadcast %174 : vector<2x1xf32> to vector<2x32xf32>
    %176 = arith.mulf %175, %138 : vector<2x32xf32>
    %177 = arith.addf %172, %176 : vector<2x32xf32>
    %178 = vector.broadcast %170 : vector<2x1xf32> to vector<2x32xf32>
    %179 = arith.mulf %178, %166 : vector<2x32xf32>
    %cst_39 = arith.constant 1.000000e+00 : f32
    %180 = vector.broadcast %cst_39 : f32 to vector<2x1xf32>
    %181 = arith.subf %180, %170 : vector<2x1xf32>
    %182 = vector.broadcast %181 : vector<2x1xf32> to vector<2x32xf32>
    %183 = arith.mulf %182, %145 : vector<2x32xf32>
    %184 = arith.addf %179, %183 : vector<2x32xf32>
    %185 = vector.broadcast %170 : vector<2x1xf32> to vector<2x32xf32>
    %186 = arith.mulf %185, %169 : vector<2x32xf32>
    %187 = vector.extract_strided_slice %28 {offsets = [4, 0, 0], sizes = [1, 2, 128], strides = [1, 1, 1]} : vector<8x2x128xf32> to vector<1x2x128xf32>
    %188 = vector.shape_cast %187 : vector<1x2x128xf32> to vector<2x128xf32>
    %189 = arith.truncf %177 : vector<2x32xf32> to vector<2x32xbf16>
    %cst_40 = arith.constant dense<0.000000e+00> : vector<2x128xf32>
    %190 = tpu.matmul %189, %3, %cst_40 {dimension_numbers = #tpu.dot_dimension_numbers<[1], [0], [0], [1], [0, 0, 1, 1], [], []>} : vector<2x32xbf16>, vector<32x128xbf16>, vector<2x128xf32> -> vector<2x128xf32>
    %191 = arith.addf %188, %190 : vector<2x128xf32>
    %192 = vector.broadcast %4 : vector<1x128xf32> to vector<2x128xf32>
    %193 = arith.addf %191, %192 : vector<2x128xf32>
    %194 = arith.negf %193 : vector<2x128xf32>
    %195 = math.exp %194 : vector<2x128xf32>
    %cst_41 = arith.constant 1.000000e+00 : f32
    %196 = vector.broadcast %cst_41 : f32 to vector<2x128xf32>
    %197 = arith.addf %196, %195 : vector<2x128xf32>
    %198 = arith.divf %196, %197 : vector<2x128xf32>
    %199 = vector.extract_strided_slice %193 {offsets = [0, 64], sizes = [2, 32], strides = [1, 1]} : vector<2x128xf32> to vector<2x32xf32>
    %200 = math.tanh %199 : vector<2x32xf32>
    %201 = vector.extract_strided_slice %198 {offsets = [0, 32], sizes = [2, 32], strides = [1, 1]} : vector<2x128xf32> to vector<2x32xf32>
    %202 = arith.mulf %201, %184 : vector<2x32xf32>
    %203 = vector.extract_strided_slice %198 {offsets = [0, 0], sizes = [2, 32], strides = [1, 1]} : vector<2x128xf32> to vector<2x32xf32>
    %204 = arith.mulf %203, %200 : vector<2x32xf32>
    %205 = arith.addf %202, %204 : vector<2x32xf32>
    %206 = vector.extract_strided_slice %198 {offsets = [0, 96], sizes = [2, 32], strides = [1, 1]} : vector<2x128xf32> to vector<2x32xf32>
    %207 = math.tanh %205 : vector<2x32xf32>
    %208 = arith.mulf %206, %207 : vector<2x32xf32>
    %209 = vector.extract_strided_slice %23 {offsets = [0, 4], sizes = [2, 1], strides = [1, 1]} : vector<2x8xf32> to vector<2x1xf32>
    %210 = vector.broadcast %209 : vector<2x1xf32> to vector<2x32xf32>
    %211 = arith.mulf %210, %208 : vector<2x32xf32>
    %cst_42 = arith.constant 1.000000e+00 : f32
    %212 = vector.broadcast %cst_42 : f32 to vector<2x1xf32>
    %213 = arith.subf %212, %209 : vector<2x1xf32>
    %214 = vector.broadcast %213 : vector<2x1xf32> to vector<2x32xf32>
    %215 = arith.mulf %214, %177 : vector<2x32xf32>
    %216 = arith.addf %211, %215 : vector<2x32xf32>
    %217 = vector.broadcast %209 : vector<2x1xf32> to vector<2x32xf32>
    %218 = arith.mulf %217, %205 : vector<2x32xf32>
    %cst_43 = arith.constant 1.000000e+00 : f32
    %219 = vector.broadcast %cst_43 : f32 to vector<2x1xf32>
    %220 = arith.subf %219, %209 : vector<2x1xf32>
    %221 = vector.broadcast %220 : vector<2x1xf32> to vector<2x32xf32>
    %222 = arith.mulf %221, %184 : vector<2x32xf32>
    %223 = arith.addf %218, %222 : vector<2x32xf32>
    %224 = vector.broadcast %209 : vector<2x1xf32> to vector<2x32xf32>
    %225 = arith.mulf %224, %208 : vector<2x32xf32>
    %226 = vector.extract_strided_slice %28 {offsets = [5, 0, 0], sizes = [1, 2, 128], strides = [1, 1, 1]} : vector<8x2x128xf32> to vector<1x2x128xf32>
    %227 = vector.shape_cast %226 : vector<1x2x128xf32> to vector<2x128xf32>
    %228 = arith.truncf %216 : vector<2x32xf32> to vector<2x32xbf16>
    %cst_44 = arith.constant dense<0.000000e+00> : vector<2x128xf32>
    %229 = tpu.matmul %228, %3, %cst_44 {dimension_numbers = #tpu.dot_dimension_numbers<[1], [0], [0], [1], [0, 0, 1, 1], [], []>} : vector<2x32xbf16>, vector<32x128xbf16>, vector<2x128xf32> -> vector<2x128xf32>
    %230 = arith.addf %227, %229 : vector<2x128xf32>
    %231 = vector.broadcast %4 : vector<1x128xf32> to vector<2x128xf32>
    %232 = arith.addf %230, %231 : vector<2x128xf32>
    %233 = arith.negf %232 : vector<2x128xf32>
    %234 = math.exp %233 : vector<2x128xf32>
    %cst_45 = arith.constant 1.000000e+00 : f32
    %235 = vector.broadcast %cst_45 : f32 to vector<2x128xf32>
    %236 = arith.addf %235, %234 : vector<2x128xf32>
    %237 = arith.divf %235, %236 : vector<2x128xf32>
    %238 = vector.extract_strided_slice %232 {offsets = [0, 64], sizes = [2, 32], strides = [1, 1]} : vector<2x128xf32> to vector<2x32xf32>
    %239 = math.tanh %238 : vector<2x32xf32>
    %240 = vector.extract_strided_slice %237 {offsets = [0, 32], sizes = [2, 32], strides = [1, 1]} : vector<2x128xf32> to vector<2x32xf32>
    %241 = arith.mulf %240, %223 : vector<2x32xf32>
    %242 = vector.extract_strided_slice %237 {offsets = [0, 0], sizes = [2, 32], strides = [1, 1]} : vector<2x128xf32> to vector<2x32xf32>
    %243 = arith.mulf %242, %239 : vector<2x32xf32>
    %244 = arith.addf %241, %243 : vector<2x32xf32>
    %245 = vector.extract_strided_slice %237 {offsets = [0, 96], sizes = [2, 32], strides = [1, 1]} : vector<2x128xf32> to vector<2x32xf32>
    %246 = math.tanh %244 : vector<2x32xf32>
    %247 = arith.mulf %245, %246 : vector<2x32xf32>
    %248 = vector.extract_strided_slice %23 {offsets = [0, 5], sizes = [2, 1], strides = [1, 1]} : vector<2x8xf32> to vector<2x1xf32>
    %249 = vector.broadcast %248 : vector<2x1xf32> to vector<2x32xf32>
    %250 = arith.mulf %249, %247 : vector<2x32xf32>
    %cst_46 = arith.constant 1.000000e+00 : f32
    %251 = vector.broadcast %cst_46 : f32 to vector<2x1xf32>
    %252 = arith.subf %251, %248 : vector<2x1xf32>
    %253 = vector.broadcast %252 : vector<2x1xf32> to vector<2x32xf32>
    %254 = arith.mulf %253, %216 : vector<2x32xf32>
    %255 = arith.addf %250, %254 : vector<2x32xf32>
    %256 = vector.broadcast %248 : vector<2x1xf32> to vector<2x32xf32>
    %257 = arith.mulf %256, %244 : vector<2x32xf32>
    %cst_47 = arith.constant 1.000000e+00 : f32
    %258 = vector.broadcast %cst_47 : f32 to vector<2x1xf32>
    %259 = arith.subf %258, %248 : vector<2x1xf32>
    %260 = vector.broadcast %259 : vector<2x1xf32> to vector<2x32xf32>
    %261 = arith.mulf %260, %223 : vector<2x32xf32>
    %262 = arith.addf %257, %261 : vector<2x32xf32>
    %263 = vector.broadcast %248 : vector<2x1xf32> to vector<2x32xf32>
    %264 = arith.mulf %263, %247 : vector<2x32xf32>
    %265 = vector.extract_strided_slice %28 {offsets = [6, 0, 0], sizes = [1, 2, 128], strides = [1, 1, 1]} : vector<8x2x128xf32> to vector<1x2x128xf32>
    %266 = vector.shape_cast %265 : vector<1x2x128xf32> to vector<2x128xf32>
    %267 = arith.truncf %255 : vector<2x32xf32> to vector<2x32xbf16>
    %cst_48 = arith.constant dense<0.000000e+00> : vector<2x128xf32>
    %268 = tpu.matmul %267, %3, %cst_48 {dimension_numbers = #tpu.dot_dimension_numbers<[1], [0], [0], [1], [0, 0, 1, 1], [], []>} : vector<2x32xbf16>, vector<32x128xbf16>, vector<2x128xf32> -> vector<2x128xf32>
    %269 = arith.addf %266, %268 : vector<2x128xf32>
    %270 = vector.broadcast %4 : vector<1x128xf32> to vector<2x128xf32>
    %271 = arith.addf %269, %270 : vector<2x128xf32>
    %272 = arith.negf %271 : vector<2x128xf32>
    %273 = math.exp %272 : vector<2x128xf32>
    %cst_49 = arith.constant 1.000000e+00 : f32
    %274 = vector.broadcast %cst_49 : f32 to vector<2x128xf32>
    %275 = arith.addf %274, %273 : vector<2x128xf32>
    %276 = arith.divf %274, %275 : vector<2x128xf32>
    %277 = vector.extract_strided_slice %271 {offsets = [0, 64], sizes = [2, 32], strides = [1, 1]} : vector<2x128xf32> to vector<2x32xf32>
    %278 = math.tanh %277 : vector<2x32xf32>
    %279 = vector.extract_strided_slice %276 {offsets = [0, 32], sizes = [2, 32], strides = [1, 1]} : vector<2x128xf32> to vector<2x32xf32>
    %280 = arith.mulf %279, %262 : vector<2x32xf32>
    %281 = vector.extract_strided_slice %276 {offsets = [0, 0], sizes = [2, 32], strides = [1, 1]} : vector<2x128xf32> to vector<2x32xf32>
    %282 = arith.mulf %281, %278 : vector<2x32xf32>
    %283 = arith.addf %280, %282 : vector<2x32xf32>
    %284 = vector.extract_strided_slice %276 {offsets = [0, 96], sizes = [2, 32], strides = [1, 1]} : vector<2x128xf32> to vector<2x32xf32>
    %285 = math.tanh %283 : vector<2x32xf32>
    %286 = arith.mulf %284, %285 : vector<2x32xf32>
    %287 = vector.extract_strided_slice %23 {offsets = [0, 6], sizes = [2, 1], strides = [1, 1]} : vector<2x8xf32> to vector<2x1xf32>
    %288 = vector.broadcast %287 : vector<2x1xf32> to vector<2x32xf32>
    %289 = arith.mulf %288, %286 : vector<2x32xf32>
    %cst_50 = arith.constant 1.000000e+00 : f32
    %290 = vector.broadcast %cst_50 : f32 to vector<2x1xf32>
    %291 = arith.subf %290, %287 : vector<2x1xf32>
    %292 = vector.broadcast %291 : vector<2x1xf32> to vector<2x32xf32>
    %293 = arith.mulf %292, %255 : vector<2x32xf32>
    %294 = arith.addf %289, %293 : vector<2x32xf32>
    %295 = vector.broadcast %287 : vector<2x1xf32> to vector<2x32xf32>
    %296 = arith.mulf %295, %283 : vector<2x32xf32>
    %cst_51 = arith.constant 1.000000e+00 : f32
    %297 = vector.broadcast %cst_51 : f32 to vector<2x1xf32>
    %298 = arith.subf %297, %287 : vector<2x1xf32>
    %299 = vector.broadcast %298 : vector<2x1xf32> to vector<2x32xf32>
    %300 = arith.mulf %299, %262 : vector<2x32xf32>
    %301 = arith.addf %296, %300 : vector<2x32xf32>
    %302 = vector.broadcast %287 : vector<2x1xf32> to vector<2x32xf32>
    %303 = arith.mulf %302, %286 : vector<2x32xf32>
    %304 = vector.extract_strided_slice %28 {offsets = [7, 0, 0], sizes = [1, 2, 128], strides = [1, 1, 1]} : vector<8x2x128xf32> to vector<1x2x128xf32>
    %305 = vector.shape_cast %304 : vector<1x2x128xf32> to vector<2x128xf32>
    %306 = arith.truncf %294 : vector<2x32xf32> to vector<2x32xbf16>
    %cst_52 = arith.constant dense<0.000000e+00> : vector<2x128xf32>
    %307 = tpu.matmul %306, %3, %cst_52 {dimension_numbers = #tpu.dot_dimension_numbers<[1], [0], [0], [1], [0, 0, 1, 1], [], []>} : vector<2x32xbf16>, vector<32x128xbf16>, vector<2x128xf32> -> vector<2x128xf32>
    %308 = arith.addf %305, %307 : vector<2x128xf32>
    %309 = vector.broadcast %4 : vector<1x128xf32> to vector<2x128xf32>
    %310 = arith.addf %308, %309 : vector<2x128xf32>
    %311 = arith.negf %310 : vector<2x128xf32>
    %312 = math.exp %311 : vector<2x128xf32>
    %cst_53 = arith.constant 1.000000e+00 : f32
    %313 = vector.broadcast %cst_53 : f32 to vector<2x128xf32>
    %314 = arith.addf %313, %312 : vector<2x128xf32>
    %315 = arith.divf %313, %314 : vector<2x128xf32>
    %316 = vector.extract_strided_slice %310 {offsets = [0, 64], sizes = [2, 32], strides = [1, 1]} : vector<2x128xf32> to vector<2x32xf32>
    %317 = math.tanh %316 : vector<2x32xf32>
    %318 = vector.extract_strided_slice %315 {offsets = [0, 32], sizes = [2, 32], strides = [1, 1]} : vector<2x128xf32> to vector<2x32xf32>
    %319 = arith.mulf %318, %301 : vector<2x32xf32>
    %320 = vector.extract_strided_slice %315 {offsets = [0, 0], sizes = [2, 32], strides = [1, 1]} : vector<2x128xf32> to vector<2x32xf32>
    %321 = arith.mulf %320, %317 : vector<2x32xf32>
    %322 = arith.addf %319, %321 : vector<2x32xf32>
    %323 = vector.extract_strided_slice %315 {offsets = [0, 96], sizes = [2, 32], strides = [1, 1]} : vector<2x128xf32> to vector<2x32xf32>
    %324 = math.tanh %322 : vector<2x32xf32>
    %325 = arith.mulf %323, %324 : vector<2x32xf32>
    %326 = vector.extract_strided_slice %23 {offsets = [0, 7], sizes = [2, 1], strides = [1, 1]} : vector<2x8xf32> to vector<2x1xf32>
    %327 = vector.broadcast %326 : vector<2x1xf32> to vector<2x32xf32>
    %328 = arith.mulf %327, %325 : vector<2x32xf32>
    %cst_54 = arith.constant 1.000000e+00 : f32
    %329 = vector.broadcast %cst_54 : f32 to vector<2x1xf32>
    %330 = arith.subf %329, %326 : vector<2x1xf32>
    %331 = vector.broadcast %330 : vector<2x1xf32> to vector<2x32xf32>
    %332 = arith.mulf %331, %294 : vector<2x32xf32>
    %333 = arith.addf %328, %332 : vector<2x32xf32>
    %334 = vector.broadcast %326 : vector<2x1xf32> to vector<2x32xf32>
    %335 = arith.mulf %334, %322 : vector<2x32xf32>
    %cst_55 = arith.constant 1.000000e+00 : f32
    %336 = vector.broadcast %cst_55 : f32 to vector<2x1xf32>
    %337 = arith.subf %336, %326 : vector<2x1xf32>
    %338 = vector.broadcast %337 : vector<2x1xf32> to vector<2x32xf32>
    %339 = arith.mulf %338, %301 : vector<2x32xf32>
    %340 = arith.addf %335, %339 : vector<2x32xf32>
    %341 = vector.broadcast %326 : vector<2x1xf32> to vector<2x32xf32>
    %342 = arith.mulf %341, %325 : vector<2x32xf32>
    %343 = vector.shape_cast %69 : vector<2x32xf32> to vector<2x1x32xf32>
    %344 = vector.shape_cast %108 : vector<2x32xf32> to vector<2x1x32xf32>
    %345 = vector.shape_cast %147 : vector<2x32xf32> to vector<2x1x32xf32>
    %346 = vector.shape_cast %186 : vector<2x32xf32> to vector<2x1x32xf32>
    %347 = vector.shape_cast %225 : vector<2x32xf32> to vector<2x1x32xf32>
    %348 = vector.shape_cast %264 : vector<2x32xf32> to vector<2x1x32xf32>
    %349 = vector.shape_cast %303 : vector<2x32xf32> to vector<2x1x32xf32>
    %350 = vector.shape_cast %342 : vector<2x32xf32> to vector<2x1x32xf32>
    %351 = tpu.concatenate %343, %344, %345, %346, %347, %348, %349, %350 in 1 : vector<2x1x32xf32>, vector<2x1x32xf32>, vector<2x1x32xf32>, vector<2x1x32xf32>, vector<2x1x32xf32>, vector<2x1x32xf32>, vector<2x1x32xf32>, vector<2x1x32xf32> -> vector<2x8x32xf32>
    %352 = arith.truncf %351 : vector<2x8x32xf32> to vector<2x8x32xbf16>
    "tpu.trace_start"() <{level = 10 : i32, message = "lbe,lem->lbm"}> : () -> ()
    %cst_56 = arith.constant dense<0.000000e+00> : vector<8x2x16xf32>
    %353 = tpu.matmul %25, %13, %cst_56 {dimension_numbers = #tpu.dot_dimension_numbers<[2], [1], [1], [2], [0, 0, 0, 1, 1, 2], [0], [0]>} : vector<8x2x8xbf16>, vector<8x8x16xbf16>, vector<8x2x16xf32> -> vector<8x2x16xf32>
    "tpu.trace_stop"() : () -> ()
    %354 = tpu.transpose %353, [1, 0, 2] : vector<8x2x16xf32> -> vector<2x8x16xf32>
    %355 = arith.truncf %354 : vector<2x8x16xf32> to vector<2x8x16xbf16>
    %c0_57 = arith.constant 0 : index
    %c0_58 = arith.constant 0 : index
    %c0_59 = arith.constant 0 : index
    %356 = vector.load %arg3[%c0_57, %c0_58, %c0_59] : memref<2x36x64xf32, #tpu.memory_space<vmem>>, vector<2x36x64xf32>
    %357 = arith.truncf %356 : vector<2x36x64xf32> to vector<2x36x64xbf16>
    %358 = vector.shape_cast %357 : vector<2x36x64xbf16> to vector<72x64xbf16>
    %cst_60 = arith.constant dense<0.000000e+00> : vector<72x16xf32>
    %359 = tpu.matmul %358, %16, %cst_60 {dimension_numbers = #tpu.dot_dimension_numbers<[1], [0], [0], [1], [0, 0, 1, 1], [], []>} : vector<72x64xbf16>, vector<64x16xbf16>, vector<72x16xf32> -> vector<72x16xf32>
    %360 = vector.shape_cast %359 : vector<72x16xf32> to vector<2x36x16xf32>
    %361 = vector.shape_cast %17 : vector<1x16xf32> to vector<1x1x16xf32>
    %362 = vector.broadcast %361 : vector<1x1x16xf32> to vector<2x36x16xf32>
    %363 = arith.addf %360, %362 : vector<2x36x16xf32>
    %cst_61 = arith.constant 0.000000e+00 : f32
    %364 = vector.broadcast %cst_61 : f32 to vector<2x6xf32>
    %cst_62 = arith.constant 0.000000e+00 : f32
    %365 = vector.broadcast %cst_62 : f32 to vector<2x36x3xf32>
    %366 = tpu.concatenate %364, %333 in 1 : vector<2x6xf32>, vector<2x32xf32> -> vector<2x38xf32>
    %367 = arith.truncf %366 : vector<2x38xf32> to vector<2x38xbf16>
    %cst_63 = arith.constant dense<0.000000e+00> : vector<2x128xf32>
    %368 = tpu.matmul %367, %6, %cst_63 {dimension_numbers = #tpu.dot_dimension_numbers<[1], [0], [0], [1], [0, 0, 1, 1], [], []>} : vector<2x38xbf16>, vector<38x128xbf16>, vector<2x128xf32> -> vector<2x128xf32>
    %369 = vector.broadcast %7 : vector<1x128xf32> to vector<2x128xf32>
    %370 = arith.addf %368, %369 : vector<2x128xf32>
    %371 = arith.negf %370 : vector<2x128xf32>
    %372 = math.exp %371 : vector<2x128xf32>
    %cst_64 = arith.constant 1.000000e+00 : f32
    %373 = vector.broadcast %cst_64 : f32 to vector<2x128xf32>
    %374 = arith.addf %373, %372 : vector<2x128xf32>
    %375 = arith.divf %373, %374 : vector<2x128xf32>
    %376 = vector.extract_strided_slice %370 {offsets = [0, 64], sizes = [2, 32], strides = [1, 1]} : vector<2x128xf32> to vector<2x32xf32>
    %377 = math.tanh %376 : vector<2x32xf32>
    %378 = vector.extract_strided_slice %375 {offsets = [0, 32], sizes = [2, 32], strides = [1, 1]} : vector<2x128xf32> to vector<2x32xf32>
    %379 = arith.mulf %378, %340 : vector<2x32xf32>
    %380 = vector.extract_strided_slice %375 {offsets = [0, 0], sizes = [2, 32], strides = [1, 1]} : vector<2x128xf32> to vector<2x32xf32>
    %381 = arith.mulf %380, %377 : vector<2x32xf32>
    %382 = arith.addf %379, %381 : vector<2x32xf32>
    %383 = vector.extract_strided_slice %375 {offsets = [0, 96], sizes = [2, 32], strides = [1, 1]} : vector<2x128xf32> to vector<2x32xf32>
    %384 = math.tanh %382 : vector<2x32xf32>
    %385 = arith.mulf %383, %384 : vector<2x32xf32>
    %386 = arith.truncf %385 : vector<2x32xf32> to vector<2x32xbf16>
    %cst_65 = arith.constant dense<0.000000e+00> : vector<2x7xf32>
    %387 = tpu.matmul %386, %9, %cst_65 {dimension_numbers = #tpu.dot_dimension_numbers<[1], [0], [0], [1], [0, 0, 1, 1], [], []>} : vector<2x32xbf16>, vector<32x7xbf16>, vector<2x7xf32> -> vector<2x7xf32>
    %388 = vector.broadcast %10 : vector<1x7xf32> to vector<2x7xf32>
    %389 = arith.addf %387, %388 : vector<2x7xf32>
    %390 = vector.extract_strided_slice %389 {offsets = [0, 0], sizes = [2, 3], strides = [1, 1]} : vector<2x7xf32> to vector<2x3xf32>
    %cst_66 = arith.constant dense<0xFF800000> : vector<2xf32>
    %391 = vector.multi_reduction <maximumf>, %390, %cst_66 [1] : vector<2x3xf32> to vector<2xf32>
    %cst_67 = arith.constant 0xFF800000 : f32
    %392 = vector.broadcast %cst_67 : f32 to vector<2xf32>
    %393 = arith.maximumf %392, %391 : vector<2xf32>
    %394 = vector.shape_cast %393 : vector<2xf32> to vector<2x1xf32>
    %395 = vector.broadcast %394 : vector<2x1xf32> to vector<2x3xf32>
    %396 = arith.subf %390, %395 : vector<2x3xf32>
    %397 = math.exp %396 : vector<2x3xf32>
    %cst_68 = arith.constant dense<0.000000e+00> : vector<2xf32>
    %398 = vector.multi_reduction <add>, %397, %cst_68 [1] : vector<2x3xf32> to vector<2xf32>
    %399 = vector.shape_cast %398 : vector<2xf32> to vector<2x1xf32>
    %400 = vector.broadcast %399 : vector<2x1xf32> to vector<2x3xf32>
    %401 = arith.divf %397, %400 : vector<2x3xf32>
    %402 = vector.extract_strided_slice %389 {offsets = [0, 3], sizes = [2, 3], strides = [1, 1]} : vector<2x7xf32> to vector<2x3xf32>
    %cst_69 = arith.constant dense<0xFF800000> : vector<2xf32>
    %403 = vector.multi_reduction <maximumf>, %402, %cst_69 [1] : vector<2x3xf32> to vector<2xf32>
    %cst_70 = arith.constant 0xFF800000 : f32
    %404 = vector.broadcast %cst_70 : f32 to vector<2xf32>
    %405 = arith.maximumf %404, %403 : vector<2xf32>
    %406 = vector.shape_cast %405 : vector<2xf32> to vector<2x1xf32>
    %407 = vector.broadcast %406 : vector<2x1xf32> to vector<2x3xf32>
    %408 = arith.subf %402, %407 : vector<2x3xf32>
    %409 = math.exp %408 : vector<2x3xf32>
    %cst_71 = arith.constant dense<0.000000e+00> : vector<2xf32>
    %410 = vector.multi_reduction <add>, %409, %cst_71 [1] : vector<2x3xf32> to vector<2xf32>
    %411 = vector.shape_cast %410 : vector<2xf32> to vector<2x1xf32>
    %412 = vector.broadcast %411 : vector<2x1xf32> to vector<2x3xf32>
    %413 = arith.divf %409, %412 : vector<2x3xf32>
    %414 = tpu.concatenate %401, %413 in 1 : vector<2x3xf32>, vector<2x3xf32> -> vector<2x6xf32>
    %415 = vector.extract_strided_slice %389 {offsets = [0, 6], sizes = [2, 1], strides = [1, 1]} : vector<2x7xf32> to vector<2x1xf32>
    %416 = arith.negf %415 : vector<2x1xf32>
    %417 = math.exp %416 : vector<2x1xf32>
    %cst_72 = arith.constant 1.000000e+00 : f32
    %418 = vector.broadcast %cst_72 : f32 to vector<2x1xf32>
    %419 = arith.addf %418, %417 : vector<2x1xf32>
    %420 = arith.divf %418, %419 : vector<2x1xf32>
    %421 = vector.shape_cast %386 : vector<2x32xbf16> to vector<2x1x32xbf16>
    "tpu.trace_start"() <{level = 10 : i32, message = "bqh,blh->bql"}> : () -> ()
    %cst_73 = arith.constant dense<0.000000e+00> : vector<2x1x8xf32>
    %422 = tpu.matmul %421, %352, %cst_73 {dimension_numbers = #tpu.dot_dimension_numbers<[2], [2], [1], [1], [0, 0, 0, 1, 1, 1], [0], [0]>} : vector<2x1x32xbf16>, vector<2x8x32xbf16>, vector<2x1x8xf32> -> vector<2x1x8xf32>
    "tpu.trace_stop"() : () -> ()
    %cst_74 = arith.constant dense<0xFF800000> : vector<2x1xf32>
    %423 = vector.multi_reduction <maximumf>, %422, %cst_74 [2] : vector<2x1x8xf32> to vector<2x1xf32>
    %cst_75 = arith.constant 0xFF800000 : f32
    %424 = vector.broadcast %cst_75 : f32 to vector<2x1xf32>
    %425 = arith.maximumf %424, %423 : vector<2x1xf32>
    %426 = vector.shape_cast %425 : vector<2x1xf32> to vector<2x1x1xf32>
    %427 = vector.broadcast %426 : vector<2x1x1xf32> to vector<2x1x8xf32>
    %428 = arith.subf %422, %427 : vector<2x1x8xf32>
    %429 = math.exp %428 : vector<2x1x8xf32>
    %cst_76 = arith.constant dense<0.000000e+00> : vector<2x1xf32>
    %430 = vector.multi_reduction <add>, %429, %cst_76 [2] : vector<2x1x8xf32> to vector<2x1xf32>
    %431 = vector.shape_cast %430 : vector<2x1xf32> to vector<2x1x1xf32>
    %432 = vector.broadcast %431 : vector<2x1x1xf32> to vector<2x1x8xf32>
    %433 = arith.divf %429, %432 : vector<2x1x8xf32>
    %434 = arith.truncf %433 : vector<2x1x8xf32> to vector<2x1x8xbf16>
    "tpu.trace_start"() <{level = 10 : i32, message = "bql,blm->bqm"}> : () -> ()
    %cst_77 = arith.constant dense<0.000000e+00> : vector<2x1x16xf32>
    %435 = tpu.matmul %434, %355, %cst_77 {dimension_numbers = #tpu.dot_dimension_numbers<[2], [1], [1], [2], [0, 0, 0, 1, 1, 2], [0], [0]>} : vector<2x1x8xbf16>, vector<2x8x16xbf16>, vector<2x1x16xf32> -> vector<2x1x16xf32>
    "tpu.trace_stop"() : () -> ()
    %436 = vector.shape_cast %14 : vector<1x16xf32> to vector<1x1x16xf32>
    %437 = vector.broadcast %436 : vector<1x1x16xf32> to vector<2x1x16xf32>
    %438 = arith.addf %435, %437 : vector<2x1x16xf32>
    %439 = vector.extract_strided_slice %365 {offsets = [0, 0, 2], sizes = [2, 36, 1], strides = [1, 1, 1]} : vector<2x36x3xf32> to vector<2x36x1xf32>
    %440 = vector.shape_cast %21 : vector<36x2xf32> to vector<1x36x2xf32>
    %441 = vector.broadcast %439 : vector<2x36x1xf32> to vector<2x36x2xf32>
    %442 = vector.broadcast %440 : vector<1x36x2xf32> to vector<2x36x2xf32>
    %443 = arith.mulf %441, %442 : vector<2x36x2xf32>
    %cst_78 = arith.constant dense<0.000000e+00> : vector<2x2xf32>
    %444 = vector.multi_reduction <add>, %443, %cst_78 [1] : vector<2x36x2xf32> to vector<2x2xf32>
    %445 = vector.broadcast %22 : vector<1x2xf32> to vector<2x2xf32>
    %446 = arith.addf %444, %445 : vector<2x2xf32>
    %447 = vector.extract_strided_slice %365 {offsets = [0, 0, 0], sizes = [2, 36, 1], strides = [1, 1, 1]} : vector<2x36x3xf32> to vector<2x36x1xf32>
    %448 = vector.extract_strided_slice %365 {offsets = [0, 0, 1], sizes = [2, 36, 1], strides = [1, 1, 1]} : vector<2x36x3xf32> to vector<2x36x1xf32>
    %449 = arith.minimumf %447, %448 : vector<2x36x1xf32>
    %450 = vector.broadcast %438 : vector<2x1x16xf32> to vector<2x36x16xf32>
    %451 = arith.mulf %363, %450 : vector<2x36x16xf32>
    %cst_79 = arith.constant 0.000000e+00 : f32
    %452 = vector.broadcast %cst_79 : f32 to vector<2x36x16xf32>
    %453 = arith.maximumf %451, %452 : vector<2x36x16xf32>
    %454 = arith.truncf %453 : vector<2x36x16xf32> to vector<2x36x16xbf16>
    %455 = vector.shape_cast %454 : vector<2x36x16xbf16> to vector<72x16xbf16>
    %cst_80 = arith.constant dense<0.000000e+00> : vector<72x1xf32>
    %456 = tpu.matmul %455, %19, %cst_80 {dimension_numbers = #tpu.dot_dimension_numbers<[1], [0], [0], [1], [0, 0, 1, 1], [], []>} : vector<72x16xbf16>, vector<16x1xbf16>, vector<72x1xf32> -> vector<72x1xf32>
    %457 = vector.broadcast %20 : vector<1x1xf32> to vector<72x1xf32>
    %458 = arith.addf %456, %457 : vector<72x1xf32>
    %459 = vector.shape_cast %458 : vector<72x1xf32> to vector<2x36x1xf32>
    %460 = vector.shape_cast %401 : vector<2x3xf32> to vector<2x1x3xf32>
    %461 = vector.broadcast %449 : vector<2x36x1xf32> to vector<2x36x3xf32>
    %462 = vector.broadcast %460 : vector<2x1x3xf32> to vector<2x36x3xf32>
    %463 = arith.mulf %461, %462 : vector<2x36x3xf32>
    %464 = vector.shape_cast %413 : vector<2x3xf32> to vector<2x1x3xf32>
    %465 = vector.broadcast %459 : vector<2x36x1xf32> to vector<2x36x3xf32>
    %466 = vector.broadcast %464 : vector<2x1x3xf32> to vector<2x36x3xf32>
    %467 = arith.mulf %465, %466 : vector<2x36x3xf32>
    %468 = arith.addf %463, %467 : vector<2x36x3xf32>
    %469 = tpu.concatenate %414, %385 in 1 : vector<2x6xf32>, vector<2x32xf32> -> vector<2x38xf32>
    %470 = arith.truncf %469 : vector<2x38xf32> to vector<2x38xbf16>
    %cst_81 = arith.constant dense<0.000000e+00> : vector<2x128xf32>
    %471 = tpu.matmul %470, %6, %cst_81 {dimension_numbers = #tpu.dot_dimension_numbers<[1], [0], [0], [1], [0, 0, 1, 1], [], []>} : vector<2x38xbf16>, vector<38x128xbf16>, vector<2x128xf32> -> vector<2x128xf32>
    %472 = vector.broadcast %7 : vector<1x128xf32> to vector<2x128xf32>
    %473 = arith.addf %471, %472 : vector<2x128xf32>
    %474 = arith.negf %473 : vector<2x128xf32>
    %475 = math.exp %474 : vector<2x128xf32>
    %cst_82 = arith.constant 1.000000e+00 : f32
    %476 = vector.broadcast %cst_82 : f32 to vector<2x128xf32>
    %477 = arith.addf %476, %475 : vector<2x128xf32>
    %478 = arith.divf %476, %477 : vector<2x128xf32>
    %479 = vector.extract_strided_slice %473 {offsets = [0, 64], sizes = [2, 32], strides = [1, 1]} : vector<2x128xf32> to vector<2x32xf32>
    %480 = math.tanh %479 : vector<2x32xf32>
    %481 = vector.extract_strided_slice %478 {offsets = [0, 32], sizes = [2, 32], strides = [1, 1]} : vector<2x128xf32> to vector<2x32xf32>
    %482 = arith.mulf %481, %382 : vector<2x32xf32>
    %483 = vector.extract_strided_slice %478 {offsets = [0, 0], sizes = [2, 32], strides = [1, 1]} : vector<2x128xf32> to vector<2x32xf32>
    %484 = arith.mulf %483, %480 : vector<2x32xf32>
    %485 = arith.addf %482, %484 : vector<2x32xf32>
    %486 = vector.extract_strided_slice %478 {offsets = [0, 96], sizes = [2, 32], strides = [1, 1]} : vector<2x128xf32> to vector<2x32xf32>
    %487 = math.tanh %485 : vector<2x32xf32>
    %488 = arith.mulf %486, %487 : vector<2x32xf32>
    %489 = arith.truncf %488 : vector<2x32xf32> to vector<2x32xbf16>
    %cst_83 = arith.constant dense<0.000000e+00> : vector<2x7xf32>
    %490 = tpu.matmul %489, %9, %cst_83 {dimension_numbers = #tpu.dot_dimension_numbers<[1], [0], [0], [1], [0, 0, 1, 1], [], []>} : vector<2x32xbf16>, vector<32x7xbf16>, vector<2x7xf32> -> vector<2x7xf32>
    %491 = vector.broadcast %10 : vector<1x7xf32> to vector<2x7xf32>
    %492 = arith.addf %490, %491 : vector<2x7xf32>
    %493 = vector.extract_strided_slice %492 {offsets = [0, 0], sizes = [2, 3], strides = [1, 1]} : vector<2x7xf32> to vector<2x3xf32>
    %cst_84 = arith.constant dense<0xFF800000> : vector<2xf32>
    %494 = vector.multi_reduction <maximumf>, %493, %cst_84 [1] : vector<2x3xf32> to vector<2xf32>
    %cst_85 = arith.constant 0xFF800000 : f32
    %495 = vector.broadcast %cst_85 : f32 to vector<2xf32>
    %496 = arith.maximumf %495, %494 : vector<2xf32>
    %497 = vector.shape_cast %496 : vector<2xf32> to vector<2x1xf32>
    %498 = vector.broadcast %497 : vector<2x1xf32> to vector<2x3xf32>
    %499 = arith.subf %493, %498 : vector<2x3xf32>
    %500 = math.exp %499 : vector<2x3xf32>
    %cst_86 = arith.constant dense<0.000000e+00> : vector<2xf32>
    %501 = vector.multi_reduction <add>, %500, %cst_86 [1] : vector<2x3xf32> to vector<2xf32>
    %502 = vector.shape_cast %501 : vector<2xf32> to vector<2x1xf32>
    %503 = vector.broadcast %502 : vector<2x1xf32> to vector<2x3xf32>
    %504 = arith.divf %500, %503 : vector<2x3xf32>
    %505 = vector.extract_strided_slice %492 {offsets = [0, 3], sizes = [2, 3], strides = [1, 1]} : vector<2x7xf32> to vector<2x3xf32>
    %cst_87 = arith.constant dense<0xFF800000> : vector<2xf32>
    %506 = vector.multi_reduction <maximumf>, %505, %cst_87 [1] : vector<2x3xf32> to vector<2xf32>
    %cst_88 = arith.constant 0xFF800000 : f32
    %507 = vector.broadcast %cst_88 : f32 to vector<2xf32>
    %508 = arith.maximumf %507, %506 : vector<2xf32>
    %509 = vector.shape_cast %508 : vector<2xf32> to vector<2x1xf32>
    %510 = vector.broadcast %509 : vector<2x1xf32> to vector<2x3xf32>
    %511 = arith.subf %505, %510 : vector<2x3xf32>
    %512 = math.exp %511 : vector<2x3xf32>
    %cst_89 = arith.constant dense<0.000000e+00> : vector<2xf32>
    %513 = vector.multi_reduction <add>, %512, %cst_89 [1] : vector<2x3xf32> to vector<2xf32>
    %514 = vector.shape_cast %513 : vector<2xf32> to vector<2x1xf32>
    %515 = vector.broadcast %514 : vector<2x1xf32> to vector<2x3xf32>
    %516 = arith.divf %512, %515 : vector<2x3xf32>
    %517 = tpu.concatenate %504, %516 in 1 : vector<2x3xf32>, vector<2x3xf32> -> vector<2x6xf32>
    %518 = vector.extract_strided_slice %492 {offsets = [0, 6], sizes = [2, 1], strides = [1, 1]} : vector<2x7xf32> to vector<2x1xf32>
    %519 = arith.negf %518 : vector<2x1xf32>
    %520 = math.exp %519 : vector<2x1xf32>
    %cst_90 = arith.constant 1.000000e+00 : f32
    %521 = vector.broadcast %cst_90 : f32 to vector<2x1xf32>
    %522 = arith.addf %521, %520 : vector<2x1xf32>
    %523 = arith.divf %521, %522 : vector<2x1xf32>
    %524 = vector.shape_cast %489 : vector<2x32xbf16> to vector<2x1x32xbf16>
    "tpu.trace_start"() <{level = 10 : i32, message = "bqh,blh->bql"}> : () -> ()
    %cst_91 = arith.constant dense<0.000000e+00> : vector<2x1x8xf32>
    %525 = tpu.matmul %524, %352, %cst_91 {dimension_numbers = #tpu.dot_dimension_numbers<[2], [2], [1], [1], [0, 0, 0, 1, 1, 1], [0], [0]>} : vector<2x1x32xbf16>, vector<2x8x32xbf16>, vector<2x1x8xf32> -> vector<2x1x8xf32>
    "tpu.trace_stop"() : () -> ()
    %cst_92 = arith.constant dense<0xFF800000> : vector<2x1xf32>
    %526 = vector.multi_reduction <maximumf>, %525, %cst_92 [2] : vector<2x1x8xf32> to vector<2x1xf32>
    %cst_93 = arith.constant 0xFF800000 : f32
    %527 = vector.broadcast %cst_93 : f32 to vector<2x1xf32>
    %528 = arith.maximumf %527, %526 : vector<2x1xf32>
    %529 = vector.shape_cast %528 : vector<2x1xf32> to vector<2x1x1xf32>
    %530 = vector.broadcast %529 : vector<2x1x1xf32> to vector<2x1x8xf32>
    %531 = arith.subf %525, %530 : vector<2x1x8xf32>
    %532 = math.exp %531 : vector<2x1x8xf32>
    %cst_94 = arith.constant dense<0.000000e+00> : vector<2x1xf32>
    %533 = vector.multi_reduction <add>, %532, %cst_94 [2] : vector<2x1x8xf32> to vector<2x1xf32>
    %534 = vector.shape_cast %533 : vector<2x1xf32> to vector<2x1x1xf32>
    %535 = vector.broadcast %534 : vector<2x1x1xf32> to vector<2x1x8xf32>
    %536 = arith.divf %532, %535 : vector<2x1x8xf32>
    %537 = arith.truncf %536 : vector<2x1x8xf32> to vector<2x1x8xbf16>
    "tpu.trace_start"() <{level = 10 : i32, message = "bql,blm->bqm"}> : () -> ()
    %cst_95 = arith.constant dense<0.000000e+00> : vector<2x1x16xf32>
    %538 = tpu.matmul %537, %355, %cst_95 {dimension_numbers = #tpu.dot_dimension_numbers<[2], [1], [1], [2], [0, 0, 0, 1, 1, 2], [0], [0]>} : vector<2x1x8xbf16>, vector<2x8x16xbf16>, vector<2x1x16xf32> -> vector<2x1x16xf32>
    "tpu.trace_stop"() : () -> ()
    %539 = vector.shape_cast %14 : vector<1x16xf32> to vector<1x1x16xf32>
    %540 = vector.broadcast %539 : vector<1x1x16xf32> to vector<2x1x16xf32>
    %541 = arith.addf %538, %540 : vector<2x1x16xf32>
    %542 = vector.extract_strided_slice %468 {offsets = [0, 0, 2], sizes = [2, 36, 1], strides = [1, 1, 1]} : vector<2x36x3xf32> to vector<2x36x1xf32>
    %543 = vector.shape_cast %21 : vector<36x2xf32> to vector<1x36x2xf32>
    %544 = vector.broadcast %542 : vector<2x36x1xf32> to vector<2x36x2xf32>
    %545 = vector.broadcast %543 : vector<1x36x2xf32> to vector<2x36x2xf32>
    %546 = arith.mulf %544, %545 : vector<2x36x2xf32>
    %cst_96 = arith.constant dense<0.000000e+00> : vector<2x2xf32>
    %547 = vector.multi_reduction <add>, %546, %cst_96 [1] : vector<2x36x2xf32> to vector<2x2xf32>
    %548 = vector.broadcast %22 : vector<1x2xf32> to vector<2x2xf32>
    %549 = arith.addf %547, %548 : vector<2x2xf32>
    %550 = vector.extract_strided_slice %468 {offsets = [0, 0, 0], sizes = [2, 36, 1], strides = [1, 1, 1]} : vector<2x36x3xf32> to vector<2x36x1xf32>
    %551 = vector.extract_strided_slice %468 {offsets = [0, 0, 1], sizes = [2, 36, 1], strides = [1, 1, 1]} : vector<2x36x3xf32> to vector<2x36x1xf32>
    %552 = arith.minimumf %550, %551 : vector<2x36x1xf32>
    %553 = vector.broadcast %541 : vector<2x1x16xf32> to vector<2x36x16xf32>
    %554 = arith.mulf %363, %553 : vector<2x36x16xf32>
    %cst_97 = arith.constant 0.000000e+00 : f32
    %555 = vector.broadcast %cst_97 : f32 to vector<2x36x16xf32>
    %556 = arith.maximumf %554, %555 : vector<2x36x16xf32>
    %557 = arith.truncf %556 : vector<2x36x16xf32> to vector<2x36x16xbf16>
    %558 = vector.shape_cast %557 : vector<2x36x16xbf16> to vector<72x16xbf16>
    %cst_98 = arith.constant dense<0.000000e+00> : vector<72x1xf32>
    %559 = tpu.matmul %558, %19, %cst_98 {dimension_numbers = #tpu.dot_dimension_numbers<[1], [0], [0], [1], [0, 0, 1, 1], [], []>} : vector<72x16xbf16>, vector<16x1xbf16>, vector<72x1xf32> -> vector<72x1xf32>
    %560 = vector.broadcast %20 : vector<1x1xf32> to vector<72x1xf32>
    %561 = arith.addf %559, %560 : vector<72x1xf32>
    %562 = vector.shape_cast %561 : vector<72x1xf32> to vector<2x36x1xf32>
    %563 = vector.shape_cast %504 : vector<2x3xf32> to vector<2x1x3xf32>
    %564 = vector.broadcast %552 : vector<2x36x1xf32> to vector<2x36x3xf32>
    %565 = vector.broadcast %563 : vector<2x1x3xf32> to vector<2x36x3xf32>
    %566 = arith.mulf %564, %565 : vector<2x36x3xf32>
    %567 = vector.shape_cast %516 : vector<2x3xf32> to vector<2x1x3xf32>
    %568 = vector.broadcast %562 : vector<2x36x1xf32> to vector<2x36x3xf32>
    %569 = vector.broadcast %567 : vector<2x1x3xf32> to vector<2x36x3xf32>
    %570 = arith.mulf %568, %569 : vector<2x36x3xf32>
    %571 = arith.addf %566, %570 : vector<2x36x3xf32>
    %572 = tpu.concatenate %517, %488 in 1 : vector<2x6xf32>, vector<2x32xf32> -> vector<2x38xf32>
    %573 = arith.truncf %572 : vector<2x38xf32> to vector<2x38xbf16>
    %cst_99 = arith.constant dense<0.000000e+00> : vector<2x128xf32>
    %574 = tpu.matmul %573, %6, %cst_99 {dimension_numbers = #tpu.dot_dimension_numbers<[1], [0], [0], [1], [0, 0, 1, 1], [], []>} : vector<2x38xbf16>, vector<38x128xbf16>, vector<2x128xf32> -> vector<2x128xf32>
    %575 = vector.broadcast %7 : vector<1x128xf32> to vector<2x128xf32>
    %576 = arith.addf %574, %575 : vector<2x128xf32>
    %577 = arith.negf %576 : vector<2x128xf32>
    %578 = math.exp %577 : vector<2x128xf32>
    %cst_100 = arith.constant 1.000000e+00 : f32
    %579 = vector.broadcast %cst_100 : f32 to vector<2x128xf32>
    %580 = arith.addf %579, %578 : vector<2x128xf32>
    %581 = arith.divf %579, %580 : vector<2x128xf32>
    %582 = vector.extract_strided_slice %576 {offsets = [0, 64], sizes = [2, 32], strides = [1, 1]} : vector<2x128xf32> to vector<2x32xf32>
    %583 = math.tanh %582 : vector<2x32xf32>
    %584 = vector.extract_strided_slice %581 {offsets = [0, 32], sizes = [2, 32], strides = [1, 1]} : vector<2x128xf32> to vector<2x32xf32>
    %585 = arith.mulf %584, %485 : vector<2x32xf32>
    %586 = vector.extract_strided_slice %581 {offsets = [0, 0], sizes = [2, 32], strides = [1, 1]} : vector<2x128xf32> to vector<2x32xf32>
    %587 = arith.mulf %586, %583 : vector<2x32xf32>
    %588 = arith.addf %585, %587 : vector<2x32xf32>
    %589 = vector.extract_strided_slice %581 {offsets = [0, 96], sizes = [2, 32], strides = [1, 1]} : vector<2x128xf32> to vector<2x32xf32>
    %590 = math.tanh %588 : vector<2x32xf32>
    %591 = arith.mulf %589, %590 : vector<2x32xf32>
    %592 = arith.truncf %591 : vector<2x32xf32> to vector<2x32xbf16>
    %cst_101 = arith.constant dense<0.000000e+00> : vector<2x7xf32>
    %593 = tpu.matmul %592, %9, %cst_101 {dimension_numbers = #tpu.dot_dimension_numbers<[1], [0], [0], [1], [0, 0, 1, 1], [], []>} : vector<2x32xbf16>, vector<32x7xbf16>, vector<2x7xf32> -> vector<2x7xf32>
    %594 = vector.broadcast %10 : vector<1x7xf32> to vector<2x7xf32>
    %595 = arith.addf %593, %594 : vector<2x7xf32>
    %596 = vector.extract_strided_slice %595 {offsets = [0, 0], sizes = [2, 3], strides = [1, 1]} : vector<2x7xf32> to vector<2x3xf32>
    %cst_102 = arith.constant dense<0xFF800000> : vector<2xf32>
    %597 = vector.multi_reduction <maximumf>, %596, %cst_102 [1] : vector<2x3xf32> to vector<2xf32>
    %cst_103 = arith.constant 0xFF800000 : f32
    %598 = vector.broadcast %cst_103 : f32 to vector<2xf32>
    %599 = arith.maximumf %598, %597 : vector<2xf32>
    %600 = vector.shape_cast %599 : vector<2xf32> to vector<2x1xf32>
    %601 = vector.broadcast %600 : vector<2x1xf32> to vector<2x3xf32>
    %602 = arith.subf %596, %601 : vector<2x3xf32>
    %603 = math.exp %602 : vector<2x3xf32>
    %cst_104 = arith.constant dense<0.000000e+00> : vector<2xf32>
    %604 = vector.multi_reduction <add>, %603, %cst_104 [1] : vector<2x3xf32> to vector<2xf32>
    %605 = vector.shape_cast %604 : vector<2xf32> to vector<2x1xf32>
    %606 = vector.broadcast %605 : vector<2x1xf32> to vector<2x3xf32>
    %607 = arith.divf %603, %606 : vector<2x3xf32>
    %608 = vector.extract_strided_slice %595 {offsets = [0, 3], sizes = [2, 3], strides = [1, 1]} : vector<2x7xf32> to vector<2x3xf32>
    %cst_105 = arith.constant dense<0xFF800000> : vector<2xf32>
    %609 = vector.multi_reduction <maximumf>, %608, %cst_105 [1] : vector<2x3xf32> to vector<2xf32>
    %cst_106 = arith.constant 0xFF800000 : f32
    %610 = vector.broadcast %cst_106 : f32 to vector<2xf32>
    %611 = arith.maximumf %610, %609 : vector<2xf32>
    %612 = vector.shape_cast %611 : vector<2xf32> to vector<2x1xf32>
    %613 = vector.broadcast %612 : vector<2x1xf32> to vector<2x3xf32>
    %614 = arith.subf %608, %613 : vector<2x3xf32>
    %615 = math.exp %614 : vector<2x3xf32>
    %cst_107 = arith.constant dense<0.000000e+00> : vector<2xf32>
    %616 = vector.multi_reduction <add>, %615, %cst_107 [1] : vector<2x3xf32> to vector<2xf32>
    %617 = vector.shape_cast %616 : vector<2xf32> to vector<2x1xf32>
    %618 = vector.broadcast %617 : vector<2x1xf32> to vector<2x3xf32>
    %619 = arith.divf %615, %618 : vector<2x3xf32>
    %620 = tpu.concatenate %607, %619 in 1 : vector<2x3xf32>, vector<2x3xf32> -> vector<2x6xf32>
    %621 = vector.extract_strided_slice %595 {offsets = [0, 6], sizes = [2, 1], strides = [1, 1]} : vector<2x7xf32> to vector<2x1xf32>
    %622 = arith.negf %621 : vector<2x1xf32>
    %623 = math.exp %622 : vector<2x1xf32>
    %cst_108 = arith.constant 1.000000e+00 : f32
    %624 = vector.broadcast %cst_108 : f32 to vector<2x1xf32>
    %625 = arith.addf %624, %623 : vector<2x1xf32>
    %626 = arith.divf %624, %625 : vector<2x1xf32>
    %627 = vector.shape_cast %592 : vector<2x32xbf16> to vector<2x1x32xbf16>
    "tpu.trace_start"() <{level = 10 : i32, message = "bqh,blh->bql"}> : () -> ()
    %cst_109 = arith.constant dense<0.000000e+00> : vector<2x1x8xf32>
    %628 = tpu.matmul %627, %352, %cst_109 {dimension_numbers = #tpu.dot_dimension_numbers<[2], [2], [1], [1], [0, 0, 0, 1, 1, 1], [0], [0]>} : vector<2x1x32xbf16>, vector<2x8x32xbf16>, vector<2x1x8xf32> -> vector<2x1x8xf32>
    "tpu.trace_stop"() : () -> ()
    %cst_110 = arith.constant dense<0xFF800000> : vector<2x1xf32>
    %629 = vector.multi_reduction <maximumf>, %628, %cst_110 [2] : vector<2x1x8xf32> to vector<2x1xf32>
    %cst_111 = arith.constant 0xFF800000 : f32
    %630 = vector.broadcast %cst_111 : f32 to vector<2x1xf32>
    %631 = arith.maximumf %630, %629 : vector<2x1xf32>
    %632 = vector.shape_cast %631 : vector<2x1xf32> to vector<2x1x1xf32>
    %633 = vector.broadcast %632 : vector<2x1x1xf32> to vector<2x1x8xf32>
    %634 = arith.subf %628, %633 : vector<2x1x8xf32>
    %635 = math.exp %634 : vector<2x1x8xf32>
    %cst_112 = arith.constant dense<0.000000e+00> : vector<2x1xf32>
    %636 = vector.multi_reduction <add>, %635, %cst_112 [2] : vector<2x1x8xf32> to vector<2x1xf32>
    %637 = vector.shape_cast %636 : vector<2x1xf32> to vector<2x1x1xf32>
    %638 = vector.broadcast %637 : vector<2x1x1xf32> to vector<2x1x8xf32>
    %639 = arith.divf %635, %638 : vector<2x1x8xf32>
    %640 = arith.truncf %639 : vector<2x1x8xf32> to vector<2x1x8xbf16>
    "tpu.trace_start"() <{level = 10 : i32, message = "bql,blm->bqm"}> : () -> ()
    %cst_113 = arith.constant dense<0.000000e+00> : vector<2x1x16xf32>
    %641 = tpu.matmul %640, %355, %cst_113 {dimension_numbers = #tpu.dot_dimension_numbers<[2], [1], [1], [2], [0, 0, 0, 1, 1, 2], [0], [0]>} : vector<2x1x8xbf16>, vector<2x8x16xbf16>, vector<2x1x16xf32> -> vector<2x1x16xf32>
    "tpu.trace_stop"() : () -> ()
    %642 = vector.shape_cast %14 : vector<1x16xf32> to vector<1x1x16xf32>
    %643 = vector.broadcast %642 : vector<1x1x16xf32> to vector<2x1x16xf32>
    %644 = arith.addf %641, %643 : vector<2x1x16xf32>
    %645 = vector.extract_strided_slice %571 {offsets = [0, 0, 2], sizes = [2, 36, 1], strides = [1, 1, 1]} : vector<2x36x3xf32> to vector<2x36x1xf32>
    %646 = vector.shape_cast %21 : vector<36x2xf32> to vector<1x36x2xf32>
    %647 = vector.broadcast %645 : vector<2x36x1xf32> to vector<2x36x2xf32>
    %648 = vector.broadcast %646 : vector<1x36x2xf32> to vector<2x36x2xf32>
    %649 = arith.mulf %647, %648 : vector<2x36x2xf32>
    %cst_114 = arith.constant dense<0.000000e+00> : vector<2x2xf32>
    %650 = vector.multi_reduction <add>, %649, %cst_114 [1] : vector<2x36x2xf32> to vector<2x2xf32>
    %651 = vector.broadcast %22 : vector<1x2xf32> to vector<2x2xf32>
    %652 = arith.addf %650, %651 : vector<2x2xf32>
    %653 = vector.extract_strided_slice %571 {offsets = [0, 0, 0], sizes = [2, 36, 1], strides = [1, 1, 1]} : vector<2x36x3xf32> to vector<2x36x1xf32>
    %654 = vector.extract_strided_slice %571 {offsets = [0, 0, 1], sizes = [2, 36, 1], strides = [1, 1, 1]} : vector<2x36x3xf32> to vector<2x36x1xf32>
    %655 = arith.minimumf %653, %654 : vector<2x36x1xf32>
    %656 = vector.broadcast %644 : vector<2x1x16xf32> to vector<2x36x16xf32>
    %657 = arith.mulf %363, %656 : vector<2x36x16xf32>
    %cst_115 = arith.constant 0.000000e+00 : f32
    %658 = vector.broadcast %cst_115 : f32 to vector<2x36x16xf32>
    %659 = arith.maximumf %657, %658 : vector<2x36x16xf32>
    %660 = arith.truncf %659 : vector<2x36x16xf32> to vector<2x36x16xbf16>
    %661 = vector.shape_cast %660 : vector<2x36x16xbf16> to vector<72x16xbf16>
    %cst_116 = arith.constant dense<0.000000e+00> : vector<72x1xf32>
    %662 = tpu.matmul %661, %19, %cst_116 {dimension_numbers = #tpu.dot_dimension_numbers<[1], [0], [0], [1], [0, 0, 1, 1], [], []>} : vector<72x16xbf16>, vector<16x1xbf16>, vector<72x1xf32> -> vector<72x1xf32>
    %663 = vector.broadcast %20 : vector<1x1xf32> to vector<72x1xf32>
    %664 = arith.addf %662, %663 : vector<72x1xf32>
    %665 = vector.shape_cast %664 : vector<72x1xf32> to vector<2x36x1xf32>
    %666 = vector.shape_cast %607 : vector<2x3xf32> to vector<2x1x3xf32>
    %667 = vector.broadcast %655 : vector<2x36x1xf32> to vector<2x36x3xf32>
    %668 = vector.broadcast %666 : vector<2x1x3xf32> to vector<2x36x3xf32>
    %669 = arith.mulf %667, %668 : vector<2x36x3xf32>
    %670 = vector.shape_cast %619 : vector<2x3xf32> to vector<2x1x3xf32>
    %671 = vector.broadcast %665 : vector<2x36x1xf32> to vector<2x36x3xf32>
    %672 = vector.broadcast %670 : vector<2x1x3xf32> to vector<2x36x3xf32>
    %673 = arith.mulf %671, %672 : vector<2x36x3xf32>
    %674 = arith.addf %669, %673 : vector<2x36x3xf32>
    %675 = tpu.concatenate %620, %591 in 1 : vector<2x6xf32>, vector<2x32xf32> -> vector<2x38xf32>
    %676 = arith.truncf %675 : vector<2x38xf32> to vector<2x38xbf16>
    %cst_117 = arith.constant dense<0.000000e+00> : vector<2x128xf32>
    %677 = tpu.matmul %676, %6, %cst_117 {dimension_numbers = #tpu.dot_dimension_numbers<[1], [0], [0], [1], [0, 0, 1, 1], [], []>} : vector<2x38xbf16>, vector<38x128xbf16>, vector<2x128xf32> -> vector<2x128xf32>
    %678 = vector.broadcast %7 : vector<1x128xf32> to vector<2x128xf32>
    %679 = arith.addf %677, %678 : vector<2x128xf32>
    %680 = arith.negf %679 : vector<2x128xf32>
    %681 = math.exp %680 : vector<2x128xf32>
    %cst_118 = arith.constant 1.000000e+00 : f32
    %682 = vector.broadcast %cst_118 : f32 to vector<2x128xf32>
    %683 = arith.addf %682, %681 : vector<2x128xf32>
    %684 = arith.divf %682, %683 : vector<2x128xf32>
    %685 = vector.extract_strided_slice %679 {offsets = [0, 64], sizes = [2, 32], strides = [1, 1]} : vector<2x128xf32> to vector<2x32xf32>
    %686 = math.tanh %685 : vector<2x32xf32>
    %687 = vector.extract_strided_slice %684 {offsets = [0, 32], sizes = [2, 32], strides = [1, 1]} : vector<2x128xf32> to vector<2x32xf32>
    %688 = arith.mulf %687, %588 : vector<2x32xf32>
    %689 = vector.extract_strided_slice %684 {offsets = [0, 0], sizes = [2, 32], strides = [1, 1]} : vector<2x128xf32> to vector<2x32xf32>
    %690 = arith.mulf %689, %686 : vector<2x32xf32>
    %691 = arith.addf %688, %690 : vector<2x32xf32>
    %692 = vector.extract_strided_slice %684 {offsets = [0, 96], sizes = [2, 32], strides = [1, 1]} : vector<2x128xf32> to vector<2x32xf32>
    %693 = math.tanh %691 : vector<2x32xf32>
    %694 = arith.mulf %692, %693 : vector<2x32xf32>
    %695 = arith.truncf %694 : vector<2x32xf32> to vector<2x32xbf16>
    %cst_119 = arith.constant dense<0.000000e+00> : vector<2x7xf32>
    %696 = tpu.matmul %695, %9, %cst_119 {dimension_numbers = #tpu.dot_dimension_numbers<[1], [0], [0], [1], [0, 0, 1, 1], [], []>} : vector<2x32xbf16>, vector<32x7xbf16>, vector<2x7xf32> -> vector<2x7xf32>
    %697 = vector.broadcast %10 : vector<1x7xf32> to vector<2x7xf32>
    %698 = arith.addf %696, %697 : vector<2x7xf32>
    %699 = vector.extract_strided_slice %698 {offsets = [0, 0], sizes = [2, 3], strides = [1, 1]} : vector<2x7xf32> to vector<2x3xf32>
    %cst_120 = arith.constant dense<0xFF800000> : vector<2xf32>
    %700 = vector.multi_reduction <maximumf>, %699, %cst_120 [1] : vector<2x3xf32> to vector<2xf32>
    %cst_121 = arith.constant 0xFF800000 : f32
    %701 = vector.broadcast %cst_121 : f32 to vector<2xf32>
    %702 = arith.maximumf %701, %700 : vector<2xf32>
    %703 = vector.shape_cast %702 : vector<2xf32> to vector<2x1xf32>
    %704 = vector.broadcast %703 : vector<2x1xf32> to vector<2x3xf32>
    %705 = arith.subf %699, %704 : vector<2x3xf32>
    %706 = math.exp %705 : vector<2x3xf32>
    %cst_122 = arith.constant dense<0.000000e+00> : vector<2xf32>
    %707 = vector.multi_reduction <add>, %706, %cst_122 [1] : vector<2x3xf32> to vector<2xf32>
    %708 = vector.shape_cast %707 : vector<2xf32> to vector<2x1xf32>
    %709 = vector.broadcast %708 : vector<2x1xf32> to vector<2x3xf32>
    %710 = arith.divf %706, %709 : vector<2x3xf32>
    %711 = vector.extract_strided_slice %698 {offsets = [0, 3], sizes = [2, 3], strides = [1, 1]} : vector<2x7xf32> to vector<2x3xf32>
    %cst_123 = arith.constant dense<0xFF800000> : vector<2xf32>
    %712 = vector.multi_reduction <maximumf>, %711, %cst_123 [1] : vector<2x3xf32> to vector<2xf32>
    %cst_124 = arith.constant 0xFF800000 : f32
    %713 = vector.broadcast %cst_124 : f32 to vector<2xf32>
    %714 = arith.maximumf %713, %712 : vector<2xf32>
    %715 = vector.shape_cast %714 : vector<2xf32> to vector<2x1xf32>
    %716 = vector.broadcast %715 : vector<2x1xf32> to vector<2x3xf32>
    %717 = arith.subf %711, %716 : vector<2x3xf32>
    %718 = math.exp %717 : vector<2x3xf32>
    %cst_125 = arith.constant dense<0.000000e+00> : vector<2xf32>
    %719 = vector.multi_reduction <add>, %718, %cst_125 [1] : vector<2x3xf32> to vector<2xf32>
    %720 = vector.shape_cast %719 : vector<2xf32> to vector<2x1xf32>
    %721 = vector.broadcast %720 : vector<2x1xf32> to vector<2x3xf32>
    %722 = arith.divf %718, %721 : vector<2x3xf32>
    %723 = tpu.concatenate %710, %722 in 1 : vector<2x3xf32>, vector<2x3xf32> -> vector<2x6xf32>
    %724 = vector.extract_strided_slice %698 {offsets = [0, 6], sizes = [2, 1], strides = [1, 1]} : vector<2x7xf32> to vector<2x1xf32>
    %725 = arith.negf %724 : vector<2x1xf32>
    %726 = math.exp %725 : vector<2x1xf32>
    %cst_126 = arith.constant 1.000000e+00 : f32
    %727 = vector.broadcast %cst_126 : f32 to vector<2x1xf32>
    %728 = arith.addf %727, %726 : vector<2x1xf32>
    %729 = arith.divf %727, %728 : vector<2x1xf32>
    %730 = vector.shape_cast %695 : vector<2x32xbf16> to vector<2x1x32xbf16>
    "tpu.trace_start"() <{level = 10 : i32, message = "bqh,blh->bql"}> : () -> ()
    %cst_127 = arith.constant dense<0.000000e+00> : vector<2x1x8xf32>
    %731 = tpu.matmul %730, %352, %cst_127 {dimension_numbers = #tpu.dot_dimension_numbers<[2], [2], [1], [1], [0, 0, 0, 1, 1, 1], [0], [0]>} : vector<2x1x32xbf16>, vector<2x8x32xbf16>, vector<2x1x8xf32> -> vector<2x1x8xf32>
    "tpu.trace_stop"() : () -> ()
    %cst_128 = arith.constant dense<0xFF800000> : vector<2x1xf32>
    %732 = vector.multi_reduction <maximumf>, %731, %cst_128 [2] : vector<2x1x8xf32> to vector<2x1xf32>
    %cst_129 = arith.constant 0xFF800000 : f32
    %733 = vector.broadcast %cst_129 : f32 to vector<2x1xf32>
    %734 = arith.maximumf %733, %732 : vector<2x1xf32>
    %735 = vector.shape_cast %734 : vector<2x1xf32> to vector<2x1x1xf32>
    %736 = vector.broadcast %735 : vector<2x1x1xf32> to vector<2x1x8xf32>
    %737 = arith.subf %731, %736 : vector<2x1x8xf32>
    %738 = math.exp %737 : vector<2x1x8xf32>
    %cst_130 = arith.constant dense<0.000000e+00> : vector<2x1xf32>
    %739 = vector.multi_reduction <add>, %738, %cst_130 [2] : vector<2x1x8xf32> to vector<2x1xf32>
    %740 = vector.shape_cast %739 : vector<2x1xf32> to vector<2x1x1xf32>
    %741 = vector.broadcast %740 : vector<2x1x1xf32> to vector<2x1x8xf32>
    %742 = arith.divf %738, %741 : vector<2x1x8xf32>
    %743 = arith.truncf %742 : vector<2x1x8xf32> to vector<2x1x8xbf16>
    "tpu.trace_start"() <{level = 10 : i32, message = "bql,blm->bqm"}> : () -> ()
    %cst_131 = arith.constant dense<0.000000e+00> : vector<2x1x16xf32>
    %744 = tpu.matmul %743, %355, %cst_131 {dimension_numbers = #tpu.dot_dimension_numbers<[2], [1], [1], [2], [0, 0, 0, 1, 1, 2], [0], [0]>} : vector<2x1x8xbf16>, vector<2x8x16xbf16>, vector<2x1x16xf32> -> vector<2x1x16xf32>
    "tpu.trace_stop"() : () -> ()
    %745 = vector.shape_cast %14 : vector<1x16xf32> to vector<1x1x16xf32>
    %746 = vector.broadcast %745 : vector<1x1x16xf32> to vector<2x1x16xf32>
    %747 = arith.addf %744, %746 : vector<2x1x16xf32>
    %748 = vector.extract_strided_slice %674 {offsets = [0, 0, 2], sizes = [2, 36, 1], strides = [1, 1, 1]} : vector<2x36x3xf32> to vector<2x36x1xf32>
    %749 = vector.shape_cast %21 : vector<36x2xf32> to vector<1x36x2xf32>
    %750 = vector.broadcast %748 : vector<2x36x1xf32> to vector<2x36x2xf32>
    %751 = vector.broadcast %749 : vector<1x36x2xf32> to vector<2x36x2xf32>
    %752 = arith.mulf %750, %751 : vector<2x36x2xf32>
    %cst_132 = arith.constant dense<0.000000e+00> : vector<2x2xf32>
    %753 = vector.multi_reduction <add>, %752, %cst_132 [1] : vector<2x36x2xf32> to vector<2x2xf32>
    %754 = vector.broadcast %22 : vector<1x2xf32> to vector<2x2xf32>
    %755 = arith.addf %753, %754 : vector<2x2xf32>
    %756 = vector.extract_strided_slice %674 {offsets = [0, 0, 0], sizes = [2, 36, 1], strides = [1, 1, 1]} : vector<2x36x3xf32> to vector<2x36x1xf32>
    %757 = vector.extract_strided_slice %674 {offsets = [0, 0, 1], sizes = [2, 36, 1], strides = [1, 1, 1]} : vector<2x36x3xf32> to vector<2x36x1xf32>
    %758 = arith.minimumf %756, %757 : vector<2x36x1xf32>
    %759 = vector.broadcast %747 : vector<2x1x16xf32> to vector<2x36x16xf32>
    %760 = arith.mulf %363, %759 : vector<2x36x16xf32>
    %cst_133 = arith.constant 0.000000e+00 : f32
    %761 = vector.broadcast %cst_133 : f32 to vector<2x36x16xf32>
    %762 = arith.maximumf %760, %761 : vector<2x36x16xf32>
    %763 = arith.truncf %762 : vector<2x36x16xf32> to vector<2x36x16xbf16>
    %764 = vector.shape_cast %763 : vector<2x36x16xbf16> to vector<72x16xbf16>
    %cst_134 = arith.constant dense<0.000000e+00> : vector<72x1xf32>
    %765 = tpu.matmul %764, %19, %cst_134 {dimension_numbers = #tpu.dot_dimension_numbers<[1], [0], [0], [1], [0, 0, 1, 1], [], []>} : vector<72x16xbf16>, vector<16x1xbf16>, vector<72x1xf32> -> vector<72x1xf32>
    %766 = vector.broadcast %20 : vector<1x1xf32> to vector<72x1xf32>
    %767 = arith.addf %765, %766 : vector<72x1xf32>
    %768 = vector.shape_cast %767 : vector<72x1xf32> to vector<2x36x1xf32>
    %769 = vector.shape_cast %710 : vector<2x3xf32> to vector<2x1x3xf32>
    %770 = vector.broadcast %758 : vector<2x36x1xf32> to vector<2x36x3xf32>
    %771 = vector.broadcast %769 : vector<2x1x3xf32> to vector<2x36x3xf32>
    %772 = arith.mulf %770, %771 : vector<2x36x3xf32>
    %773 = vector.shape_cast %722 : vector<2x3xf32> to vector<2x1x3xf32>
    %774 = vector.broadcast %768 : vector<2x36x1xf32> to vector<2x36x3xf32>
    %775 = vector.broadcast %773 : vector<2x1x3xf32> to vector<2x36x3xf32>
    %776 = arith.mulf %774, %775 : vector<2x36x3xf32>
    %777 = arith.addf %772, %776 : vector<2x36x3xf32>
    %778 = tpu.concatenate %723, %694 in 1 : vector<2x6xf32>, vector<2x32xf32> -> vector<2x38xf32>
    %779 = arith.truncf %778 : vector<2x38xf32> to vector<2x38xbf16>
    %cst_135 = arith.constant dense<0.000000e+00> : vector<2x128xf32>
    %780 = tpu.matmul %779, %6, %cst_135 {dimension_numbers = #tpu.dot_dimension_numbers<[1], [0], [0], [1], [0, 0, 1, 1], [], []>} : vector<2x38xbf16>, vector<38x128xbf16>, vector<2x128xf32> -> vector<2x128xf32>
    %781 = vector.broadcast %7 : vector<1x128xf32> to vector<2x128xf32>
    %782 = arith.addf %780, %781 : vector<2x128xf32>
    %783 = arith.negf %782 : vector<2x128xf32>
    %784 = math.exp %783 : vector<2x128xf32>
    %cst_136 = arith.constant 1.000000e+00 : f32
    %785 = vector.broadcast %cst_136 : f32 to vector<2x128xf32>
    %786 = arith.addf %785, %784 : vector<2x128xf32>
    %787 = arith.divf %785, %786 : vector<2x128xf32>
    %788 = vector.extract_strided_slice %782 {offsets = [0, 64], sizes = [2, 32], strides = [1, 1]} : vector<2x128xf32> to vector<2x32xf32>
    %789 = math.tanh %788 : vector<2x32xf32>
    %790 = vector.extract_strided_slice %787 {offsets = [0, 32], sizes = [2, 32], strides = [1, 1]} : vector<2x128xf32> to vector<2x32xf32>
    %791 = arith.mulf %790, %691 : vector<2x32xf32>
    %792 = vector.extract_strided_slice %787 {offsets = [0, 0], sizes = [2, 32], strides = [1, 1]} : vector<2x128xf32> to vector<2x32xf32>
    %793 = arith.mulf %792, %789 : vector<2x32xf32>
    %794 = arith.addf %791, %793 : vector<2x32xf32>
    %795 = vector.extract_strided_slice %787 {offsets = [0, 96], sizes = [2, 32], strides = [1, 1]} : vector<2x128xf32> to vector<2x32xf32>
    %796 = math.tanh %794 : vector<2x32xf32>
    %797 = arith.mulf %795, %796 : vector<2x32xf32>
    %798 = arith.truncf %797 : vector<2x32xf32> to vector<2x32xbf16>
    %cst_137 = arith.constant dense<0.000000e+00> : vector<2x7xf32>
    %799 = tpu.matmul %798, %9, %cst_137 {dimension_numbers = #tpu.dot_dimension_numbers<[1], [0], [0], [1], [0, 0, 1, 1], [], []>} : vector<2x32xbf16>, vector<32x7xbf16>, vector<2x7xf32> -> vector<2x7xf32>
    %800 = vector.broadcast %10 : vector<1x7xf32> to vector<2x7xf32>
    %801 = arith.addf %799, %800 : vector<2x7xf32>
    %802 = vector.extract_strided_slice %801 {offsets = [0, 6], sizes = [2, 1], strides = [1, 1]} : vector<2x7xf32> to vector<2x1xf32>
    %803 = arith.negf %802 : vector<2x1xf32>
    %804 = math.exp %803 : vector<2x1xf32>
    %cst_138 = arith.constant 1.000000e+00 : f32
    %805 = vector.broadcast %cst_138 : f32 to vector<2x1xf32>
    %806 = arith.addf %805, %804 : vector<2x1xf32>
    %807 = arith.divf %805, %806 : vector<2x1xf32>
    %808 = vector.extract_strided_slice %777 {offsets = [0, 0, 2], sizes = [2, 36, 1], strides = [1, 1, 1]} : vector<2x36x3xf32> to vector<2x36x1xf32>
    %809 = vector.shape_cast %21 : vector<36x2xf32> to vector<1x36x2xf32>
    %810 = vector.broadcast %808 : vector<2x36x1xf32> to vector<2x36x2xf32>
    %811 = vector.broadcast %809 : vector<1x36x2xf32> to vector<2x36x2xf32>
    %812 = arith.mulf %810, %811 : vector<2x36x2xf32>
    %cst_139 = arith.constant dense<0.000000e+00> : vector<2x2xf32>
    %813 = vector.multi_reduction <add>, %812, %cst_139 [1] : vector<2x36x2xf32> to vector<2x2xf32>
    %814 = vector.broadcast %22 : vector<1x2xf32> to vector<2x2xf32>
    %815 = arith.addf %813, %814 : vector<2x2xf32>
    %816 = tpu.concatenate %420, %523, %626, %729, %807 in 1 : vector<2x1xf32>, vector<2x1xf32>, vector<2x1xf32>, vector<2x1xf32>, vector<2x1xf32> -> vector<2x5xf32>
    %cst_140 = arith.constant dense<0xFF800000> : vector<2xf32>
    %817 = vector.multi_reduction <maximumf>, %816, %cst_140 [1] : vector<2x5xf32> to vector<2xf32>
    %cst_141 = arith.constant 0xFF800000 : f32
    %818 = vector.broadcast %cst_141 : f32 to vector<2xf32>
    %819 = arith.maximumf %818, %817 : vector<2xf32>
    %820 = vector.shape_cast %819 : vector<2xf32> to vector<2x1xf32>
    %821 = vector.broadcast %820 : vector<2x1xf32> to vector<2x5xf32>
    %822 = arith.subf %816, %821 : vector<2x5xf32>
    %823 = math.exp %822 : vector<2x5xf32>
    %cst_142 = arith.constant dense<0.000000e+00> : vector<2xf32>
    %824 = vector.multi_reduction <add>, %823, %cst_142 [1] : vector<2x5xf32> to vector<2xf32>
    %825 = vector.shape_cast %824 : vector<2xf32> to vector<2x1xf32>
    %826 = vector.broadcast %825 : vector<2x1xf32> to vector<2x5xf32>
    %827 = arith.divf %823, %826 : vector<2x5xf32>
    %cst_143 = arith.constant 0.000000e+00 : f32
    %828 = vector.broadcast %cst_143 : f32 to vector<2x2xf32>
    %829 = vector.extract_strided_slice %827 {offsets = [0, 0], sizes = [2, 1], strides = [1, 1]} : vector<2x5xf32> to vector<2x1xf32>
    %830 = vector.broadcast %829 : vector<2x1xf32> to vector<2x2xf32>
    %831 = arith.mulf %830, %446 : vector<2x2xf32>
    %832 = arith.addf %828, %831 : vector<2x2xf32>
    %833 = vector.extract_strided_slice %827 {offsets = [0, 1], sizes = [2, 1], strides = [1, 1]} : vector<2x5xf32> to vector<2x1xf32>
    %834 = vector.broadcast %833 : vector<2x1xf32> to vector<2x2xf32>
    %835 = arith.mulf %834, %549 : vector<2x2xf32>
    %836 = arith.addf %832, %835 : vector<2x2xf32>
    %837 = vector.extract_strided_slice %827 {offsets = [0, 2], sizes = [2, 1], strides = [1, 1]} : vector<2x5xf32> to vector<2x1xf32>
    %838 = vector.broadcast %837 : vector<2x1xf32> to vector<2x2xf32>
    %839 = arith.mulf %838, %652 : vector<2x2xf32>
    %840 = arith.addf %836, %839 : vector<2x2xf32>
    %841 = vector.extract_strided_slice %827 {offsets = [0, 3], sizes = [2, 1], strides = [1, 1]} : vector<2x5xf32> to vector<2x1xf32>
    %842 = vector.broadcast %841 : vector<2x1xf32> to vector<2x2xf32>
    %843 = arith.mulf %842, %755 : vector<2x2xf32>
    %844 = arith.addf %840, %843 : vector<2x2xf32>
    %845 = vector.extract_strided_slice %827 {offsets = [0, 4], sizes = [2, 1], strides = [1, 1]} : vector<2x5xf32> to vector<2x1xf32>
    %846 = vector.broadcast %845 : vector<2x1xf32> to vector<2x2xf32>
    %847 = arith.mulf %846, %815 : vector<2x2xf32>
    %848 = arith.addf %844, %847 : vector<2x2xf32>
    %cst_144 = arith.constant dense<0xFF800000> : vector<2xf32>
    %849 = vector.multi_reduction <maximumf>, %848, %cst_144 [1] : vector<2x2xf32> to vector<2xf32>
    %850 = vector.shape_cast %849 : vector<2xf32> to vector<2x1xf32>
    %851 = vector.broadcast %850 : vector<2x1xf32> to vector<2x2xf32>
    %852 = arith.subf %848, %851 : vector<2x2xf32>
    %853 = math.exp %852 : vector<2x2xf32>
    %cst_145 = arith.constant dense<0.000000e+00> : vector<2xf32>
    %854 = vector.multi_reduction <add>, %853, %cst_145 [1] : vector<2x2xf32> to vector<2xf32>
    %855 = vector.shape_cast %854 : vector<2xf32> to vector<2x1xf32>
    %856 = math.log %855 : vector<2x1xf32>
    %857 = vector.broadcast %856 : vector<2x1xf32> to vector<2x2xf32>
    %858 = arith.subf %852, %857 : vector<2x2xf32>
    %c0_146 = arith.constant 0 : index
    %c0_147 = arith.constant 0 : index
    %859 = vector.load %arg6[%c0_146, %c0_147] : memref<2x2xf32, #tpu.memory_space<vmem>>, vector<2x2xf32>
    tpu.vector_store %arg6[%c0_146, %c0_147], %858 {strides = array<i32>} : memref<2x2xf32, #tpu.memory_space<vmem>>, vector<2x2xf32>,
    return
  }
  func.func @transform_0(%arg0: i32) -> (i32, i32) {
    %c0_i32 = arith.constant 0 : i32
    %c0_i32_0 = arith.constant 0 : i32
    return %arg0, %c0_i32 : i32, i32
  }
  func.func @transform_1(%arg0: i32) -> (i32, i32, i32) {
    %c0_i32 = arith.constant 0 : i32
    %c0_i32_0 = arith.constant 0 : i32
    %c0_i32_1 = arith.constant 0 : i32
    return %c0_i32, %arg0, %c0_i32_0 : i32, i32, i32
  }
  func.func @transform_2(%arg0: i32) -> (i32, i32, i32) {
    %c0_i32 = arith.constant 0 : i32
    %c0_i32_0 = arith.constant 0 : i32
    %c0_i32_1 = arith.constant 0 : i32
    return %arg0, %c0_i32, %c0_i32_0 : i32, i32, i32
  }
  func.func @transform_3(%arg0: i32) -> (i32, i32) {
    %c0_i32 = arith.constant 0 : i32
    %c0_i32_0 = arith.constant 0 : i32
    %c0_i32_1 = arith.constant 0 : i32
    return %c0_i32, %c0_i32_0 : i32, i32
  }
  func.func @transform_4(%arg0: i32) -> (i32, i32) {
    %c0_i32 = arith.constant 0 : i32
    %c0_i32_0 = arith.constant 0 : i32
    %c0_i32_1 = arith.constant 0 : i32
    return %c0_i32, %c0_i32_0 : i32, i32
  }
  func.func @transform_5(%arg0: i32) -> (i32, i32) {
    %c0_i32 = arith.constant 0 : i32
    %c0_i32_0 = arith.constant 0 : i32
    return %arg0, %c0_i32 : i32, i32
  }
}

</mosaic_0001>

<llo_original>
// kernel: rnmn_forward.1
$region0: #{rnmn_forward.1}
  #allocation0 [shape = 'u32[]', space=smem, size = 0x4, offset = 0x4, fixed_abs, tag = 'smem constant byte address 0x4 - core index']
  #allocation1 [shape = 'u32[144,128]{1,0:T(1,128)}', space=vmem, size = 0x12000, scoped, tag = 'internal scratch']
  %s0 = inlined_call_operand.vmem [shape: f32[2,8], index: 0, kind: input, shape index: {}]
  %s1 = inlined_call_operand.vmem [shape: f32[8,2,8], index: 1, kind: input, shape index: {}]
  %s2 = inlined_call_operand.vmem [shape: f32[2,36,64], index: 2, kind: input, shape index: {}]
  %s3 = inlined_call_operand.vmem [shape: f32[96,128], index: 3, kind: input, shape index: {}]
  %s4 = inlined_call_operand.vmem [shape: f32[256,16], index: 4, kind: input, shape index: {}]
  %s5 = inlined_call_operand.hbm [shape: f32[2,2], index: 5, kind: output, shape index: {}]
  %s6 = sld [smem:[#allocation0]]
  $region30: #{rnmn_forward.1} parent=0
    _
  %s8 = ssub.s32 1, %s6
  %s9 = scalar_select 0, %s8, %s6
  $region1: #{rnmn_forward.1} parent=0
    #allocation2 [shape = 'u8[1024]{0}', space=vmem, size = 0x400, scoped, tag = 'output window, operand 0, single buffered']
    #allocation3 [shape = 's32[1]{0}', space=sflag, size = 0x4, scoped, tag = 'scoped memory for rnmn_forward.1']
    %10 = vsyncpa [#allocation3], 0
    // Predicated region
    $region2: #{rnmn_forward.1} parent=1 // pred_check
      _
    $region3: #{rnmn_forward.1} parent=1 // pred_check_branch
      %12 = sbr.rel (0) target = $region5
    $region4: #{rnmn_forward.1} parent=1 // pred_region
      _
    $region5: #{rnmn_forward.1} parent=1 // pred_fallthru
      _
    // Predicated region
    $region6: #{rnmn_forward.1} parent=1 // pred_check
      _
    $region7: #{rnmn_forward.1} parent=1 // pred_check_branch
      %14 = sbr.rel (0) target = $region9
    $region8: #{rnmn_forward.1} parent=1 // pred_region
      _
    $region9: #{rnmn_forward.1} parent=1 // pred_fallthru
      _
    // Predicated region
    $region10: #{rnmn_forward.1} parent=1 // pred_check
      _
    $region11: #{rnmn_forward.1} parent=1 // pred_check_branch
      %16 = sbr.rel (0) target = $region13
    $region12: #{rnmn_forward.1} parent=1 // pred_region
      _
    $region13: #{rnmn_forward.1} parent=1 // pred_fallthru
      _
    // Predicated region
    $region14: #{rnmn_forward.1} parent=1 // pred_check
      _
    $region15: #{rnmn_forward.1} parent=1 // pred_check_branch
      %18 = sbr.rel (0) target = $region17
    $region16: #{rnmn_forward.1} parent=1 // pred_region
      _
    $region17: #{rnmn_forward.1} parent=1 // pred_fallthru
      _
    // Predicated region
    $region18: #{rnmn_forward.1} parent=1 // pred_check
      _
    $region19: #{rnmn_forward.1} parent=1 // pred_check_branch
      %20 = sbr.rel (0) target = $region21
    $region20: #{rnmn_forward.1} parent=1 // pred_region
      _
    $region21: #{rnmn_forward.1} parent=1 // pred_fallthru
      _
    %v22 = vld [vmem:[%s3] sm:$0xff]
    %v23 = vpack.c.bf16 %v22, %v22
    %v24 = vld [vmem:[%s3 + $0x8] sm:$0xff]
    %v25 = vld [vmem:[%s3 + $0x10] sm:$0xff]
    %v26 = vld [vmem:[%s3 + $0x18] sm:$0xff]
    %v27 = vld [vmem:[%s3 + $0x20] sm:$0xff]
    %v28 = vpack.c.bf16 %v25, %v24
    %v29 = vpack.c.bf16 %v27, %v26
    %v30 = vld [vmem:[%s3 + $0x28] sm:$0x1]
    %v31 = vld [vmem:[%s3 + $0x30] sm:$0xff]
    %v32 = vld [vmem:[%s3 + $0x38] sm:$0xff]
    %v33 = vld [vmem:[%s3 + $0x40] sm:$0xff]
    %v34 = vld [vmem:[%s3 + $0x48] sm:$0xff]
    %v35 = vld [vmem:[%s3 + $0x50] sm:$0x3f]
    %v36 = vpack.c.bf16 %v32, %v31
    %v37 = vpack.c.bf16 %v34, %v33
    %v38 = vpack.c.bf16 %v35, %v35
    %v39 = vld [vmem:[%s3 + $0x58] sm:$0x1]
    %v40 = vld [vmem:[%s4] sm:$0xff]
    %v41 = vld [vmem:[%s4 + $0x8] sm:$0xff]
    %v42 = vld [vmem:[%s4 + $0x10] sm:$0xff]
    %v43 = vld [vmem:[%s4 + $0x18] sm:$0xff]
    %v44 = vpack.c.bf16 %v41, %v40
    %v45 = vpack.c.bf16 %v43, %v42
    %v46 = vld [vmem:[%s4 + $0x20] sm:$0x1]
    %v47 = vld [vmem:[%s4 + $0x28] sm:$0xff]
    %v48 = vld [vmem:[%s4 + $0x30] sm:$0xff]
    %v49 = vld [vmem:[%s4 + $0x38] sm:$0xff]
    %v50 = vld [vmem:[%s4 + $0x40] sm:$0xff]
    %v51 = vld [vmem:[%s4 + $0x48] sm:$0xff]
    %v52 = vld [vmem:[%s4 + $0x50] sm:$0xff]
    %v53 = vld [vmem:[%s4 + $0x58] sm:$0xff]
    %v54 = vld [vmem:[%s4 + $0x60] sm:$0xff]
    %v55 = vpack.c.bf16 %v48, %v47
    %v56 = vpack.c.bf16 %v50, %v49
    %v57 = vpack.c.bf16 %v52, %v51
    %v58 = vpack.c.bf16 %v54, %v53
    %v63 = vunpack.c.l.b16 %v55
    %v64 = vunpack.c.h.b16 %v55
    %v65 = vunpack.c.l.b16 %v56
    %v66 = vunpack.c.h.b16 %v56
    %v67 = vunpack.c.l.b16 %v57
    %v68 = vunpack.c.h.b16 %v57
    %v69 = vunpack.c.l.b16 %v58
    %v70 = vunpack.c.h.b16 %v58
    %v71 = vpack.c.b16 %v63, %v63
    %v72 = vpack.c.b16 %v64, %v64
    %v73 = vpack.c.b16 %v65, %v65
    %v74 = vpack.c.b16 %v66, %v66
    %v75 = vpack.c.b16 %v67, %v67
    %v76 = vpack.c.b16 %v68, %v68
    %v77 = vpack.c.b16 %v69, %v69
    %v78 = vpack.c.b16 %v70, %v70
    %v79 = vld [vmem:[%s4 + $0x68] sm:$0x1]
    %v80 = vld [vmem:[%s4 + $0x70] sm:$0xff]
    %v81 = vld [vmem:[%s4 + $0x78] sm:$0xff]
    %v82 = vld [vmem:[%s4 + $0x80] sm:$0xff]
    %v83 = vld [vmem:[%s4 + $0x88] sm:$0xff]
    %v84 = vld [vmem:[%s4 + $0x90] sm:$0xff]
    %v85 = vld [vmem:[%s4 + $0x98] sm:$0xff]
    %v86 = vld [vmem:[%s4 + $0xa0] sm:$0xff]
    %v87 = vld [vmem:[%s4 + $0xa8] sm:$0xff]
    %v88 = vpack.c.bf16 %v81, %v80
    %v89 = vpack.c.bf16 %v83, %v82
    %v90 = vpack.c.bf16 %v85, %v84
    %v91 = vpack.c.bf16 %v87, %v86
    %v92 = vld [vmem:[%s4 + $0xb0] sm:$0x1]
    %v93 = vld [vmem:[%s4 + $0xb8] sm:$0xff]
    %v94 = vld [vmem:[%s4 + $0xc0] sm:$0xff]
    %v95 = vpack.c.bf16 %v94, %v93
    %v96 = vld [vmem:[%s4 + $0xc8] sm:$0x1]
    %v97 = vld [vmem:[%s4 + $0xd0] sm:$0xff]
    %v98 = vld [vmem:[%s4 + $0xd8] sm:$0xff]
    %v99 = vld [vmem:[%s4 + $0xe0] sm:$0xff]
    %v100 = vld [vmem:[%s4 + $0xe8] sm:$0xff]
    %v101 = vld [vmem:[%s4 + $0xf0] sm:$0xf]
    %v102 = vld [vmem:[%s4 + $0xf8] sm:$0x1]
    %v103 = vld [vmem:[%s0] sm:$0x3]
    %v104 = vld [vmem:[%s1] sm:$0x3]
    %v105 = vld [vmem:[%s1 + $0x2] sm:$0x3]
    %v106 = vld [vmem:[%s1 + $0x4] sm:$0x3]
    %v107 = vld [vmem:[%s1 + $0x6] sm:$0x3]
    %v108 = vld [vmem:[%s1 + $0x8] sm:$0x3]
    %v109 = vld [vmem:[%s1 + $0xa] sm:$0x3]
    %v110 = vld [vmem:[%s1 + $0xc] sm:$0x3]
    %v111 = vld [vmem:[%s1 + $0xe] sm:$0x3]
    %v112 = vpack.c.bf16 %v104, %v104
    %v113 = vpack.c.bf16 %v105, %v105
    %v114 = vpack.c.bf16 %v106, %v106
    %v115 = vpack.c.bf16 %v107, %v107
    %v116 = vpack.c.bf16 %v108, %v108
    %v117 = vpack.c.bf16 %v109, %v109
    %v118 = vpack.c.bf16 %v110, %v110
    %v119 = vpack.c.bf16 %v111, %v111
    %v128 = vcombine.low %v112, %v113
    %v129 = vcombine.low %v114, %v115
    %v130 = vcombine.low %v116, %v117
    %v131 = vcombine.low %v118, %v119
    %v133 = vunpack.c.l.s4 1966171168
    %v134 = vunpack.c.0.s8 %v133
    %v135 = vlaneseq
    %v136 = vshrl.u32 %v135, 7
    %v137 = vsub.s32 %v134, %v136
    %v138 = vrot.slane %v128, %v137
    %v140 = vunpack.c.l.s4 1966171168
    %v141 = vunpack.c.0.s8 %v140
    %v142 = vlaneseq
    %v143 = vshrl.u32 %v142, 7
    %v144 = vsub.s32 %v141, %v143
    %v145 = vrot.slane %v129, %v144
    %v147 = vunpack.c.l.s4 1966171168
    %v148 = vunpack.c.0.s8 %v147
    %v149 = vlaneseq
    %v150 = vshrl.u32 %v149, 7
    %v151 = vsub.s32 %v148, %v150
    %v152 = vrot.slane %v130, %v151
    %v154 = vunpack.c.l.s4 1966171168
    %v155 = vunpack.c.0.s8 %v154
    %v156 = vlaneseq
    %v157 = vshrl.u32 %v156, 7
    %v158 = vsub.s32 %v155, %v157
    %v159 = vrot.slane %v131, %v158
    %v160 = vcombine.low %v138, %v145
    %v161 = vcombine.low %v152, %v159
    %v163 = vunpack.c.l.s4 1966171168
    %v164 = vunpack.c.0.s8 %v163
    %v165 = vlaneseq
    %v166 = vshrl.u32 %v165, 7
    %v167 = vsub.s32 %v164, %v166
    %v168 = vrot.slane %v160, %v167
    %v170 = vunpack.c.l.s4 1966171168
    %v171 = vunpack.c.0.s8 %v170
    %v172 = vlaneseq
    %v173 = vshrl.u32 %v172, 7
    %v174 = vsub.s32 %v171, %v173
    %v175 = vrot.slane %v161, %v174
    %v176 = vcombine.low %v168, %v175
    %vm177 = vcmask 64512
    %v179 = vsel %vm177, %v176, 0
    %vm181 = vcmask 1043456
    %v183 = vsel %vm181, %v23, 0
    %185 = vmatprep.subr.bf16.mxu0 0
    %186 = vmatpush1.bf16.msra.mxu0 %v183
    %187 = vmatprep.subr.bf16.mxu0 0
    %188 = vmatpush1.bf16.msra.mxu0 0
    %189 = vmatprep.subr.bf16.mxu0 0
    %190 = vmatpush1.bf16.msra.mxu0 0
    %191 = vmatprep.subr.bf16.mxu0 0
    %192 = vmatpush1.bf16.msra.mxu0 0
    %193 = vmatprep.subr.bf16.mxu0 0
    %194 = vmatpush1.bf16.msra.mxu0 0
    %195 = vmatprep.subr.bf16.mxu0 0
    %196 = vmatpush1.bf16.msra.mxu0 0
    %197 = vmatprep.subr.bf16.mxu0 0
    %198 = vmatpush1.bf16.msra.mxu0 0
    %199 = vmatprep.subr.bf16.mxu0 0
    %200 = vmatpush1.bf16.msra.mxu0 0
    %201 = vmatprep.subr.bf16.mxu0 0
    %202 = vmatpush1.bf16.msra.mxu0 0
    %203 = vmatprep.subr.bf16.mxu0 0
    %204 = vmatpush1.bf16.msra.mxu0 0
    %205 = vmatprep.subr.bf16.mxu0 0
    %206 = vmatpush1.bf16.msra.mxu0 0
    %207 = vmatprep.subr.bf16.mxu0 0
    %208 = vmatpush1.bf16.msra.mxu0 0
    %209 = vmatprep.subr.bf16.mxu0 0
    %210 = vmatpush1.bf16.msra.mxu0 0
    %211 = vmatprep.subr.bf16.mxu0 0
    %212 = vmatpush1.bf16.msra.mxu0 0
    %213 = vmatprep.subr.bf16.mxu0 0
    %214 = vmatpush1.bf16.msra.mxu0 0
    %215 = vmatprep.subr.bf16.mxu0 0
    %216 = vmatpush1.bf16.msra.mxu0 0
    %217 = vmatprep.mubr.bf16.mxu0 0
    %218 = vmatmul.mubr.bf16.gmra.mrb[0].mxu0 %v179
    %v219 = vpop.f32.mrb[0].mxu0
    %v220 = vadd.f32 0.0, %v219
    %v221 = vpop.f32.mrb[0].mxu0
    %v222 = vpop.f32.mrb[0].mxu0
    %v223 = vadd.f32 0.0, %v222
    %v224 = vpop.f32.mrb[0].mxu0
    %225 = vdwg.mxu0
    %v228 = vcombine.high %v220, %v220
    %v230 = vunpack.c.l.s4 1983009808
    %v231 = vunpack.c.0.s8 %v230
    %v232 = vlaneseq
    %v233 = vshrl.u32 %v232, 7
    %v234 = vsub.s32 %v231, %v233
    %v235 = vrot.slane %v220, %v234
    %v237 = vunpack.c.l.s4 1983009808
    %v238 = vunpack.c.0.s8 %v237
    %v239 = vlaneseq
    %v240 = vshrl.u32 %v239, 7
    %v241 = vsub.s32 %v238, %v240
    %v242 = vrot.slane %v228, %v241
    %v243 = vcombine.high %v235, %v235
    %v244 = vcombine.high %v242, %v242
    %v245 = vcombine.high %v223, %v223
    %v247 = vunpack.c.l.s4 1983009808
    %v248 = vunpack.c.0.s8 %v247
    %v249 = vlaneseq
    %v250 = vshrl.u32 %v249, 7
    %v251 = vsub.s32 %v248, %v250
    %v252 = vrot.slane %v223, %v251
    %v254 = vunpack.c.l.s4 1983009808
    %v255 = vunpack.c.0.s8 %v254
    %v256 = vlaneseq
    %v257 = vshrl.u32 %v256, 7
    %v258 = vsub.s32 %v255, %v257
    %v259 = vrot.slane %v245, %v258
    %v260 = vcombine.high %v252, %v252
    %v261 = vcombine.high %v259, %v259
    %vm270 = vcmask 261120
    %v272 = vsel %vm270, 0, 0
    %274 = vmatprep.subr.bf16.mxu0 0
    %275 = vmatpush1.bf16.msra.mxu0 %v28
    %276 = vmatprep.subr.bf16.mxu0 0
    %277 = vmatpush1.bf16.msra.mxu0 %v29
    %278 = vmatprep.subr.bf16.mxu0 0
    %279 = vmatpush1.bf16.msra.mxu0 0
    %280 = vmatprep.subr.bf16.mxu0 0
    %281 = vmatpush1.bf16.msra.mxu0 0
    %282 = vmatprep.subr.bf16.mxu0 0
    %283 = vmatpush1.bf16.msra.mxu0 0
    %284 = vmatprep.subr.bf16.mxu0 0
    %285 = vmatpush1.bf16.msra.mxu0 0
    %286 = vmatprep.subr.bf16.mxu0 0
    %287 = vmatpush1.bf16.msra.mxu0 0
    %288 = vmatprep.subr.bf16.mxu0 0
    %289 = vmatpush1.bf16.msra.mxu0 0
    %290 = vmatprep.subr.bf16.mxu0 0
    %291 = vmatpush1.bf16.msra.mxu0 0
    %292 = vmatprep.subr.bf16.mxu0 0
    %293 = vmatpush1.bf16.msra.mxu0 0
    %294 = vmatprep.subr.bf16.mxu0 0
    %295 = vmatpush1.bf16.msra.mxu0 0
    %296 = vmatprep.subr.bf16.mxu0 0
    %297 = vmatpush1.bf16.msra.mxu0 0
    %298 = vmatprep.subr.bf16.mxu0 0
    %299 = vmatpush1.bf16.msra.mxu0 0
    %300 = vmatprep.subr.bf16.mxu0 0
    %301 = vmatpush1.bf16.msra.mxu0 0
    %302 = vmatprep.subr.bf16.mxu0 0
    %303 = vmatpush1.bf16.msra.mxu0 0
    %304 = vmatprep.subr.bf16.mxu0 0
    %305 = vmatpush1.bf16.msra.mxu0 0
    %306 = vmatprep.mubr.bf16.mxu0 0
    %307 = vmatmul.mubr.bf16.gmra.mrb[0].mxu0 %v272
    %v308 = vpop.f32.mrb[0].mxu0
    %v309 = vadd.f32 0.0, %v308
    %v310 = vpop.f32.mrb[0].mxu0
    %v311 = vpop.f32.mrb[0].mxu0
    %v312 = vpop.f32.mrb[0].mxu0
    %313 = vdwg.mxu0
    %v314 = vadd.f32 %v235, %v309
    %v315 = vlaneseq
    %v316 = vshrl.u32 %v315, 7
    %v317 = vsub.s32 0, %v316
    %v318 = vrot.slane %v30, %v317
    %v319 = vadd.f32 %v314, %v318
    %v320 = vxor.u32 %v319, 2147483648
    %v321 = vmul.f32 %v320, 1.442695
    %v322 = vpow.pop %v321
    %v323 = vadd.f32 %v322, 1.0
    %v324 = vrcp.pop %v323
    %v325 = vmul.f32 1.0, %v324
    %v326 = vtanh.pop %v319
    %v327 = vmul.f32 %v325, 0.0
    %329 = vrot.lane.b32.xlu0 %v326, 64
    %v330 = vpop.permute.xlu0 %329
    %v332 = vmul.f32 %v325, %v330
    %334 = vrot.lane.b32.xlu0 %v332, 32
    %v335 = vpop.permute.xlu0 %334
    %v337 = vadd.f32 %v327, %v335
    %v338 = vtanh.pop %v337
    %340 = vrot.lane.b32.xlu0 %v338, 64
    %v341 = vpop.permute.xlu0 %340
    %v343 = vmul.f32 %v325, %v341
    %345 = vset.pattern.permute.xlu0 0
    %346 = vperm.xlu0 %345, %v103
    %v347 = vpop.permute.xlu0 %346
    %v351 = vunpack.c.l.s4 1983009808
    %v352 = vunpack.c.0.s8 %v351
    %v353 = vlaneseq
    %v354 = vshrl.u32 %v353, 7
    %v355 = vsub.s32 %v352, %v354
    %v356 = vrot.slane %v343, %v355
    %357 = vrot.lane.b32.xlu0 %v356, 32
    %v358 = vpop.permute.xlu0 %357
    %v360 = vmul.f32 %v347, %v358
    %v361 = vsub.f32 1.0, %v103
    %363 = vset.pattern.permute.xlu0 0
    %364 = vperm.xlu0 %363, %v361
    %v365 = vpop.permute.xlu0 %364
    %v367 = vmul.f32 %v365, 0.0
    %v368 = vadd.f32 %v360, %v367
    %v371 = vunpack.c.l.s4 1983009808
    %v372 = vunpack.c.0.s8 %v371
    %v373 = vlaneseq
    %v374 = vshrl.u32 %v373, 7
    %v375 = vsub.s32 %v372, %v374
    %v376 = vrot.slane %v337, %v375
    %377 = vrot.lane.b32.xlu0 %v376, 96
    %v378 = vpop.permute.xlu0 %377
    %v380 = vmul.f32 %v347, %v378
    %v381 = vadd.f32 %v380, %v367
    %v382 = vpack.c.bf16 %v368, %v368
    %v384 = vsel %vm270, %v382, 0
    %386 = vmatprep.subr.bf16.mxu0 0
    %387 = vmatpush1.bf16.msra.mxu0 %v28
    %388 = vmatprep.subr.bf16.mxu0 0
    %389 = vmatpush1.bf16.msra.mxu0 %v29
    %390 = vmatprep.subr.bf16.mxu0 0
    %391 = vmatpush1.bf16.msra.mxu0 0
    %392 = vmatprep.subr.bf16.mxu0 0
    %393 = vmatpush1.bf16.msra.mxu0 0
    %394 = vmatprep.subr.bf16.mxu0 0
    %395 = vmatpush1.bf16.msra.mxu0 0
    %396 = vmatprep.subr.bf16.mxu0 0
    %397 = vmatpush1.bf16.msra.mxu0 0
    %398 = vmatprep.subr.bf16.mxu0 0
    %399 = vmatpush1.bf16.msra.mxu0 0
    %400 = vmatprep.subr.bf16.mxu0 0
    %401 = vmatpush1.bf16.msra.mxu0 0
    %402 = vmatprep.subr.bf16.mxu0 0
    %403 = vmatpush1.bf16.msra.mxu0 0
    %404 = vmatprep.subr.bf16.mxu0 0
    %405 = vmatpush1.bf16.msra.mxu0 0
    %406 = vmatprep.subr.bf16.mxu0 0
    %407 = vmatpush1.bf16.msra.mxu0 0
    %408 = vmatprep.subr.bf16.mxu0 0
    %409 = vmatpush1.bf16.msra.mxu0 0
    %410 = vmatprep.subr.bf16.mxu0 0
    %411 = vmatpush1.bf16.msra.mxu0 0
    %412 = vmatprep.subr.bf16.mxu0 0
    %413 = vmatpush1.bf16.msra.mxu0 0
    %414 = vmatprep.subr.bf16.mxu0 0
    %415 = vmatpush1.bf16.msra.mxu0 0
    %416 = vmatprep.subr.bf16.mxu0 0
    %417 = vmatpush1.bf16.msra.mxu0 0
    %418 = vmatprep.mubr.bf16.mxu0 0
    %419 = vmatmul.mubr.bf16.gmra.mrb[0].mxu0 %v384
    %v420 = vpop.f32.mrb[0].mxu0
    %v421 = vadd.f32 0.0, %v420
    %v422 = vpop.f32.mrb[0].mxu0
    %v423 = vpop.f32.mrb[0].mxu0
    %v424 = vpop.f32.mrb[0].mxu0
    %425 = vdwg.mxu0
    %v426 = vadd.f32 %v243, %v421
    %v427 = vadd.f32 %v426, %v318
    %v428 = vxor.u32 %v427, 2147483648
    %v429 = vmul.f32 %v428, 1.442695
    %v430 = vpow.pop %v429
    %v431 = vadd.f32 %v430, 1.0
    %v432 = vrcp.pop %v431
    %v433 = vmul.f32 1.0, %v432
    %v434 = vtanh.pop %v427
    %v437 = vunpack.c.l.s4 1983009808
    %v438 = vunpack.c.0.s8 %v437
    %v439 = vlaneseq
    %v440 = vshrl.u32 %v439, 7
    %v441 = vsub.s32 %v438, %v440
    %v442 = vrot.slane %v381, %v441
    %443 = vrot.lane.b32.xlu0 %v442, 32
    %v444 = vpop.permute.xlu0 %443
    %v446 = vmul.f32 %v433, %v444
    %448 = vrot.lane.b32.xlu0 %v434, 64
    %v449 = vpop.permute.xlu0 %448
    %v451 = vmul.f32 %v433, %v449
    %453 = vrot.lane.b32.xlu0 %v451, 32
    %v454 = vpop.permute.xlu0 %453
    %v456 = vadd.f32 %v446, %v454
    %v457 = vtanh.pop %v456
    %459 = vrot.lane.b32.xlu0 %v457, 64
    %v460 = vpop.permute.xlu0 %459
    %v462 = vmul.f32 %v433, %v460
    %463 = vset.pattern.permute.xlu0 1
    %464 = vperm.xlu0 %463, %v103
    %v465 = vpop.permute.xlu0 %464
    %v469 = vunpack.c.l.s4 1983009808
    %v470 = vunpack.c.0.s8 %v469
    %v471 = vlaneseq
    %v472 = vshrl.u32 %v471, 7
    %v473 = vsub.s32 %v470, %v472
    %v474 = vrot.slane %v462, %v473
    %475 = vrot.lane.b32.xlu0 %v474, 32
    %v476 = vpop.permute.xlu0 %475
    %v478 = vmul.f32 %v465, %v476
    %479 = vset.pattern.permute.xlu0 1
    %480 = vperm.xlu0 %479, %v361
    %v481 = vpop.permute.xlu0 %480
    %v483 = vmul.f32 %v481, %v368
    %v484 = vadd.f32 %v478, %v483
    %v487 = vunpack.c.l.s4 1983009808
    %v488 = vunpack.c.0.s8 %v487
    %v489 = vlaneseq
    %v490 = vshrl.u32 %v489, 7
    %v491 = vsub.s32 %v488, %v490
    %v492 = vrot.slane %v456, %v491
    %493 = vrot.lane.b32.xlu0 %v492, 96
    %v494 = vpop.permute.xlu0 %493
    %v496 = vmul.f32 %v465, %v494
    %v497 = vmul.f32 %v481, %v381
    %v498 = vadd.f32 %v496, %v497
    %v499 = vpack.c.bf16 %v484, %v484
    %v501 = vsel %vm270, %v499, 0
    %503 = vmatprep.subr.bf16.mxu0 0
    %504 = vmatpush1.bf16.msra.mxu0 %v28
    %505 = vmatprep.subr.bf16.mxu0 0
    %506 = vmatpush1.bf16.msra.mxu0 %v29
    %507 = vmatprep.subr.bf16.mxu0 0
    %508 = vmatpush1.bf16.msra.mxu0 0
    %509 = vmatprep.subr.bf16.mxu0 0
    %510 = vmatpush1.bf16.msra.mxu0 0
    %511 = vmatprep.subr.bf16.mxu0 0
    %512 = vmatpush1.bf16.msra.mxu0 0
    %513 = vmatprep.subr.bf16.mxu0 0
    %514 = vmatpush1.bf16.msra.mxu0 0
    %515 = vmatprep.subr.bf16.mxu0 0
    %516 = vmatpush1.bf16.msra.mxu0 0
    %517 = vmatprep.subr.bf16.mxu0 0
    %518 = vmatpush1.bf16.msra.mxu0 0
    %519 = vmatprep.subr.bf16.mxu0 0
    %520 = vmatpush1.bf16.msra.mxu0 0
    %521 = vmatprep.subr.bf16.mxu0 0
    %522 = vmatpush1.bf16.msra.mxu0 0
    %523 = vmatprep.subr.bf16.mxu0 0
    %524 = vmatpush1.bf16.msra.mxu0 0
    %525 = vmatprep.subr.bf16.mxu0 0
    %526 = vmatpush1.bf16.msra.mxu0 0
    %527 = vmatprep.subr.bf16.mxu0 0
    %528 = vmatpush1.bf16.msra.mxu0 0
    %529 = vmatprep.subr.bf16.mxu0 0
    %530 = vmatpush1.bf16.msra.mxu0 0
    %531 = vmatprep.subr.bf16.mxu0 0
    %532 = vmatpush1.bf16.msra.mxu0 0
    %533 = vmatprep.subr.bf16.mxu0 0
    %534 = vmatpush1.bf16.msra.mxu0 0
    %535 = vmatprep.mubr.bf16.mxu0 0
    %536 = vmatmul.mubr.bf16.gmra.mrb[0].mxu0 %v501
    %v537 = vpop.f32.mrb[0].mxu0
    %v538 = vadd.f32 0.0, %v537
    %v539 = vpop.f32.mrb[0].mxu0
    %v540 = vpop.f32.mrb[0].mxu0
    %v541 = vpop.f32.mrb[0].mxu0
    %542 = vdwg.mxu0
    %v543 = vadd.f32 %v242, %v538
    %v544 = vadd.f32 %v543, %v318
    %v545 = vxor.u32 %v544, 2147483648
    %v546 = vmul.f32 %v545, 1.442695
    %v547 = vpow.pop %v546
    %v548 = vadd.f32 %v547, 1.0
    %v549 = vrcp.pop %v548
    %v550 = vmul.f32 1.0, %v549
    %v551 = vtanh.pop %v544
    %v554 = vunpack.c.l.s4 1983009808
    %v555 = vunpack.c.0.s8 %v554
    %v556 = vlaneseq
    %v557 = vshrl.u32 %v556, 7
    %v558 = vsub.s32 %v555, %v557
    %v559 = vrot.slane %v498, %v558
    %560 = vrot.lane.b32.xlu0 %v559, 32
    %v561 = vpop.permute.xlu0 %560
    %v563 = vmul.f32 %v550, %v561
    %565 = vrot.lane.b32.xlu0 %v551, 64
    %v566 = vpop.permute.xlu0 %565
    %v568 = vmul.f32 %v550, %v566
    %570 = vrot.lane.b32.xlu0 %v568, 32
    %v571 = vpop.permute.xlu0 %570
    %v573 = vadd.f32 %v563, %v571
    %v574 = vtanh.pop %v573
    %576 = vrot.lane.b32.xlu0 %v574, 64
    %v577 = vpop.permute.xlu0 %576
    %v579 = vmul.f32 %v550, %v577
    %580 = vset.pattern.permute.xlu0 2
    %581 = vperm.xlu0 %580, %v103
    %v582 = vpop.permute.xlu0 %581
    %v586 = vunpack.c.l.s4 1983009808
    %v587 = vunpack.c.0.s8 %v586
    %v588 = vlaneseq
    %v589 = vshrl.u32 %v588, 7
    %v590 = vsub.s32 %v587, %v589
    %v591 = vrot.slane %v579, %v590
    %592 = vrot.lane.b32.xlu0 %v591, 32
    %v593 = vpop.permute.xlu0 %592
    %v595 = vmul.f32 %v582, %v593
    %596 = vset.pattern.permute.xlu0 2
    %597 = vperm.xlu0 %596, %v361
    %v598 = vpop.permute.xlu0 %597
    %v600 = vmul.f32 %v598, %v484
    %v601 = vadd.f32 %v595, %v600
    %v604 = vunpack.c.l.s4 1983009808
    %v605 = vunpack.c.0.s8 %v604
    %v606 = vlaneseq
    %v607 = vshrl.u32 %v606, 7
    %v608 = vsub.s32 %v605, %v607
    %v609 = vrot.slane %v573, %v608
    %610 = vrot.lane.b32.xlu0 %v609, 96
    %v611 = vpop.permute.xlu0 %610
    %v613 = vmul.f32 %v582, %v611
    %v614 = vmul.f32 %v598, %v498
    %v615 = vadd.f32 %v613, %v614
    %v616 = vpack.c.bf16 %v601, %v601
    %v618 = vsel %vm270, %v616, 0
    %620 = vmatprep.subr.bf16.mxu0 0
    %621 = vmatpush1.bf16.msra.mxu0 %v28
    %622 = vmatprep.subr.bf16.mxu0 0
    %623 = vmatpush1.bf16.msra.mxu0 %v29
    %624 = vmatprep.subr.bf16.mxu0 0
    %625 = vmatpush1.bf16.msra.mxu0 0
    %626 = vmatprep.subr.bf16.mxu0 0
    %627 = vmatpush1.bf16.msra.mxu0 0
    %628 = vmatprep.subr.bf16.mxu0 0
    %629 = vmatpush1.bf16.msra.mxu0 0
    %630 = vmatprep.subr.bf16.mxu0 0
    %631 = vmatpush1.bf16.msra.mxu0 0
    %632 = vmatprep.subr.bf16.mxu0 0
    %633 = vmatpush1.bf16.msra.mxu0 0
    %634 = vmatprep.subr.bf16.mxu0 0
    %635 = vmatpush1.bf16.msra.mxu0 0
    %636 = vmatprep.subr.bf16.mxu0 0
    %637 = vmatpush1.bf16.msra.mxu0 0
    %638 = vmatprep.subr.bf16.mxu0 0
    %639 = vmatpush1.bf16.msra.mxu0 0
    %640 = vmatprep.subr.bf16.mxu0 0
    %641 = vmatpush1.bf16.msra.mxu0 0
    %642 = vmatprep.subr.bf16.mxu0 0
    %643 = vmatpush1.bf16.msra.mxu0 0
    %644 = vmatprep.subr.bf16.mxu0 0
    %645 = vmatpush1.bf16.msra.mxu0 0
    %646 = vmatprep.subr.bf16.mxu0 0
    %647 = vmatpush1.bf16.msra.mxu0 0
    %648 = vmatprep.subr.bf16.mxu0 0
    %649 = vmatpush1.bf16.msra.mxu0 0
    %650 = vmatprep.subr.bf16.mxu0 0
    %651 = vmatpush1.bf16.msra.mxu0 0
    %652 = vmatprep.mubr.bf16.mxu0 0
    %653 = vmatmul.mubr.bf16.gmra.mrb[0].mxu0 %v618
    %v654 = vpop.f32.mrb[0].mxu0
    %v655 = vadd.f32 0.0, %v654
    %v656 = vpop.f32.mrb[0].mxu0
    %v657 = vpop.f32.mrb[0].mxu0
    %v658 = vpop.f32.mrb[0].mxu0
    %659 = vdwg.mxu0
    %v660 = vadd.f32 %v244, %v655
    %v661 = vadd.f32 %v660, %v318
    %v662 = vxor.u32 %v661, 2147483648
    %v663 = vmul.f32 %v662, 1.442695
    %v664 = vpow.pop %v663
    %v665 = vadd.f32 %v664, 1.0
    %v666 = vrcp.pop %v665
    %v667 = vmul.f32 1.0, %v666
    %v668 = vtanh.pop %v661
    %v671 = vunpack.c.l.s4 1983009808
    %v672 = vunpack.c.0.s8 %v671
    %v673 = vlaneseq
    %v674 = vshrl.u32 %v673, 7
    %v675 = vsub.s32 %v672, %v674
    %v676 = vrot.slane %v615, %v675
    %677 = vrot.lane.b32.xlu0 %v676, 32
    %v678 = vpop.permute.xlu0 %677
    %v680 = vmul.f32 %v667, %v678
    %682 = vrot.lane.b32.xlu0 %v668, 64
    %v683 = vpop.permute.xlu0 %682
    %v685 = vmul.f32 %v667, %v683
    %687 = vrot.lane.b32.xlu0 %v685, 32
    %v688 = vpop.permute.xlu0 %687
    %v690 = vadd.f32 %v680, %v688
    %v691 = vtanh.pop %v690
    %693 = vrot.lane.b32.xlu0 %v691, 64
    %v694 = vpop.permute.xlu0 %693
    %v696 = vmul.f32 %v667, %v694
    %697 = vset.pattern.permute.xlu0 3
    %698 = vperm.xlu0 %697, %v103
    %v699 = vpop.permute.xlu0 %698
    %v703 = vunpack.c.l.s4 1983009808
    %v704 = vunpack.c.0.s8 %v703
    %v705 = vlaneseq
    %v706 = vshrl.u32 %v705, 7
    %v707 = vsub.s32 %v704, %v706
    %v708 = vrot.slane %v696, %v707
    %709 = vrot.lane.b32.xlu0 %v708, 32
    %v710 = vpop.permute.xlu0 %709
    %v712 = vmul.f32 %v699, %v710
    %713 = vset.pattern.permute.xlu0 3
    %714 = vperm.xlu0 %713, %v361
    %v715 = vpop.permute.xlu0 %714
    %v717 = vmul.f32 %v715, %v601
    %v718 = vadd.f32 %v712, %v717
    %v721 = vunpack.c.l.s4 1983009808
    %v722 = vunpack.c.0.s8 %v721
    %v723 = vlaneseq
    %v724 = vshrl.u32 %v723, 7
    %v725 = vsub.s32 %v722, %v724
    %v726 = vrot.slane %v690, %v725
    %727 = vrot.lane.b32.xlu0 %v726, 96
    %v728 = vpop.permute.xlu0 %727
    %v730 = vmul.f32 %v699, %v728
    %v731 = vmul.f32 %v715, %v615
    %v732 = vadd.f32 %v730, %v731
    %v733 = vpack.c.bf16 %v718, %v718
    %v735 = vsel %vm270, %v733, 0
    %737 = vmatprep.subr.bf16.mxu0 0
    %738 = vmatpush1.bf16.msra.mxu0 %v28
    %739 = vmatprep.subr.bf16.mxu0 0
    %740 = vmatpush1.bf16.msra.mxu0 %v29
    %741 = vmatprep.subr.bf16.mxu0 0
    %742 = vmatpush1.bf16.msra.mxu0 0
    %743 = vmatprep.subr.bf16.mxu0 0
    %744 = vmatpush1.bf16.msra.mxu0 0
    %745 = vmatprep.subr.bf16.mxu0 0
    %746 = vmatpush1.bf16.msra.mxu0 0
    %747 = vmatprep.subr.bf16.mxu0 0
    %748 = vmatpush1.bf16.msra.mxu0 0
    %749 = vmatprep.subr.bf16.mxu0 0
    %750 = vmatpush1.bf16.msra.mxu0 0
    %751 = vmatprep.subr.bf16.mxu0 0
    %752 = vmatpush1.bf16.msra.mxu0 0
    %753 = vmatprep.subr.bf16.mxu0 0
    %754 = vmatpush1.bf16.msra.mxu0 0
    %755 = vmatprep.subr.bf16.mxu0 0
    %756 = vmatpush1.bf16.msra.mxu0 0
    %757 = vmatprep.subr.bf16.mxu0 0
    %758 = vmatpush1.bf16.msra.mxu0 0
    %759 = vmatprep.subr.bf16.mxu0 0
    %760 = vmatpush1.bf16.msra.mxu0 0
    %761 = vmatprep.subr.bf16.mxu0 0
    %762 = vmatpush1.bf16.msra.mxu0 0
    %763 = vmatprep.subr.bf16.mxu0 0
    %764 = vmatpush1.bf16.msra.mxu0 0
    %765 = vmatprep.subr.bf16.mxu0 0
    %766 = vmatpush1.bf16.msra.mxu0 0
    %767 = vmatprep.subr.bf16.mxu0 0
    %768 = vmatpush1.bf16.msra.mxu0 0
    %769 = vmatprep.mubr.bf16.mxu0 0
    %770 = vmatmul.mubr.bf16.gmra.mrb[0].mxu0 %v735
    %v771 = vpop.f32.mrb[0].mxu0
    %v772 = vadd.f32 0.0, %v771
    %v773 = vpop.f32.mrb[0].mxu0
    %v774 = vpop.f32.mrb[0].mxu0
    %v775 = vpop.f32.mrb[0].mxu0
    %776 = vdwg.mxu0
    %v777 = vadd.f32 %v252, %v772
    %v778 = vadd.f32 %v777, %v318
    %v779 = vxor.u32 %v778, 2147483648
    %v780 = vmul.f32 %v779, 1.442695
    %v781 = vpow.pop %v780
    %v782 = vadd.f32 %v781, 1.0
    %v783 = vrcp.pop %v782
    %v784 = vmul.f32 1.0, %v783
    %v785 = vtanh.pop %v778
    %v788 = vunpack.c.l.s4 1983009808
    %v789 = vunpack.c.0.s8 %v788
    %v790 = vlaneseq
    %v791 = vshrl.u32 %v790, 7
    %v792 = vsub.s32 %v789, %v791
    %v793 = vrot.slane %v732, %v792
    %794 = vrot.lane.b32.xlu0 %v793, 32
    %v795 = vpop.permute.xlu0 %794
    %v797 = vmul.f32 %v784, %v795
    %799 = vrot.lane.b32.xlu0 %v785, 64
    %v800 = vpop.permute.xlu0 %799
    %v802 = vmul.f32 %v784, %v800
    %804 = vrot.lane.b32.xlu0 %v802, 32
    %v805 = vpop.permute.xlu0 %804
    %v807 = vadd.f32 %v797, %v805
    %v808 = vtanh.pop %v807
    %810 = vrot.lane.b32.xlu0 %v808, 64
    %v811 = vpop.permute.xlu0 %810
    %v813 = vmul.f32 %v784, %v811
    %814 = vset.pattern.permute.xlu0 4
    %815 = vperm.xlu0 %814, %v103
    %v816 = vpop.permute.xlu0 %815
    %v820 = vunpack.c.l.s4 1983009808
    %v821 = vunpack.c.0.s8 %v820
    %v822 = vlaneseq
    %v823 = vshrl.u32 %v822, 7
    %v824 = vsub.s32 %v821, %v823
    %v825 = vrot.slane %v813, %v824
    %826 = vrot.lane.b32.xlu0 %v825, 32
    %v827 = vpop.permute.xlu0 %826
    %v829 = vmul.f32 %v816, %v827
    %830 = vset.pattern.permute.xlu0 4
    %831 = vperm.xlu0 %830, %v361
    %v832 = vpop.permute.xlu0 %831
    %v834 = vmul.f32 %v832, %v718
    %v835 = vadd.f32 %v829, %v834
    %v838 = vunpack.c.l.s4 1983009808
    %v839 = vunpack.c.0.s8 %v838
    %v840 = vlaneseq
    %v841 = vshrl.u32 %v840, 7
    %v842 = vsub.s32 %v839, %v841
    %v843 = vrot.slane %v807, %v842
    %844 = vrot.lane.b32.xlu0 %v843, 96
    %v845 = vpop.permute.xlu0 %844
    %v847 = vmul.f32 %v816, %v845
    %v848 = vmul.f32 %v832, %v732
    %v849 = vadd.f32 %v847, %v848
    %v850 = vpack.c.bf16 %v835, %v835
    %v852 = vsel %vm270, %v850, 0
    %854 = vmatprep.subr.bf16.mxu0 0
    %855 = vmatpush1.bf16.msra.mxu0 %v28
    %856 = vmatprep.subr.bf16.mxu0 0
    %857 = vmatpush1.bf16.msra.mxu0 %v29
    %858 = vmatprep.subr.bf16.mxu0 0
    %859 = vmatpush1.bf16.msra.mxu0 0
    %860 = vmatprep.subr.bf16.mxu0 0
    %861 = vmatpush1.bf16.msra.mxu0 0
    %862 = vmatprep.subr.bf16.mxu0 0
    %863 = vmatpush1.bf16.msra.mxu0 0
    %864 = vmatprep.subr.bf16.mxu0 0
    %865 = vmatpush1.bf16.msra.mxu0 0
    %866 = vmatprep.subr.bf16.mxu0 0
    %867 = vmatpush1.bf16.msra.mxu0 0
    %868 = vmatprep.subr.bf16.mxu0 0
    %869 = vmatpush1.bf16.msra.mxu0 0
    %870 = vmatprep.subr.bf16.mxu0 0
    %871 = vmatpush1.bf16.msra.mxu0 0
    %872 = vmatprep.subr.bf16.mxu0 0
    %873 = vmatpush1.bf16.msra.mxu0 0
    %874 = vmatprep.subr.bf16.mxu0 0
    %875 = vmatpush1.bf16.msra.mxu0 0
    %876 = vmatprep.subr.bf16.mxu0 0
    %877 = vmatpush1.bf16.msra.mxu0 0
    %878 = vmatprep.subr.bf16.mxu0 0
    %879 = vmatpush1.bf16.msra.mxu0 0
    %880 = vmatprep.subr.bf16.mxu0 0
    %881 = vmatpush1.bf16.msra.mxu0 0
    %882 = vmatprep.subr.bf16.mxu0 0
    %883 = vmatpush1.bf16.msra.mxu0 0
    %884 = vmatprep.subr.bf16.mxu0 0
    %885 = vmatpush1.bf16.msra.mxu0 0
    %886 = vmatprep.mubr.bf16.mxu0 0
    %887 = vmatmul.mubr.bf16.gmra.mrb[0].mxu0 %v852
    %v888 = vpop.f32.mrb[0].mxu0
    %v889 = vadd.f32 0.0, %v888
    %v890 = vpop.f32.mrb[0].mxu0
    %v891 = vpop.f32.mrb[0].mxu0
    %v892 = vpop.f32.mrb[0].mxu0
    %893 = vdwg.mxu0
    %v894 = vadd.f32 %v260, %v889
    %v895 = vadd.f32 %v894, %v318
    %v896 = vxor.u32 %v895, 2147483648
    %v897 = vmul.f32 %v896, 1.442695
    %v898 = vpow.pop %v897
    %v899 = vadd.f32 %v898, 1.0
    %v900 = vrcp.pop %v899
    %v901 = vmul.f32 1.0, %v900
    %v902 = vtanh.pop %v895
    %v905 = vunpack.c.l.s4 1983009808
    %v906 = vunpack.c.0.s8 %v905
    %v907 = vlaneseq
    %v908 = vshrl.u32 %v907, 7
    %v909 = vsub.s32 %v906, %v908
    %v910 = vrot.slane %v849, %v909
    %911 = vrot.lane.b32.xlu0 %v910, 32
    %v912 = vpop.permute.xlu0 %911
    %v914 = vmul.f32 %v901, %v912
    %916 = vrot.lane.b32.xlu0 %v902, 64
    %v917 = vpop.permute.xlu0 %916
    %v919 = vmul.f32 %v901, %v917
    %921 = vrot.lane.b32.xlu0 %v919, 32
    %v922 = vpop.permute.xlu0 %921
    %v924 = vadd.f32 %v914, %v922
    %v925 = vtanh.pop %v924
    %927 = vrot.lane.b32.xlu0 %v925, 64
    %v928 = vpop.permute.xlu0 %927
    %v930 = vmul.f32 %v901, %v928
    %931 = vset.pattern.permute.xlu0 5
    %932 = vperm.xlu0 %931, %v103
    %v933 = vpop.permute.xlu0 %932
    %v937 = vunpack.c.l.s4 1983009808
    %v938 = vunpack.c.0.s8 %v937
    %v939 = vlaneseq
    %v940 = vshrl.u32 %v939, 7
    %v941 = vsub.s32 %v938, %v940
    %v942 = vrot.slane %v930, %v941
    %943 = vrot.lane.b32.xlu0 %v942, 32
    %v944 = vpop.permute.xlu0 %943
    %v946 = vmul.f32 %v933, %v944
    %947 = vset.pattern.permute.xlu0 5
    %948 = vperm.xlu0 %947, %v361
    %v949 = vpop.permute.xlu0 %948
    %v951 = vmul.f32 %v949, %v835
    %v952 = vadd.f32 %v946, %v951
    %v955 = vunpack.c.l.s4 1983009808
    %v956 = vunpack.c.0.s8 %v955
    %v957 = vlaneseq
    %v958 = vshrl.u32 %v957, 7
    %v959 = vsub.s32 %v956, %v958
    %v960 = vrot.slane %v924, %v959
    %961 = vrot.lane.b32.xlu0 %v960, 96
    %v962 = vpop.permute.xlu0 %961
    %v964 = vmul.f32 %v933, %v962
    %v965 = vmul.f32 %v949, %v849
    %v966 = vadd.f32 %v964, %v965
    %v967 = vpack.c.bf16 %v952, %v952
    %v969 = vsel %vm270, %v967, 0
    %971 = vmatprep.subr.bf16.mxu0 0
    %972 = vmatpush1.bf16.msra.mxu0 %v28
    %973 = vmatprep.subr.bf16.mxu0 0
    %974 = vmatpush1.bf16.msra.mxu0 %v29
    %975 = vmatprep.subr.bf16.mxu0 0
    %976 = vmatpush1.bf16.msra.mxu0 0
    %977 = vmatprep.subr.bf16.mxu0 0
    %978 = vmatpush1.bf16.msra.mxu0 0
    %979 = vmatprep.subr.bf16.mxu0 0
    %980 = vmatpush1.bf16.msra.mxu0 0
    %981 = vmatprep.subr.bf16.mxu0 0
    %982 = vmatpush1.bf16.msra.mxu0 0
    %983 = vmatprep.subr.bf16.mxu0 0
    %984 = vmatpush1.bf16.msra.mxu0 0
    %985 = vmatprep.subr.bf16.mxu0 0
    %986 = vmatpush1.bf16.msra.mxu0 0
    %987 = vmatprep.subr.bf16.mxu0 0
    %988 = vmatpush1.bf16.msra.mxu0 0
    %989 = vmatprep.subr.bf16.mxu0 0
    %990 = vmatpush1.bf16.msra.mxu0 0
    %991 = vmatprep.subr.bf16.mxu0 0
    %992 = vmatpush1.bf16.msra.mxu0 0
    %993 = vmatprep.subr.bf16.mxu0 0
    %994 = vmatpush1.bf16.msra.mxu0 0
    %995 = vmatprep.subr.bf16.mxu0 0
    %996 = vmatpush1.bf16.msra.mxu0 0
    %997 = vmatprep.subr.bf16.mxu0 0
    %998 = vmatpush1.bf16.msra.mxu0 0
    %999 = vmatprep.subr.bf16.mxu0 0
    %1000 = vmatpush1.bf16.msra.mxu0 0
    %1001 = vmatprep.subr.bf16.mxu0 0
    %1002 = vmatpush1.bf16.msra.mxu0 0
    %1003 = vmatprep.mubr.bf16.mxu0 0
    %1004 = vmatmul.mubr.bf16.gmra.mrb[0].mxu0 %v969
    %v1005 = vpop.f32.mrb[0].mxu0
    %v1006 = vadd.f32 0.0, %v1005
    %v1007 = vpop.f32.mrb[0].mxu0
    %v1008 = vpop.f32.mrb[0].mxu0
    %v1009 = vpop.f32.mrb[0].mxu0
    %1010 = vdwg.mxu0
    %v1011 = vadd.f32 %v259, %v1006
    %v1012 = vadd.f32 %v1011, %v318
    %v1013 = vxor.u32 %v1012, 2147483648
    %v1014 = vmul.f32 %v1013, 1.442695
    %v1015 = vpow.pop %v1014
    %v1016 = vadd.f32 %v1015, 1.0
    %v1017 = vrcp.pop %v1016
    %v1018 = vmul.f32 1.0, %v1017
    %v1019 = vtanh.pop %v1012
    %v1022 = vunpack.c.l.s4 1983009808
    %v1023 = vunpack.c.0.s8 %v1022
    %v1024 = vlaneseq
    %v1025 = vshrl.u32 %v1024, 7
    %v1026 = vsub.s32 %v1023, %v1025
    %v1027 = vrot.slane %v966, %v1026
    %1028 = vrot.lane.b32.xlu0 %v1027, 32
    %v1029 = vpop.permute.xlu0 %1028
    %v1031 = vmul.f32 %v1018, %v1029
    %1033 = vrot.lane.b32.xlu0 %v1019, 64
    %v1034 = vpop.permute.xlu0 %1033
    %v1036 = vmul.f32 %v1018, %v1034
    %1038 = vrot.lane.b32.xlu0 %v1036, 32
    %v1039 = vpop.permute.xlu0 %1038
    %v1041 = vadd.f32 %v1031, %v1039
    %v1042 = vtanh.pop %v1041
    %1044 = vrot.lane.b32.xlu0 %v1042, 64
    %v1045 = vpop.permute.xlu0 %1044
    %v1047 = vmul.f32 %v1018, %v1045
    %1048 = vset.pattern.permute.xlu0 6
    %1049 = vperm.xlu0 %1048, %v103
    %v1050 = vpop.permute.xlu0 %1049
    %v1054 = vunpack.c.l.s4 1983009808
    %v1055 = vunpack.c.0.s8 %v1054
    %v1056 = vlaneseq
    %v1057 = vshrl.u32 %v1056, 7
    %v1058 = vsub.s32 %v1055, %v1057
    %v1059 = vrot.slane %v1047, %v1058
    %1060 = vrot.lane.b32.xlu0 %v1059, 32
    %v1061 = vpop.permute.xlu0 %1060
    %v1063 = vmul.f32 %v1050, %v1061
    %1064 = vset.pattern.permute.xlu0 6
    %1065 = vperm.xlu0 %1064, %v361
    %v1066 = vpop.permute.xlu0 %1065
    %v1068 = vmul.f32 %v1066, %v952
    %v1069 = vadd.f32 %v1063, %v1068
    %v1072 = vunpack.c.l.s4 1983009808
    %v1073 = vunpack.c.0.s8 %v1072
    %v1074 = vlaneseq
    %v1075 = vshrl.u32 %v1074, 7
    %v1076 = vsub.s32 %v1073, %v1075
    %v1077 = vrot.slane %v1041, %v1076
    %1078 = vrot.lane.b32.xlu0 %v1077, 96
    %v1079 = vpop.permute.xlu0 %1078
    %v1081 = vmul.f32 %v1050, %v1079
    %v1082 = vmul.f32 %v1066, %v966
    %v1083 = vadd.f32 %v1081, %v1082
    %v1084 = vpack.c.bf16 %v1069, %v1069
    %v1086 = vsel %vm270, %v1084, 0
    %1088 = vmatprep.subr.bf16.mxu0 0
    %1089 = vmatpush1.bf16.msra.mxu0 %v28
    %1090 = vmatprep.subr.bf16.mxu0 0
    %1091 = vmatpush1.bf16.msra.mxu0 %v29
    %1092 = vmatprep.subr.bf16.mxu0 0
    %1093 = vmatpush1.bf16.msra.mxu0 0
    %1094 = vmatprep.subr.bf16.mxu0 0
    %1095 = vmatpush1.bf16.msra.mxu0 0
    %1096 = vmatprep.subr.bf16.mxu0 0
    %1097 = vmatpush1.bf16.msra.mxu0 0
    %1098 = vmatprep.subr.bf16.mxu0 0
    %1099 = vmatpush1.bf16.msra.mxu0 0
    %1100 = vmatprep.subr.bf16.mxu0 0
    %1101 = vmatpush1.bf16.msra.mxu0 0
    %1102 = vmatprep.subr.bf16.mxu0 0
    %1103 = vmatpush1.bf16.msra.mxu0 0
    %1104 = vmatprep.subr.bf16.mxu0 0
    %1105 = vmatpush1.bf16.msra.mxu0 0
    %1106 = vmatprep.subr.bf16.mxu0 0
    %1107 = vmatpush1.bf16.msra.mxu0 0
    %1108 = vmatprep.subr.bf16.mxu0 0
    %1109 = vmatpush1.bf16.msra.mxu0 0
    %1110 = vmatprep.subr.bf16.mxu0 0
    %1111 = vmatpush1.bf16.msra.mxu0 0
    %1112 = vmatprep.subr.bf16.mxu0 0
    %1113 = vmatpush1.bf16.msra.mxu0 0
    %1114 = vmatprep.subr.bf16.mxu0 0
    %1115 = vmatpush1.bf16.msra.mxu0 0
    %1116 = vmatprep.subr.bf16.mxu0 0
    %1117 = vmatpush1.bf16.msra.mxu0 0
    %1118 = vmatprep.subr.bf16.mxu0 0
    %1119 = vmatpush1.bf16.msra.mxu0 0
    %1120 = vmatprep.mubr.bf16.mxu0 0
    %1121 = vmatmul.mubr.bf16.gmra.mrb[0].mxu0 %v1086
    %v1122 = vpop.f32.mrb[0].mxu0
    %v1123 = vadd.f32 0.0, %v1122
    %v1124 = vpop.f32.mrb[0].mxu0
    %v1125 = vpop.f32.mrb[0].mxu0
    %v1126 = vpop.f32.mrb[0].mxu0
    %1127 = vdwg.mxu0
    %v1128 = vadd.f32 %v261, %v1123
    %v1129 = vadd.f32 %v1128, %v318
    %v1130 = vxor.u32 %v1129, 2147483648
    %v1131 = vmul.f32 %v1130, 1.442695
    %v1132 = vpow.pop %v1131
    %v1133 = vadd.f32 %v1132, 1.0
    %v1134 = vrcp.pop %v1133
    %v1135 = vmul.f32 1.0, %v1134
    %v1136 = vtanh.pop %v1129
    %v1139 = vunpack.c.l.s4 1983009808
    %v1140 = vunpack.c.0.s8 %v1139
    %v1141 = vlaneseq
    %v1142 = vshrl.u32 %v1141, 7
    %v1143 = vsub.s32 %v1140, %v1142
    %v1144 = vrot.slane %v1083, %v1143
    %1145 = vrot.lane.b32.xlu0 %v1144, 32
    %v1146 = vpop.permute.xlu0 %1145
    %v1148 = vmul.f32 %v1135, %v1146
    %1150 = vrot.lane.b32.xlu0 %v1136, 64
    %v1151 = vpop.permute.xlu0 %1150
    %v1153 = vmul.f32 %v1135, %v1151
    %1155 = vrot.lane.b32.xlu0 %v1153, 32
    %v1156 = vpop.permute.xlu0 %1155
    %v1158 = vadd.f32 %v1148, %v1156
    %v1159 = vtanh.pop %v1158
    %1161 = vrot.lane.b32.xlu0 %v1159, 64
    %v1162 = vpop.permute.xlu0 %1161
    %v1164 = vmul.f32 %v1135, %v1162
    %1165 = vset.pattern.permute.xlu0 7
    %1166 = vperm.xlu0 %1165, %v103
    %v1167 = vpop.permute.xlu0 %1166
    %v1171 = vunpack.c.l.s4 1983009808
    %v1172 = vunpack.c.0.s8 %v1171
    %v1173 = vlaneseq
    %v1174 = vshrl.u32 %v1173, 7
    %v1175 = vsub.s32 %v1172, %v1174
    %v1176 = vrot.slane %v1164, %v1175
    %1177 = vrot.lane.b32.xlu0 %v1176, 32
    %v1178 = vpop.permute.xlu0 %1177
    %v1180 = vmul.f32 %v1167, %v1178
    %1181 = vset.pattern.permute.xlu0 7
    %1182 = vperm.xlu0 %1181, %v361
    %v1183 = vpop.permute.xlu0 %1182
    %v1185 = vmul.f32 %v1183, %v1069
    %v1186 = vadd.f32 %v1180, %v1185
    %v1189 = vunpack.c.l.s4 1983009808
    %v1190 = vunpack.c.0.s8 %v1189
    %v1191 = vlaneseq
    %v1192 = vshrl.u32 %v1191, 7
    %v1193 = vsub.s32 %v1190, %v1192
    %v1194 = vrot.slane %v1158, %v1193
    %1195 = vrot.lane.b32.xlu0 %v1194, 96
    %v1196 = vpop.permute.xlu0 %1195
    %v1198 = vmul.f32 %v1167, %v1196
    %v1199 = vmul.f32 %v1183, %v1083
    %v1200 = vadd.f32 %v1198, %v1199
    %v1203 = vunpack.c.l.s4 1966171168
    %v1204 = vunpack.c.0.s8 %v1203
    %v1205 = vlaneseq
    %v1206 = vshrl.u32 %v1205, 7
    %v1207 = vsub.s32 %v1204, %v1206
    %v1208 = vrot.slane %v360, %v1207
    %v1209 = vcombine.high %v1208, %v1208
    %v1211 = vunpack.c.l.s4 1966171168
    %v1212 = vunpack.c.0.s8 %v1211
    %v1213 = vlaneseq
    %v1214 = vshrl.u32 %v1213, 7
    %v1215 = vsub.s32 %v1212, %v1214
    %v1216 = vrot.slane %v1208, %v1215
    %v1218 = vunpack.c.l.s4 1966171168
    %v1219 = vunpack.c.0.s8 %v1218
    %v1220 = vlaneseq
    %v1221 = vshrl.u32 %v1220, 7
    %v1222 = vsub.s32 %v1219, %v1221
    %v1223 = vrot.slane %v1209, %v1222
    %v1228 = vunpack.c.l.s4 1966171168
    %v1229 = vunpack.c.0.s8 %v1228
    %v1230 = vlaneseq
    %v1231 = vshrl.u32 %v1230, 7
    %v1232 = vsub.s32 %v1229, %v1231
    %v1233 = vrot.slane %v478, %v1232
    %v1234 = vcombine.high %v1233, %v1233
    %v1236 = vunpack.c.l.s4 1966171168
    %v1237 = vunpack.c.0.s8 %v1236
    %v1238 = vlaneseq
    %v1239 = vshrl.u32 %v1238, 7
    %v1240 = vsub.s32 %v1237, %v1239
    %v1241 = vrot.slane %v1233, %v1240
    %v1243 = vunpack.c.l.s4 1966171168
    %v1244 = vunpack.c.0.s8 %v1243
    %v1245 = vlaneseq
    %v1246 = vshrl.u32 %v1245, 7
    %v1247 = vsub.s32 %v1244, %v1246
    %v1248 = vrot.slane %v1234, %v1247
    %v1251 = vunpack.c.l.s4 1966171168
    %v1252 = vunpack.c.0.s8 %v1251
    %v1253 = vlaneseq
    %v1254 = vshrl.u32 %v1253, 7
    %v1255 = vsub.s32 %v1252, %v1254
    %v1256 = vrot.slane %v595, %v1255
    %v1257 = vcombine.high %v1256, %v1256
    %v1259 = vunpack.c.l.s4 1966171168
    %v1260 = vunpack.c.0.s8 %v1259
    %v1261 = vlaneseq
    %v1262 = vshrl.u32 %v1261, 7
    %v1263 = vsub.s32 %v1260, %v1262
    %v1264 = vrot.slane %v1256, %v1263
    %v1266 = vunpack.c.l.s4 1966171168
    %v1267 = vunpack.c.0.s8 %v1266
    %v1268 = vlaneseq
    %v1269 = vshrl.u32 %v1268, 7
    %v1270 = vsub.s32 %v1267, %v1269
    %v1271 = vrot.slane %v1257, %v1270
    %v1274 = vunpack.c.l.s4 1966171168
    %v1275 = vunpack.c.0.s8 %v1274
    %v1276 = vlaneseq
    %v1277 = vshrl.u32 %v1276, 7
    %v1278 = vsub.s32 %v1275, %v1277
    %v1279 = vrot.slane %v712, %v1278
    %v1280 = vcombine.high %v1279, %v1279
    %v1282 = vunpack.c.l.s4 1966171168
    %v1283 = vunpack.c.0.s8 %v1282
    %v1284 = vlaneseq
    %v1285 = vshrl.u32 %v1284, 7
    %v1286 = vsub.s32 %v1283, %v1285
    %v1287 = vrot.slane %v1279, %v1286
    %v1289 = vunpack.c.l.s4 1966171168
    %v1290 = vunpack.c.0.s8 %v1289
    %v1291 = vlaneseq
    %v1292 = vshrl.u32 %v1291, 7
    %v1293 = vsub.s32 %v1290, %v1292
    %v1294 = vrot.slane %v1280, %v1293
    %v1297 = vunpack.c.l.s4 1966171168
    %v1298 = vunpack.c.0.s8 %v1297
    %v1299 = vlaneseq
    %v1300 = vshrl.u32 %v1299, 7
    %v1301 = vsub.s32 %v1298, %v1300
    %v1302 = vrot.slane %v829, %v1301
    %v1303 = vcombine.high %v1302, %v1302
    %v1305 = vunpack.c.l.s4 1966171168
    %v1306 = vunpack.c.0.s8 %v1305
    %v1307 = vlaneseq
    %v1308 = vshrl.u32 %v1307, 7
    %v1309 = vsub.s32 %v1306, %v1308
    %v1310 = vrot.slane %v1302, %v1309
    %v1312 = vunpack.c.l.s4 1966171168
    %v1313 = vunpack.c.0.s8 %v1312
    %v1314 = vlaneseq
    %v1315 = vshrl.u32 %v1314, 7
    %v1316 = vsub.s32 %v1313, %v1315
    %v1317 = vrot.slane %v1303, %v1316
    %v1320 = vunpack.c.l.s4 1966171168
    %v1321 = vunpack.c.0.s8 %v1320
    %v1322 = vlaneseq
    %v1323 = vshrl.u32 %v1322, 7
    %v1324 = vsub.s32 %v1321, %v1323
    %v1325 = vrot.slane %v946, %v1324
    %v1326 = vcombine.high %v1325, %v1325
    %v1328 = vunpack.c.l.s4 1966171168
    %v1329 = vunpack.c.0.s8 %v1328
    %v1330 = vlaneseq
    %v1331 = vshrl.u32 %v1330, 7
    %v1332 = vsub.s32 %v1329, %v1331
    %v1333 = vrot.slane %v1325, %v1332
    %v1335 = vunpack.c.l.s4 1966171168
    %v1336 = vunpack.c.0.s8 %v1335
    %v1337 = vlaneseq
    %v1338 = vshrl.u32 %v1337, 7
    %v1339 = vsub.s32 %v1336, %v1338
    %v1340 = vrot.slane %v1326, %v1339
    %v1343 = vunpack.c.l.s4 1966171168
    %v1344 = vunpack.c.0.s8 %v1343
    %v1345 = vlaneseq
    %v1346 = vshrl.u32 %v1345, 7
    %v1347 = vsub.s32 %v1344, %v1346
    %v1348 = vrot.slane %v1063, %v1347
    %v1349 = vcombine.high %v1348, %v1348
    %v1351 = vunpack.c.l.s4 1966171168
    %v1352 = vunpack.c.0.s8 %v1351
    %v1353 = vlaneseq
    %v1354 = vshrl.u32 %v1353, 7
    %v1355 = vsub.s32 %v1352, %v1354
    %v1356 = vrot.slane %v1348, %v1355
    %v1358 = vunpack.c.l.s4 1966171168
    %v1359 = vunpack.c.0.s8 %v1358
    %v1360 = vlaneseq
    %v1361 = vshrl.u32 %v1360, 7
    %v1362 = vsub.s32 %v1359, %v1361
    %v1363 = vrot.slane %v1349, %v1362
    %v1366 = vunpack.c.l.s4 1966171168
    %v1367 = vunpack.c.0.s8 %v1366
    %v1368 = vlaneseq
    %v1369 = vshrl.u32 %v1368, 7
    %v1370 = vsub.s32 %v1367, %v1369
    %v1371 = vrot.slane %v1180, %v1370
    %v1372 = vcombine.high %v1371, %v1371
    %v1374 = vunpack.c.l.s4 1966171168
    %v1375 = vunpack.c.0.s8 %v1374
    %v1376 = vlaneseq
    %v1377 = vshrl.u32 %v1376, 7
    %v1378 = vsub.s32 %v1375, %v1377
    %v1379 = vrot.slane %v1371, %v1378
    %v1381 = vunpack.c.l.s4 1966171168
    %v1382 = vunpack.c.0.s8 %v1381
    %v1383 = vlaneseq
    %v1384 = vshrl.u32 %v1383, 7
    %v1385 = vsub.s32 %v1382, %v1384
    %v1386 = vrot.slane %v1372, %v1385
    %v1387 = vlaneseq
    %v1388 = vshrl.u32 %v1387, 7
    %v1389 = vsub.s32 0, %v1388
    %v1390 = vrot.slane %v1241, %v1389
    %v1391 = vlaneseq
    %v1392 = vshrl.u32 %v1391, 7
    %v1393 = vsub.s32 0, %v1392
    %v1394 = vrot.slane %v1248, %v1393
    %v1397 = vlaneseq
    %v1398 = vshrl.u32 %v1397, 7
    %v1399 = vsub.s32 0, %v1398
    %v1400 = vrot.slane %v1264, %v1399
    %v1401 = vlaneseq
    %v1402 = vshrl.u32 %v1401, 7
    %v1403 = vsub.s32 0, %v1402
    %v1404 = vrot.slane %v1271, %v1403
    %v1407 = vlaneseq
    %v1408 = vshrl.u32 %v1407, 7
    %v1409 = vsub.s32 0, %v1408
    %v1410 = vrot.slane %v1287, %v1409
    %v1411 = vlaneseq
    %v1412 = vshrl.u32 %v1411, 7
    %v1413 = vsub.s32 0, %v1412
    %v1414 = vrot.slane %v1294, %v1413
    %v1417 = vlaneseq
    %v1418 = vshrl.u32 %v1417, 7
    %v1419 = vsub.s32 0, %v1418
    %v1420 = vrot.slane %v1310, %v1419
    %v1421 = vlaneseq
    %v1422 = vshrl.u32 %v1421, 7
    %v1423 = vsub.s32 0, %v1422
    %v1424 = vrot.slane %v1317, %v1423
    %v1427 = vlaneseq
    %v1428 = vshrl.u32 %v1427, 7
    %v1429 = vsub.s32 0, %v1428
    %v1430 = vrot.slane %v1333, %v1429
    %v1431 = vlaneseq
    %v1432 = vshrl.u32 %v1431, 7
    %v1433 = vsub.s32 0, %v1432
    %v1434 = vrot.slane %v1340, %v1433
    %v1437 = vlaneseq
    %v1438 = vshrl.u32 %v1437, 7
    %v1439 = vsub.s32 0, %v1438
    %v1440 = vrot.slane %v1356, %v1439
    %v1441 = vlaneseq
    %v1442 = vshrl.u32 %v1441, 7
    %v1443 = vsub.s32 0, %v1442
    %v1444 = vrot.slane %v1363, %v1443
    %v1447 = vlaneseq
    %v1448 = vshrl.u32 %v1447, 7
    %v1449 = vsub.s32 0, %v1448
    %v1450 = vrot.slane %v1379, %v1449
    %v1451 = vlaneseq
    %v1452 = vshrl.u32 %v1451, 7
    %v1453 = vsub.s32 0, %v1452
    %v1454 = vrot.slane %v1386, %v1453
    %vm1457 = vcmask 1040384
    %v1458 = vsel %vm1457, %v1216, %v1390
    %v1459 = vsel %vm1457, %v1223, %v1394
    %vm1460 = vcmask 1041408
    %v1461 = vsel %vm1460, %v1458, %v1400
    %v1462 = vsel %vm1460, %v1459, %v1404
    %vm1463 = vcmask 1042432
    %v1464 = vsel %vm1463, %v1461, %v1410
    %v1465 = vsel %vm1463, %v1462, %v1414
    %v1466 = vsel %vm181, %v1464, %v1420
    %v1467 = vsel %vm181, %v1465, %v1424
    %vm1468 = vcmask 1044480
    %v1469 = vsel %vm1468, %v1466, %v1430
    %v1470 = vsel %vm1468, %v1467, %v1434
    %vm1471 = vcmask 1045504
    %v1472 = vsel %vm1471, %v1469, %v1440
    %v1473 = vsel %vm1471, %v1470, %v1444
    %vm1474 = vcmask 1046528
    %v1475 = vsel %vm1474, %v1472, %v1450
    %v1476 = vsel %vm1474, %v1473, %v1454
    %v1477 = vpack.c.bf16 %v1475, %v1475
    %v1478 = vpack.c.bf16 %v1476, %v1476
    %v1480 = vsel %vm177, %v112, 0
    %v1483 = vsel %vm181, %v71, 0
    %1485 = vmatprep.subr.bf16.mxu0 0
    %1486 = vmatpush1.bf16.msra.mxu0 %v1483
    %1487 = vmatprep.subr.bf16.mxu0 0
    %1488 = vmatpush1.bf16.msra.mxu0 0
    %1489 = vmatprep.subr.bf16.mxu0 0
    %1490 = vmatpush1.bf16.msra.mxu0 0
    %1491 = vmatprep.subr.bf16.mxu0 0
    %1492 = vmatpush1.bf16.msra.mxu0 0
    %1493 = vmatprep.subr.bf16.mxu0 0
    %1494 = vmatpush1.bf16.msra.mxu0 0
    %1495 = vmatprep.subr.bf16.mxu0 0
    %1496 = vmatpush1.bf16.msra.mxu0 0
    %1497 = vmatprep.subr.bf16.mxu0 0
    %1498 = vmatpush1.bf16.msra.mxu0 0
    %1499 = vmatprep.subr.bf16.mxu0 0
    %1500 = vmatpush1.bf16.msra.mxu0 0
    %1501 = vmatprep.subr.bf16.mxu0 0
    %1502 = vmatpush1.bf16.msra.mxu0 0
    %1503 = vmatprep.subr.bf16.mxu0 0
    %1504 = vmatpush1.bf16.msra.mxu0 0
    %1505 = vmatprep.subr.bf16.mxu0 0
    %1506 = vmatpush1.bf16.msra.mxu0 0
    %1507 = vmatprep.subr.bf16.mxu0 0
    %1508 = vmatpush1.bf16.msra.mxu0 0
    %1509 = vmatprep.subr.bf16.mxu0 0
    %1510 = vmatpush1.bf16.msra.mxu0 0
    %1511 = vmatprep.subr.bf16.mxu0 0
    %1512 = vmatpush1.bf16.msra.mxu0 0
    %1513 = vmatprep.subr.bf16.mxu0 0
    %1514 = vmatpush1.bf16.msra.mxu0 0
    %1515 = vmatprep.subr.bf16.mxu0 0
    %1516 = vmatpush1.bf16.msra.mxu0 0
    %1517 = vmatprep.mubr.bf16.mxu0 0
    %1518 = vmatmul.mubr.bf16.gmra.mrb[0].mxu0 %v1480
    %v1519 = vpop.f32.mrb[0].mxu0
    %v1520 = vadd.f32 0.0, %v1519
    %v1521 = vpop.f32.mrb[0].mxu0
    %v1522 = vpop.f32.mrb[0].mxu0
    %v1523 = vpop.f32.mrb[0].mxu0
    %1524 = vdwg.mxu0
    %v1526 = vsel %vm177, %v113, 0
    %v1529 = vsel %vm181, %v72, 0
    %1531 = vmatprep.subr.bf16.mxu0 0
    %1532 = vmatpush1.bf16.msra.mxu0 %v1529
    %1533 = vmatprep.subr.bf16.mxu0 0
    %1534 = vmatpush1.bf16.msra.mxu0 0
    %1535 = vmatprep.subr.bf16.mxu0 0
    %1536 = vmatpush1.bf16.msra.mxu0 0
    %1537 = vmatprep.subr.bf16.mxu0 0
    %1538 = vmatpush1.bf16.msra.mxu0 0
    %1539 = vmatprep.subr.bf16.mxu0 0
    %1540 = vmatpush1.bf16.msra.mxu0 0
    %1541 = vmatprep.subr.bf16.mxu0 0
    %1542 = vmatpush1.bf16.msra.mxu0 0
    %1543 = vmatprep.subr.bf16.mxu0 0
    %1544 = vmatpush1.bf16.msra.mxu0 0
    %1545 = vmatprep.subr.bf16.mxu0 0
    %1546 = vmatpush1.bf16.msra.mxu0 0
    %1547 = vmatprep.subr.bf16.mxu0 0
    %1548 = vmatpush1.bf16.msra.mxu0 0
    %1549 = vmatprep.subr.bf16.mxu0 0
    %1550 = vmatpush1.bf16.msra.mxu0 0
    %1551 = vmatprep.subr.bf16.mxu0 0
    %1552 = vmatpush1.bf16.msra.mxu0 0
    %1553 = vmatprep.subr.bf16.mxu0 0
    %1554 = vmatpush1.bf16.msra.mxu0 0
    %1555 = vmatprep.subr.bf16.mxu0 0
    %1556 = vmatpush1.bf16.msra.mxu0 0
    %1557 = vmatprep.subr.bf16.mxu0 0
    %1558 = vmatpush1.bf16.msra.mxu0 0
    %1559 = vmatprep.subr.bf16.mxu0 0
    %1560 = vmatpush1.bf16.msra.mxu0 0
    %1561 = vmatprep.subr.bf16.mxu0 0
    %1562 = vmatpush1.bf16.msra.mxu0 0
    %1563 = vmatprep.mubr.bf16.mxu0 0
    %1564 = vmatmul.mubr.bf16.gmra.mrb[0].mxu0 %v1526
    %v1565 = vpop.f32.mrb[0].mxu0
    %v1566 = vadd.f32 0.0, %v1565
    %v1567 = vpop.f32.mrb[0].mxu0
    %v1568 = vpop.f32.mrb[0].mxu0
    %v1569 = vpop.f32.mrb[0].mxu0
    %1570 = vdwg.mxu0
    %v1572 = vsel %vm177, %v114, 0
    %v1575 = vsel %vm181, %v73, 0
    %1577 = vmatprep.subr.bf16.mxu0 0
    %1578 = vmatpush1.bf16.msra.mxu0 %v1575
    %1579 = vmatprep.subr.bf16.mxu0 0
    %1580 = vmatpush1.bf16.msra.mxu0 0
    %1581 = vmatprep.subr.bf16.mxu0 0
    %1582 = vmatpush1.bf16.msra.mxu0 0
    %1583 = vmatprep.subr.bf16.mxu0 0
    %1584 = vmatpush1.bf16.msra.mxu0 0
    %1585 = vmatprep.subr.bf16.mxu0 0
    %1586 = vmatpush1.bf16.msra.mxu0 0
    %1587 = vmatprep.subr.bf16.mxu0 0
    %1588 = vmatpush1.bf16.msra.mxu0 0
    %1589 = vmatprep.subr.bf16.mxu0 0
    %1590 = vmatpush1.bf16.msra.mxu0 0
    %1591 = vmatprep.subr.bf16.mxu0 0
    %1592 = vmatpush1.bf16.msra.mxu0 0
    %1593 = vmatprep.subr.bf16.mxu0 0
    %1594 = vmatpush1.bf16.msra.mxu0 0
    %1595 = vmatprep.subr.bf16.mxu0 0
    %1596 = vmatpush1.bf16.msra.mxu0 0
    %1597 = vmatprep.subr.bf16.mxu0 0
    %1598 = vmatpush1.bf16.msra.mxu0 0
    %1599 = vmatprep.subr.bf16.mxu0 0
    %1600 = vmatpush1.bf16.msra.mxu0 0
    %1601 = vmatprep.subr.bf16.mxu0 0
    %1602 = vmatpush1.bf16.msra.mxu0 0
    %1603 = vmatprep.subr.bf16.mxu0 0
    %1604 = vmatpush1.bf16.msra.mxu0 0
    %1605 = vmatprep.subr.bf16.mxu0 0
    %1606 = vmatpush1.bf16.msra.mxu0 0
    %1607 = vmatprep.subr.bf16.mxu0 0
    %1608 = vmatpush1.bf16.msra.mxu0 0
    %1609 = vmatprep.mubr.bf16.mxu0 0
    %1610 = vmatmul.mubr.bf16.gmra.mrb[0].mxu0 %v1572
    %v1611 = vpop.f32.mrb[0].mxu0
    %v1612 = vadd.f32 0.0, %v1611
    %v1613 = vpop.f32.mrb[0].mxu0
    %v1614 = vpop.f32.mrb[0].mxu0
    %v1615 = vpop.f32.mrb[0].mxu0
    %1616 = vdwg.mxu0
    %v1618 = vsel %vm177, %v115, 0
    %v1621 = vsel %vm181, %v74, 0
    %1623 = vmatprep.subr.bf16.mxu0 0
    %1624 = vmatpush1.bf16.msra.mxu0 %v1621
    %1625 = vmatprep.subr.bf16.mxu0 0
    %1626 = vmatpush1.bf16.msra.mxu0 0
    %1627 = vmatprep.subr.bf16.mxu0 0
    %1628 = vmatpush1.bf16.msra.mxu0 0
    %1629 = vmatprep.subr.bf16.mxu0 0
    %1630 = vmatpush1.bf16.msra.mxu0 0
    %1631 = vmatprep.subr.bf16.mxu0 0
    %1632 = vmatpush1.bf16.msra.mxu0 0
    %1633 = vmatprep.subr.bf16.mxu0 0
    %1634 = vmatpush1.bf16.msra.mxu0 0
    %1635 = vmatprep.subr.bf16.mxu0 0
    %1636 = vmatpush1.bf16.msra.mxu0 0
    %1637 = vmatprep.subr.bf16.mxu0 0
    %1638 = vmatpush1.bf16.msra.mxu0 0
    %1639 = vmatprep.subr.bf16.mxu0 0
    %1640 = vmatpush1.bf16.msra.mxu0 0
    %1641 = vmatprep.subr.bf16.mxu0 0
    %1642 = vmatpush1.bf16.msra.mxu0 0
    %1643 = vmatprep.subr.bf16.mxu0 0
    %1644 = vmatpush1.bf16.msra.mxu0 0
    %1645 = vmatprep.subr.bf16.mxu0 0
    %1646 = vmatpush1.bf16.msra.mxu0 0
    %1647 = vmatprep.subr.bf16.mxu0 0
    %1648 = vmatpush1.bf16.msra.mxu0 0
    %1649 = vmatprep.subr.bf16.mxu0 0
    %1650 = vmatpush1.bf16.msra.mxu0 0
    %1651 = vmatprep.subr.bf16.mxu0 0
    %1652 = vmatpush1.bf16.msra.mxu0 0
    %1653 = vmatprep.subr.bf16.mxu0 0
    %1654 = vmatpush1.bf16.msra.mxu0 0
    %1655 = vmatprep.mubr.bf16.mxu0 0
    %1656 = vmatmul.mubr.bf16.gmra.mrb[0].mxu0 %v1618
    %v1657 = vpop.f32.mrb[0].mxu0
    %v1658 = vadd.f32 0.0, %v1657
    %v1659 = vpop.f32.mrb[0].mxu0
    %v1660 = vpop.f32.mrb[0].mxu0
    %v1661 = vpop.f32.mrb[0].mxu0
    %1662 = vdwg.mxu0
    %v1664 = vsel %vm177, %v116, 0
    %v1667 = vsel %vm181, %v75, 0
    %1669 = vmatprep.subr.bf16.mxu0 0
    %1670 = vmatpush1.bf16.msra.mxu0 %v1667
    %1671 = vmatprep.subr.bf16.mxu0 0
    %1672 = vmatpush1.bf16.msra.mxu0 0
    %1673 = vmatprep.subr.bf16.mxu0 0
    %1674 = vmatpush1.bf16.msra.mxu0 0
    %1675 = vmatprep.subr.bf16.mxu0 0
    %1676 = vmatpush1.bf16.msra.mxu0 0
    %1677 = vmatprep.subr.bf16.mxu0 0
    %1678 = vmatpush1.bf16.msra.mxu0 0
    %1679 = vmatprep.subr.bf16.mxu0 0
    %1680 = vmatpush1.bf16.msra.mxu0 0
    %1681 = vmatprep.subr.bf16.mxu0 0
    %1682 = vmatpush1.bf16.msra.mxu0 0
    %1683 = vmatprep.subr.bf16.mxu0 0
    %1684 = vmatpush1.bf16.msra.mxu0 0
    %1685 = vmatprep.subr.bf16.mxu0 0
    %1686 = vmatpush1.bf16.msra.mxu0 0
    %1687 = vmatprep.subr.bf16.mxu0 0
    %1688 = vmatpush1.bf16.msra.mxu0 0
    %1689 = vmatprep.subr.bf16.mxu0 0
    %1690 = vmatpush1.bf16.msra.mxu0 0
    %1691 = vmatprep.subr.bf16.mxu0 0
    %1692 = vmatpush1.bf16.msra.mxu0 0
    %1693 = vmatprep.subr.bf16.mxu0 0
    %1694 = vmatpush1.bf16.msra.mxu0 0
    %1695 = vmatprep.subr.bf16.mxu0 0
    %1696 = vmatpush1.bf16.msra.mxu0 0
    %1697 = vmatprep.subr.bf16.mxu0 0
    %1698 = vmatpush1.bf16.msra.mxu0 0
    %1699 = vmatprep.subr.bf16.mxu0 0
    %1700 = vmatpush1.bf16.msra.mxu0 0
    %1701 = vmatprep.mubr.bf16.mxu0 0
    %1702 = vmatmul.mubr.bf16.gmra.mrb[0].mxu0 %v1664
    %v1703 = vpop.f32.mrb[0].mxu0
    %v1704 = vadd.f32 0.0, %v1703
    %v1705 = vpop.f32.mrb[0].mxu0
    %v1706 = vpop.f32.mrb[0].mxu0
    %v1707 = vpop.f32.mrb[0].mxu0
    %1708 = vdwg.mxu0
    %v1710 = vsel %vm177, %v117, 0
    %v1713 = vsel %vm181, %v76, 0
    %1715 = vmatprep.subr.bf16.mxu0 0
    %1716 = vmatpush1.bf16.msra.mxu0 %v1713
    %1717 = vmatprep.subr.bf16.mxu0 0
    %1718 = vmatpush1.bf16.msra.mxu0 0
    %1719 = vmatprep.subr.bf16.mxu0 0
    %1720 = vmatpush1.bf16.msra.mxu0 0
    %1721 = vmatprep.subr.bf16.mxu0 0
    %1722 = vmatpush1.bf16.msra.mxu0 0
    %1723 = vmatprep.subr.bf16.mxu0 0
    %1724 = vmatpush1.bf16.msra.mxu0 0
    %1725 = vmatprep.subr.bf16.mxu0 0
    %1726 = vmatpush1.bf16.msra.mxu0 0
    %1727 = vmatprep.subr.bf16.mxu0 0
    %1728 = vmatpush1.bf16.msra.mxu0 0
    %1729 = vmatprep.subr.bf16.mxu0 0
    %1730 = vmatpush1.bf16.msra.mxu0 0
    %1731 = vmatprep.subr.bf16.mxu0 0
    %1732 = vmatpush1.bf16.msra.mxu0 0
    %1733 = vmatprep.subr.bf16.mxu0 0
    %1734 = vmatpush1.bf16.msra.mxu0 0
    %1735 = vmatprep.subr.bf16.mxu0 0
    %1736 = vmatpush1.bf16.msra.mxu0 0
    %1737 = vmatprep.subr.bf16.mxu0 0
    %1738 = vmatpush1.bf16.msra.mxu0 0
    %1739 = vmatprep.subr.bf16.mxu0 0
    %1740 = vmatpush1.bf16.msra.mxu0 0
    %1741 = vmatprep.subr.bf16.mxu0 0
    %1742 = vmatpush1.bf16.msra.mxu0 0
    %1743 = vmatprep.subr.bf16.mxu0 0
    %1744 = vmatpush1.bf16.msra.mxu0 0
    %1745 = vmatprep.subr.bf16.mxu0 0
    %1746 = vmatpush1.bf16.msra.mxu0 0
    %1747 = vmatprep.mubr.bf16.mxu0 0
    %1748 = vmatmul.mubr.bf16.gmra.mrb[0].mxu0 %v1710
    %v1749 = vpop.f32.mrb[0].mxu0
    %v1750 = vadd.f32 0.0, %v1749
    %v1751 = vpop.f32.mrb[0].mxu0
    %v1752 = vpop.f32.mrb[0].mxu0
    %v1753 = vpop.f32.mrb[0].mxu0
    %1754 = vdwg.mxu0
    %v1756 = vsel %vm177, %v118, 0
    %v1759 = vsel %vm181, %v77, 0
    %1761 = vmatprep.subr.bf16.mxu0 0
    %1762 = vmatpush1.bf16.msra.mxu0 %v1759
    %1763 = vmatprep.subr.bf16.mxu0 0
    %1764 = vmatpush1.bf16.msra.mxu0 0
    %1765 = vmatprep.subr.bf16.mxu0 0
    %1766 = vmatpush1.bf16.msra.mxu0 0
    %1767 = vmatprep.subr.bf16.mxu0 0
    %1768 = vmatpush1.bf16.msra.mxu0 0
    %1769 = vmatprep.subr.bf16.mxu0 0
    %1770 = vmatpush1.bf16.msra.mxu0 0
    %1771 = vmatprep.subr.bf16.mxu0 0
    %1772 = vmatpush1.bf16.msra.mxu0 0
    %1773 = vmatprep.subr.bf16.mxu0 0
    %1774 = vmatpush1.bf16.msra.mxu0 0
    %1775 = vmatprep.subr.bf16.mxu0 0
    %1776 = vmatpush1.bf16.msra.mxu0 0
    %1777 = vmatprep.subr.bf16.mxu0 0
    %1778 = vmatpush1.bf16.msra.mxu0 0
    %1779 = vmatprep.subr.bf16.mxu0 0
    %1780 = vmatpush1.bf16.msra.mxu0 0
    %1781 = vmatprep.subr.bf16.mxu0 0
    %1782 = vmatpush1.bf16.msra.mxu0 0
    %1783 = vmatprep.subr.bf16.mxu0 0
    %1784 = vmatpush1.bf16.msra.mxu0 0
    %1785 = vmatprep.subr.bf16.mxu0 0
    %1786 = vmatpush1.bf16.msra.mxu0 0
    %1787 = vmatprep.subr.bf16.mxu0 0
    %1788 = vmatpush1.bf16.msra.mxu0 0
    %1789 = vmatprep.subr.bf16.mxu0 0
    %1790 = vmatpush1.bf16.msra.mxu0 0
    %1791 = vmatprep.subr.bf16.mxu0 0
    %1792 = vmatpush1.bf16.msra.mxu0 0
    %1793 = vmatprep.mubr.bf16.mxu0 0
    %1794 = vmatmul.mubr.bf16.gmra.mrb[0].mxu0 %v1756
    %v1795 = vpop.f32.mrb[0].mxu0
    %v1796 = vadd.f32 0.0, %v1795
    %v1797 = vpop.f32.mrb[0].mxu0
    %v1798 = vpop.f32.mrb[0].mxu0
    %v1799 = vpop.f32.mrb[0].mxu0
    %1800 = vdwg.mxu0
    %v1802 = vsel %vm177, %v119, 0
    %v1805 = vsel %vm181, %v78, 0
    %1807 = vmatprep.subr.bf16.mxu0 0
    %1808 = vmatpush1.bf16.msra.mxu0 %v1805
    %1809 = vmatprep.subr.bf16.mxu0 0
    %1810 = vmatpush1.bf16.msra.mxu0 0
    %1811 = vmatprep.subr.bf16.mxu0 0
    %1812 = vmatpush1.bf16.msra.mxu0 0
    %1813 = vmatprep.subr.bf16.mxu0 0
    %1814 = vmatpush1.bf16.msra.mxu0 0
    %1815 = vmatprep.subr.bf16.mxu0 0
    %1816 = vmatpush1.bf16.msra.mxu0 0
    %1817 = vmatprep.subr.bf16.mxu0 0
    %1818 = vmatpush1.bf16.msra.mxu0 0
    %1819 = vmatprep.subr.bf16.mxu0 0
    %1820 = vmatpush1.bf16.msra.mxu0 0
    %1821 = vmatprep.subr.bf16.mxu0 0
    %1822 = vmatpush1.bf16.msra.mxu0 0
    %1823 = vmatprep.subr.bf16.mxu0 0
    %1824 = vmatpush1.bf16.msra.mxu0 0
    %1825 = vmatprep.subr.bf16.mxu0 0
    %1826 = vmatpush1.bf16.msra.mxu0 0
    %1827 = vmatprep.subr.bf16.mxu0 0
    %1828 = vmatpush1.bf16.msra.mxu0 0
    %1829 = vmatprep.subr.bf16.mxu0 0
    %1830 = vmatpush1.bf16.msra.mxu0 0
    %1831 = vmatprep.subr.bf16.mxu0 0
    %1832 = vmatpush1.bf16.msra.mxu0 0
    %1833 = vmatprep.subr.bf16.mxu0 0
    %1834 = vmatpush1.bf16.msra.mxu0 0
    %1835 = vmatprep.subr.bf16.mxu0 0
    %1836 = vmatpush1.bf16.msra.mxu0 0
    %1837 = vmatprep.subr.bf16.mxu0 0
    %1838 = vmatpush1.bf16.msra.mxu0 0
    %1839 = vmatprep.mubr.bf16.mxu0 0
    %1840 = vmatmul.mubr.bf16.gmra.mrb[0].mxu0 %v1802
    %v1841 = vpop.f32.mrb[0].mxu0
    %v1842 = vadd.f32 0.0, %v1841
    %v1843 = vpop.f32.mrb[0].mxu0
    %v1844 = vpop.f32.mrb[0].mxu0
    %v1845 = vpop.f32.mrb[0].mxu0
    %1846 = vdwg.mxu0
    %v1847 = vcombine.low %v1520, %v1612
    %v1849 = vunpack.c.l.s4 1983009808
    %v1850 = vunpack.c.0.s8 %v1849
    %v1851 = vlaneseq
    %v1852 = vshrl.u32 %v1851, 7
    %v1853 = vsub.s32 %v1850, %v1852
    %v1854 = vrot.slane %v1847, %v1853
    %v1855 = vcombine.low %v1566, %v1658
    %v1857 = vunpack.c.l.s4 1983009808
    %v1858 = vunpack.c.0.s8 %v1857
    %v1859 = vlaneseq
    %v1860 = vshrl.u32 %v1859, 7
    %v1861 = vsub.s32 %v1858, %v1860
    %v1862 = vrot.slane %v1855, %v1861
    %v1863 = vcombine.low %v1704, %v1796
    %v1865 = vunpack.c.l.s4 1983009808
    %v1866 = vunpack.c.0.s8 %v1865
    %v1867 = vlaneseq
    %v1868 = vshrl.u32 %v1867, 7
    %v1869 = vsub.s32 %v1866, %v1868
    %v1870 = vrot.slane %v1863, %v1869
    %v1871 = vcombine.low %v1750, %v1842
    %v1873 = vunpack.c.l.s4 1983009808
    %v1874 = vunpack.c.0.s8 %v1873
    %v1875 = vlaneseq
    %v1876 = vshrl.u32 %v1875, 7
    %v1877 = vsub.s32 %v1874, %v1876
    %v1878 = vrot.slane %v1871, %v1877
    %v1879 = vcombine.low %v1854, %v1862
    %v1881 = vunpack.c.l.s4 1934713408
    %v1882 = vunpack.c.0.s8 %v1881
    %v1883 = vlaneseq
    %v1884 = vshrl.u32 %v1883, 7
    %v1885 = vsub.s32 %v1882, %v1884
    %v1886 = vrot.slane %v1879, %v1885
    %v1887 = vcombine.low %v1870, %v1878
    %v1889 = vunpack.c.l.s4 1934713408
    %v1890 = vunpack.c.0.s8 %v1889
    %v1891 = vlaneseq
    %v1892 = vshrl.u32 %v1891, 7
    %v1893 = vsub.s32 %v1890, %v1892
    %v1894 = vrot.slane %v1887, %v1893
    %v1895 = vcombine.low %v1886, %v1894
    %v1896 = vcombine.high %v1886, %v1894
    %v1897 = vpack.c.bf16 %v1895, %v1895
    %v1898 = vpack.c.bf16 %v1896, %v1896
    %v1899 = vld [vmem:[%s2] sm:$0xff]
    %v1900 = vld [vmem:[%s2 + $0x8] sm:$0xff]
    %v1901 = vld [vmem:[%s2 + $0x10] sm:$0xff]
    %v1902 = vld [vmem:[%s2 + $0x18] sm:$0xff]
    %v1903 = vld [vmem:[%s2 + $0x20] sm:$0xf]
    %v1904 = vld [vmem:[%s2 + $0x28] sm:$0xff]
    %v1905 = vld [vmem:[%s2 + $0x30] sm:$0xff]
    %v1906 = vld [vmem:[%s2 + $0x38] sm:$0xff]
    %v1907 = vld [vmem:[%s2 + $0x40] sm:$0xff]
    %v1908 = vld [vmem:[%s2 + $0x48] sm:$0xf]
    %v1909 = vpack.c.bf16 %v1900, %v1899
    %v1910 = vpack.c.bf16 %v1902, %v1901
    %v1911 = vpack.c.bf16 %v1903, %v1903
    %v1912 = vpack.c.bf16 %v1905, %v1904
    %v1913 = vpack.c.bf16 %v1907, %v1906
    %v1914 = vpack.c.bf16 %v1908, %v1908
    %v1921 = vcombine.high %v1909, %v1909
    %v1923 = vunpack.c.l.s4 1983009808
    %v1924 = vunpack.c.0.s8 %v1923
    %v1925 = vlaneseq
    %v1926 = vshrl.u32 %v1925, 7
    %v1927 = vsub.s32 %v1924, %v1926
    %v1928 = vrot.slane %v1909, %v1927
    %v1930 = vunpack.c.l.s4 1983009808
    %v1931 = vunpack.c.0.s8 %v1930
    %v1932 = vlaneseq
    %v1933 = vshrl.u32 %v1932, 7
    %v1934 = vsub.s32 %v1931, %v1933
    %v1935 = vrot.slane %v1921, %v1934
    %v1936 = vcombine.high %v1928, %v1928
    %v1937 = vcombine.high %v1935, %v1935
    %v1938 = vcombine.high %v1910, %v1910
    %v1940 = vunpack.c.l.s4 1983009808
    %v1941 = vunpack.c.0.s8 %v1940
    %v1942 = vlaneseq
    %v1943 = vshrl.u32 %v1942, 7
    %v1944 = vsub.s32 %v1941, %v1943
    %v1945 = vrot.slane %v1910, %v1944
    %v1947 = vunpack.c.l.s4 1983009808
    %v1948 = vunpack.c.0.s8 %v1947
    %v1949 = vlaneseq
    %v1950 = vshrl.u32 %v1949, 7
    %v1951 = vsub.s32 %v1948, %v1950
    %v1952 = vrot.slane %v1938, %v1951
    %v1953 = vcombine.high %v1945, %v1945
    %v1954 = vcombine.high %v1952, %v1952
    %v1956 = vunpack.c.l.s4 1983009808
    %v1957 = vunpack.c.0.s8 %v1956
    %v1958 = vlaneseq
    %v1959 = vshrl.u32 %v1958, 7
    %v1960 = vsub.s32 %v1957, %v1959
    %v1961 = vrot.slane %v1911, %v1960
    %v1962 = vcombine.high %v1912, %v1912
    %v1964 = vunpack.c.l.s4 1983009808
    %v1965 = vunpack.c.0.s8 %v1964
    %v1966 = vlaneseq
    %v1967 = vshrl.u32 %v1966, 7
    %v1968 = vsub.s32 %v1965, %v1967
    %v1969 = vrot.slane %v1912, %v1968
    %v1971 = vunpack.c.l.s4 1983009808
    %v1972 = vunpack.c.0.s8 %v1971
    %v1973 = vlaneseq
    %v1974 = vshrl.u32 %v1973, 7
    %v1975 = vsub.s32 %v1972, %v1974
    %v1976 = vrot.slane %v1962, %v1975
    %v1977 = vcombine.high %v1969, %v1969
    %v1978 = vcombine.high %v1976, %v1976
    %v1979 = vcombine.high %v1913, %v1913
    %v1981 = vunpack.c.l.s4 1983009808
    %v1982 = vunpack.c.0.s8 %v1981
    %v1983 = vlaneseq
    %v1984 = vshrl.u32 %v1983, 7
    %v1985 = vsub.s32 %v1982, %v1984
    %v1986 = vrot.slane %v1913, %v1985
    %v1988 = vunpack.c.l.s4 1983009808
    %v1989 = vunpack.c.0.s8 %v1988
    %v1990 = vlaneseq
    %v1991 = vshrl.u32 %v1990, 7
    %v1992 = vsub.s32 %v1989, %v1991
    %v1993 = vrot.slane %v1979, %v1992
    %v1994 = vcombine.high %v1986, %v1986
    %v1995 = vcombine.high %v1993, %v1993
    %v1997 = vunpack.c.l.s4 1983009808
    %v1998 = vunpack.c.0.s8 %v1997
    %v1999 = vlaneseq
    %v2000 = vshrl.u32 %v1999, 7
    %v2001 = vsub.s32 %v1998, %v2000
    %v2002 = vrot.slane %v1914, %v2001
    %v2003 = vcombine.low %v1928, %v1936
    %v2004 = vcombine.low %v1935, %v1937
    %v2006 = vunpack.c.l.s4 1983009808
    %v2007 = vunpack.c.0.s8 %v2006
    %v2008 = vlaneseq
    %v2009 = vshrl.u32 %v2008, 7
    %v2010 = vsub.s32 %v2007, %v2009
    %v2011 = vrot.slane %v2003, %v2010
    %v2013 = vunpack.c.l.s4 1983009808
    %v2014 = vunpack.c.0.s8 %v2013
    %v2015 = vlaneseq
    %v2016 = vshrl.u32 %v2015, 7
    %v2017 = vsub.s32 %v2014, %v2016
    %v2018 = vrot.slane %v2004, %v2017
    %v2019 = vcombine.low %v2011, %v2018
    %v2020 = vcombine.low %v1945, %v1953
    %v2021 = vcombine.low %v1952, %v1954
    %v2023 = vunpack.c.l.s4 1983009808
    %v2024 = vunpack.c.0.s8 %v2023
    %v2025 = vlaneseq
    %v2026 = vshrl.u32 %v2025, 7
    %v2027 = vsub.s32 %v2024, %v2026
    %v2028 = vrot.slane %v2020, %v2027
    %v2030 = vunpack.c.l.s4 1983009808
    %v2031 = vunpack.c.0.s8 %v2030
    %v2032 = vlaneseq
    %v2033 = vshrl.u32 %v2032, 7
    %v2034 = vsub.s32 %v2031, %v2033
    %v2035 = vrot.slane %v2021, %v2034
    %v2036 = vcombine.low %v2028, %v2035
    %v2037 = vcombine.low %v1961, %v1969
    %v2038 = vcombine.low %v1977, %v1976
    %v2040 = vunpack.c.l.s4 1983009808
    %v2041 = vunpack.c.0.s8 %v2040
    %v2042 = vlaneseq
    %v2043 = vshrl.u32 %v2042, 7
    %v2044 = vsub.s32 %v2041, %v2043
    %v2045 = vrot.slane %v2037, %v2044
    %v2047 = vunpack.c.l.s4 1983009808
    %v2048 = vunpack.c.0.s8 %v2047
    %v2049 = vlaneseq
    %v2050 = vshrl.u32 %v2049, 7
    %v2051 = vsub.s32 %v2048, %v2050
    %v2052 = vrot.slane %v2038, %v2051
    %v2053 = vcombine.low %v2045, %v2052
    %v2054 = vcombine.low %v1978, %v1986
    %v2055 = vcombine.low %v1994, %v1993
    %v2057 = vunpack.c.l.s4 1983009808
    %v2058 = vunpack.c.0.s8 %v2057
    %v2059 = vlaneseq
    %v2060 = vshrl.u32 %v2059, 7
    %v2061 = vsub.s32 %v2058, %v2060
    %v2062 = vrot.slane %v2054, %v2061
    %v2064 = vunpack.c.l.s4 1983009808
    %v2065 = vunpack.c.0.s8 %v2064
    %v2066 = vlaneseq
    %v2067 = vshrl.u32 %v2066, 7
    %v2068 = vsub.s32 %v2065, %v2067
    %v2069 = vrot.slane %v2055, %v2068
    %v2070 = vcombine.low %v2062, %v2069
    %v2071 = vcombine.low %v1995, %v2002
    %v2073 = vunpack.c.l.s4 1983009808
    %v2074 = vunpack.c.0.s8 %v2073
    %v2075 = vlaneseq
    %v2076 = vshrl.u32 %v2075, 7
    %v2077 = vsub.s32 %v2074, %v2076
    %v2078 = vrot.slane %v2071, %v2077
    %vm2079 = vcmask 523264
    %v2081 = vsel %vm2079, %v2019, 0
    %v2084 = vsel %vm2079, %v2036, 0
    %v2087 = vsel %vm2079, %v2053, 0
    %v2090 = vsel %vm2079, %v2070, 0
    %v2093 = vsel %vm2079, %v2078, 0
    %2095 = vmatprep.subr.bf16.mxu0 0
    %2096 = vmatpush1.bf16.msra.mxu0 %v88
    %2097 = vmatprep.subr.bf16.mxu0 0
    %2098 = vmatpush1.bf16.msra.mxu0 %v89
    %2099 = vmatprep.subr.bf16.mxu0 0
    %2100 = vmatpush1.bf16.msra.mxu0 %v90
    %2101 = vmatprep.subr.bf16.mxu0 0
    %2102 = vmatpush1.bf16.msra.mxu0 %v91
    %2103 = vmatprep.subr.bf16.mxu0 0
    %2104 = vmatpush1.bf16.msra.mxu0 0
    %2105 = vmatprep.subr.bf16.mxu0 0
    %2106 = vmatpush1.bf16.msra.mxu0 0
    %2107 = vmatprep.subr.bf16.mxu0 0
    %2108 = vmatpush1.bf16.msra.mxu0 0
    %2109 = vmatprep.subr.bf16.mxu0 0
    %2110 = vmatpush1.bf16.msra.mxu0 0
    %2111 = vmatprep.subr.bf16.mxu0 0
    %2112 = vmatpush1.bf16.msra.mxu0 0
    %2113 = vmatprep.subr.bf16.mxu0 0
    %2114 = vmatpush1.bf16.msra.mxu0 0
    %2115 = vmatprep.subr.bf16.mxu0 0
    %2116 = vmatpush1.bf16.msra.mxu0 0
    %2117 = vmatprep.subr.bf16.mxu0 0
    %2118 = vmatpush1.bf16.msra.mxu0 0
    %2119 = vmatprep.subr.bf16.mxu0 0
    %2120 = vmatpush1.bf16.msra.mxu0 0
    %2121 = vmatprep.subr.bf16.mxu0 0
    %2122 = vmatpush1.bf16.msra.mxu0 0
    %2123 = vmatprep.subr.bf16.mxu0 0
    %2124 = vmatpush1.bf16.msra.mxu0 0
    %2125 = vmatprep.subr.bf16.mxu0 0
    %2126 = vmatpush1.bf16.msra.mxu0 0
    %2127 = vmatprep.mubr.bf16.mxu0 0
    %2128 = vmatmul.mubr.bf16.gmra.mrb[0].mxu0 %v2081
    %v2129 = vpop.f32.mrb[0].mxu0
    %v2130 = vadd.f32 0.0, %v2129
    %v2131 = vpop.f32.mrb[0].mxu0
    %v2132 = vpop.f32.mrb[0].mxu0
    %v2133 = vadd.f32 0.0, %v2132
    %v2134 = vpop.f32.mrb[0].mxu0
    %2135 = vmatprep.mubr.bf16.mxu0 0
    %2136 = vmatmul.mubr.bf16.gmra.mrb[0].mxu0 %v2084
    %v2137 = vpop.f32.mrb[0].mxu0
    %v2138 = vadd.f32 0.0, %v2137
    %v2139 = vpop.f32.mrb[0].mxu0
    %v2140 = vpop.f32.mrb[0].mxu0
    %v2141 = vadd.f32 0.0, %v2140
    %v2142 = vpop.f32.mrb[0].mxu0
    %2143 = vmatprep.mubr.bf16.mxu0 0
    %2144 = vmatmul.mubr.bf16.gmra.mrb[0].mxu0 %v2087
    %v2145 = vpop.f32.mrb[0].mxu0
    %v2146 = vadd.f32 0.0, %v2145
    %v2147 = vpop.f32.mrb[0].mxu0
    %v2148 = vpop.f32.mrb[0].mxu0
    %v2149 = vadd.f32 0.0, %v2148
    %v2150 = vpop.f32.mrb[0].mxu0
    %2151 = vmatprep.mubr.bf16.mxu0 0
    %2152 = vmatmul.mubr.bf16.gmra.mrb[0].mxu0 %v2090
    %v2153 = vpop.f32.mrb[0].mxu0
    %v2154 = vadd.f32 0.0, %v2153
    %v2155 = vpop.f32.mrb[0].mxu0
    %v2156 = vpop.f32.mrb[0].mxu0
    %v2157 = vadd.f32 0.0, %v2156
    %v2158 = vpop.f32.mrb[0].mxu0
    %2159 = vmatprep.mubr.bf16.mxu0 0
    %2160 = vmatmul.mubr.bf16.gmra.mrb[0].mxu0 %v2093
    %v2161 = vpop.f32.mrb[0].mxu0
    %v2162 = vadd.f32 0.0, %v2161
    %v2163 = vpop.f32.mrb[0].mxu0
    %v2164 = vpop.f32.mrb[0].mxu0
    %v2165 = vpop.f32.mrb[0].mxu0
    %2166 = vdwg.mxu0
    %v2176 = vcombine.high %v2130, %v2130
    %v2177 = vcombine.high %v2133, %v2133
    %v2178 = vcombine.high %v2138, %v2138
    %v2179 = vcombine.high %v2141, %v2141
    %v2180 = vcombine.high %v2146, %v2146
    %v2181 = vcombine.high %v2149, %v2149
    %v2182 = vcombine.high %v2154, %v2154
    %v2183 = vcombine.high %v2157, %v2157
    %v2184 = vcombine.high %v2162, %v2162
    %v2194 = vlaneseq
    %v2195 = vshrl.u32 %v2194, 7
    %v2196 = vsub.s32 0, %v2195
    %v2197 = vrot.slane %v92, %v2196
    %v2199 = vcombine.high %v2197, %v2197
    %v2201 = vadd.f32 %v2130, %v2197
    %v2202 = vadd.f32 %v2176, %v2199
    %v2203 = vadd.f32 %v2133, %v2197
    %v2204 = vadd.f32 %v2177, %v2199
    %v2205 = vadd.f32 %v2138, %v2197
    %v2206 = vadd.f32 %v2178, %v2199
    %v2207 = vadd.f32 %v2141, %v2197
    %v2208 = vadd.f32 %v2179, %v2199
    %v2209 = vadd.f32 %v2146, %v2197
    %v2210 = vadd.f32 %v2180, %v2197
    %v2211 = vadd.f32 %v2149, %v2199
    %v2212 = vadd.f32 %v2181, %v2197
    %v2213 = vadd.f32 %v2154, %v2199
    %v2214 = vadd.f32 %v2182, %v2197
    %v2215 = vadd.f32 %v2157, %v2199
    %v2216 = vadd.f32 %v2183, %v2197
    %v2217 = vadd.f32 %v2162, %v2199
    %v2218 = vadd.f32 %v2184, %v2197
    %2220 = vrot.lane.b32.xlu0 %v1186, 6
    %v2221 = vpop.permute.xlu0 %2220
    %vm2223 = vcmask 48128
    %v2224 = vsel %vm2223, 0.0, %v2221
    %v2225 = vpack.c.bf16 %v2224, %v2224
    %v2226 = vlaneseq
    %v2227 = vshrl.u32 %v2226, 7
    %v2228 = vsub.s32 0, %v2227
    %v2229 = vrot.slane %v39, %v2228
    %vm2230 = vcmask 310272
    %v2232 = vsel %vm2230, %v2225, 0
    %v2235 = vsel %vm1463, %v38, 0
    %2237 = vmatprep.subr.bf16.mxu0 0
    %2238 = vmatpush1.bf16.msra.mxu0 %v36
    %2239 = vmatprep.subr.bf16.mxu0 0
    %2240 = vmatpush1.bf16.msra.mxu0 %v37
    %2241 = vmatprep.subr.bf16.mxu0 0
    %2242 = vmatpush1.bf16.msra.mxu0 %v2235
    %2243 = vmatprep.subr.bf16.mxu0 0
    %2244 = vmatpush1.bf16.msra.mxu0 0
    %2245 = vmatprep.subr.bf16.mxu0 0
    %2246 = vmatpush1.bf16.msra.mxu0 0
    %2247 = vmatprep.subr.bf16.mxu0 0
    %2248 = vmatpush1.bf16.msra.mxu0 0
    %2249 = vmatprep.subr.bf16.mxu0 0
    %2250 = vmatpush1.bf16.msra.mxu0 0
    %2251 = vmatprep.subr.bf16.mxu0 0
    %2252 = vmatpush1.bf16.msra.mxu0 0
    %2253 = vmatprep.subr.bf16.mxu0 0
    %2254 = vmatpush1.bf16.msra.mxu0 0
    %2255 = vmatprep.subr.bf16.mxu0 0
    %2256 = vmatpush1.bf16.msra.mxu0 0
    %2257 = vmatprep.subr.bf16.mxu0 0
    %2258 = vmatpush1.bf16.msra.mxu0 0
    %2259 = vmatprep.subr.bf16.mxu0 0
    %2260 = vmatpush1.bf16.msra.mxu0 0
    %2261 = vmatprep.subr.bf16.mxu0 0
    %2262 = vmatpush1.bf16.msra.mxu0 0
    %2263 = vmatprep.subr.bf16.mxu0 0
    %2264 = vmatpush1.bf16.msra.mxu0 0
    %2265 = vmatprep.subr.bf16.mxu0 0
    %2266 = vmatpush1.bf16.msra.mxu0 0
    %2267 = vmatprep.subr.bf16.mxu0 0
    %2268 = vmatpush1.bf16.msra.mxu0 0
    %2269 = vmatprep.mubr.bf16.mxu0 0
    %2270 = vmatmul.mubr.bf16.gmra.mrb[0].mxu0 %v2232
    %v2271 = vpop.f32.mrb[0].mxu0
    %v2272 = vadd.f32 %v2229, %v2271
    %v2273 = vpop.f32.mrb[0].mxu0
    %v2274 = vpop.f32.mrb[0].mxu0
    %v2275 = vpop.f32.mrb[0].mxu0
    %2276 = vdwg.mxu0
    %v2277 = vxor.u32 %v2272, 2147483648
    %v2278 = vmul.f32 %v2277, 1.442695
    %v2279 = vpow.pop %v2278
    %v2280 = vadd.f32 %v2279, 1.0
    %v2281 = vrcp.pop %v2280
    %v2282 = vmul.f32 1.0, %v2281
    %v2283 = vtanh.pop %v2272
    %2285 = vrot.lane.b32.xlu0 %v1200, 32
    %v2286 = vpop.permute.xlu0 %2285
    %v2288 = vmul.f32 %v2282, %v2286
    %2290 = vrot.lane.b32.xlu0 %v2283, 64
    %v2291 = vpop.permute.xlu0 %2290
    %v2293 = vmul.f32 %v2282, %v2291
    %2295 = vrot.lane.b32.xlu0 %v2293, 32
    %v2296 = vpop.permute.xlu0 %2295
    %v2298 = vadd.f32 %v2288, %v2296
    %v2299 = vtanh.pop %v2298
    %2301 = vrot.lane.b32.xlu0 %v2299, 64
    %v2302 = vpop.permute.xlu0 %2301
    %v2304 = vmul.f32 %v2282, %v2302
    %v2305 = vpack.c.bf16 %v2304, %v2304
    %v2306 = vlaneseq
    %v2307 = vshrl.u32 %v2306, 7
    %v2308 = vsub.s32 0, %v2307
    %v2309 = vrot.slane %v46, %v2308
    %2311 = vrot.lane.b32.xlu0 %v2305, 32
    %v2312 = vpop.permute.xlu0 %2311
    %v2314 = vsel %vm270, %v2312, 0
    %2316 = vmatprep.subr.bf16.mxu0 0
    %2317 = vmatpush1.bf16.msra.mxu0 %v44
    %2318 = vmatprep.subr.bf16.mxu0 0
    %2319 = vmatpush1.bf16.msra.mxu0 %v45
    %2320 = vmatprep.subr.bf16.mxu0 0
    %2321 = vmatpush1.bf16.msra.mxu0 0
    %2322 = vmatprep.subr.bf16.mxu0 0
    %2323 = vmatpush1.bf16.msra.mxu0 0
    %2324 = vmatprep.subr.bf16.mxu0 0
    %2325 = vmatpush1.bf16.msra.mxu0 0
    %2326 = vmatprep.subr.bf16.mxu0 0
    %2327 = vmatpush1.bf16.msra.mxu0 0
    %2328 = vmatprep.subr.bf16.mxu0 0
    %2329 = vmatpush1.bf16.msra.mxu0 0
    %2330 = vmatprep.subr.bf16.mxu0 0
    %2331 = vmatpush1.bf16.msra.mxu0 0
    %2332 = vmatprep.subr.bf16.mxu0 0
    %2333 = vmatpush1.bf16.msra.mxu0 0
    %2334 = vmatprep.subr.bf16.mxu0 0
    %2335 = vmatpush1.bf16.msra.mxu0 0
    %2336 = vmatprep.subr.bf16.mxu0 0
    %2337 = vmatpush1.bf16.msra.mxu0 0
    %2338 = vmatprep.subr.bf16.mxu0 0
    %2339 = vmatpush1.bf16.msra.mxu0 0
    %2340 = vmatprep.subr.bf16.mxu0 0
    %2341 = vmatpush1.bf16.msra.mxu0 0
    %2342 = vmatprep.subr.bf16.mxu0 0
    %2343 = vmatpush1.bf16.msra.mxu0 0
    %2344 = vmatprep.subr.bf16.mxu0 0
    %2345 = vmatpush1.bf16.msra.mxu0 0
    %2346 = vmatprep.subr.bf16.mxu0 0
    %2347 = vmatpush1.bf16.msra.mxu0 0
    %2348 = vmatprep.mubr.bf16.mxu0 0
    %2349 = vmatmul.mubr.bf16.gmra.mrb[0].mxu0 %v2314
    %v2350 = vpop.f32.mrb[0].mxu0
    %v2351 = vadd.f32 %v2309, %v2350
    %v2352 = vpop.f32.mrb[0].mxu0
    %v2353 = vpop.f32.mrb[0].mxu0
    %v2354 = vpop.f32.mrb[0].mxu0
    %2355 = vdwg.mxu0
    %vm2356 = vcmask 17408
    %v2357 = vsel %vm2356, %v2351, -inf
    %2358 = vmax.xlane.f32.xlu0 %v2357
    %v2359 = vpop.xlane.xlu0 %2358
    %v2360 = vsub.f32 %v2351, %v2359
    %v2361 = vmul.f32 %v2360, 1.442695
    %v2362 = vpow.pop %v2361
    %v2363 = vsel %vm2356, %v2362, 0.0
    %2364 = vadd.xlane.f32.xlu0 %v2363
    %v2365 = vpop.xlane.xlu0 %2364
    %v2366 = vrcp.pop %v2365
    %v2367 = vmul.f32 %v2362, %v2366
    %vm2368 = vcmask 42008
    %v2369 = vsel %vm2368, %v2351, -inf
    %2370 = vmax.xlane.f32.xlu0 %v2369
    %v2371 = vpop.xlane.xlu0 %2370
    %v2372 = vsub.f32 %v2351, %v2371
    %v2373 = vmul.f32 %v2372, 1.442695
    %v2374 = vpow.pop %v2373
    %2376 = vrot.lane.b32.xlu0 %v2374, 125
    %v2377 = vpop.permute.xlu0 %2376
    %v2379 = vsel %vm2356, %v2377, 0.0
    %2380 = vadd.xlane.f32.xlu0 %v2379
    %v2381 = vpop.xlane.xlu0 %2380
    %v2382 = vrcp.pop %v2381
    %v2383 = vmul.f32 %v2374, %v2382
    %vm2384 = vcmask 23552
    %v2385 = vsel %vm2384, %v2367, %v2383
    %v2386 = vxor.u32 %v2351, 2147483648
    %v2387 = vmul.f32 %v2386, 1.442695
    %v2388 = vpow.pop %v2387
    %v2389 = vadd.f32 %v2388, 1.0
    %v2390 = vrcp.pop %v2389
    %v2391 = vmul.f32 1.0, %v2390
    %v2393 = vunpack.c.l.s4 1966171168
    %v2394 = vunpack.c.0.s8 %v2393
    %v2395 = vlaneseq
    %v2396 = vshrl.u32 %v2395, 7
    %v2397 = vsub.s32 %v2394, %v2396
    %v2398 = vrot.slane %v2305, %v2397
    %v2400 = vunpack.c.l.s4 1966171168
    %v2401 = vunpack.c.0.s8 %v2400
    %v2402 = vlaneseq
    %v2403 = vshrl.u32 %v2402, 7
    %v2404 = vsub.s32 %v2401, %v2403
    %v2405 = vrot.slane %v2398, %v2404
    %v2406 = vunpack.i.l.s16 %v2405
    %v2407 = vunpack.i.h.s16 %v2405
    %v2408 = vpack.i.b16 %v2406, %v2406
    %v2409 = vlaneseq
    %v2410 = vshrl.u32 %v2409, 7
    %v2411 = vsub.s32 0, %v2410
    %v2412 = vrot.slane %v2408, %v2411
    %2413 = vrot.lane.b32.xlu0 %v2412, 32
    %v2414 = vpop.permute.xlu0 %2413
    %v2416 = vsel %vm270, %v2414, 0
    %v2419 = vsel %vm270, %v1477, 0
    %2421 = vmatprep.subr.bf16.mxu0 0
    %2422 = vmatpush1.bf16.xpose.msra.mxu0 %v2419
    %2423 = vmatprep.subr.bf16.mxu0 0
    %2424 = vmatpush1.bf16.xpose.msra.mxu0 0
    %2425 = vmatprep.subr.bf16.mxu0 0
    %2426 = vmatpush1.bf16.xpose.msra.mxu0 0
    %2427 = vmatprep.subr.bf16.mxu0 0
    %2428 = vmatpush1.bf16.xpose.msra.mxu0 0
    %2429 = vmatprep.subr.bf16.mxu0 0
    %2430 = vmatpush1.bf16.xpose.msra.mxu0 0
    %2431 = vmatprep.subr.bf16.mxu0 0
    %2432 = vmatpush1.bf16.xpose.msra.mxu0 0
    %2433 = vmatprep.subr.bf16.mxu0 0
    %2434 = vmatpush1.bf16.xpose.msra.mxu0 0
    %2435 = vmatprep.subr.bf16.mxu0 0
    %2436 = vmatpush1.bf16.xpose.msra.mxu0 0
    %2437 = vmatprep.subr.bf16.mxu0 0
    %2438 = vmatpush1.bf16.xpose.msra.mxu0 0
    %2439 = vmatprep.subr.bf16.mxu0 0
    %2440 = vmatpush1.bf16.xpose.msra.mxu0 0
    %2441 = vmatprep.subr.bf16.mxu0 0
    %2442 = vmatpush1.bf16.xpose.msra.mxu0 0
    %2443 = vmatprep.subr.bf16.mxu0 0
    %2444 = vmatpush1.bf16.xpose.msra.mxu0 0
    %2445 = vmatprep.subr.bf16.mxu0 0
    %2446 = vmatpush1.bf16.xpose.msra.mxu0 0
    %2447 = vmatprep.subr.bf16.mxu0 0
    %2448 = vmatpush1.bf16.xpose.msra.mxu0 0
    %2449 = vmatprep.subr.bf16.mxu0 0
    %2450 = vmatpush1.bf16.xpose.msra.mxu0 0
    %2451 = vmatprep.subr.bf16.mxu0 0
    %2452 = vmatpush1.bf16.xpose.msra.mxu0 0
    %2453 = vmatprep.mubr.bf16.mxu0 0
    %2454 = vmatmul.mubr.bf16.gmra.mrb[0].mxu0 %v2416
    %v2455 = vpop.f32.mrb[0].mxu0
    %v2456 = vadd.f32 0.0, %v2455
    %v2457 = vpop.f32.mrb[0].mxu0
    %v2458 = vpop.f32.mrb[0].mxu0
    %v2459 = vpop.f32.mrb[0].mxu0
    %2460 = vdwg.mxu0
    %v2461 = vpack.i.b16 %v2407, %v2407
    %v2462 = vlaneseq
    %v2463 = vshrl.u32 %v2462, 7
    %v2464 = vsub.s32 0, %v2463
    %v2465 = vrot.slane %v2461, %v2464
    %2466 = vrot.lane.b32.xlu0 %v2465, 32
    %v2467 = vpop.permute.xlu0 %2466
    %v2469 = vsel %vm270, %v2467, 0
    %v2472 = vsel %vm270, %v1478, 0
    %2474 = vmatprep.subr.bf16.mxu0 0
    %2475 = vmatpush1.bf16.xpose.msra.mxu0 %v2472
    %2476 = vmatprep.subr.bf16.mxu0 0
    %2477 = vmatpush1.bf16.xpose.msra.mxu0 0
    %2478 = vmatprep.subr.bf16.mxu0 0
    %2479 = vmatpush1.bf16.xpose.msra.mxu0 0
    %2480 = vmatprep.subr.bf16.mxu0 0
    %2481 = vmatpush1.bf16.xpose.msra.mxu0 0
    %2482 = vmatprep.subr.bf16.mxu0 0
    %2483 = vmatpush1.bf16.xpose.msra.mxu0 0
    %2484 = vmatprep.subr.bf16.mxu0 0
    %2485 = vmatpush1.bf16.xpose.msra.mxu0 0
    %2486 = vmatprep.subr.bf16.mxu0 0
    %2487 = vmatpush1.bf16.xpose.msra.mxu0 0
    %2488 = vmatprep.subr.bf16.mxu0 0
    %2489 = vmatpush1.bf16.xpose.msra.mxu0 0
    %2490 = vmatprep.subr.bf16.mxu0 0
    %2491 = vmatpush1.bf16.xpose.msra.mxu0 0
    %2492 = vmatprep.subr.bf16.mxu0 0
    %2493 = vmatpush1.bf16.xpose.msra.mxu0 0
    %2494 = vmatprep.subr.bf16.mxu0 0
    %2495 = vmatpush1.bf16.xpose.msra.mxu0 0
    %2496 = vmatprep.subr.bf16.mxu0 0
    %2497 = vmatpush1.bf16.xpose.msra.mxu0 0
    %2498 = vmatprep.subr.bf16.mxu0 0
    %2499 = vmatpush1.bf16.xpose.msra.mxu0 0
    %2500 = vmatprep.subr.bf16.mxu0 0
    %2501 = vmatpush1.bf16.xpose.msra.mxu0 0
    %2502 = vmatprep.subr.bf16.mxu0 0
    %2503 = vmatpush1.bf16.xpose.msra.mxu0 0
    %2504 = vmatprep.subr.bf16.mxu0 0
    %2505 = vmatpush1.bf16.xpose.msra.mxu0 0
    %2506 = vmatprep.mubr.bf16.mxu0 0
    %2507 = vmatmul.mubr.bf16.gmra.mrb[0].mxu0 %v2469
    %v2508 = vpop.f32.mrb[0].mxu0
    %v2509 = vadd.f32 0.0, %v2508
    %v2510 = vpop.f32.mrb[0].mxu0
    %v2511 = vpop.f32.mrb[0].mxu0
    %v2512 = vpop.f32.mrb[0].mxu0
    %2513 = vdwg.mxu0
    %vm2514 = vcmask 57344
    %v2515 = vsel %vm2514, %v2456, -inf
    %2516 = vmax.xlane.f32.xlu0 %v2515
    %v2517 = vpop.xlane.xlu0 %2516
    %v2518 = vsel %vm2514, %v2509, -inf
    %2519 = vmax.xlane.f32.xlu0 %v2518
    %v2520 = vpop.xlane.xlu0 %2519
    %v2521 = vsub.f32 %v2456, %v2517
    %v2522 = vsub.f32 %v2509, %v2520
    %v2523 = vmul.f32 %v2521, 1.442695
    %v2524 = vpow.pop %v2523
    %v2525 = vmul.f32 %v2522, 1.442695
    %v2526 = vpow.pop %v2525
    %v2527 = vsel %vm2514, %v2524, 0.0
    %2528 = vadd.xlane.f32.xlu0 %v2527
    %v2529 = vpop.xlane.xlu0 %2528
    %v2530 = vsel %vm2514, %v2526, 0.0
    %2531 = vadd.xlane.f32.xlu0 %v2530
    %v2532 = vpop.xlane.xlu0 %2531
    %v2533 = vrcp.pop %v2529
    %v2534 = vmul.f32 %v2524, %v2533
    %v2535 = vrcp.pop %v2532
    %v2536 = vmul.f32 %v2526, %v2535
    %v2537 = vpack.c.bf16 %v2534, %v2534
    %v2538 = vpack.c.bf16 %v2536, %v2536
    %v2540 = vsel %vm177, %v2537, 0
    %v2543 = vsel %vm181, %v1897, 0
    %2545 = vmatprep.subr.bf16.mxu0 0
    %2546 = vmatpush1.bf16.msra.mxu0 %v2543
    %2547 = vmatprep.subr.bf16.mxu0 0
    %2548 = vmatpush1.bf16.msra.mxu0 0
    %2549 = vmatprep.subr.bf16.mxu0 0
    %2550 = vmatpush1.bf16.msra.mxu0 0
    %2551 = vmatprep.subr.bf16.mxu0 0
    %2552 = vmatpush1.bf16.msra.mxu0 0
    %2553 = vmatprep.subr.bf16.mxu0 0
    %2554 = vmatpush1.bf16.msra.mxu0 0
    %2555 = vmatprep.subr.bf16.mxu0 0
    %2556 = vmatpush1.bf16.msra.mxu0 0
    %2557 = vmatprep.subr.bf16.mxu0 0
    %2558 = vmatpush1.bf16.msra.mxu0 0
    %2559 = vmatprep.subr.bf16.mxu0 0
    %2560 = vmatpush1.bf16.msra.mxu0 0
    %2561 = vmatprep.subr.bf16.mxu0 0
    %2562 = vmatpush1.bf16.msra.mxu0 0
    %2563 = vmatprep.subr.bf16.mxu0 0
    %2564 = vmatpush1.bf16.msra.mxu0 0
    %2565 = vmatprep.subr.bf16.mxu0 0
    %2566 = vmatpush1.bf16.msra.mxu0 0
    %2567 = vmatprep.subr.bf16.mxu0 0
    %2568 = vmatpush1.bf16.msra.mxu0 0
    %2569 = vmatprep.subr.bf16.mxu0 0
    %2570 = vmatpush1.bf16.msra.mxu0 0
    %2571 = vmatprep.subr.bf16.mxu0 0
    %2572 = vmatpush1.bf16.msra.mxu0 0
    %2573 = vmatprep.subr.bf16.mxu0 0
    %2574 = vmatpush1.bf16.msra.mxu0 0
    %2575 = vmatprep.subr.bf16.mxu0 0
    %2576 = vmatpush1.bf16.msra.mxu0 0
    %2577 = vmatprep.mubr.bf16.mxu0 0
    %2578 = vmatmul.mubr.bf16.gmra.mrb[0].mxu0 %v2540
    %v2579 = vpop.f32.mrb[0].mxu0
    %v2580 = vadd.f32 %v79, %v2579
    %v2581 = vpop.f32.mrb[0].mxu0
    %v2582 = vpop.f32.mrb[0].mxu0
    %v2583 = vpop.f32.mrb[0].mxu0
    %2584 = vdwg.mxu0
    %v2586 = vsel %vm177, %v2538, 0
    %v2589 = vsel %vm181, %v1898, 0
    %2591 = vmatprep.subr.bf16.mxu0 0
    %2592 = vmatpush1.bf16.msra.mxu0 %v2589
    %2593 = vmatprep.subr.bf16.mxu0 0
    %2594 = vmatpush1.bf16.msra.mxu0 0
    %2595 = vmatprep.subr.bf16.mxu0 0
    %2596 = vmatpush1.bf16.msra.mxu0 0
    %2597 = vmatprep.subr.bf16.mxu0 0
    %2598 = vmatpush1.bf16.msra.mxu0 0
    %2599 = vmatprep.subr.bf16.mxu0 0
    %2600 = vmatpush1.bf16.msra.mxu0 0
    %2601 = vmatprep.subr.bf16.mxu0 0
    %2602 = vmatpush1.bf16.msra.mxu0 0
    %2603 = vmatprep.subr.bf16.mxu0 0
    %2604 = vmatpush1.bf16.msra.mxu0 0
    %2605 = vmatprep.subr.bf16.mxu0 0
    %2606 = vmatpush1.bf16.msra.mxu0 0
    %2607 = vmatprep.subr.bf16.mxu0 0
    %2608 = vmatpush1.bf16.msra.mxu0 0
    %2609 = vmatprep.subr.bf16.mxu0 0
    %2610 = vmatpush1.bf16.msra.mxu0 0
    %2611 = vmatprep.subr.bf16.mxu0 0
    %2612 = vmatpush1.bf16.msra.mxu0 0
    %2613 = vmatprep.subr.bf16.mxu0 0
    %2614 = vmatpush1.bf16.msra.mxu0 0
    %2615 = vmatprep.subr.bf16.mxu0 0
    %2616 = vmatpush1.bf16.msra.mxu0 0
    %2617 = vmatprep.subr.bf16.mxu0 0
    %2618 = vmatpush1.bf16.msra.mxu0 0
    %2619 = vmatprep.subr.bf16.mxu0 0
    %2620 = vmatpush1.bf16.msra.mxu0 0
    %2621 = vmatprep.subr.bf16.mxu0 0
    %2622 = vmatpush1.bf16.msra.mxu0 0
    %2623 = vmatprep.mubr.bf16.mxu0 0
    %2624 = vmatmul.mubr.bf16.gmra.mrb[0].mxu0 %v2586
    %v2625 = vpop.f32.mrb[0].mxu0
    %v2626 = vadd.f32 %v79, %v2625
    %v2627 = vpop.f32.mrb[0].mxu0
    %v2628 = vpop.f32.mrb[0].mxu0
    %v2629 = vpop.f32.mrb[0].mxu0
    %2630 = vdwg.mxu0
    %v2631 = vmul.f32 %v97, 0.0
    %v2632 = vmul.f32 %v98, 0.0
    %v2633 = vmul.f32 %v99, 0.0
    %v2634 = vmul.f32 %v100, 0.0
    %v2635 = vmul.f32 %v101, 0.0
    %vm2636 = vcmask 15360
    %v2637 = vsel %vm2636, %v2631, 0.0
    %v2638 = vsel %vm2636, %v2632, 0.0
    %v2639 = vadd.f32 %v2637, %v2638
    %v2640 = vsel %vm2636, %v2633, 0.0
    %v2641 = vadd.f32 %v2639, %v2640
    %v2642 = vsel %vm2636, %v2634, 0.0
    %v2643 = vadd.f32 %v2641, %v2642
    %vm2644 = vcmask 11264
    %v2645 = vsel %vm2644, %v2635, 0.0
    %v2646 = vadd.f32 %v2643, %v2645
    %v2647 = vrot.slane %v2646, 4
    %v2648 = vadd.f32 %v2646, %v2647
    %v2649 = vrot.slane %v2648, 2
    %v2650 = vadd.f32 %v2648, %v2649
    %v2651 = vrot.slane %v2650, 1
    %v2652 = vadd.f32 %v2650, %v2651
    %v2653 = vlaneseq
    %v2654 = vshrl.u32 %v2653, 7
    %v2655 = vsub.s32 0, %v2654
    %v2656 = vrot.slane %v102, %v2655
    %v2657 = vadd.f32 %v2652, %v2656
    %v2658 = vlaneseq
    %v2659 = vshrl.u32 %v2658, 7
    %v2660 = vsub.s32 0, %v2659
    %v2661 = vrot.slane %v2580, %v2660
    %v2662 = vlaneseq
    %v2663 = vshrl.u32 %v2662, 7
    %v2664 = vsub.s32 0, %v2663
    %v2665 = vrot.slane %v2626, %v2664
    %v2668 = vcombine.high %v2661, %v2661
    %v2669 = vcombine.high %v2665, %v2665
    %v2672 = vmul.f32 %v2201, %v2661
    %v2673 = vmul.f32 %v2202, %v2668
    %v2674 = vmul.f32 %v2203, %v2661
    %v2675 = vmul.f32 %v2204, %v2668
    %v2676 = vmul.f32 %v2205, %v2661
    %v2677 = vmul.f32 %v2206, %v2668
    %v2678 = vmul.f32 %v2207, %v2661
    %v2679 = vmul.f32 %v2208, %v2668
    %v2680 = vmul.f32 %v2209, %v2661
    %v2681 = vmul.f32 %v2210, %v2665
    %v2682 = vmul.f32 %v2211, %v2669
    %v2683 = vmul.f32 %v2212, %v2665
    %v2684 = vmul.f32 %v2213, %v2669
    %v2685 = vmul.f32 %v2214, %v2665
    %v2686 = vmul.f32 %v2215, %v2669
    %v2687 = vmul.f32 %v2216, %v2665
    %v2688 = vmul.f32 %v2217, %v2669
    %v2689 = vmul.f32 %v2218, %v2665
    %v2690 = vmax.f32 %v2672, 0.0
    %v2691 = vmax.f32 %v2673, 0.0
    %v2692 = vmax.f32 %v2674, 0.0
    %v2693 = vmax.f32 %v2675, 0.0
    %v2694 = vmax.f32 %v2676, 0.0
    %v2695 = vmax.f32 %v2677, 0.0
    %v2696 = vmax.f32 %v2678, 0.0
    %v2697 = vmax.f32 %v2679, 0.0
    %v2698 = vmax.f32 %v2680, 0.0
    %v2699 = vmax.f32 %v2681, 0.0
    %v2700 = vmax.f32 %v2682, 0.0
    %v2701 = vmax.f32 %v2683, 0.0
    %v2702 = vmax.f32 %v2684, 0.0
    %v2703 = vmax.f32 %v2685, 0.0
    %v2704 = vmax.f32 %v2686, 0.0
    %v2705 = vmax.f32 %v2687, 0.0
    %v2706 = vmax.f32 %v2688, 0.0
    %v2707 = vmax.f32 %v2689, 0.0
    %v2724 = vcombine.low %v2690, %v2691
    %v2725 = vcombine.low %v2692, %v2693
    %v2726 = vcombine.low %v2694, %v2695
    %v2727 = vcombine.low %v2696, %v2697
    %v2728 = vcombine.low %v2699, %v2700
    %v2729 = vcombine.low %v2701, %v2702
    %v2730 = vcombine.low %v2703, %v2704
    %v2731 = vcombine.low %v2705, %v2706
    %v2740 = vpack.c.bf16 %v2725, %v2724
    %v2741 = vpack.c.bf16 %v2727, %v2726
    %v2742 = vpack.c.bf16 %v2698, %v2698
    %v2743 = vpack.c.bf16 %v2729, %v2728
    %v2744 = vpack.c.bf16 %v2731, %v2730
    %v2745 = vpack.c.bf16 %v2707, %v2707
    %v2752 = vcombine.high %v2740, %v2740
    %v2754 = vunpack.c.l.s4 1983009808
    %v2755 = vunpack.c.0.s8 %v2754
    %v2756 = vlaneseq
    %v2757 = vshrl.u32 %v2756, 7
    %v2758 = vsub.s32 %v2755, %v2757
    %v2759 = vrot.slane %v2740, %v2758
    %v2761 = vunpack.c.l.s4 1983009808
    %v2762 = vunpack.c.0.s8 %v2761
    %v2763 = vlaneseq
    %v2764 = vshrl.u32 %v2763, 7
    %v2765 = vsub.s32 %v2762, %v2764
    %v2766 = vrot.slane %v2752, %v2765
    %v2767 = vcombine.high %v2759, %v2759
    %v2768 = vcombine.high %v2766, %v2766
    %v2769 = vcombine.high %v2741, %v2741
    %v2771 = vunpack.c.l.s4 1983009808
    %v2772 = vunpack.c.0.s8 %v2771
    %v2773 = vlaneseq
    %v2774 = vshrl.u32 %v2773, 7
    %v2775 = vsub.s32 %v2772, %v2774
    %v2776 = vrot.slane %v2741, %v2775
    %v2778 = vunpack.c.l.s4 1983009808
    %v2779 = vunpack.c.0.s8 %v2778
    %v2780 = vlaneseq
    %v2781 = vshrl.u32 %v2780, 7
    %v2782 = vsub.s32 %v2779, %v2781
    %v2783 = vrot.slane %v2769, %v2782
    %v2784 = vcombine.high %v2776, %v2776
    %v2785 = vcombine.high %v2783, %v2783
    %v2787 = vunpack.c.l.s4 1983009808
    %v2788 = vunpack.c.0.s8 %v2787
    %v2789 = vlaneseq
    %v2790 = vshrl.u32 %v2789, 7
    %v2791 = vsub.s32 %v2788, %v2790
    %v2792 = vrot.slane %v2742, %v2791
    %v2793 = vcombine.high %v2743, %v2743
    %v2795 = vunpack.c.l.s4 1983009808
    %v2796 = vunpack.c.0.s8 %v2795
    %v2797 = vlaneseq
    %v2798 = vshrl.u32 %v2797, 7
    %v2799 = vsub.s32 %v2796, %v2798
    %v2800 = vrot.slane %v2743, %v2799
    %v2802 = vunpack.c.l.s4 1983009808
    %v2803 = vunpack.c.0.s8 %v2802
    %v2804 = vlaneseq
    %v2805 = vshrl.u32 %v2804, 7
    %v2806 = vsub.s32 %v2803, %v2805
    %v2807 = vrot.slane %v2793, %v2806
    %v2808 = vcombine.high %v2800, %v2800
    %v2809 = vcombine.high %v2807, %v2807
    %v2810 = vcombine.high %v2744, %v2744
    %v2812 = vunpack.c.l.s4 1983009808
    %v2813 = vunpack.c.0.s8 %v2812
    %v2814 = vlaneseq
    %v2815 = vshrl.u32 %v2814, 7
    %v2816 = vsub.s32 %v2813, %v2815
    %v2817 = vrot.slane %v2744, %v2816
    %v2819 = vunpack.c.l.s4 1983009808
    %v2820 = vunpack.c.0.s8 %v2819
    %v2821 = vlaneseq
    %v2822 = vshrl.u32 %v2821, 7
    %v2823 = vsub.s32 %v2820, %v2822
    %v2824 = vrot.slane %v2810, %v2823
    %v2825 = vcombine.high %v2817, %v2817
    %v2826 = vcombine.high %v2824, %v2824
    %v2828 = vunpack.c.l.s4 1983009808
    %v2829 = vunpack.c.0.s8 %v2828
    %v2830 = vlaneseq
    %v2831 = vshrl.u32 %v2830, 7
    %v2832 = vsub.s32 %v2829, %v2831
    %v2833 = vrot.slane %v2745, %v2832
    %v2834 = vlaneseq
    %v2835 = vshrl.u32 %v2834, 7
    %v2836 = vsub.s32 0, %v2835
    %v2837 = vrot.slane %v96, %v2836
    %v2838 = vcombine.low %v2759, %v2767
    %v2839 = vcombine.low %v2766, %v2768
    %v2841 = vunpack.c.l.s4 1983009808
    %v2842 = vunpack.c.0.s8 %v2841
    %v2843 = vlaneseq
    %v2844 = vshrl.u32 %v2843, 7
    %v2845 = vsub.s32 %v2842, %v2844
    %v2846 = vrot.slane %v2838, %v2845
    %v2848 = vunpack.c.l.s4 1983009808
    %v2849 = vunpack.c.0.s8 %v2848
    %v2850 = vlaneseq
    %v2851 = vshrl.u32 %v2850, 7
    %v2852 = vsub.s32 %v2849, %v2851
    %v2853 = vrot.slane %v2839, %v2852
    %v2854 = vcombine.low %v2846, %v2853
    %v2855 = vcombine.low %v2776, %v2784
    %v2856 = vcombine.low %v2783, %v2785
    %v2858 = vunpack.c.l.s4 1983009808
    %v2859 = vunpack.c.0.s8 %v2858
    %v2860 = vlaneseq
    %v2861 = vshrl.u32 %v2860, 7
    %v2862 = vsub.s32 %v2859, %v2861
    %v2863 = vrot.slane %v2855, %v2862
    %v2865 = vunpack.c.l.s4 1983009808
    %v2866 = vunpack.c.0.s8 %v2865
    %v2867 = vlaneseq
    %v2868 = vshrl.u32 %v2867, 7
    %v2869 = vsub.s32 %v2866, %v2868
    %v2870 = vrot.slane %v2856, %v2869
    %v2871 = vcombine.low %v2863, %v2870
    %v2872 = vcombine.low %v2792, %v2800
    %v2873 = vcombine.low %v2808, %v2807
    %v2875 = vunpack.c.l.s4 1983009808
    %v2876 = vunpack.c.0.s8 %v2875
    %v2877 = vlaneseq
    %v2878 = vshrl.u32 %v2877, 7
    %v2879 = vsub.s32 %v2876, %v2878
    %v2880 = vrot.slane %v2872, %v2879
    %v2882 = vunpack.c.l.s4 1983009808
    %v2883 = vunpack.c.0.s8 %v2882
    %v2884 = vlaneseq
    %v2885 = vshrl.u32 %v2884, 7
    %v2886 = vsub.s32 %v2883, %v2885
    %v2887 = vrot.slane %v2873, %v2886
    %v2888 = vcombine.low %v2880, %v2887
    %v2889 = vcombine.low %v2809, %v2817
    %v2890 = vcombine.low %v2825, %v2824
    %v2892 = vunpack.c.l.s4 1983009808
    %v2893 = vunpack.c.0.s8 %v2892
    %v2894 = vlaneseq
    %v2895 = vshrl.u32 %v2894, 7
    %v2896 = vsub.s32 %v2893, %v2895
    %v2897 = vrot.slane %v2889, %v2896
    %v2899 = vunpack.c.l.s4 1983009808
    %v2900 = vunpack.c.0.s8 %v2899
    %v2901 = vlaneseq
    %v2902 = vshrl.u32 %v2901, 7
    %v2903 = vsub.s32 %v2900, %v2902
    %v2904 = vrot.slane %v2890, %v2903
    %v2905 = vcombine.low %v2897, %v2904
    %v2906 = vcombine.low %v2826, %v2833
    %v2908 = vunpack.c.l.s4 1983009808
    %v2909 = vunpack.c.0.s8 %v2908
    %v2910 = vlaneseq
    %v2911 = vshrl.u32 %v2910, 7
    %v2912 = vsub.s32 %v2909, %v2911
    %v2913 = vrot.slane %v2906, %v2912
    %vm2914 = vcmask 130048
    %v2916 = vsel %vm2914, %v2854, 0
    %v2919 = vsel %vm2914, %v2871, 0
    %v2922 = vsel %vm2914, %v2888, 0
    %v2925 = vsel %vm2914, %v2905, 0
    %v2928 = vsel %vm2914, %v2913, 0
    %2930 = vmatprep.subr.bf16.mxu0 0
    %2931 = vmatpush1.bf16.msra.mxu0 %v95
    %2932 = vmatprep.subr.bf16.mxu0 0
    %2933 = vmatpush1.bf16.msra.mxu0 0
    %2934 = vmatprep.subr.bf16.mxu0 0
    %2935 = vmatpush1.bf16.msra.mxu0 0
    %2936 = vmatprep.subr.bf16.mxu0 0
    %2937 = vmatpush1.bf16.msra.mxu0 0
    %2938 = vmatprep.subr.bf16.mxu0 0
    %2939 = vmatpush1.bf16.msra.mxu0 0
    %2940 = vmatprep.subr.bf16.mxu0 0
    %2941 = vmatpush1.bf16.msra.mxu0 0
    %2942 = vmatprep.subr.bf16.mxu0 0
    %2943 = vmatpush1.bf16.msra.mxu0 0
    %2944 = vmatprep.subr.bf16.mxu0 0
    %2945 = vmatpush1.bf16.msra.mxu0 0
    %2946 = vmatprep.subr.bf16.mxu0 0
    %2947 = vmatpush1.bf16.msra.mxu0 0
    %2948 = vmatprep.subr.bf16.mxu0 0
    %2949 = vmatpush1.bf16.msra.mxu0 0
    %2950 = vmatprep.subr.bf16.mxu0 0
    %2951 = vmatpush1.bf16.msra.mxu0 0
    %2952 = vmatprep.subr.bf16.mxu0 0
    %2953 = vmatpush1.bf16.msra.mxu0 0
    %2954 = vmatprep.subr.bf16.mxu0 0
    %2955 = vmatpush1.bf16.msra.mxu0 0
    %2956 = vmatprep.subr.bf16.mxu0 0
    %2957 = vmatpush1.bf16.msra.mxu0 0
    %2958 = vmatprep.subr.bf16.mxu0 0
    %2959 = vmatpush1.bf16.msra.mxu0 0
    %2960 = vmatprep.subr.bf16.mxu0 0
    %2961 = vmatpush1.bf16.msra.mxu0 0
    %2962 = vmatprep.mubr.bf16.mxu0 0
    %2963 = vmatmul.mubr.bf16.gmra.mrb[0].mxu0 %v2916
    %v2964 = vpop.f32.mrb[0].mxu0
    %v2965 = vadd.f32 %v2837, %v2964
    %v2966 = vpop.f32.mrb[0].mxu0
    %v2967 = vpop.f32.mrb[0].mxu0
    %v2968 = vadd.f32 %v2837, %v2967
    %v2969 = vpop.f32.mrb[0].mxu0
    %2970 = vmatprep.mubr.bf16.mxu0 0
    %2971 = vmatmul.mubr.bf16.gmra.mrb[0].mxu0 %v2919
    %v2972 = vpop.f32.mrb[0].mxu0
    %v2973 = vadd.f32 %v2837, %v2972
    %v2974 = vpop.f32.mrb[0].mxu0
    %v2975 = vpop.f32.mrb[0].mxu0
    %v2976 = vadd.f32 %v2837, %v2975
    %v2977 = vpop.f32.mrb[0].mxu0
    %2978 = vmatprep.mubr.bf16.mxu0 0
    %2979 = vmatmul.mubr.bf16.gmra.mrb[0].mxu0 %v2922
    %v2980 = vpop.f32.mrb[0].mxu0
    %v2981 = vadd.f32 %v2837, %v2980
    %v2982 = vpop.f32.mrb[0].mxu0
    %v2983 = vpop.f32.mrb[0].mxu0
    %v2984 = vadd.f32 %v2837, %v2983
    %v2985 = vpop.f32.mrb[0].mxu0
    %2986 = vmatprep.mubr.bf16.mxu0 0
    %2987 = vmatmul.mubr.bf16.gmra.mrb[0].mxu0 %v2925
    %v2988 = vpop.f32.mrb[0].mxu0
    %v2989 = vadd.f32 %v2837, %v2988
    %v2990 = vpop.f32.mrb[0].mxu0
    %v2991 = vpop.f32.mrb[0].mxu0
    %v2992 = vadd.f32 %v2837, %v2991
    %v2993 = vpop.f32.mrb[0].mxu0
    %2994 = vmatprep.mubr.bf16.mxu0 0
    %2995 = vmatmul.mubr.bf16.gmra.mrb[0].mxu0 %v2928
    %v2996 = vpop.f32.mrb[0].mxu0
    %v2997 = vadd.f32 %v2837, %v2996
    %v2998 = vpop.f32.mrb[0].mxu0
    %v2999 = vpop.f32.mrb[0].mxu0
    %v3000 = vpop.f32.mrb[0].mxu0
    %3001 = vdwg.mxu0
    %v3011 = vcombine.high %v2965, %v2965
    %v3012 = vcombine.high %v2968, %v2968
    %v3013 = vcombine.high %v2973, %v2973
    %v3014 = vcombine.high %v2976, %v2976
    %v3015 = vcombine.high %v2981, %v2981
    %v3016 = vcombine.high %v2984, %v2984
    %v3017 = vcombine.high %v2989, %v2989
    %v3018 = vcombine.high %v2992, %v2992
    %v3019 = vcombine.high %v2997, %v2997
    %v3022 = vunpack.c.l.s4 1966171168
    %v3023 = vunpack.c.0.s8 %v3022
    %v3024 = vlaneseq
    %v3025 = vshrl.u32 %v3024, 7
    %v3026 = vsub.s32 %v3023, %v3025
    %v3027 = vrot.slane %v2367, %v3026
    %v3028 = vcombine.high %v3027, %v3027
    %v3030 = vunpack.c.l.s4 1966171168
    %v3031 = vunpack.c.0.s8 %v3030
    %v3032 = vlaneseq
    %v3033 = vshrl.u32 %v3032, 7
    %v3034 = vsub.s32 %v3031, %v3033
    %v3035 = vrot.slane %v3027, %v3034
    %v3037 = vunpack.c.l.s4 1966171168
    %v3038 = vunpack.c.0.s8 %v3037
    %v3039 = vlaneseq
    %v3040 = vshrl.u32 %v3039, 7
    %v3041 = vsub.s32 %v3038, %v3040
    %v3042 = vrot.slane %v3028, %v3041
    %v3043 = vlaneseq
    %v3044 = vshrl.u32 %v3043, 7
    %v3045 = vsub.s32 0, %v3044
    %v3046 = vrot.slane %v3035, %v3045
    %v3047 = vlaneseq
    %v3048 = vshrl.u32 %v3047, 7
    %v3049 = vsub.s32 0, %v3048
    %v3050 = vrot.slane %v3042, %v3049
    %v3053 = vmul.f32 %v3046, 0.0
    %v3054 = vmul.f32 %v3050, 0.0
    %v3057 = vunpack.c.l.s4 1966171168
    %v3058 = vunpack.c.0.s8 %v3057
    %v3059 = vlaneseq
    %v3060 = vshrl.u32 %v3059, 7
    %v3061 = vsub.s32 %v3058, %v3060
    %v3062 = vrot.slane %v2383, %v3061
    %v3063 = vcombine.high %v3062, %v3062
    %v3065 = vunpack.c.l.s4 1966171168
    %v3066 = vunpack.c.0.s8 %v3065
    %v3067 = vlaneseq
    %v3068 = vshrl.u32 %v3067, 7
    %v3069 = vsub.s32 %v3066, %v3068
    %v3070 = vrot.slane %v3062, %v3069
    %v3072 = vunpack.c.l.s4 1966171168
    %v3073 = vunpack.c.0.s8 %v3072
    %v3074 = vlaneseq
    %v3075 = vshrl.u32 %v3074, 7
    %v3076 = vsub.s32 %v3073, %v3075
    %v3077 = vrot.slane %v3063, %v3076
    %3078 = vset.pattern.permute.xlu0 0
    %3079 = vperm.xlu0 %3078, %v2965
    %v3080 = vpop.permute.xlu0 %3079
    %v3083 = vunpack.c.l.s4 839922192
    %v3084 = vunpack.c.0.s8 %v3083
    %v3085 = vlaneseq
    %v3086 = vshrl.u32 %v3085, 7
    %v3087 = vsub.s32 %v3084, %v3086
    %v3088 = vrot.slane %v3080, %v3087
    %3089 = vset.pattern.permute.xlu0 0
    %3090 = vperm.xlu0 %3089, %v3011
    %v3091 = vpop.permute.xlu0 %3090
    %v3094 = vunpack.c.l.s4 839922192
    %v3095 = vunpack.c.0.s8 %v3094
    %v3096 = vlaneseq
    %v3097 = vshrl.u32 %v3096, 7
    %v3098 = vsub.s32 %v3095, %v3097
    %v3099 = vrot.slane %v3091, %v3098
    %3100 = vset.pattern.permute.xlu0 0
    %3101 = vperm.xlu0 %3100, %v2968
    %v3102 = vpop.permute.xlu0 %3101
    %v3105 = vunpack.c.l.s4 839922192
    %v3106 = vunpack.c.0.s8 %v3105
    %v3107 = vlaneseq
    %v3108 = vshrl.u32 %v3107, 7
    %v3109 = vsub.s32 %v3106, %v3108
    %v3110 = vrot.slane %v3102, %v3109
    %3111 = vset.pattern.permute.xlu0 0
    %3112 = vperm.xlu0 %3111, %v3012
    %v3113 = vpop.permute.xlu0 %3112
    %v3116 = vunpack.c.l.s4 839922192
    %v3117 = vunpack.c.0.s8 %v3116
    %v3118 = vlaneseq
    %v3119 = vshrl.u32 %v3118, 7
    %v3120 = vsub.s32 %v3117, %v3119
    %v3121 = vrot.slane %v3113, %v3120
    %3122 = vset.pattern.permute.xlu0 0
    %3123 = vperm.xlu0 %3122, %v2973
    %v3124 = vpop.permute.xlu0 %3123
    %v3127 = vunpack.c.l.s4 839922192
    %v3128 = vunpack.c.0.s8 %v3127
    %v3129 = vlaneseq
    %v3130 = vshrl.u32 %v3129, 7
    %v3131 = vsub.s32 %v3128, %v3130
    %v3132 = vrot.slane %v3124, %v3131
    %3133 = vset.pattern.permute.xlu0 0
    %3134 = vperm.xlu0 %3133, %v3013
    %v3135 = vpop.permute.xlu0 %3134
    %v3138 = vunpack.c.l.s4 839922192
    %v3139 = vunpack.c.0.s8 %v3138
    %v3140 = vlaneseq
    %v3141 = vshrl.u32 %v3140, 7
    %v3142 = vsub.s32 %v3139, %v3141
    %v3143 = vrot.slane %v3135, %v3142
    %3144 = vset.pattern.permute.xlu0 0
    %3145 = vperm.xlu0 %3144, %v2976
    %v3146 = vpop.permute.xlu0 %3145
    %v3149 = vunpack.c.l.s4 839922192
    %v3150 = vunpack.c.0.s8 %v3149
    %v3151 = vlaneseq
    %v3152 = vshrl.u32 %v3151, 7
    %v3153 = vsub.s32 %v3150, %v3152
    %v3154 = vrot.slane %v3146, %v3153
    %3155 = vset.pattern.permute.xlu0 0
    %3156 = vperm.xlu0 %3155, %v3014
    %v3157 = vpop.permute.xlu0 %3156
    %v3160 = vunpack.c.l.s4 839922192
    %v3161 = vunpack.c.0.s8 %v3160
    %v3162 = vlaneseq
    %v3163 = vshrl.u32 %v3162, 7
    %v3164 = vsub.s32 %v3161, %v3163
    %v3165 = vrot.slane %v3157, %v3164
    %3166 = vset.pattern.permute.xlu0 0
    %3167 = vperm.xlu0 %3166, %v2981
    %v3168 = vpop.permute.xlu0 %3167
    %v3171 = vunpack.c.l.s4 839922192
    %v3172 = vunpack.c.0.s8 %v3171
    %v3173 = vlaneseq
    %v3174 = vshrl.u32 %v3173, 7
    %v3175 = vsub.s32 %v3172, %v3174
    %v3176 = vrot.slane %v3168, %v3175
    %3177 = vset.pattern.permute.xlu0 0
    %3178 = vperm.xlu0 %3177, %v3015
    %v3179 = vpop.permute.xlu0 %3178
    %v3182 = vunpack.c.l.s4 839922192
    %v3183 = vunpack.c.0.s8 %v3182
    %v3184 = vlaneseq
    %v3185 = vshrl.u32 %v3184, 7
    %v3186 = vsub.s32 %v3183, %v3185
    %v3187 = vrot.slane %v3179, %v3186
    %3188 = vset.pattern.permute.xlu0 0
    %3189 = vperm.xlu0 %3188, %v2984
    %v3190 = vpop.permute.xlu0 %3189
    %v3193 = vunpack.c.l.s4 839922192
    %v3194 = vunpack.c.0.s8 %v3193
    %v3195 = vlaneseq
    %v3196 = vshrl.u32 %v3195, 7
    %v3197 = vsub.s32 %v3194, %v3196
    %v3198 = vrot.slane %v3190, %v3197
    %3199 = vset.pattern.permute.xlu0 0
    %3200 = vperm.xlu0 %3199, %v3016
    %v3201 = vpop.permute.xlu0 %3200
    %v3204 = vunpack.c.l.s4 839922192
    %v3205 = vunpack.c.0.s8 %v3204
    %v3206 = vlaneseq
    %v3207 = vshrl.u32 %v3206, 7
    %v3208 = vsub.s32 %v3205, %v3207
    %v3209 = vrot.slane %v3201, %v3208
    %3210 = vset.pattern.permute.xlu0 0
    %3211 = vperm.xlu0 %3210, %v2989
    %v3212 = vpop.permute.xlu0 %3211
    %v3215 = vunpack.c.l.s4 839922192
    %v3216 = vunpack.c.0.s8 %v3215
    %v3217 = vlaneseq
    %v3218 = vshrl.u32 %v3217, 7
    %v3219 = vsub.s32 %v3216, %v3218
    %v3220 = vrot.slane %v3212, %v3219
    %3221 = vset.pattern.permute.xlu0 0
    %3222 = vperm.xlu0 %3221, %v3017
    %v3223 = vpop.permute.xlu0 %3222
    %v3226 = vunpack.c.l.s4 839922192
    %v3227 = vunpack.c.0.s8 %v3226
    %v3228 = vlaneseq
    %v3229 = vshrl.u32 %v3228, 7
    %v3230 = vsub.s32 %v3227, %v3229
    %v3231 = vrot.slane %v3223, %v3230
    %3232 = vset.pattern.permute.xlu0 0
    %3233 = vperm.xlu0 %3232, %v2992
    %v3234 = vpop.permute.xlu0 %3233
    %v3237 = vunpack.c.l.s4 839922192
    %v3238 = vunpack.c.0.s8 %v3237
    %v3239 = vlaneseq
    %v3240 = vshrl.u32 %v3239, 7
    %v3241 = vsub.s32 %v3238, %v3240
    %v3242 = vrot.slane %v3234, %v3241
    %3243 = vset.pattern.permute.xlu0 0
    %3244 = vperm.xlu0 %3243, %v3018
    %v3245 = vpop.permute.xlu0 %3244
    %v3248 = vunpack.c.l.s4 839922192
    %v3249 = vunpack.c.0.s8 %v3248
    %v3250 = vlaneseq
    %v3251 = vshrl.u32 %v3250, 7
    %v3252 = vsub.s32 %v3249, %v3251
    %v3253 = vrot.slane %v3245, %v3252
    %3254 = vset.pattern.permute.xlu0 0
    %3255 = vperm.xlu0 %3254, %v2997
    %v3256 = vpop.permute.xlu0 %3255
    %v3259 = vunpack.c.l.s4 839922192
    %v3260 = vunpack.c.0.s8 %v3259
    %v3261 = vlaneseq
    %v3262 = vshrl.u32 %v3261, 7
    %v3263 = vsub.s32 %v3260, %v3262
    %v3264 = vrot.slane %v3256, %v3263
    %3265 = vset.pattern.permute.xlu0 0
    %3266 = vperm.xlu0 %3265, %v3019
    %v3267 = vpop.permute.xlu0 %3266
    %v3270 = vunpack.c.l.s4 839922192
    %v3271 = vunpack.c.0.s8 %v3270
    %v3272 = vlaneseq
    %v3273 = vshrl.u32 %v3272, 7
    %v3274 = vsub.s32 %v3271, %v3273
    %v3275 = vrot.slane %v3267, %v3274
    %v3276 = vlaneseq
    %v3277 = vshrl.u32 %v3276, 7
    %v3278 = vsub.s32 0, %v3277
    %v3279 = vrot.slane %v3070, %v3278
    %v3280 = vlaneseq
    %v3281 = vshrl.u32 %v3280, 7
    %v3282 = vsub.s32 0, %v3281
    %v3283 = vrot.slane %v3077, %v3282
    %v3284 = vcombine.high %v3279, %v3279
    %v3285 = vcombine.high %v3283, %v3283
    %3286 = vrot.lane.b32.xlu0 %v3279, 125
    %v3287 = vpop.permute.xlu0 %3286
    %3288 = vrot.lane.b32.xlu0 %v3284, 125
    %v3289 = vpop.permute.xlu0 %3288
    %3290 = vrot.lane.b32.xlu0 %v3283, 125
    %v3291 = vpop.permute.xlu0 %3290
    %3292 = vrot.lane.b32.xlu0 %v3285, 125
    %v3293 = vpop.permute.xlu0 %3292
    %v3298 = vmul.f32 %v3088, %v3287
    %v3299 = vmul.f32 %v3099, %v3289
    %v3300 = vmul.f32 %v3110, %v3287
    %v3301 = vmul.f32 %v3121, %v3289
    %v3302 = vmul.f32 %v3132, %v3287
    %v3303 = vmul.f32 %v3143, %v3289
    %v3304 = vmul.f32 %v3154, %v3287
    %v3305 = vmul.f32 %v3165, %v3289
    %v3306 = vmul.f32 %v3176, %v3287
    %v3307 = vmul.f32 %v3187, %v3291
    %v3308 = vmul.f32 %v3198, %v3293
    %v3309 = vmul.f32 %v3209, %v3291
    %v3310 = vmul.f32 %v3220, %v3293
    %v3311 = vmul.f32 %v3231, %v3291
    %v3312 = vmul.f32 %v3242, %v3293
    %v3313 = vmul.f32 %v3253, %v3291
    %v3314 = vmul.f32 %v3264, %v3293
    %v3315 = vmul.f32 %v3275, %v3291
    %v3332 = vcombine.low %v3298, %v3299
    %v3333 = vcombine.low %v3300, %v3301
    %v3334 = vcombine.low %v3302, %v3303
    %v3335 = vcombine.low %v3304, %v3305
    %v3336 = vcombine.low %v3307, %v3308
    %v3337 = vcombine.low %v3309, %v3310
    %v3338 = vcombine.low %v3311, %v3312
    %v3339 = vcombine.low %v3313, %v3314
    %v3348 = vadd.f32 %v3053, %v3332
    %v3349 = vadd.f32 %v3053, %v3333
    %v3350 = vadd.f32 %v3053, %v3334
    %v3351 = vadd.f32 %v3053, %v3335
    %v3352 = vadd.f32 %v3053, %v3306
    %v3353 = vadd.f32 %v3054, %v3336
    %v3354 = vadd.f32 %v3054, %v3337
    %v3355 = vadd.f32 %v3054, %v3338
    %v3356 = vadd.f32 %v3054, %v3339
    %v3357 = vadd.f32 %v3054, %v3315
    %3359 = vrot.lane.b32.xlu0 %v2304, 38
    %v3360 = vpop.permute.xlu0 %3359
    %v3362 = vsel %vm2223, %v2385, %v3360
    %v3363 = vpack.c.bf16 %v3362, %v3362
    %v3365 = vsel %vm2230, %v3363, 0
    %3367 = vmatprep.subr.bf16.mxu0 0
    %3368 = vmatpush1.bf16.msra.mxu0 %v36
    %3369 = vmatprep.subr.bf16.mxu0 0
    %3370 = vmatpush1.bf16.msra.mxu0 %v37
    %3371 = vmatprep.subr.bf16.mxu0 0
    %3372 = vmatpush1.bf16.msra.mxu0 %v2235
    %3373 = vmatprep.subr.bf16.mxu0 0
    %3374 = vmatpush1.bf16.msra.mxu0 0
    %3375 = vmatprep.subr.bf16.mxu0 0
    %3376 = vmatpush1.bf16.msra.mxu0 0
    %3377 = vmatprep.subr.bf16.mxu0 0
    %3378 = vmatpush1.bf16.msra.mxu0 0
    %3379 = vmatprep.subr.bf16.mxu0 0
    %3380 = vmatpush1.bf16.msra.mxu0 0
    %3381 = vmatprep.subr.bf16.mxu0 0
    %3382 = vmatpush1.bf16.msra.mxu0 0
    %3383 = vmatprep.subr.bf16.mxu0 0
    %3384 = vmatpush1.bf16.msra.mxu0 0
    %3385 = vmatprep.subr.bf16.mxu0 0
    %3386 = vmatpush1.bf16.msra.mxu0 0
    %3387 = vmatprep.subr.bf16.mxu0 0
    %3388 = vmatpush1.bf16.msra.mxu0 0
    %3389 = vmatprep.subr.bf16.mxu0 0
    %3390 = vmatpush1.bf16.msra.mxu0 0
    %3391 = vmatprep.subr.bf16.mxu0 0
    %3392 = vmatpush1.bf16.msra.mxu0 0
    %3393 = vmatprep.subr.bf16.mxu0 0
    %3394 = vmatpush1.bf16.msra.mxu0 0
    %3395 = vmatprep.subr.bf16.mxu0 0
    %3396 = vmatpush1.bf16.msra.mxu0 0
    %3397 = vmatprep.subr.bf16.mxu0 0
    %3398 = vmatpush1.bf16.msra.mxu0 0
    %3399 = vmatprep.mubr.bf16.mxu0 0
    %3400 = vmatmul.mubr.bf16.gmra.mrb[0].mxu0 %v3365
    %v3401 = vpop.f32.mrb[0].mxu0
    %v3402 = vadd.f32 %v2229, %v3401
    %v3403 = vpop.f32.mrb[0].mxu0
    %v3404 = vpop.f32.mrb[0].mxu0
    %v3405 = vpop.f32.mrb[0].mxu0
    %3406 = vdwg.mxu0
    %v3407 = vxor.u32 %v3402, 2147483648
    %v3408 = vmul.f32 %v3407, 1.442695
    %v3409 = vpow.pop %v3408
    %v3410 = vadd.f32 %v3409, 1.0
    %v3411 = vrcp.pop %v3410
    %v3412 = vmul.f32 1.0, %v3411
    %v3413 = vtanh.pop %v3402
    %v3414 = vmul.f32 %v3412, %v2298
    %3416 = vrot.lane.b32.xlu0 %v3413, 64
    %v3417 = vpop.permute.xlu0 %3416
    %v3419 = vmul.f32 %v3412, %v3417
    %3421 = vrot.lane.b32.xlu0 %v3419, 32
    %v3422 = vpop.permute.xlu0 %3421
    %v3424 = vadd.f32 %v3414, %v3422
    %v3425 = vtanh.pop %v3424
    %3427 = vrot.lane.b32.xlu0 %v3425, 64
    %v3428 = vpop.permute.xlu0 %3427
    %v3430 = vmul.f32 %v3412, %v3428
    %v3431 = vpack.c.bf16 %v3430, %v3430
    %3433 = vrot.lane.b32.xlu0 %v3431, 32
    %v3434 = vpop.permute.xlu0 %3433
    %v3436 = vsel %vm270, %v3434, 0
    %3438 = vmatprep.subr.bf16.mxu0 0
    %3439 = vmatpush1.bf16.msra.mxu0 %v44
    %3440 = vmatprep.subr.bf16.mxu0 0
    %3441 = vmatpush1.bf16.msra.mxu0 %v45
    %3442 = vmatprep.subr.bf16.mxu0 0
    %3443 = vmatpush1.bf16.msra.mxu0 0
    %3444 = vmatprep.subr.bf16.mxu0 0
    %3445 = vmatpush1.bf16.msra.mxu0 0
    %3446 = vmatprep.subr.bf16.mxu0 0
    %3447 = vmatpush1.bf16.msra.mxu0 0
    %3448 = vmatprep.subr.bf16.mxu0 0
    %3449 = vmatpush1.bf16.msra.mxu0 0
    %3450 = vmatprep.subr.bf16.mxu0 0
    %3451 = vmatpush1.bf16.msra.mxu0 0
    %3452 = vmatprep.subr.bf16.mxu0 0
    %3453 = vmatpush1.bf16.msra.mxu0 0
    %3454 = vmatprep.subr.bf16.mxu0 0
    %3455 = vmatpush1.bf16.msra.mxu0 0
    %3456 = vmatprep.subr.bf16.mxu0 0
    %3457 = vmatpush1.bf16.msra.mxu0 0
    %3458 = vmatprep.subr.bf16.mxu0 0
    %3459 = vmatpush1.bf16.msra.mxu0 0
    %3460 = vmatprep.subr.bf16.mxu0 0
    %3461 = vmatpush1.bf16.msra.mxu0 0
    %3462 = vmatprep.subr.bf16.mxu0 0
    %3463 = vmatpush1.bf16.msra.mxu0 0
    %3464 = vmatprep.subr.bf16.mxu0 0
    %3465 = vmatpush1.bf16.msra.mxu0 0
    %3466 = vmatprep.subr.bf16.mxu0 0
    %3467 = vmatpush1.bf16.msra.mxu0 0
    %3468 = vmatprep.subr.bf16.mxu0 0
    %3469 = vmatpush1.bf16.msra.mxu0 0
    %3470 = vmatprep.mubr.bf16.mxu0 0
    %3471 = vmatmul.mubr.bf16.gmra.mrb[0].mxu0 %v3436
    %v3472 = vpop.f32.mrb[0].mxu0
    %v3473 = vadd.f32 %v2309, %v3472
    %v3474 = vpop.f32.mrb[0].mxu0
    %v3475 = vpop.f32.mrb[0].mxu0
    %v3476 = vpop.f32.mrb[0].mxu0
    %3477 = vdwg.mxu0
    %v3478 = vsel %vm2356, %v3473, -inf
    %3479 = vmax.xlane.f32.xlu0 %v3478
    %v3480 = vpop.xlane.xlu0 %3479
    %v3481 = vsub.f32 %v3473, %v3480
    %v3482 = vmul.f32 %v3481, 1.442695
    %v3483 = vpow.pop %v3482
    %v3484 = vsel %vm2356, %v3483, 0.0
    %3485 = vadd.xlane.f32.xlu0 %v3484
    %v3486 = vpop.xlane.xlu0 %3485
    %v3487 = vrcp.pop %v3486
    %v3488 = vmul.f32 %v3483, %v3487
    %v3489 = vsel %vm2368, %v3473, -inf
    %3490 = vmax.xlane.f32.xlu0 %v3489
    %v3491 = vpop.xlane.xlu0 %3490
    %v3492 = vsub.f32 %v3473, %v3491
    %v3493 = vmul.f32 %v3492, 1.442695
    %v3494 = vpow.pop %v3493
    %3496 = vrot.lane.b32.xlu0 %v3494, 125
    %v3497 = vpop.permute.xlu0 %3496
    %v3499 = vsel %vm2356, %v3497, 0.0
    %3500 = vadd.xlane.f32.xlu0 %v3499
    %v3501 = vpop.xlane.xlu0 %3500
    %v3502 = vrcp.pop %v3501
    %v3503 = vmul.f32 %v3494, %v3502
    %v3504 = vsel %vm2384, %v3488, %v3503
    %v3505 = vxor.u32 %v3473, 2147483648
    %v3506 = vmul.f32 %v3505, 1.442695
    %v3507 = vpow.pop %v3506
    %v3508 = vadd.f32 %v3507, 1.0
    %v3509 = vrcp.pop %v3508
    %v3510 = vmul.f32 1.0, %v3509
    %v3512 = vunpack.c.l.s4 1966171168
    %v3513 = vunpack.c.0.s8 %v3512
    %v3514 = vlaneseq
    %v3515 = vshrl.u32 %v3514, 7
    %v3516 = vsub.s32 %v3513, %v3515
    %v3517 = vrot.slane %v3431, %v3516
    %v3519 = vunpack.c.l.s4 1966171168
    %v3520 = vunpack.c.0.s8 %v3519
    %v3521 = vlaneseq
    %v3522 = vshrl.u32 %v3521, 7
    %v3523 = vsub.s32 %v3520, %v3522
    %v3524 = vrot.slane %v3517, %v3523
    %v3525 = vunpack.i.l.s16 %v3524
    %v3526 = vunpack.i.h.s16 %v3524
    %v3527 = vpack.i.b16 %v3525, %v3525
    %v3528 = vlaneseq
    %v3529 = vshrl.u32 %v3528, 7
    %v3530 = vsub.s32 0, %v3529
    %v3531 = vrot.slane %v3527, %v3530
    %3532 = vrot.lane.b32.xlu0 %v3531, 32
    %v3533 = vpop.permute.xlu0 %3532
    %v3535 = vsel %vm270, %v3533, 0
    %3537 = vmatprep.subr.bf16.mxu0 0
    %3538 = vmatpush1.bf16.xpose.msra.mxu0 %v2419
    %3539 = vmatprep.subr.bf16.mxu0 0
    %3540 = vmatpush1.bf16.xpose.msra.mxu0 0
    %3541 = vmatprep.subr.bf16.mxu0 0
    %3542 = vmatpush1.bf16.xpose.msra.mxu0 0
    %3543 = vmatprep.subr.bf16.mxu0 0
    %3544 = vmatpush1.bf16.xpose.msra.mxu0 0
    %3545 = vmatprep.subr.bf16.mxu0 0
    %3546 = vmatpush1.bf16.xpose.msra.mxu0 0
    %3547 = vmatprep.subr.bf16.mxu0 0
    %3548 = vmatpush1.bf16.xpose.msra.mxu0 0
    %3549 = vmatprep.subr.bf16.mxu0 0
    %3550 = vmatpush1.bf16.xpose.msra.mxu0 0
    %3551 = vmatprep.subr.bf16.mxu0 0
    %3552 = vmatpush1.bf16.xpose.msra.mxu0 0
    %3553 = vmatprep.subr.bf16.mxu0 0
    %3554 = vmatpush1.bf16.xpose.msra.mxu0 0
    %3555 = vmatprep.subr.bf16.mxu0 0
    %3556 = vmatpush1.bf16.xpose.msra.mxu0 0
    %3557 = vmatprep.subr.bf16.mxu0 0
    %3558 = vmatpush1.bf16.xpose.msra.mxu0 0
    %3559 = vmatprep.subr.bf16.mxu0 0
    %3560 = vmatpush1.bf16.xpose.msra.mxu0 0
    %3561 = vmatprep.subr.bf16.mxu0 0
    %3562 = vmatpush1.bf16.xpose.msra.mxu0 0
    %3563 = vmatprep.subr.bf16.mxu0 0
    %3564 = vmatpush1.bf16.xpose.msra.mxu0 0
    %3565 = vmatprep.subr.bf16.mxu0 0
    %3566 = vmatpush1.bf16.xpose.msra.mxu0 0
    %3567 = vmatprep.subr.bf16.mxu0 0
    %3568 = vmatpush1.bf16.xpose.msra.mxu0 0
    %3569 = vmatprep.mubr.bf16.mxu0 0
    %3570 = vmatmul.mubr.bf16.gmra.mrb[0].mxu0 %v3535
    %v3571 = vpop.f32.mrb[0].mxu0
    %v3572 = vadd.f32 0.0, %v3571
    %v3573 = vpop.f32.mrb[0].mxu0
    %v3574 = vpop.f32.mrb[0].mxu0
    %v3575 = vpop.f32.mrb[0].mxu0
    %3576 = vdwg.mxu0
    %v3577 = vpack.i.b16 %v3526, %v3526
    %v3578 = vlaneseq
    %v3579 = vshrl.u32 %v3578, 7
    %v3580 = vsub.s32 0, %v3579
    %v3581 = vrot.slane %v3577, %v3580
    %3582 = vrot.lane.b32.xlu0 %v3581, 32
    %v3583 = vpop.permute.xlu0 %3582
    %v3585 = vsel %vm270, %v3583, 0
    %3587 = vmatprep.subr.bf16.mxu0 0
    %3588 = vmatpush1.bf16.xpose.msra.mxu0 %v2472
    %3589 = vmatprep.subr.bf16.mxu0 0
    %3590 = vmatpush1.bf16.xpose.msra.mxu0 0
    %3591 = vmatprep.subr.bf16.mxu0 0
    %3592 = vmatpush1.bf16.xpose.msra.mxu0 0
    %3593 = vmatprep.subr.bf16.mxu0 0
    %3594 = vmatpush1.bf16.xpose.msra.mxu0 0
    %3595 = vmatprep.subr.bf16.mxu0 0
    %3596 = vmatpush1.bf16.xpose.msra.mxu0 0
    %3597 = vmatprep.subr.bf16.mxu0 0
    %3598 = vmatpush1.bf16.xpose.msra.mxu0 0
    %3599 = vmatprep.subr.bf16.mxu0 0
    %3600 = vmatpush1.bf16.xpose.msra.mxu0 0
    %3601 = vmatprep.subr.bf16.mxu0 0
    %3602 = vmatpush1.bf16.xpose.msra.mxu0 0
    %3603 = vmatprep.subr.bf16.mxu0 0
    %3604 = vmatpush1.bf16.xpose.msra.mxu0 0
    %3605 = vmatprep.subr.bf16.mxu0 0
    %3606 = vmatpush1.bf16.xpose.msra.mxu0 0
    %3607 = vmatprep.subr.bf16.mxu0 0
    %3608 = vmatpush1.bf16.xpose.msra.mxu0 0
    %3609 = vmatprep.subr.bf16.mxu0 0
    %3610 = vmatpush1.bf16.xpose.msra.mxu0 0
    %3611 = vmatprep.subr.bf16.mxu0 0
    %3612 = vmatpush1.bf16.xpose.msra.mxu0 0
    %3613 = vmatprep.subr.bf16.mxu0 0
    %3614 = vmatpush1.bf16.xpose.msra.mxu0 0
    %3615 = vmatprep.subr.bf16.mxu0 0
    %3616 = vmatpush1.bf16.xpose.msra.mxu0 0
    %3617 = vmatprep.subr.bf16.mxu0 0
    %3618 = vmatpush1.bf16.xpose.msra.mxu0 0
    %3619 = vmatprep.mubr.bf16.mxu0 0
    %3620 = vmatmul.mubr.bf16.gmra.mrb[0].mxu0 %v3585
    %v3621 = vpop.f32.mrb[0].mxu0
    %v3622 = vadd.f32 0.0, %v3621
    %v3623 = vpop.f32.mrb[0].mxu0
    %v3624 = vpop.f32.mrb[0].mxu0
    %v3625 = vpop.f32.mrb[0].mxu0
    %3626 = vdwg.mxu0
    %v3627 = vsel %vm2514, %v3572, -inf
    %3628 = vmax.xlane.f32.xlu0 %v3627
    %v3629 = vpop.xlane.xlu0 %3628
    %v3630 = vsel %vm2514, %v3622, -inf
    %3631 = vmax.xlane.f32.xlu0 %v3630
    %v3632 = vpop.xlane.xlu0 %3631
    %v3633 = vsub.f32 %v3572, %v3629
    %v3634 = vsub.f32 %v3622, %v3632
    %v3635 = vmul.f32 %v3633, 1.442695
    %v3636 = vpow.pop %v3635
    %v3637 = vmul.f32 %v3634, 1.442695
    %v3638 = vpow.pop %v3637
    %v3639 = vsel %vm2514, %v3636, 0.0
    %3640 = vadd.xlane.f32.xlu0 %v3639
    %v3641 = vpop.xlane.xlu0 %3640
    %v3642 = vsel %vm2514, %v3638, 0.0
    %3643 = vadd.xlane.f32.xlu0 %v3642
    %v3644 = vpop.xlane.xlu0 %3643
    %v3645 = vrcp.pop %v3641
    %v3646 = vmul.f32 %v3636, %v3645
    %v3647 = vrcp.pop %v3644
    %v3648 = vmul.f32 %v3638, %v3647
    %v3649 = vpack.c.bf16 %v3646, %v3646
    %v3650 = vpack.c.bf16 %v3648, %v3648
    %v3652 = vsel %vm177, %v3649, 0
    %3654 = vmatprep.subr.bf16.mxu0 0
    %3655 = vmatpush1.bf16.msra.mxu0 %v2543
    %3656 = vmatprep.subr.bf16.mxu0 0
    %3657 = vmatpush1.bf16.msra.mxu0 0
    %3658 = vmatprep.subr.bf16.mxu0 0
    %3659 = vmatpush1.bf16.msra.mxu0 0
    %3660 = vmatprep.subr.bf16.mxu0 0
    %3661 = vmatpush1.bf16.msra.mxu0 0
    %3662 = vmatprep.subr.bf16.mxu0 0
    %3663 = vmatpush1.bf16.msra.mxu0 0
    %3664 = vmatprep.subr.bf16.mxu0 0
    %3665 = vmatpush1.bf16.msra.mxu0 0
    %3666 = vmatprep.subr.bf16.mxu0 0
    %3667 = vmatpush1.bf16.msra.mxu0 0
    %3668 = vmatprep.subr.bf16.mxu0 0
    %3669 = vmatpush1.bf16.msra.mxu0 0
    %3670 = vmatprep.subr.bf16.mxu0 0
    %3671 = vmatpush1.bf16.msra.mxu0 0
    %3672 = vmatprep.subr.bf16.mxu0 0
    %3673 = vmatpush1.bf16.msra.mxu0 0
    %3674 = vmatprep.subr.bf16.mxu0 0
    %3675 = vmatpush1.bf16.msra.mxu0 0
    %3676 = vmatprep.subr.bf16.mxu0 0
    %3677 = vmatpush1.bf16.msra.mxu0 0
    %3678 = vmatprep.subr.bf16.mxu0 0
    %3679 = vmatpush1.bf16.msra.mxu0 0
    %3680 = vmatprep.subr.bf16.mxu0 0
    %3681 = vmatpush1.bf16.msra.mxu0 0
    %3682 = vmatprep.subr.bf16.mxu0 0
    %3683 = vmatpush1.bf16.msra.mxu0 0
    %3684 = vmatprep.subr.bf16.mxu0 0
    %3685 = vmatpush1.bf16.msra.mxu0 0
    %3686 = vmatprep.mubr.bf16.mxu0 0
    %3687 = vmatmul.mubr.bf16.gmra.mrb[0].mxu0 %v3652
    %v3688 = vpop.f32.mrb[0].mxu0
    %v3689 = vadd.f32 %v79, %v3688
    %v3690 = vpop.f32.mrb[0].mxu0
    %v3691 = vpop.f32.mrb[0].mxu0
    %v3692 = vpop.f32.mrb[0].mxu0
    %3693 = vdwg.mxu0
    %v3695 = vsel %vm177, %v3650, 0
    %3697 = vmatprep.subr.bf16.mxu0 0
    %3698 = vmatpush1.bf16.msra.mxu0 %v2589
    %3699 = vmatprep.subr.bf16.mxu0 0
    %3700 = vmatpush1.bf16.msra.mxu0 0
    %3701 = vmatprep.subr.bf16.mxu0 0
    %3702 = vmatpush1.bf16.msra.mxu0 0
    %3703 = vmatprep.subr.bf16.mxu0 0
    %3704 = vmatpush1.bf16.msra.mxu0 0
    %3705 = vmatprep.subr.bf16.mxu0 0
    %3706 = vmatpush1.bf16.msra.mxu0 0
    %3707 = vmatprep.subr.bf16.mxu0 0
    %3708 = vmatpush1.bf16.msra.mxu0 0
    %3709 = vmatprep.subr.bf16.mxu0 0
    %3710 = vmatpush1.bf16.msra.mxu0 0
    %3711 = vmatprep.subr.bf16.mxu0 0
    %3712 = vmatpush1.bf16.msra.mxu0 0
    %3713 = vmatprep.subr.bf16.mxu0 0
    %3714 = vmatpush1.bf16.msra.mxu0 0
    %3715 = vmatprep.subr.bf16.mxu0 0
    %3716 = vmatpush1.bf16.msra.mxu0 0
    %3717 = vmatprep.subr.bf16.mxu0 0
    %3718 = vmatpush1.bf16.msra.mxu0 0
    %3719 = vmatprep.subr.bf16.mxu0 0
    %3720 = vmatpush1.bf16.msra.mxu0 0
    %3721 = vmatprep.subr.bf16.mxu0 0
    %3722 = vmatpush1.bf16.msra.mxu0 0
    %3723 = vmatprep.subr.bf16.mxu0 0
    %3724 = vmatpush1.bf16.msra.mxu0 0
    %3725 = vmatprep.subr.bf16.mxu0 0
    %3726 = vmatpush1.bf16.msra.mxu0 0
    %3727 = vmatprep.subr.bf16.mxu0 0
    %3728 = vmatpush1.bf16.msra.mxu0 0
    %3729 = vmatprep.mubr.bf16.mxu0 0
    %3730 = vmatmul.mubr.bf16.gmra.mrb[0].mxu0 %v3695
    %v3731 = vpop.f32.mrb[0].mxu0
    %v3732 = vadd.f32 %v79, %v3731
    %v3733 = vpop.f32.mrb[0].mxu0
    %v3734 = vpop.f32.mrb[0].mxu0
    %v3735 = vpop.f32.mrb[0].mxu0
    %3736 = vdwg.mxu0
    %3738 = vset.pattern.permute.xlu0 2
    %3739 = vperm.xlu0 %3738, %v3348
    %v3740 = vpop.permute.xlu0 %3739
    %3743 = vset.pattern.permute.xlu0 2
    %3744 = vperm.xlu0 %3743, %v3349
    %v3745 = vpop.permute.xlu0 %3744
    %3748 = vset.pattern.permute.xlu0 2
    %3749 = vperm.xlu0 %3748, %v3350
    %v3750 = vpop.permute.xlu0 %3749
    %3753 = vset.pattern.permute.xlu0 2
    %3754 = vperm.xlu0 %3753, %v3351
    %v3755 = vpop.permute.xlu0 %3754
    %3758 = vset.pattern.permute.xlu0 2
    %3759 = vperm.xlu0 %3758, %v3352
    %v3760 = vpop.permute.xlu0 %3759
    %3763 = vset.pattern.permute.xlu0 2
    %3764 = vperm.xlu0 %3763, %v3353
    %v3765 = vpop.permute.xlu0 %3764
    %3768 = vset.pattern.permute.xlu0 2
    %3769 = vperm.xlu0 %3768, %v3354
    %v3770 = vpop.permute.xlu0 %3769
    %3773 = vset.pattern.permute.xlu0 2
    %3774 = vperm.xlu0 %3773, %v3355
    %v3775 = vpop.permute.xlu0 %3774
    %3778 = vset.pattern.permute.xlu0 2
    %3779 = vperm.xlu0 %3778, %v3356
    %v3780 = vpop.permute.xlu0 %3779
    %3783 = vset.pattern.permute.xlu0 2
    %3784 = vperm.xlu0 %3783, %v3357
    %v3785 = vpop.permute.xlu0 %3784
    %v3787 = vmul.f32 %v3740, %v97
    %v3788 = vmul.f32 %v3745, %v98
    %v3789 = vmul.f32 %v3750, %v99
    %v3790 = vmul.f32 %v3755, %v100
    %v3791 = vmul.f32 %v3760, %v101
    %v3792 = vmul.f32 %v3765, %v97
    %v3793 = vmul.f32 %v3770, %v98
    %v3794 = vmul.f32 %v3775, %v99
    %v3795 = vmul.f32 %v3780, %v100
    %v3796 = vmul.f32 %v3785, %v101
    %v3797 = vsel %vm2636, %v3787, 0.0
    %v3798 = vsel %vm2636, %v3788, 0.0
    %v3799 = vadd.f32 %v3797, %v3798
    %v3800 = vsel %vm2636, %v3789, 0.0
    %v3801 = vadd.f32 %v3799, %v3800
    %v3802 = vsel %vm2636, %v3790, 0.0
    %v3803 = vadd.f32 %v3801, %v3802
    %v3804 = vsel %vm2644, %v3791, 0.0
    %v3805 = vadd.f32 %v3803, %v3804
    %v3806 = vrot.slane %v3805, 4
    %v3807 = vadd.f32 %v3805, %v3806
    %v3808 = vrot.slane %v3807, 2
    %v3809 = vadd.f32 %v3807, %v3808
    %v3810 = vrot.slane %v3809, 1
    %v3811 = vadd.f32 %v3809, %v3810
    %v3812 = vsel %vm2636, %v3792, 0.0
    %v3813 = vsel %vm2636, %v3793, 0.0
    %v3814 = vadd.f32 %v3812, %v3813
    %v3815 = vsel %vm2636, %v3794, 0.0
    %v3816 = vadd.f32 %v3814, %v3815
    %v3817 = vsel %vm2636, %v3795, 0.0
    %v3818 = vadd.f32 %v3816, %v3817
    %v3819 = vsel %vm2644, %v3796, 0.0
    %v3820 = vadd.f32 %v3818, %v3819
    %v3821 = vrot.slane %v3820, 4
    %v3822 = vadd.f32 %v3820, %v3821
    %v3823 = vrot.slane %v3822, 2
    %v3824 = vadd.f32 %v3822, %v3823
    %v3825 = vrot.slane %v3824, 1
    %v3826 = vadd.f32 %v3824, %v3825
    %v3827 = vadd.f32 %v3811, %v2656
    %v3828 = vadd.f32 %v3826, %v2656
    %3829 = vrot.lane.b32.xlu0 %v3348, 127
    %v3830 = vpop.permute.xlu0 %3829
    %3831 = vrot.lane.b32.xlu0 %v3349, 127
    %v3832 = vpop.permute.xlu0 %3831
    %3833 = vrot.lane.b32.xlu0 %v3350, 127
    %v3834 = vpop.permute.xlu0 %3833
    %3835 = vrot.lane.b32.xlu0 %v3351, 127
    %v3836 = vpop.permute.xlu0 %3835
    %3837 = vrot.lane.b32.xlu0 %v3352, 127
    %v3838 = vpop.permute.xlu0 %3837
    %3839 = vrot.lane.b32.xlu0 %v3353, 127
    %v3840 = vpop.permute.xlu0 %3839
    %3841 = vrot.lane.b32.xlu0 %v3354, 127
    %v3842 = vpop.permute.xlu0 %3841
    %3843 = vrot.lane.b32.xlu0 %v3355, 127
    %v3844 = vpop.permute.xlu0 %3843
    %3845 = vrot.lane.b32.xlu0 %v3356, 127
    %v3846 = vpop.permute.xlu0 %3845
    %3847 = vrot.lane.b32.xlu0 %v3357, 127
    %v3848 = vpop.permute.xlu0 %3847
    %v3859 = vmin.f32 %v3348, %v3830
    %v3860 = vmin.f32 %v3349, %v3832
    %v3861 = vmin.f32 %v3350, %v3834
    %v3862 = vmin.f32 %v3351, %v3836
    %v3863 = vmin.f32 %v3352, %v3838
    %v3864 = vmin.f32 %v3353, %v3840
    %v3865 = vmin.f32 %v3354, %v3842
    %v3866 = vmin.f32 %v3355, %v3844
    %v3867 = vmin.f32 %v3356, %v3846
    %v3868 = vmin.f32 %v3357, %v3848
    %v3869 = vlaneseq
    %v3870 = vshrl.u32 %v3869, 7
    %v3871 = vsub.s32 0, %v3870
    %v3872 = vrot.slane %v3689, %v3871
    %v3873 = vlaneseq
    %v3874 = vshrl.u32 %v3873, 7
    %v3875 = vsub.s32 0, %v3874
    %v3876 = vrot.slane %v3732, %v3875
    %v3879 = vcombine.high %v3872, %v3872
    %v3880 = vcombine.high %v3876, %v3876
    %v3883 = vmul.f32 %v2201, %v3872
    %v3884 = vmul.f32 %v2202, %v3879
    %v3885 = vmul.f32 %v2203, %v3872
    %v3886 = vmul.f32 %v2204, %v3879
    %v3887 = vmul.f32 %v2205, %v3872
    %v3888 = vmul.f32 %v2206, %v3879
    %v3889 = vmul.f32 %v2207, %v3872
    %v3890 = vmul.f32 %v2208, %v3879
    %v3891 = vmul.f32 %v2209, %v3872
    %v3892 = vmul.f32 %v2210, %v3876
    %v3893 = vmul.f32 %v2211, %v3880
    %v3894 = vmul.f32 %v2212, %v3876
    %v3895 = vmul.f32 %v2213, %v3880
    %v3896 = vmul.f32 %v2214, %v3876
    %v3897 = vmul.f32 %v2215, %v3880
    %v3898 = vmul.f32 %v2216, %v3876
    %v3899 = vmul.f32 %v2217, %v3880
    %v3900 = vmul.f32 %v2218, %v3876
    %v3901 = vmax.f32 %v3883, 0.0
    %v3902 = vmax.f32 %v3884, 0.0
    %v3903 = vmax.f32 %v3885, 0.0
    %v3904 = vmax.f32 %v3886, 0.0
    %v3905 = vmax.f32 %v3887, 0.0
    %v3906 = vmax.f32 %v3888, 0.0
    %v3907 = vmax.f32 %v3889, 0.0
    %v3908 = vmax.f32 %v3890, 0.0
    %v3909 = vmax.f32 %v3891, 0.0
    %v3910 = vmax.f32 %v3892, 0.0
    %v3911 = vmax.f32 %v3893, 0.0
    %v3912 = vmax.f32 %v3894, 0.0
    %v3913 = vmax.f32 %v3895, 0.0
    %v3914 = vmax.f32 %v3896, 0.0
    %v3915 = vmax.f32 %v3897, 0.0
    %v3916 = vmax.f32 %v3898, 0.0
    %v3917 = vmax.f32 %v3899, 0.0
    %v3918 = vmax.f32 %v3900, 0.0
    %v3935 = vcombine.low %v3901, %v3902
    %v3936 = vcombine.low %v3903, %v3904
    %v3937 = vcombine.low %v3905, %v3906
    %v3938 = vcombine.low %v3907, %v3908
    %v3939 = vcombine.low %v3910, %v3911
    %v3940 = vcombine.low %v3912, %v3913
    %v3941 = vcombine.low %v3914, %v3915
    %v3942 = vcombine.low %v3916, %v3917
    %v3951 = vpack.c.bf16 %v3936, %v3935
    %v3952 = vpack.c.bf16 %v3938, %v3937
    %v3953 = vpack.c.bf16 %v3909, %v3909
    %v3954 = vpack.c.bf16 %v3940, %v3939
    %v3955 = vpack.c.bf16 %v3942, %v3941
    %v3956 = vpack.c.bf16 %v3918, %v3918
    %v3963 = vcombine.high %v3951, %v3951
    %v3965 = vunpack.c.l.s4 1983009808
    %v3966 = vunpack.c.0.s8 %v3965
    %v3967 = vlaneseq
    %v3968 = vshrl.u32 %v3967, 7
    %v3969 = vsub.s32 %v3966, %v3968
    %v3970 = vrot.slane %v3951, %v3969
    %v3972 = vunpack.c.l.s4 1983009808
    %v3973 = vunpack.c.0.s8 %v3972
    %v3974 = vlaneseq
    %v3975 = vshrl.u32 %v3974, 7
    %v3976 = vsub.s32 %v3973, %v3975
    %v3977 = vrot.slane %v3963, %v3976
    %v3978 = vcombine.high %v3970, %v3970
    %v3979 = vcombine.high %v3977, %v3977
    %v3980 = vcombine.high %v3952, %v3952
    %v3982 = vunpack.c.l.s4 1983009808
    %v3983 = vunpack.c.0.s8 %v3982
    %v3984 = vlaneseq
    %v3985 = vshrl.u32 %v3984, 7
    %v3986 = vsub.s32 %v3983, %v3985
    %v3987 = vrot.slane %v3952, %v3986
    %v3989 = vunpack.c.l.s4 1983009808
    %v3990 = vunpack.c.0.s8 %v3989
    %v3991 = vlaneseq
    %v3992 = vshrl.u32 %v3991, 7
    %v3993 = vsub.s32 %v3990, %v3992
    %v3994 = vrot.slane %v3980, %v3993
    %v3995 = vcombine.high %v3987, %v3987
    %v3996 = vcombine.high %v3994, %v3994
    %v3998 = vunpack.c.l.s4 1983009808
    %v3999 = vunpack.c.0.s8 %v3998
    %v4000 = vlaneseq
    %v4001 = vshrl.u32 %v4000, 7
    %v4002 = vsub.s32 %v3999, %v4001
    %v4003 = vrot.slane %v3953, %v4002
    %v4004 = vcombine.high %v3954, %v3954
    %v4006 = vunpack.c.l.s4 1983009808
    %v4007 = vunpack.c.0.s8 %v4006
    %v4008 = vlaneseq
    %v4009 = vshrl.u32 %v4008, 7
    %v4010 = vsub.s32 %v4007, %v4009
    %v4011 = vrot.slane %v3954, %v4010
    %v4013 = vunpack.c.l.s4 1983009808
    %v4014 = vunpack.c.0.s8 %v4013
    %v4015 = vlaneseq
    %v4016 = vshrl.u32 %v4015, 7
    %v4017 = vsub.s32 %v4014, %v4016
    %v4018 = vrot.slane %v4004, %v4017
    %v4019 = vcombine.high %v4011, %v4011
    %v4020 = vcombine.high %v4018, %v4018
    %v4021 = vcombine.high %v3955, %v3955
    %v4023 = vunpack.c.l.s4 1983009808
    %v4024 = vunpack.c.0.s8 %v4023
    %v4025 = vlaneseq
    %v4026 = vshrl.u32 %v4025, 7
    %v4027 = vsub.s32 %v4024, %v4026
    %v4028 = vrot.slane %v3955, %v4027
    %v4030 = vunpack.c.l.s4 1983009808
    %v4031 = vunpack.c.0.s8 %v4030
    %v4032 = vlaneseq
    %v4033 = vshrl.u32 %v4032, 7
    %v4034 = vsub.s32 %v4031, %v4033
    %v4035 = vrot.slane %v4021, %v4034
    %v4036 = vcombine.high %v4028, %v4028
    %v4037 = vcombine.high %v4035, %v4035
    %v4039 = vunpack.c.l.s4 1983009808
    %v4040 = vunpack.c.0.s8 %v4039
    %v4041 = vlaneseq
    %v4042 = vshrl.u32 %v4041, 7
    %v4043 = vsub.s32 %v4040, %v4042
    %v4044 = vrot.slane %v3956, %v4043
    %v4045 = vcombine.low %v3970, %v3978
    %v4046 = vcombine.low %v3977, %v3979
    %v4048 = vunpack.c.l.s4 1983009808
    %v4049 = vunpack.c.0.s8 %v4048
    %v4050 = vlaneseq
    %v4051 = vshrl.u32 %v4050, 7
    %v4052 = vsub.s32 %v4049, %v4051
    %v4053 = vrot.slane %v4045, %v4052
    %v4055 = vunpack.c.l.s4 1983009808
    %v4056 = vunpack.c.0.s8 %v4055
    %v4057 = vlaneseq
    %v4058 = vshrl.u32 %v4057, 7
    %v4059 = vsub.s32 %v4056, %v4058
    %v4060 = vrot.slane %v4046, %v4059
    %v4061 = vcombine.low %v4053, %v4060
    %v4062 = vcombine.low %v3987, %v3995
    %v4063 = vcombine.low %v3994, %v3996
    %v4065 = vunpack.c.l.s4 1983009808
    %v4066 = vunpack.c.0.s8 %v4065
    %v4067 = vlaneseq
    %v4068 = vshrl.u32 %v4067, 7
    %v4069 = vsub.s32 %v4066, %v4068
    %v4070 = vrot.slane %v4062, %v4069
    %v4072 = vunpack.c.l.s4 1983009808
    %v4073 = vunpack.c.0.s8 %v4072
    %v4074 = vlaneseq
    %v4075 = vshrl.u32 %v4074, 7
    %v4076 = vsub.s32 %v4073, %v4075
    %v4077 = vrot.slane %v4063, %v4076
    %v4078 = vcombine.low %v4070, %v4077
    %v4079 = vcombine.low %v4003, %v4011
    %v4080 = vcombine.low %v4019, %v4018
    %v4082 = vunpack.c.l.s4 1983009808
    %v4083 = vunpack.c.0.s8 %v4082
    %v4084 = vlaneseq
    %v4085 = vshrl.u32 %v4084, 7
    %v4086 = vsub.s32 %v4083, %v4085
    %v4087 = vrot.slane %v4079, %v4086
    %v4089 = vunpack.c.l.s4 1983009808
    %v4090 = vunpack.c.0.s8 %v4089
    %v4091 = vlaneseq
    %v4092 = vshrl.u32 %v4091, 7
    %v4093 = vsub.s32 %v4090, %v4092
    %v4094 = vrot.slane %v4080, %v4093
    %v4095 = vcombine.low %v4087, %v4094
    %v4096 = vcombine.low %v4020, %v4028
    %v4097 = vcombine.low %v4036, %v4035
    %v4099 = vunpack.c.l.s4 1983009808
    %v4100 = vunpack.c.0.s8 %v4099
    %v4101 = vlaneseq
    %v4102 = vshrl.u32 %v4101, 7
    %v4103 = vsub.s32 %v4100, %v4102
    %v4104 = vrot.slane %v4096, %v4103
    %v4106 = vunpack.c.l.s4 1983009808
    %v4107 = vunpack.c.0.s8 %v4106
    %v4108 = vlaneseq
    %v4109 = vshrl.u32 %v4108, 7
    %v4110 = vsub.s32 %v4107, %v4109
    %v4111 = vrot.slane %v4097, %v4110
    %v4112 = vcombine.low %v4104, %v4111
    %v4113 = vcombine.low %v4037, %v4044
    %v4115 = vunpack.c.l.s4 1983009808
    %v4116 = vunpack.c.0.s8 %v4115
    %v4117 = vlaneseq
    %v4118 = vshrl.u32 %v4117, 7
    %v4119 = vsub.s32 %v4116, %v4118
    %v4120 = vrot.slane %v4113, %v4119
    %v4122 = vsel %vm2914, %v4061, 0
    %v4125 = vsel %vm2914, %v4078, 0
    %v4128 = vsel %vm2914, %v4095, 0
    %v4131 = vsel %vm2914, %v4112, 0
    %v4134 = vsel %vm2914, %v4120, 0
    %4136 = vmatprep.subr.bf16.mxu0 0
    %4137 = vmatpush1.bf16.msra.mxu0 %v95
    %4138 = vmatprep.subr.bf16.mxu0 0
    %4139 = vmatpush1.bf16.msra.mxu0 0
    %4140 = vmatprep.subr.bf16.mxu0 0
    %4141 = vmatpush1.bf16.msra.mxu0 0
    %4142 = vmatprep.subr.bf16.mxu0 0
    %4143 = vmatpush1.bf16.msra.mxu0 0
    %4144 = vmatprep.subr.bf16.mxu0 0
    %4145 = vmatpush1.bf16.msra.mxu0 0
    %4146 = vmatprep.subr.bf16.mxu0 0
    %4147 = vmatpush1.bf16.msra.mxu0 0
    %4148 = vmatprep.subr.bf16.mxu0 0
    %4149 = vmatpush1.bf16.msra.mxu0 0
    %4150 = vmatprep.subr.bf16.mxu0 0
    %4151 = vmatpush1.bf16.msra.mxu0 0
    %4152 = vmatprep.subr.bf16.mxu0 0
    %4153 = vmatpush1.bf16.msra.mxu0 0
    %4154 = vmatprep.subr.bf16.mxu0 0
    %4155 = vmatpush1.bf16.msra.mxu0 0
    %4156 = vmatprep.subr.bf16.mxu0 0
    %4157 = vmatpush1.bf16.msra.mxu0 0
    %4158 = vmatprep.subr.bf16.mxu0 0
    %4159 = vmatpush1.bf16.msra.mxu0 0
    %4160 = vmatprep.subr.bf16.mxu0 0
    %4161 = vmatpush1.bf16.msra.mxu0 0
    %4162 = vmatprep.subr.bf16.mxu0 0
    %4163 = vmatpush1.bf16.msra.mxu0 0
    %4164 = vmatprep.subr.bf16.mxu0 0
    %4165 = vmatpush1.bf16.msra.mxu0 0
    %4166 = vmatprep.subr.bf16.mxu0 0
    %4167 = vmatpush1.bf16.msra.mxu0 0
    %4168 = vmatprep.mubr.bf16.mxu0 0
    %4169 = vmatmul.mubr.bf16.gmra.mrb[0].mxu0 %v4122
    %v4170 = vpop.f32.mrb[0].mxu0
    %v4171 = vadd.f32 %v2837, %v4170
    %v4172 = vpop.f32.mrb[0].mxu0
    %v4173 = vpop.f32.mrb[0].mxu0
    %v4174 = vadd.f32 %v2837, %v4173
    %v4175 = vpop.f32.mrb[0].mxu0
    %4176 = vmatprep.mubr.bf16.mxu0 0
    %4177 = vmatmul.mubr.bf16.gmra.mrb[0].mxu0 %v4125
    %v4178 = vpop.f32.mrb[0].mxu0
    %v4179 = vadd.f32 %v2837, %v4178
    %v4180 = vpop.f32.mrb[0].mxu0
    %v4181 = vpop.f32.mrb[0].mxu0
    %v4182 = vadd.f32 %v2837, %v4181
    %v4183 = vpop.f32.mrb[0].mxu0
    %4184 = vmatprep.mubr.bf16.mxu0 0
    %4185 = vmatmul.mubr.bf16.gmra.mrb[0].mxu0 %v4128
    %v4186 = vpop.f32.mrb[0].mxu0
    %v4187 = vadd.f32 %v2837, %v4186
    %v4188 = vpop.f32.mrb[0].mxu0
    %v4189 = vpop.f32.mrb[0].mxu0
    %v4190 = vadd.f32 %v2837, %v4189
    %v4191 = vpop.f32.mrb[0].mxu0
    %4192 = vmatprep.mubr.bf16.mxu0 0
    %4193 = vmatmul.mubr.bf16.gmra.mrb[0].mxu0 %v4131
    %v4194 = vpop.f32.mrb[0].mxu0
    %v4195 = vadd.f32 %v2837, %v4194
    %v4196 = vpop.f32.mrb[0].mxu0
    %v4197 = vpop.f32.mrb[0].mxu0
    %v4198 = vadd.f32 %v2837, %v4197
    %v4199 = vpop.f32.mrb[0].mxu0
    %4200 = vmatprep.mubr.bf16.mxu0 0
    %4201 = vmatmul.mubr.bf16.gmra.mrb[0].mxu0 %v4134
    %v4202 = vpop.f32.mrb[0].mxu0
    %v4203 = vadd.f32 %v2837, %v4202
    %v4204 = vpop.f32.mrb[0].mxu0
    %v4205 = vpop.f32.mrb[0].mxu0
    %v4206 = vpop.f32.mrb[0].mxu0
    %4207 = vdwg.mxu0
    %v4217 = vcombine.high %v4171, %v4171
    %v4218 = vcombine.high %v4174, %v4174
    %v4219 = vcombine.high %v4179, %v4179
    %v4220 = vcombine.high %v4182, %v4182
    %v4221 = vcombine.high %v4187, %v4187
    %v4222 = vcombine.high %v4190, %v4190
    %v4223 = vcombine.high %v4195, %v4195
    %v4224 = vcombine.high %v4198, %v4198
    %v4225 = vcombine.high %v4203, %v4203
    %v4228 = vunpack.c.l.s4 1966171168
    %v4229 = vunpack.c.0.s8 %v4228
    %v4230 = vlaneseq
    %v4231 = vshrl.u32 %v4230, 7
    %v4232 = vsub.s32 %v4229, %v4231
    %v4233 = vrot.slane %v3488, %v4232
    %v4234 = vcombine.high %v4233, %v4233
    %v4236 = vunpack.c.l.s4 1966171168
    %v4237 = vunpack.c.0.s8 %v4236
    %v4238 = vlaneseq
    %v4239 = vshrl.u32 %v4238, 7
    %v4240 = vsub.s32 %v4237, %v4239
    %v4241 = vrot.slane %v4233, %v4240
    %v4243 = vunpack.c.l.s4 1966171168
    %v4244 = vunpack.c.0.s8 %v4243
    %v4245 = vlaneseq
    %v4246 = vshrl.u32 %v4245, 7
    %v4247 = vsub.s32 %v4244, %v4246
    %v4248 = vrot.slane %v4234, %v4247
    %4250 = vset.pattern.permute.xlu0 0
    %4251 = vperm.xlu0 %4250, %v3859
    %v4252 = vpop.permute.xlu0 %4251
    %4255 = vset.pattern.permute.xlu0 0
    %4256 = vperm.xlu0 %4255, %v3860
    %v4257 = vpop.permute.xlu0 %4256
    %4260 = vset.pattern.permute.xlu0 0
    %4261 = vperm.xlu0 %4260, %v3861
    %v4262 = vpop.permute.xlu0 %4261
    %4265 = vset.pattern.permute.xlu0 0
    %4266 = vperm.xlu0 %4265, %v3862
    %v4267 = vpop.permute.xlu0 %4266
    %4270 = vset.pattern.permute.xlu0 0
    %4271 = vperm.xlu0 %4270, %v3863
    %v4272 = vpop.permute.xlu0 %4271
    %4275 = vset.pattern.permute.xlu0 0
    %4276 = vperm.xlu0 %4275, %v3864
    %v4277 = vpop.permute.xlu0 %4276
    %4280 = vset.pattern.permute.xlu0 0
    %4281 = vperm.xlu0 %4280, %v3865
    %v4282 = vpop.permute.xlu0 %4281
    %4285 = vset.pattern.permute.xlu0 0
    %4286 = vperm.xlu0 %4285, %v3866
    %v4287 = vpop.permute.xlu0 %4286
    %4290 = vset.pattern.permute.xlu0 0
    %4291 = vperm.xlu0 %4290, %v3867
    %v4292 = vpop.permute.xlu0 %4291
    %4295 = vset.pattern.permute.xlu0 0
    %4296 = vperm.xlu0 %4295, %v3868
    %v4297 = vpop.permute.xlu0 %4296
    %v4299 = vlaneseq
    %v4300 = vshrl.u32 %v4299, 7
    %v4301 = vsub.s32 0, %v4300
    %v4302 = vrot.slane %v4241, %v4301
    %v4303 = vlaneseq
    %v4304 = vshrl.u32 %v4303, 7
    %v4305 = vsub.s32 0, %v4304
    %v4306 = vrot.slane %v4248, %v4305
    %v4309 = vmul.f32 %v4252, %v4302
    %v4310 = vmul.f32 %v4257, %v4302
    %v4311 = vmul.f32 %v4262, %v4302
    %v4312 = vmul.f32 %v4267, %v4302
    %v4313 = vmul.f32 %v4272, %v4302
    %v4314 = vmul.f32 %v4277, %v4306
    %v4315 = vmul.f32 %v4282, %v4306
    %v4316 = vmul.f32 %v4287, %v4306
    %v4317 = vmul.f32 %v4292, %v4306
    %v4318 = vmul.f32 %v4297, %v4306
    %v4321 = vunpack.c.l.s4 1966171168
    %v4322 = vunpack.c.0.s8 %v4321
    %v4323 = vlaneseq
    %v4324 = vshrl.u32 %v4323, 7
    %v4325 = vsub.s32 %v4322, %v4324
    %v4326 = vrot.slane %v3503, %v4325
    %v4327 = vcombine.high %v4326, %v4326
    %v4329 = vunpack.c.l.s4 1966171168
    %v4330 = vunpack.c.0.s8 %v4329
    %v4331 = vlaneseq
    %v4332 = vshrl.u32 %v4331, 7
    %v4333 = vsub.s32 %v4330, %v4332
    %v4334 = vrot.slane %v4326, %v4333
    %v4336 = vunpack.c.l.s4 1966171168
    %v4337 = vunpack.c.0.s8 %v4336
    %v4338 = vlaneseq
    %v4339 = vshrl.u32 %v4338, 7
    %v4340 = vsub.s32 %v4337, %v4339
    %v4341 = vrot.slane %v4327, %v4340
    %4342 = vset.pattern.permute.xlu0 0
    %4343 = vperm.xlu0 %4342, %v4171
    %v4344 = vpop.permute.xlu0 %4343
    %v4347 = vunpack.c.l.s4 839922192
    %v4348 = vunpack.c.0.s8 %v4347
    %v4349 = vlaneseq
    %v4350 = vshrl.u32 %v4349, 7
    %v4351 = vsub.s32 %v4348, %v4350
    %v4352 = vrot.slane %v4344, %v4351
    %4353 = vset.pattern.permute.xlu0 0
    %4354 = vperm.xlu0 %4353, %v4217
    %v4355 = vpop.permute.xlu0 %4354
    %v4358 = vunpack.c.l.s4 839922192
    %v4359 = vunpack.c.0.s8 %v4358
    %v4360 = vlaneseq
    %v4361 = vshrl.u32 %v4360, 7
    %v4362 = vsub.s32 %v4359, %v4361
    %v4363 = vrot.slane %v4355, %v4362
    %4364 = vset.pattern.permute.xlu0 0
    %4365 = vperm.xlu0 %4364, %v4174
    %v4366 = vpop.permute.xlu0 %4365
    %v4369 = vunpack.c.l.s4 839922192
    %v4370 = vunpack.c.0.s8 %v4369
    %v4371 = vlaneseq
    %v4372 = vshrl.u32 %v4371, 7
    %v4373 = vsub.s32 %v4370, %v4372
    %v4374 = vrot.slane %v4366, %v4373
    %4375 = vset.pattern.permute.xlu0 0
    %4376 = vperm.xlu0 %4375, %v4218
    %v4377 = vpop.permute.xlu0 %4376
    %v4380 = vunpack.c.l.s4 839922192
    %v4381 = vunpack.c.0.s8 %v4380
    %v4382 = vlaneseq
    %v4383 = vshrl.u32 %v4382, 7
    %v4384 = vsub.s32 %v4381, %v4383
    %v4385 = vrot.slane %v4377, %v4384
    %4386 = vset.pattern.permute.xlu0 0
    %4387 = vperm.xlu0 %4386, %v4179
    %v4388 = vpop.permute.xlu0 %4387
    %v4391 = vunpack.c.l.s4 839922192
    %v4392 = vunpack.c.0.s8 %v4391
    %v4393 = vlaneseq
    %v4394 = vshrl.u32 %v4393, 7
    %v4395 = vsub.s32 %v4392, %v4394
    %v4396 = vrot.slane %v4388, %v4395
    %4397 = vset.pattern.permute.xlu0 0
    %4398 = vperm.xlu0 %4397, %v4219
    %v4399 = vpop.permute.xlu0 %4398
    %v4402 = vunpack.c.l.s4 839922192
    %v4403 = vunpack.c.0.s8 %v4402
    %v4404 = vlaneseq
    %v4405 = vshrl.u32 %v4404, 7
    %v4406 = vsub.s32 %v4403, %v4405
    %v4407 = vrot.slane %v4399, %v4406
    %4408 = vset.pattern.permute.xlu0 0
    %4409 = vperm.xlu0 %4408, %v4182
    %v4410 = vpop.permute.xlu0 %4409
    %v4413 = vunpack.c.l.s4 839922192
    %v4414 = vunpack.c.0.s8 %v4413
    %v4415 = vlaneseq
    %v4416 = vshrl.u32 %v4415, 7
    %v4417 = vsub.s32 %v4414, %v4416
    %v4418 = vrot.slane %v4410, %v4417
    %4419 = vset.pattern.permute.xlu0 0
    %4420 = vperm.xlu0 %4419, %v4220
    %v4421 = vpop.permute.xlu0 %4420
    %v4424 = vunpack.c.l.s4 839922192
    %v4425 = vunpack.c.0.s8 %v4424
    %v4426 = vlaneseq
    %v4427 = vshrl.u32 %v4426, 7
    %v4428 = vsub.s32 %v4425, %v4427
    %v4429 = vrot.slane %v4421, %v4428
    %4430 = vset.pattern.permute.xlu0 0
    %4431 = vperm.xlu0 %4430, %v4187
    %v4432 = vpop.permute.xlu0 %4431
    %v4435 = vunpack.c.l.s4 839922192
    %v4436 = vunpack.c.0.s8 %v4435
    %v4437 = vlaneseq
    %v4438 = vshrl.u32 %v4437, 7
    %v4439 = vsub.s32 %v4436, %v4438
    %v4440 = vrot.slane %v4432, %v4439
    %4441 = vset.pattern.permute.xlu0 0
    %4442 = vperm.xlu0 %4441, %v4221
    %v4443 = vpop.permute.xlu0 %4442
    %v4446 = vunpack.c.l.s4 839922192
    %v4447 = vunpack.c.0.s8 %v4446
    %v4448 = vlaneseq
    %v4449 = vshrl.u32 %v4448, 7
    %v4450 = vsub.s32 %v4447, %v4449
    %v4451 = vrot.slane %v4443, %v4450
    %4452 = vset.pattern.permute.xlu0 0
    %4453 = vperm.xlu0 %4452, %v4190
    %v4454 = vpop.permute.xlu0 %4453
    %v4457 = vunpack.c.l.s4 839922192
    %v4458 = vunpack.c.0.s8 %v4457
    %v4459 = vlaneseq
    %v4460 = vshrl.u32 %v4459, 7
    %v4461 = vsub.s32 %v4458, %v4460
    %v4462 = vrot.slane %v4454, %v4461
    %4463 = vset.pattern.permute.xlu0 0
    %4464 = vperm.xlu0 %4463, %v4222
    %v4465 = vpop.permute.xlu0 %4464
    %v4468 = vunpack.c.l.s4 839922192
    %v4469 = vunpack.c.0.s8 %v4468
    %v4470 = vlaneseq
    %v4471 = vshrl.u32 %v4470, 7
    %v4472 = vsub.s32 %v4469, %v4471
    %v4473 = vrot.slane %v4465, %v4472
    %4474 = vset.pattern.permute.xlu0 0
    %4475 = vperm.xlu0 %4474, %v4195
    %v4476 = vpop.permute.xlu0 %4475
    %v4479 = vunpack.c.l.s4 839922192
    %v4480 = vunpack.c.0.s8 %v4479
    %v4481 = vlaneseq
    %v4482 = vshrl.u32 %v4481, 7
    %v4483 = vsub.s32 %v4480, %v4482
    %v4484 = vrot.slane %v4476, %v4483
    %4485 = vset.pattern.permute.xlu0 0
    %4486 = vperm.xlu0 %4485, %v4223
    %v4487 = vpop.permute.xlu0 %4486
    %v4490 = vunpack.c.l.s4 839922192
    %v4491 = vunpack.c.0.s8 %v4490
    %v4492 = vlaneseq
    %v4493 = vshrl.u32 %v4492, 7
    %v4494 = vsub.s32 %v4491, %v4493
    %v4495 = vrot.slane %v4487, %v4494
    %4496 = vset.pattern.permute.xlu0 0
    %4497 = vperm.xlu0 %4496, %v4198
    %v4498 = vpop.permute.xlu0 %4497
    %v4501 = vunpack.c.l.s4 839922192
    %v4502 = vunpack.c.0.s8 %v4501
    %v4503 = vlaneseq
    %v4504 = vshrl.u32 %v4503, 7
    %v4505 = vsub.s32 %v4502, %v4504
    %v4506 = vrot.slane %v4498, %v4505
    %4507 = vset.pattern.permute.xlu0 0
    %4508 = vperm.xlu0 %4507, %v4224
    %v4509 = vpop.permute.xlu0 %4508
    %v4512 = vunpack.c.l.s4 839922192
    %v4513 = vunpack.c.0.s8 %v4512
    %v4514 = vlaneseq
    %v4515 = vshrl.u32 %v4514, 7
    %v4516 = vsub.s32 %v4513, %v4515
    %v4517 = vrot.slane %v4509, %v4516
    %4518 = vset.pattern.permute.xlu0 0
    %4519 = vperm.xlu0 %4518, %v4203
    %v4520 = vpop.permute.xlu0 %4519
    %v4523 = vunpack.c.l.s4 839922192
    %v4524 = vunpack.c.0.s8 %v4523
    %v4525 = vlaneseq
    %v4526 = vshrl.u32 %v4525, 7
    %v4527 = vsub.s32 %v4524, %v4526
    %v4528 = vrot.slane %v4520, %v4527
    %4529 = vset.pattern.permute.xlu0 0
    %4530 = vperm.xlu0 %4529, %v4225
    %v4531 = vpop.permute.xlu0 %4530
    %v4534 = vunpack.c.l.s4 839922192
    %v4535 = vunpack.c.0.s8 %v4534
    %v4536 = vlaneseq
    %v4537 = vshrl.u32 %v4536, 7
    %v4538 = vsub.s32 %v4535, %v4537
    %v4539 = vrot.slane %v4531, %v4538
    %v4540 = vlaneseq
    %v4541 = vshrl.u32 %v4540, 7
    %v4542 = vsub.s32 0, %v4541
    %v4543 = vrot.slane %v4334, %v4542
    %v4544 = vlaneseq
    %v4545 = vshrl.u32 %v4544, 7
    %v4546 = vsub.s32 0, %v4545
    %v4547 = vrot.slane %v4341, %v4546
    %v4548 = vcombine.high %v4543, %v4543
    %v4549 = vcombine.high %v4547, %v4547
    %4550 = vrot.lane.b32.xlu0 %v4543, 125
    %v4551 = vpop.permute.xlu0 %4550
    %4552 = vrot.lane.b32.xlu0 %v4548, 125
    %v4553 = vpop.permute.xlu0 %4552
    %4554 = vrot.lane.b32.xlu0 %v4547, 125
    %v4555 = vpop.permute.xlu0 %4554
    %4556 = vrot.lane.b32.xlu0 %v4549, 125
    %v4557 = vpop.permute.xlu0 %4556
    %v4562 = vmul.f32 %v4352, %v4551
    %v4563 = vmul.f32 %v4363, %v4553
    %v4564 = vmul.f32 %v4374, %v4551
    %v4565 = vmul.f32 %v4385, %v4553
    %v4566 = vmul.f32 %v4396, %v4551
    %v4567 = vmul.f32 %v4407, %v4553
    %v4568 = vmul.f32 %v4418, %v4551
    %v4569 = vmul.f32 %v4429, %v4553
    %v4570 = vmul.f32 %v4440, %v4551
    %v4571 = vmul.f32 %v4451, %v4555
    %v4572 = vmul.f32 %v4462, %v4557
    %v4573 = vmul.f32 %v4473, %v4555
    %v4574 = vmul.f32 %v4484, %v4557
    %v4575 = vmul.f32 %v4495, %v4555
    %v4576 = vmul.f32 %v4506, %v4557
    %v4577 = vmul.f32 %v4517, %v4555
    %v4578 = vmul.f32 %v4528, %v4557
    %v4579 = vmul.f32 %v4539, %v4555
    %v4596 = vcombine.low %v4562, %v4563
    %v4597 = vcombine.low %v4564, %v4565
    %v4598 = vcombine.low %v4566, %v4567
    %v4599 = vcombine.low %v4568, %v4569
    %v4600 = vcombine.low %v4571, %v4572
    %v4601 = vcombine.low %v4573, %v4574
    %v4602 = vcombine.low %v4575, %v4576
    %v4603 = vcombine.low %v4577, %v4578
    %v4612 = vadd.f32 %v4309, %v4596
    %v4613 = vadd.f32 %v4310, %v4597
    %v4614 = vadd.f32 %v4311, %v4598
    %v4615 = vadd.f32 %v4312, %v4599
    %v4616 = vadd.f32 %v4313, %v4570
    %v4617 = vadd.f32 %v4314, %v4600
    %v4618 = vadd.f32 %v4315, %v4601
    %v4619 = vadd.f32 %v4316, %v4602
    %v4620 = vadd.f32 %v4317, %v4603
    %v4621 = vadd.f32 %v4318, %v4579
    %4623 = vrot.lane.b32.xlu0 %v3430, 38
    %v4624 = vpop.permute.xlu0 %4623
    %v4626 = vsel %vm2223, %v3504, %v4624
    %v4627 = vpack.c.bf16 %v4626, %v4626
    %v4629 = vsel %vm2230, %v4627, 0
    %4631 = vmatprep.subr.bf16.mxu0 0
    %4632 = vmatpush1.bf16.msra.mxu0 %v36
    %4633 = vmatprep.subr.bf16.mxu0 0
    %4634 = vmatpush1.bf16.msra.mxu0 %v37
    %4635 = vmatprep.subr.bf16.mxu0 0
    %4636 = vmatpush1.bf16.msra.mxu0 %v2235
    %4637 = vmatprep.subr.bf16.mxu0 0
    %4638 = vmatpush1.bf16.msra.mxu0 0
    %4639 = vmatprep.subr.bf16.mxu0 0
    %4640 = vmatpush1.bf16.msra.mxu0 0
    %4641 = vmatprep.subr.bf16.mxu0 0
    %4642 = vmatpush1.bf16.msra.mxu0 0
    %4643 = vmatprep.subr.bf16.mxu0 0
    %4644 = vmatpush1.bf16.msra.mxu0 0
    %4645 = vmatprep.subr.bf16.mxu0 0
    %4646 = vmatpush1.bf16.msra.mxu0 0
    %4647 = vmatprep.subr.bf16.mxu0 0
    %4648 = vmatpush1.bf16.msra.mxu0 0
    %4649 = vmatprep.subr.bf16.mxu0 0
    %4650 = vmatpush1.bf16.msra.mxu0 0
    %4651 = vmatprep.subr.bf16.mxu0 0
    %4652 = vmatpush1.bf16.msra.mxu0 0
    %4653 = vmatprep.subr.bf16.mxu0 0
    %4654 = vmatpush1.bf16.msra.mxu0 0
    %4655 = vmatprep.subr.bf16.mxu0 0
    %4656 = vmatpush1.bf16.msra.mxu0 0
    %4657 = vmatprep.subr.bf16.mxu0 0
    %4658 = vmatpush1.bf16.msra.mxu0 0
    %4659 = vmatprep.subr.bf16.mxu0 0
    %4660 = vmatpush1.bf16.msra.mxu0 0
    %4661 = vmatprep.subr.bf16.mxu0 0
    %4662 = vmatpush1.bf16.msra.mxu0 0
    %4663 = vmatprep.mubr.bf16.mxu0 0
    %4664 = vmatmul.mubr.bf16.gmra.mrb[0].mxu0 %v4629
    %v4665 = vpop.f32.mrb[0].mxu0
    %v4666 = vadd.f32 %v2229, %v4665
    %v4667 = vpop.f32.mrb[0].mxu0
    %v4668 = vpop.f32.mrb[0].mxu0
    %v4669 = vpop.f32.mrb[0].mxu0
    %4670 = vdwg.mxu0
    %v4671 = vxor.u32 %v4666, 2147483648
    %v4672 = vmul.f32 %v4671, 1.442695
    %v4673 = vpow.pop %v4672
    %v4674 = vadd.f32 %v4673, 1.0
    %v4675 = vrcp.pop %v4674
    %v4676 = vmul.f32 1.0, %v4675
    %v4677 = vtanh.pop %v4666
    %v4678 = vmul.f32 %v4676, %v3424
    %4680 = vrot.lane.b32.xlu0 %v4677, 64
    %v4681 = vpop.permute.xlu0 %4680
    %v4683 = vmul.f32 %v4676, %v4681
    %4685 = vrot.lane.b32.xlu0 %v4683, 32
    %v4686 = vpop.permute.xlu0 %4685
    %v4688 = vadd.f32 %v4678, %v4686
    %v4689 = vtanh.pop %v4688
    %4691 = vrot.lane.b32.xlu0 %v4689, 64
    %v4692 = vpop.permute.xlu0 %4691
    %v4694 = vmul.f32 %v4676, %v4692
    %v4695 = vpack.c.bf16 %v4694, %v4694
    %4697 = vrot.lane.b32.xlu0 %v4695, 32
    %v4698 = vpop.permute.xlu0 %4697
    %v4700 = vsel %vm270, %v4698, 0
    %4702 = vmatprep.subr.bf16.mxu0 0
    %4703 = vmatpush1.bf16.msra.mxu0 %v44
    %4704 = vmatprep.subr.bf16.mxu0 0
    %4705 = vmatpush1.bf16.msra.mxu0 %v45
    %4706 = vmatprep.subr.bf16.mxu0 0
    %4707 = vmatpush1.bf16.msra.mxu0 0
    %4708 = vmatprep.subr.bf16.mxu0 0
    %4709 = vmatpush1.bf16.msra.mxu0 0
    %4710 = vmatprep.subr.bf16.mxu0 0
    %4711 = vmatpush1.bf16.msra.mxu0 0
    %4712 = vmatprep.subr.bf16.mxu0 0
    %4713 = vmatpush1.bf16.msra.mxu0 0
    %4714 = vmatprep.subr.bf16.mxu0 0
    %4715 = vmatpush1.bf16.msra.mxu0 0
    %4716 = vmatprep.subr.bf16.mxu0 0
    %4717 = vmatpush1.bf16.msra.mxu0 0
    %4718 = vmatprep.subr.bf16.mxu0 0
    %4719 = vmatpush1.bf16.msra.mxu0 0
    %4720 = vmatprep.subr.bf16.mxu0 0
    %4721 = vmatpush1.bf16.msra.mxu0 0
    %4722 = vmatprep.subr.bf16.mxu0 0
    %4723 = vmatpush1.bf16.msra.mxu0 0
    %4724 = vmatprep.subr.bf16.mxu0 0
    %4725 = vmatpush1.bf16.msra.mxu0 0
    %4726 = vmatprep.subr.bf16.mxu0 0
    %4727 = vmatpush1.bf16.msra.mxu0 0
    %4728 = vmatprep.subr.bf16.mxu0 0
    %4729 = vmatpush1.bf16.msra.mxu0 0
    %4730 = vmatprep.subr.bf16.mxu0 0
    %4731 = vmatpush1.bf16.msra.mxu0 0
    %4732 = vmatprep.subr.bf16.mxu0 0
    %4733 = vmatpush1.bf16.msra.mxu0 0
    %4734 = vmatprep.mubr.bf16.mxu0 0
    %4735 = vmatmul.mubr.bf16.gmra.mrb[0].mxu0 %v4700
    %v4736 = vpop.f32.mrb[0].mxu0
    %v4737 = vadd.f32 %v2309, %v4736
    %v4738 = vpop.f32.mrb[0].mxu0
    %v4739 = vpop.f32.mrb[0].mxu0
    %v4740 = vpop.f32.mrb[0].mxu0
    %4741 = vdwg.mxu0
    %v4742 = vsel %vm2356, %v4737, -inf
    %4743 = vmax.xlane.f32.xlu0 %v4742
    %v4744 = vpop.xlane.xlu0 %4743
    %v4745 = vsub.f32 %v4737, %v4744
    %v4746 = vmul.f32 %v4745, 1.442695
    %v4747 = vpow.pop %v4746
    %v4748 = vsel %vm2356, %v4747, 0.0
    %4749 = vadd.xlane.f32.xlu0 %v4748
    %v4750 = vpop.xlane.xlu0 %4749
    %v4751 = vrcp.pop %v4750
    %v4752 = vmul.f32 %v4747, %v4751
    %v4753 = vsel %vm2368, %v4737, -inf
    %4754 = vmax.xlane.f32.xlu0 %v4753
    %v4755 = vpop.xlane.xlu0 %4754
    %v4756 = vsub.f32 %v4737, %v4755
    %v4757 = vmul.f32 %v4756, 1.442695
    %v4758 = vpow.pop %v4757
    %4760 = vrot.lane.b32.xlu0 %v4758, 125
    %v4761 = vpop.permute.xlu0 %4760
    %v4763 = vsel %vm2356, %v4761, 0.0
    %4764 = vadd.xlane.f32.xlu0 %v4763
    %v4765 = vpop.xlane.xlu0 %4764
    %v4766 = vrcp.pop %v4765
    %v4767 = vmul.f32 %v4758, %v4766
    %v4768 = vsel %vm2384, %v4752, %v4767
    %v4769 = vxor.u32 %v4737, 2147483648
    %v4770 = vmul.f32 %v4769, 1.442695
    %v4771 = vpow.pop %v4770
    %v4772 = vadd.f32 %v4771, 1.0
    %v4773 = vrcp.pop %v4772
    %v4774 = vmul.f32 1.0, %v4773
    %v4776 = vunpack.c.l.s4 1966171168
    %v4777 = vunpack.c.0.s8 %v4776
    %v4778 = vlaneseq
    %v4779 = vshrl.u32 %v4778, 7
    %v4780 = vsub.s32 %v4777, %v4779
    %v4781 = vrot.slane %v4695, %v4780
    %v4783 = vunpack.c.l.s4 1966171168
    %v4784 = vunpack.c.0.s8 %v4783
    %v4785 = vlaneseq
    %v4786 = vshrl.u32 %v4785, 7
    %v4787 = vsub.s32 %v4784, %v4786
    %v4788 = vrot.slane %v4781, %v4787
    %v4789 = vunpack.i.l.s16 %v4788
    %v4790 = vunpack.i.h.s16 %v4788
    %v4791 = vpack.i.b16 %v4789, %v4789
    %v4792 = vlaneseq
    %v4793 = vshrl.u32 %v4792, 7
    %v4794 = vsub.s32 0, %v4793
    %v4795 = vrot.slane %v4791, %v4794
    %4796 = vrot.lane.b32.xlu0 %v4795, 32
    %v4797 = vpop.permute.xlu0 %4796
    %v4799 = vsel %vm270, %v4797, 0
    %4801 = vmatprep.subr.bf16.mxu0 0
    %4802 = vmatpush1.bf16.xpose.msra.mxu0 %v2419
    %4803 = vmatprep.subr.bf16.mxu0 0
    %4804 = vmatpush1.bf16.xpose.msra.mxu0 0
    %4805 = vmatprep.subr.bf16.mxu0 0
    %4806 = vmatpush1.bf16.xpose.msra.mxu0 0
    %4807 = vmatprep.subr.bf16.mxu0 0
    %4808 = vmatpush1.bf16.xpose.msra.mxu0 0
    %4809 = vmatprep.subr.bf16.mxu0 0
    %4810 = vmatpush1.bf16.xpose.msra.mxu0 0
    %4811 = vmatprep.subr.bf16.mxu0 0
    %4812 = vmatpush1.bf16.xpose.msra.mxu0 0
    %4813 = vmatprep.subr.bf16.mxu0 0
    %4814 = vmatpush1.bf16.xpose.msra.mxu0 0
    %4815 = vmatprep.subr.bf16.mxu0 0
    %4816 = vmatpush1.bf16.xpose.msra.mxu0 0
    %4817 = vmatprep.subr.bf16.mxu0 0
    %4818 = vmatpush1.bf16.xpose.msra.mxu0 0
    %4819 = vmatprep.subr.bf16.mxu0 0
    %4820 = vmatpush1.bf16.xpose.msra.mxu0 0
    %4821 = vmatprep.subr.bf16.mxu0 0
    %4822 = vmatpush1.bf16.xpose.msra.mxu0 0
    %4823 = vmatprep.subr.bf16.mxu0 0
    %4824 = vmatpush1.bf16.xpose.msra.mxu0 0
    %4825 = vmatprep.subr.bf16.mxu0 0
    %4826 = vmatpush1.bf16.xpose.msra.mxu0 0
    %4827 = vmatprep.subr.bf16.mxu0 0
    %4828 = vmatpush1.bf16.xpose.msra.mxu0 0
    %4829 = vmatprep.subr.bf16.mxu0 0
    %4830 = vmatpush1.bf16.xpose.msra.mxu0 0
    %4831 = vmatprep.subr.bf16.mxu0 0
    %4832 = vmatpush1.bf16.xpose.msra.mxu0 0
    %4833 = vmatprep.mubr.bf16.mxu0 0
    %4834 = vmatmul.mubr.bf16.gmra.mrb[0].mxu0 %v4799
    %v4835 = vpop.f32.mrb[0].mxu0
    %v4836 = vadd.f32 0.0, %v4835
    %v4837 = vpop.f32.mrb[0].mxu0
    %v4838 = vpop.f32.mrb[0].mxu0
    %v4839 = vpop.f32.mrb[0].mxu0
    %4840 = vdwg.mxu0
    %v4841 = vpack.i.b16 %v4790, %v4790
    %v4842 = vlaneseq
    %v4843 = vshrl.u32 %v4842, 7
    %v4844 = vsub.s32 0, %v4843
    %v4845 = vrot.slane %v4841, %v4844
    %4846 = vrot.lane.b32.xlu0 %v4845, 32
    %v4847 = vpop.permute.xlu0 %4846
    %v4849 = vsel %vm270, %v4847, 0
    %4851 = vmatprep.subr.bf16.mxu0 0
    %4852 = vmatpush1.bf16.xpose.msra.mxu0 %v2472
    %4853 = vmatprep.subr.bf16.mxu0 0
    %4854 = vmatpush1.bf16.xpose.msra.mxu0 0
    %4855 = vmatprep.subr.bf16.mxu0 0
    %4856 = vmatpush1.bf16.xpose.msra.mxu0 0
    %4857 = vmatprep.subr.bf16.mxu0 0
    %4858 = vmatpush1.bf16.xpose.msra.mxu0 0
    %4859 = vmatprep.subr.bf16.mxu0 0
    %4860 = vmatpush1.bf16.xpose.msra.mxu0 0
    %4861 = vmatprep.subr.bf16.mxu0 0
    %4862 = vmatpush1.bf16.xpose.msra.mxu0 0
    %4863 = vmatprep.subr.bf16.mxu0 0
    %4864 = vmatpush1.bf16.xpose.msra.mxu0 0
    %4865 = vmatprep.subr.bf16.mxu0 0
    %4866 = vmatpush1.bf16.xpose.msra.mxu0 0
    %4867 = vmatprep.subr.bf16.mxu0 0
    %4868 = vmatpush1.bf16.xpose.msra.mxu0 0
    %4869 = vmatprep.subr.bf16.mxu0 0
    %4870 = vmatpush1.bf16.xpose.msra.mxu0 0
    %4871 = vmatprep.subr.bf16.mxu0 0
    %4872 = vmatpush1.bf16.xpose.msra.mxu0 0
    %4873 = vmatprep.subr.bf16.mxu0 0
    %4874 = vmatpush1.bf16.xpose.msra.mxu0 0
    %4875 = vmatprep.subr.bf16.mxu0 0
    %4876 = vmatpush1.bf16.xpose.msra.mxu0 0
    %4877 = vmatprep.subr.bf16.mxu0 0
    %4878 = vmatpush1.bf16.xpose.msra.mxu0 0
    %4879 = vmatprep.subr.bf16.mxu0 0
    %4880 = vmatpush1.bf16.xpose.msra.mxu0 0
    %4881 = vmatprep.subr.bf16.mxu0 0
    %4882 = vmatpush1.bf16.xpose.msra.mxu0 0
    %4883 = vmatprep.mubr.bf16.mxu0 0
    %4884 = vmatmul.mubr.bf16.gmra.mrb[0].mxu0 %v4849
    %v4885 = vpop.f32.mrb[0].mxu0
    %v4886 = vadd.f32 0.0, %v4885
    %v4887 = vpop.f32.mrb[0].mxu0
    %v4888 = vpop.f32.mrb[0].mxu0
    %v4889 = vpop.f32.mrb[0].mxu0
    %4890 = vdwg.mxu0
    %v4891 = vsel %vm2514, %v4836, -inf
    %4892 = vmax.xlane.f32.xlu0 %v4891
    %v4893 = vpop.xlane.xlu0 %4892
    %v4894 = vsel %vm2514, %v4886, -inf
    %4895 = vmax.xlane.f32.xlu0 %v4894
    %v4896 = vpop.xlane.xlu0 %4895
    %v4897 = vsub.f32 %v4836, %v4893
    %v4898 = vsub.f32 %v4886, %v4896
    %v4899 = vmul.f32 %v4897, 1.442695
    %v4900 = vpow.pop %v4899
    %v4901 = vmul.f32 %v4898, 1.442695
    %v4902 = vpow.pop %v4901
    %v4903 = vsel %vm2514, %v4900, 0.0
    %4904 = vadd.xlane.f32.xlu0 %v4903
    %v4905 = vpop.xlane.xlu0 %4904
    %v4906 = vsel %vm2514, %v4902, 0.0
    %4907 = vadd.xlane.f32.xlu0 %v4906
    %v4908 = vpop.xlane.xlu0 %4907
    %v4909 = vrcp.pop %v4905
    %v4910 = vmul.f32 %v4900, %v4909
    %v4911 = vrcp.pop %v4908
    %v4912 = vmul.f32 %v4902, %v4911
    %v4913 = vpack.c.bf16 %v4910, %v4910
    %v4914 = vpack.c.bf16 %v4912, %v4912
    %v4916 = vsel %vm177, %v4913, 0
    %4918 = vmatprep.subr.bf16.mxu0 0
    %4919 = vmatpush1.bf16.msra.mxu0 %v2543
    %4920 = vmatprep.subr.bf16.mxu0 0
    %4921 = vmatpush1.bf16.msra.mxu0 0
    %4922 = vmatprep.subr.bf16.mxu0 0
    %4923 = vmatpush1.bf16.msra.mxu0 0
    %4924 = vmatprep.subr.bf16.mxu0 0
    %4925 = vmatpush1.bf16.msra.mxu0 0
    %4926 = vmatprep.subr.bf16.mxu0 0
    %4927 = vmatpush1.bf16.msra.mxu0 0
    %4928 = vmatprep.subr.bf16.mxu0 0
    %4929 = vmatpush1.bf16.msra.mxu0 0
    %4930 = vmatprep.subr.bf16.mxu0 0
    %4931 = vmatpush1.bf16.msra.mxu0 0
    %4932 = vmatprep.subr.bf16.mxu0 0
    %4933 = vmatpush1.bf16.msra.mxu0 0
    %4934 = vmatprep.subr.bf16.mxu0 0
    %4935 = vmatpush1.bf16.msra.mxu0 0
    %4936 = vmatprep.subr.bf16.mxu0 0
    %4937 = vmatpush1.bf16.msra.mxu0 0
    %4938 = vmatprep.subr.bf16.mxu0 0
    %4939 = vmatpush1.bf16.msra.mxu0 0
    %4940 = vmatprep.subr.bf16.mxu0 0
    %4941 = vmatpush1.bf16.msra.mxu0 0
    %4942 = vmatprep.subr.bf16.mxu0 0
    %4943 = vmatpush1.bf16.msra.mxu0 0
    %4944 = vmatprep.subr.bf16.mxu0 0
    %4945 = vmatpush1.bf16.msra.mxu0 0
    %4946 = vmatprep.subr.bf16.mxu0 0
    %4947 = vmatpush1.bf16.msra.mxu0 0
    %4948 = vmatprep.subr.bf16.mxu0 0
    %4949 = vmatpush1.bf16.msra.mxu0 0
    %4950 = vmatprep.mubr.bf16.mxu0 0
    %4951 = vmatmul.mubr.bf16.gmra.mrb[0].mxu0 %v4916
    %v4952 = vpop.f32.mrb[0].mxu0
    %v4953 = vadd.f32 %v79, %v4952
    %v4954 = vpop.f32.mrb[0].mxu0
    %v4955 = vpop.f32.mrb[0].mxu0
    %v4956 = vpop.f32.mrb[0].mxu0
    %4957 = vdwg.mxu0
    %v4959 = vsel %vm177, %v4914, 0
    %4961 = vmatprep.subr.bf16.mxu0 0
    %4962 = vmatpush1.bf16.msra.mxu0 %v2589
    %4963 = vmatprep.subr.bf16.mxu0 0
    %4964 = vmatpush1.bf16.msra.mxu0 0
    %4965 = vmatprep.subr.bf16.mxu0 0
    %4966 = vmatpush1.bf16.msra.mxu0 0
    %4967 = vmatprep.subr.bf16.mxu0 0
    %4968 = vmatpush1.bf16.msra.mxu0 0
    %4969 = vmatprep.subr.bf16.mxu0 0
    %4970 = vmatpush1.bf16.msra.mxu0 0
    %4971 = vmatprep.subr.bf16.mxu0 0
    %4972 = vmatpush1.bf16.msra.mxu0 0
    %4973 = vmatprep.subr.bf16.mxu0 0
    %4974 = vmatpush1.bf16.msra.mxu0 0
    %4975 = vmatprep.subr.bf16.mxu0 0
    %4976 = vmatpush1.bf16.msra.mxu0 0
    %4977 = vmatprep.subr.bf16.mxu0 0
    %4978 = vmatpush1.bf16.msra.mxu0 0
    %4979 = vmatprep.subr.bf16.mxu0 0
    %4980 = vmatpush1.bf16.msra.mxu0 0
    %4981 = vmatprep.subr.bf16.mxu0 0
    %4982 = vmatpush1.bf16.msra.mxu0 0
    %4983 = vmatprep.subr.bf16.mxu0 0
    %4984 = vmatpush1.bf16.msra.mxu0 0
    %4985 = vmatprep.subr.bf16.mxu0 0
    %4986 = vmatpush1.bf16.msra.mxu0 0
    %4987 = vmatprep.subr.bf16.mxu0 0
    %4988 = vmatpush1.bf16.msra.mxu0 0
    %4989 = vmatprep.subr.bf16.mxu0 0
    %4990 = vmatpush1.bf16.msra.mxu0 0
    %4991 = vmatprep.subr.bf16.mxu0 0
    %4992 = vmatpush1.bf16.msra.mxu0 0
    %4993 = vmatprep.mubr.bf16.mxu0 0
    %4994 = vmatmul.mubr.bf16.gmra.mrb[0].mxu0 %v4959
    %v4995 = vpop.f32.mrb[0].mxu0
    %v4996 = vadd.f32 %v79, %v4995
    %v4997 = vpop.f32.mrb[0].mxu0
    %v4998 = vpop.f32.mrb[0].mxu0
    %v4999 = vpop.f32.mrb[0].mxu0
    %5000 = vdwg.mxu0
    %5002 = vset.pattern.permute.xlu0 2
    %5003 = vperm.xlu0 %5002, %v4612
    %v5004 = vpop.permute.xlu0 %5003
    %5007 = vset.pattern.permute.xlu0 2
    %5008 = vperm.xlu0 %5007, %v4613
    %v5009 = vpop.permute.xlu0 %5008
    %5012 = vset.pattern.permute.xlu0 2
    %5013 = vperm.xlu0 %5012, %v4614
    %v5014 = vpop.permute.xlu0 %5013
    %5017 = vset.pattern.permute.xlu0 2
    %5018 = vperm.xlu0 %5017, %v4615
    %v5019 = vpop.permute.xlu0 %5018
    %5022 = vset.pattern.permute.xlu0 2
    %5023 = vperm.xlu0 %5022, %v4616
    %v5024 = vpop.permute.xlu0 %5023
    %5027 = vset.pattern.permute.xlu0 2
    %5028 = vperm.xlu0 %5027, %v4617
    %v5029 = vpop.permute.xlu0 %5028
    %5032 = vset.pattern.permute.xlu0 2
    %5033 = vperm.xlu0 %5032, %v4618
    %v5034 = vpop.permute.xlu0 %5033
    %5037 = vset.pattern.permute.xlu0 2
    %5038 = vperm.xlu0 %5037, %v4619
    %v5039 = vpop.permute.xlu0 %5038
    %5042 = vset.pattern.permute.xlu0 2
    %5043 = vperm.xlu0 %5042, %v4620
    %v5044 = vpop.permute.xlu0 %5043
    %5047 = vset.pattern.permute.xlu0 2
    %5048 = vperm.xlu0 %5047, %v4621
    %v5049 = vpop.permute.xlu0 %5048
    %v5051 = vmul.f32 %v5004, %v97
    %v5052 = vmul.f32 %v5009, %v98
    %v5053 = vmul.f32 %v5014, %v99
    %v5054 = vmul.f32 %v5019, %v100
    %v5055 = vmul.f32 %v5024, %v101
    %v5056 = vmul.f32 %v5029, %v97
    %v5057 = vmul.f32 %v5034, %v98
    %v5058 = vmul.f32 %v5039, %v99
    %v5059 = vmul.f32 %v5044, %v100
    %v5060 = vmul.f32 %v5049, %v101
    %v5061 = vsel %vm2636, %v5051, 0.0
    %v5062 = vsel %vm2636, %v5052, 0.0
    %v5063 = vadd.f32 %v5061, %v5062
    %v5064 = vsel %vm2636, %v5053, 0.0
    %v5065 = vadd.f32 %v5063, %v5064
    %v5066 = vsel %vm2636, %v5054, 0.0
    %v5067 = vadd.f32 %v5065, %v5066
    %v5068 = vsel %vm2644, %v5055, 0.0
    %v5069 = vadd.f32 %v5067, %v5068
    %v5070 = vrot.slane %v5069, 4
    %v5071 = vadd.f32 %v5069, %v5070
    %v5072 = vrot.slane %v5071, 2
    %v5073 = vadd.f32 %v5071, %v5072
    %v5074 = vrot.slane %v5073, 1
    %v5075 = vadd.f32 %v5073, %v5074
    %v5076 = vsel %vm2636, %v5056, 0.0
    %v5077 = vsel %vm2636, %v5057, 0.0
    %v5078 = vadd.f32 %v5076, %v5077
    %v5079 = vsel %vm2636, %v5058, 0.0
    %v5080 = vadd.f32 %v5078, %v5079
    %v5081 = vsel %vm2636, %v5059, 0.0
    %v5082 = vadd.f32 %v5080, %v5081
    %v5083 = vsel %vm2644, %v5060, 0.0
    %v5084 = vadd.f32 %v5082, %v5083
    %v5085 = vrot.slane %v5084, 4
    %v5086 = vadd.f32 %v5084, %v5085
    %v5087 = vrot.slane %v5086, 2
    %v5088 = vadd.f32 %v5086, %v5087
    %v5089 = vrot.slane %v5088, 1
    %v5090 = vadd.f32 %v5088, %v5089
    %v5091 = vadd.f32 %v5075, %v2656
    %v5092 = vadd.f32 %v5090, %v2656
    %5093 = vrot.lane.b32.xlu0 %v4612, 127
    %v5094 = vpop.permute.xlu0 %5093
    %5095 = vrot.lane.b32.xlu0 %v4613, 127
    %v5096 = vpop.permute.xlu0 %5095
    %5097 = vrot.lane.b32.xlu0 %v4614, 127
    %v5098 = vpop.permute.xlu0 %5097
    %5099 = vrot.lane.b32.xlu0 %v4615, 127
    %v5100 = vpop.permute.xlu0 %5099
    %5101 = vrot.lane.b32.xlu0 %v4616, 127
    %v5102 = vpop.permute.xlu0 %5101
    %5103 = vrot.lane.b32.xlu0 %v4617, 127
    %v5104 = vpop.permute.xlu0 %5103
    %5105 = vrot.lane.b32.xlu0 %v4618, 127
    %v5106 = vpop.permute.xlu0 %5105
    %5107 = vrot.lane.b32.xlu0 %v4619, 127
    %v5108 = vpop.permute.xlu0 %5107
    %5109 = vrot.lane.b32.xlu0 %v4620, 127
    %v5110 = vpop.permute.xlu0 %5109
    %5111 = vrot.lane.b32.xlu0 %v4621, 127
    %v5112 = vpop.permute.xlu0 %5111
    %v5123 = vmin.f32 %v4612, %v5094
    %v5124 = vmin.f32 %v4613, %v5096
    %v5125 = vmin.f32 %v4614, %v5098
    %v5126 = vmin.f32 %v4615, %v5100
    %v5127 = vmin.f32 %v4616, %v5102
    %v5128 = vmin.f32 %v4617, %v5104
    %v5129 = vmin.f32 %v4618, %v5106
    %v5130 = vmin.f32 %v4619, %v5108
    %v5131 = vmin.f32 %v4620, %v5110
    %v5132 = vmin.f32 %v4621, %v5112
    %v5133 = vlaneseq
    %v5134 = vshrl.u32 %v5133, 7
    %v5135 = vsub.s32 0, %v5134
    %v5136 = vrot.slane %v4953, %v5135
    %v5137 = vlaneseq
    %v5138 = vshrl.u32 %v5137, 7
    %v5139 = vsub.s32 0, %v5138
    %v5140 = vrot.slane %v4996, %v5139
    %v5143 = vcombine.high %v5136, %v5136
    %v5144 = vcombine.high %v5140, %v5140
    %v5147 = vmul.f32 %v2201, %v5136
    %v5148 = vmul.f32 %v2202, %v5143
    %v5149 = vmul.f32 %v2203, %v5136
    %v5150 = vmul.f32 %v2204, %v5143
    %v5151 = vmul.f32 %v2205, %v5136
    %v5152 = vmul.f32 %v2206, %v5143
    %v5153 = vmul.f32 %v2207, %v5136
    %v5154 = vmul.f32 %v2208, %v5143
    %v5155 = vmul.f32 %v2209, %v5136
    %v5156 = vmul.f32 %v2210, %v5140
    %v5157 = vmul.f32 %v2211, %v5144
    %v5158 = vmul.f32 %v2212, %v5140
    %v5159 = vmul.f32 %v2213, %v5144
    %v5160 = vmul.f32 %v2214, %v5140
    %v5161 = vmul.f32 %v2215, %v5144
    %v5162 = vmul.f32 %v2216, %v5140
    %v5163 = vmul.f32 %v2217, %v5144
    %v5164 = vmul.f32 %v2218, %v5140
    %v5165 = vmax.f32 %v5147, 0.0
    %v5166 = vmax.f32 %v5148, 0.0
    %v5167 = vmax.f32 %v5149, 0.0
    %v5168 = vmax.f32 %v5150, 0.0
    %v5169 = vmax.f32 %v5151, 0.0
    %v5170 = vmax.f32 %v5152, 0.0
    %v5171 = vmax.f32 %v5153, 0.0
    %v5172 = vmax.f32 %v5154, 0.0
    %v5173 = vmax.f32 %v5155, 0.0
    %v5174 = vmax.f32 %v5156, 0.0
    %v5175 = vmax.f32 %v5157, 0.0
    %v5176 = vmax.f32 %v5158, 0.0
    %v5177 = vmax.f32 %v5159, 0.0
    %v5178 = vmax.f32 %v5160, 0.0
    %v5179 = vmax.f32 %v5161, 0.0
    %v5180 = vmax.f32 %v5162, 0.0
    %v5181 = vmax.f32 %v5163, 0.0
    %v5182 = vmax.f32 %v5164, 0.0
    %v5199 = vcombine.low %v5165, %v5166
    %v5200 = vcombine.low %v5167, %v5168
    %v5201 = vcombine.low %v5169, %v5170
    %v5202 = vcombine.low %v5171, %v5172
    %v5203 = vcombine.low %v5174, %v5175
    %v5204 = vcombine.low %v5176, %v5177
    %v5205 = vcombine.low %v5178, %v5179
    %v5206 = vcombine.low %v5180, %v5181
    %v5215 = vpack.c.bf16 %v5200, %v5199
    %v5216 = vpack.c.bf16 %v5202, %v5201
    %v5217 = vpack.c.bf16 %v5173, %v5173
    %v5218 = vpack.c.bf16 %v5204, %v5203
    %v5219 = vpack.c.bf16 %v5206, %v5205
    %v5220 = vpack.c.bf16 %v5182, %v5182
    %v5227 = vcombine.high %v5215, %v5215
    %v5229 = vunpack.c.l.s4 1983009808
    %v5230 = vunpack.c.0.s8 %v5229
    %v5231 = vlaneseq
    %v5232 = vshrl.u32 %v5231, 7
    %v5233 = vsub.s32 %v5230, %v5232
    %v5234 = vrot.slane %v5215, %v5233
    %v5236 = vunpack.c.l.s4 1983009808
    %v5237 = vunpack.c.0.s8 %v5236
    %v5238 = vlaneseq
    %v5239 = vshrl.u32 %v5238, 7
    %v5240 = vsub.s32 %v5237, %v5239
    %v5241 = vrot.slane %v5227, %v5240
    %v5242 = vcombine.high %v5234, %v5234
    %v5243 = vcombine.high %v5241, %v5241
    %v5244 = vcombine.high %v5216, %v5216
    %v5246 = vunpack.c.l.s4 1983009808
    %v5247 = vunpack.c.0.s8 %v5246
    %v5248 = vlaneseq
    %v5249 = vshrl.u32 %v5248, 7
    %v5250 = vsub.s32 %v5247, %v5249
    %v5251 = vrot.slane %v5216, %v5250
    %v5253 = vunpack.c.l.s4 1983009808
    %v5254 = vunpack.c.0.s8 %v5253
    %v5255 = vlaneseq
    %v5256 = vshrl.u32 %v5255, 7
    %v5257 = vsub.s32 %v5254, %v5256
    %v5258 = vrot.slane %v5244, %v5257
    %v5259 = vcombine.high %v5251, %v5251
    %v5260 = vcombine.high %v5258, %v5258
    %v5262 = vunpack.c.l.s4 1983009808
    %v5263 = vunpack.c.0.s8 %v5262
    %v5264 = vlaneseq
    %v5265 = vshrl.u32 %v5264, 7
    %v5266 = vsub.s32 %v5263, %v5265
    %v5267 = vrot.slane %v5217, %v5266
    %v5268 = vcombine.high %v5218, %v5218
    %v5270 = vunpack.c.l.s4 1983009808
    %v5271 = vunpack.c.0.s8 %v5270
    %v5272 = vlaneseq
    %v5273 = vshrl.u32 %v5272, 7
    %v5274 = vsub.s32 %v5271, %v5273
    %v5275 = vrot.slane %v5218, %v5274
    %v5277 = vunpack.c.l.s4 1983009808
    %v5278 = vunpack.c.0.s8 %v5277
    %v5279 = vlaneseq
    %v5280 = vshrl.u32 %v5279, 7
    %v5281 = vsub.s32 %v5278, %v5280
    %v5282 = vrot.slane %v5268, %v5281
    %v5283 = vcombine.high %v5275, %v5275
    %v5284 = vcombine.high %v5282, %v5282
    %v5285 = vcombine.high %v5219, %v5219
    %v5287 = vunpack.c.l.s4 1983009808
    %v5288 = vunpack.c.0.s8 %v5287
    %v5289 = vlaneseq
    %v5290 = vshrl.u32 %v5289, 7
    %v5291 = vsub.s32 %v5288, %v5290
    %v5292 = vrot.slane %v5219, %v5291
    %v5294 = vunpack.c.l.s4 1983009808
    %v5295 = vunpack.c.0.s8 %v5294
    %v5296 = vlaneseq
    %v5297 = vshrl.u32 %v5296, 7
    %v5298 = vsub.s32 %v5295, %v5297
    %v5299 = vrot.slane %v5285, %v5298
    %v5300 = vcombine.high %v5292, %v5292
    %v5301 = vcombine.high %v5299, %v5299
    %v5303 = vunpack.c.l.s4 1983009808
    %v5304 = vunpack.c.0.s8 %v5303
    %v5305 = vlaneseq
    %v5306 = vshrl.u32 %v5305, 7
    %v5307 = vsub.s32 %v5304, %v5306
    %v5308 = vrot.slane %v5220, %v5307
    %v5309 = vcombine.low %v5234, %v5242
    %v5310 = vcombine.low %v5241, %v5243
    %v5312 = vunpack.c.l.s4 1983009808
    %v5313 = vunpack.c.0.s8 %v5312
    %v5314 = vlaneseq
    %v5315 = vshrl.u32 %v5314, 7
    %v5316 = vsub.s32 %v5313, %v5315
    %v5317 = vrot.slane %v5309, %v5316
    %v5319 = vunpack.c.l.s4 1983009808
    %v5320 = vunpack.c.0.s8 %v5319
    %v5321 = vlaneseq
    %v5322 = vshrl.u32 %v5321, 7
    %v5323 = vsub.s32 %v5320, %v5322
    %v5324 = vrot.slane %v5310, %v5323
    %v5325 = vcombine.low %v5317, %v5324
    %v5326 = vcombine.low %v5251, %v5259
    %v5327 = vcombine.low %v5258, %v5260
    %v5329 = vunpack.c.l.s4 1983009808
    %v5330 = vunpack.c.0.s8 %v5329
    %v5331 = vlaneseq
    %v5332 = vshrl.u32 %v5331, 7
    %v5333 = vsub.s32 %v5330, %v5332
    %v5334 = vrot.slane %v5326, %v5333
    %v5336 = vunpack.c.l.s4 1983009808
    %v5337 = vunpack.c.0.s8 %v5336
    %v5338 = vlaneseq
    %v5339 = vshrl.u32 %v5338, 7
    %v5340 = vsub.s32 %v5337, %v5339
    %v5341 = vrot.slane %v5327, %v5340
    %v5342 = vcombine.low %v5334, %v5341
    %v5343 = vcombine.low %v5267, %v5275
    %v5344 = vcombine.low %v5283, %v5282
    %v5346 = vunpack.c.l.s4 1983009808
    %v5347 = vunpack.c.0.s8 %v5346
    %v5348 = vlaneseq
    %v5349 = vshrl.u32 %v5348, 7
    %v5350 = vsub.s32 %v5347, %v5349
    %v5351 = vrot.slane %v5343, %v5350
    %v5353 = vunpack.c.l.s4 1983009808
    %v5354 = vunpack.c.0.s8 %v5353
    %v5355 = vlaneseq
    %v5356 = vshrl.u32 %v5355, 7
    %v5357 = vsub.s32 %v5354, %v5356
    %v5358 = vrot.slane %v5344, %v5357
    %v5359 = vcombine.low %v5351, %v5358
    %v5360 = vcombine.low %v5284, %v5292
    %v5361 = vcombine.low %v5300, %v5299
    %v5363 = vunpack.c.l.s4 1983009808
    %v5364 = vunpack.c.0.s8 %v5363
    %v5365 = vlaneseq
    %v5366 = vshrl.u32 %v5365, 7
    %v5367 = vsub.s32 %v5364, %v5366
    %v5368 = vrot.slane %v5360, %v5367
    %v5370 = vunpack.c.l.s4 1983009808
    %v5371 = vunpack.c.0.s8 %v5370
    %v5372 = vlaneseq
    %v5373 = vshrl.u32 %v5372, 7
    %v5374 = vsub.s32 %v5371, %v5373
    %v5375 = vrot.slane %v5361, %v5374
    %v5376 = vcombine.low %v5368, %v5375
    %v5377 = vcombine.low %v5301, %v5308
    %v5379 = vunpack.c.l.s4 1983009808
    %v5380 = vunpack.c.0.s8 %v5379
    %v5381 = vlaneseq
    %v5382 = vshrl.u32 %v5381, 7
    %v5383 = vsub.s32 %v5380, %v5382
    %v5384 = vrot.slane %v5377, %v5383
    %v5386 = vsel %vm2914, %v5325, 0
    %v5389 = vsel %vm2914, %v5342, 0
    %v5392 = vsel %vm2914, %v5359, 0
    %v5395 = vsel %vm2914, %v5376, 0
    %v5398 = vsel %vm2914, %v5384, 0
    %5400 = vmatprep.subr.bf16.mxu0 0
    %5401 = vmatpush1.bf16.msra.mxu0 %v95
    %5402 = vmatprep.subr.bf16.mxu0 0
    %5403 = vmatpush1.bf16.msra.mxu0 0
    %5404 = vmatprep.subr.bf16.mxu0 0
    %5405 = vmatpush1.bf16.msra.mxu0 0
    %5406 = vmatprep.subr.bf16.mxu0 0
    %5407 = vmatpush1.bf16.msra.mxu0 0
    %5408 = vmatprep.subr.bf16.mxu0 0
    %5409 = vmatpush1.bf16.msra.mxu0 0
    %5410 = vmatprep.subr.bf16.mxu0 0
    %5411 = vmatpush1.bf16.msra.mxu0 0
    %5412 = vmatprep.subr.bf16.mxu0 0
    %5413 = vmatpush1.bf16.msra.mxu0 0
    %5414 = vmatprep.subr.bf16.mxu0 0
    %5415 = vmatpush1.bf16.msra.mxu0 0
    %5416 = vmatprep.subr.bf16.mxu0 0
    %5417 = vmatpush1.bf16.msra.mxu0 0
    %5418 = vmatprep.subr.bf16.mxu0 0
    %5419 = vmatpush1.bf16.msra.mxu0 0
    %5420 = vmatprep.subr.bf16.mxu0 0
    %5421 = vmatpush1.bf16.msra.mxu0 0
    %5422 = vmatprep.subr.bf16.mxu0 0
    %5423 = vmatpush1.bf16.msra.mxu0 0
    %5424 = vmatprep.subr.bf16.mxu0 0
    %5425 = vmatpush1.bf16.msra.mxu0 0
    %5426 = vmatprep.subr.bf16.mxu0 0
    %5427 = vmatpush1.bf16.msra.mxu0 0
    %5428 = vmatprep.subr.bf16.mxu0 0
    %5429 = vmatpush1.bf16.msra.mxu0 0
    %5430 = vmatprep.subr.bf16.mxu0 0
    %5431 = vmatpush1.bf16.msra.mxu0 0
    %5432 = vmatprep.mubr.bf16.mxu0 0
    %5433 = vmatmul.mubr.bf16.gmra.mrb[0].mxu0 %v5386
    %v5434 = vpop.f32.mrb[0].mxu0
    %v5435 = vadd.f32 %v2837, %v5434
    %v5436 = vpop.f32.mrb[0].mxu0
    %v5437 = vpop.f32.mrb[0].mxu0
    %v5438 = vadd.f32 %v2837, %v5437
    %v5439 = vpop.f32.mrb[0].mxu0
    %5440 = vmatprep.mubr.bf16.mxu0 0
    %5441 = vmatmul.mubr.bf16.gmra.mrb[0].mxu0 %v5389
    %v5442 = vpop.f32.mrb[0].mxu0
    %v5443 = vadd.f32 %v2837, %v5442
    %v5444 = vpop.f32.mrb[0].mxu0
    %v5445 = vpop.f32.mrb[0].mxu0
    %v5446 = vadd.f32 %v2837, %v5445
    %v5447 = vpop.f32.mrb[0].mxu0
    %5448 = vmatprep.mubr.bf16.mxu0 0
    %5449 = vmatmul.mubr.bf16.gmra.mrb[0].mxu0 %v5392
    %v5450 = vpop.f32.mrb[0].mxu0
    %v5451 = vadd.f32 %v2837, %v5450
    %v5452 = vpop.f32.mrb[0].mxu0
    %v5453 = vpop.f32.mrb[0].mxu0
    %v5454 = vadd.f32 %v2837, %v5453
    %v5455 = vpop.f32.mrb[0].mxu0
    %5456 = vmatprep.mubr.bf16.mxu0 0
    %5457 = vmatmul.mubr.bf16.gmra.mrb[0].mxu0 %v5395
    %v5458 = vpop.f32.mrb[0].mxu0
    %v5459 = vadd.f32 %v2837, %v5458
    %v5460 = vpop.f32.mrb[0].mxu0
    %v5461 = vpop.f32.mrb[0].mxu0
    %v5462 = vadd.f32 %v2837, %v5461
    %v5463 = vpop.f32.mrb[0].mxu0
    %5464 = vmatprep.mubr.bf16.mxu0 0
    %5465 = vmatmul.mubr.bf16.gmra.mrb[0].mxu0 %v5398
    %v5466 = vpop.f32.mrb[0].mxu0
    %v5467 = vadd.f32 %v2837, %v5466
    %v5468 = vpop.f32.mrb[0].mxu0
    %v5469 = vpop.f32.mrb[0].mxu0
    %v5470 = vpop.f32.mrb[0].mxu0
    %5471 = vdwg.mxu0
    %v5481 = vcombine.high %v5435, %v5435
    %v5482 = vcombine.high %v5438, %v5438
    %v5483 = vcombine.high %v5443, %v5443
    %v5484 = vcombine.high %v5446, %v5446
    %v5485 = vcombine.high %v5451, %v5451
    %v5486 = vcombine.high %v5454, %v5454
    %v5487 = vcombine.high %v5459, %v5459
    %v5488 = vcombine.high %v5462, %v5462
    %v5489 = vcombine.high %v5467, %v5467
    %v5492 = vunpack.c.l.s4 1966171168
    %v5493 = vunpack.c.0.s8 %v5492
    %v5494 = vlaneseq
    %v5495 = vshrl.u32 %v5494, 7
    %v5496 = vsub.s32 %v5493, %v5495
    %v5497 = vrot.slane %v4752, %v5496
    %v5498 = vcombine.high %v5497, %v5497
    %v5500 = vunpack.c.l.s4 1966171168
    %v5501 = vunpack.c.0.s8 %v5500
    %v5502 = vlaneseq
    %v5503 = vshrl.u32 %v5502, 7
    %v5504 = vsub.s32 %v5501, %v5503
    %v5505 = vrot.slane %v5497, %v5504
    %v5507 = vunpack.c.l.s4 1966171168
    %v5508 = vunpack.c.0.s8 %v5507
    %v5509 = vlaneseq
    %v5510 = vshrl.u32 %v5509, 7
    %v5511 = vsub.s32 %v5508, %v5510
    %v5512 = vrot.slane %v5498, %v5511
    %5514 = vset.pattern.permute.xlu0 0
    %5515 = vperm.xlu0 %5514, %v5123
    %v5516 = vpop.permute.xlu0 %5515
    %5519 = vset.pattern.permute.xlu0 0
    %5520 = vperm.xlu0 %5519, %v5124
    %v5521 = vpop.permute.xlu0 %5520
    %5524 = vset.pattern.permute.xlu0 0
    %5525 = vperm.xlu0 %5524, %v5125
    %v5526 = vpop.permute.xlu0 %5525
    %5529 = vset.pattern.permute.xlu0 0
    %5530 = vperm.xlu0 %5529, %v5126
    %v5531 = vpop.permute.xlu0 %5530
    %5534 = vset.pattern.permute.xlu0 0
    %5535 = vperm.xlu0 %5534, %v5127
    %v5536 = vpop.permute.xlu0 %5535
    %5539 = vset.pattern.permute.xlu0 0
    %5540 = vperm.xlu0 %5539, %v5128
    %v5541 = vpop.permute.xlu0 %5540
    %5544 = vset.pattern.permute.xlu0 0
    %5545 = vperm.xlu0 %5544, %v5129
    %v5546 = vpop.permute.xlu0 %5545
    %5549 = vset.pattern.permute.xlu0 0
    %5550 = vperm.xlu0 %5549, %v5130
    %v5551 = vpop.permute.xlu0 %5550
    %5554 = vset.pattern.permute.xlu0 0
    %5555 = vperm.xlu0 %5554, %v5131
    %v5556 = vpop.permute.xlu0 %5555
    %5559 = vset.pattern.permute.xlu0 0
    %5560 = vperm.xlu0 %5559, %v5132
    %v5561 = vpop.permute.xlu0 %5560
    %v5563 = vlaneseq
    %v5564 = vshrl.u32 %v5563, 7
    %v5565 = vsub.s32 0, %v5564
    %v5566 = vrot.slane %v5505, %v5565
    %v5567 = vlaneseq
    %v5568 = vshrl.u32 %v5567, 7
    %v5569 = vsub.s32 0, %v5568
    %v5570 = vrot.slane %v5512, %v5569
    %v5573 = vmul.f32 %v5516, %v5566
    %v5574 = vmul.f32 %v5521, %v5566
    %v5575 = vmul.f32 %v5526, %v5566
    %v5576 = vmul.f32 %v5531, %v5566
    %v5577 = vmul.f32 %v5536, %v5566
    %v5578 = vmul.f32 %v5541, %v5570
    %v5579 = vmul.f32 %v5546, %v5570
    %v5580 = vmul.f32 %v5551, %v5570
    %v5581 = vmul.f32 %v5556, %v5570
    %v5582 = vmul.f32 %v5561, %v5570
    %v5585 = vunpack.c.l.s4 1966171168
    %v5586 = vunpack.c.0.s8 %v5585
    %v5587 = vlaneseq
    %v5588 = vshrl.u32 %v5587, 7
    %v5589 = vsub.s32 %v5586, %v5588
    %v5590 = vrot.slane %v4767, %v5589
    %v5591 = vcombine.high %v5590, %v5590
    %v5593 = vunpack.c.l.s4 1966171168
    %v5594 = vunpack.c.0.s8 %v5593
    %v5595 = vlaneseq
    %v5596 = vshrl.u32 %v5595, 7
    %v5597 = vsub.s32 %v5594, %v5596
    %v5598 = vrot.slane %v5590, %v5597
    %v5600 = vunpack.c.l.s4 1966171168
    %v5601 = vunpack.c.0.s8 %v5600
    %v5602 = vlaneseq
    %v5603 = vshrl.u32 %v5602, 7
    %v5604 = vsub.s32 %v5601, %v5603
    %v5605 = vrot.slane %v5591, %v5604
    %5606 = vset.pattern.permute.xlu0 0
    %5607 = vperm.xlu0 %5606, %v5435
    %v5608 = vpop.permute.xlu0 %5607
    %v5611 = vunpack.c.l.s4 839922192
    %v5612 = vunpack.c.0.s8 %v5611
    %v5613 = vlaneseq
    %v5614 = vshrl.u32 %v5613, 7
    %v5615 = vsub.s32 %v5612, %v5614
    %v5616 = vrot.slane %v5608, %v5615
    %5617 = vset.pattern.permute.xlu0 0
    %5618 = vperm.xlu0 %5617, %v5481
    %v5619 = vpop.permute.xlu0 %5618
    %v5622 = vunpack.c.l.s4 839922192
    %v5623 = vunpack.c.0.s8 %v5622
    %v5624 = vlaneseq
    %v5625 = vshrl.u32 %v5624, 7
    %v5626 = vsub.s32 %v5623, %v5625
    %v5627 = vrot.slane %v5619, %v5626
    %5628 = vset.pattern.permute.xlu0 0
    %5629 = vperm.xlu0 %5628, %v5438
    %v5630 = vpop.permute.xlu0 %5629
    %v5633 = vunpack.c.l.s4 839922192
    %v5634 = vunpack.c.0.s8 %v5633
    %v5635 = vlaneseq
    %v5636 = vshrl.u32 %v5635, 7
    %v5637 = vsub.s32 %v5634, %v5636
    %v5638 = vrot.slane %v5630, %v5637
    %5639 = vset.pattern.permute.xlu0 0
    %5640 = vperm.xlu0 %5639, %v5482
    %v5641 = vpop.permute.xlu0 %5640
    %v5644 = vunpack.c.l.s4 839922192
    %v5645 = vunpack.c.0.s8 %v5644
    %v5646 = vlaneseq
    %v5647 = vshrl.u32 %v5646, 7
    %v5648 = vsub.s32 %v5645, %v5647
    %v5649 = vrot.slane %v5641, %v5648
    %5650 = vset.pattern.permute.xlu0 0
    %5651 = vperm.xlu0 %5650, %v5443
    %v5652 = vpop.permute.xlu0 %5651
    %v5655 = vunpack.c.l.s4 839922192
    %v5656 = vunpack.c.0.s8 %v5655
    %v5657 = vlaneseq
    %v5658 = vshrl.u32 %v5657, 7
    %v5659 = vsub.s32 %v5656, %v5658
    %v5660 = vrot.slane %v5652, %v5659
    %5661 = vset.pattern.permute.xlu0 0
    %5662 = vperm.xlu0 %5661, %v5483
    %v5663 = vpop.permute.xlu0 %5662
    %v5666 = vunpack.c.l.s4 839922192
    %v5667 = vunpack.c.0.s8 %v5666
    %v5668 = vlaneseq
    %v5669 = vshrl.u32 %v5668, 7
    %v5670 = vsub.s32 %v5667, %v5669
    %v5671 = vrot.slane %v5663, %v5670
    %5672 = vset.pattern.permute.xlu0 0
    %5673 = vperm.xlu0 %5672, %v5446
    %v5674 = vpop.permute.xlu0 %5673
    %v5677 = vunpack.c.l.s4 839922192
    %v5678 = vunpack.c.0.s8 %v5677
    %v5679 = vlaneseq
    %v5680 = vshrl.u32 %v5679, 7
    %v5681 = vsub.s32 %v5678, %v5680
    %v5682 = vrot.slane %v5674, %v5681
    %5683 = vset.pattern.permute.xlu0 0
    %5684 = vperm.xlu0 %5683, %v5484
    %v5685 = vpop.permute.xlu0 %5684
    %v5688 = vunpack.c.l.s4 839922192
    %v5689 = vunpack.c.0.s8 %v5688
    %v5690 = vlaneseq
    %v5691 = vshrl.u32 %v5690, 7
    %v5692 = vsub.s32 %v5689, %v5691
    %v5693 = vrot.slane %v5685, %v5692
    %5694 = vset.pattern.permute.xlu0 0
    %5695 = vperm.xlu0 %5694, %v5451
    %v5696 = vpop.permute.xlu0 %5695
    %v5699 = vunpack.c.l.s4 839922192
    %v5700 = vunpack.c.0.s8 %v5699
    %v5701 = vlaneseq
    %v5702 = vshrl.u32 %v5701, 7
    %v5703 = vsub.s32 %v5700, %v5702
    %v5704 = vrot.slane %v5696, %v5703
    %5705 = vset.pattern.permute.xlu0 0
    %5706 = vperm.xlu0 %5705, %v5485
    %v5707 = vpop.permute.xlu0 %5706
    %v5710 = vunpack.c.l.s4 839922192
    %v5711 = vunpack.c.0.s8 %v5710
    %v5712 = vlaneseq
    %v5713 = vshrl.u32 %v5712, 7
    %v5714 = vsub.s32 %v5711, %v5713
    %v5715 = vrot.slane %v5707, %v5714
    %5716 = vset.pattern.permute.xlu0 0
    %5717 = vperm.xlu0 %5716, %v5454
    %v5718 = vpop.permute.xlu0 %5717
    %v5721 = vunpack.c.l.s4 839922192
    %v5722 = vunpack.c.0.s8 %v5721
    %v5723 = vlaneseq
    %v5724 = vshrl.u32 %v5723, 7
    %v5725 = vsub.s32 %v5722, %v5724
    %v5726 = vrot.slane %v5718, %v5725
    %5727 = vset.pattern.permute.xlu0 0
    %5728 = vperm.xlu0 %5727, %v5486
    %v5729 = vpop.permute.xlu0 %5728
    %v5732 = vunpack.c.l.s4 839922192
    %v5733 = vunpack.c.0.s8 %v5732
    %v5734 = vlaneseq
    %v5735 = vshrl.u32 %v5734, 7
    %v5736 = vsub.s32 %v5733, %v5735
    %v5737 = vrot.slane %v5729, %v5736
    %5738 = vset.pattern.permute.xlu0 0
    %5739 = vperm.xlu0 %5738, %v5459
    %v5740 = vpop.permute.xlu0 %5739
    %v5743 = vunpack.c.l.s4 839922192
    %v5744 = vunpack.c.0.s8 %v5743
    %v5745 = vlaneseq
    %v5746 = vshrl.u32 %v5745, 7
    %v5747 = vsub.s32 %v5744, %v5746
    %v5748 = vrot.slane %v5740, %v5747
    %5749 = vset.pattern.permute.xlu0 0
    %5750 = vperm.xlu0 %5749, %v5487
    %v5751 = vpop.permute.xlu0 %5750
    %v5754 = vunpack.c.l.s4 839922192
    %v5755 = vunpack.c.0.s8 %v5754
    %v5756 = vlaneseq
    %v5757 = vshrl.u32 %v5756, 7
    %v5758 = vsub.s32 %v5755, %v5757
    %v5759 = vrot.slane %v5751, %v5758
    %5760 = vset.pattern.permute.xlu0 0
    %5761 = vperm.xlu0 %5760, %v5462
    %v5762 = vpop.permute.xlu0 %5761
    %v5765 = vunpack.c.l.s4 839922192
    %v5766 = vunpack.c.0.s8 %v5765
    %v5767 = vlaneseq
    %v5768 = vshrl.u32 %v5767, 7
    %v5769 = vsub.s32 %v5766, %v5768
    %v5770 = vrot.slane %v5762, %v5769
    %5771 = vset.pattern.permute.xlu0 0
    %5772 = vperm.xlu0 %5771, %v5488
    %v5773 = vpop.permute.xlu0 %5772
    %v5776 = vunpack.c.l.s4 839922192
    %v5777 = vunpack.c.0.s8 %v5776
    %v5778 = vlaneseq
    %v5779 = vshrl.u32 %v5778, 7
    %v5780 = vsub.s32 %v5777, %v5779
    %v5781 = vrot.slane %v5773, %v5780
    %5782 = vset.pattern.permute.xlu0 0
    %5783 = vperm.xlu0 %5782, %v5467
    %v5784 = vpop.permute.xlu0 %5783
    %v5787 = vunpack.c.l.s4 839922192
    %v5788 = vunpack.c.0.s8 %v5787
    %v5789 = vlaneseq
    %v5790 = vshrl.u32 %v5789, 7
    %v5791 = vsub.s32 %v5788, %v5790
    %v5792 = vrot.slane %v5784, %v5791
    %5793 = vset.pattern.permute.xlu0 0
    %5794 = vperm.xlu0 %5793, %v5489
    %v5795 = vpop.permute.xlu0 %5794
    %v5798 = vunpack.c.l.s4 839922192
    %v5799 = vunpack.c.0.s8 %v5798
    %v5800 = vlaneseq
    %v5801 = vshrl.u32 %v5800, 7
    %v5802 = vsub.s32 %v5799, %v5801
    %v5803 = vrot.slane %v5795, %v5802
    %v5804 = vlaneseq
    %v5805 = vshrl.u32 %v5804, 7
    %v5806 = vsub.s32 0, %v5805
    %v5807 = vrot.slane %v5598, %v5806
    %v5808 = vlaneseq
    %v5809 = vshrl.u32 %v5808, 7
    %v5810 = vsub.s32 0, %v5809
    %v5811 = vrot.slane %v5605, %v5810
    %v5812 = vcombine.high %v5807, %v5807
    %v5813 = vcombine.high %v5811, %v5811
    %5814 = vrot.lane.b32.xlu0 %v5807, 125
    %v5815 = vpop.permute.xlu0 %5814
    %5816 = vrot.lane.b32.xlu0 %v5812, 125
    %v5817 = vpop.permute.xlu0 %5816
    %5818 = vrot.lane.b32.xlu0 %v5811, 125
    %v5819 = vpop.permute.xlu0 %5818
    %5820 = vrot.lane.b32.xlu0 %v5813, 125
    %v5821 = vpop.permute.xlu0 %5820
    %v5826 = vmul.f32 %v5616, %v5815
    %v5827 = vmul.f32 %v5627, %v5817
    %v5828 = vmul.f32 %v5638, %v5815
    %v5829 = vmul.f32 %v5649, %v5817
    %v5830 = vmul.f32 %v5660, %v5815
    %v5831 = vmul.f32 %v5671, %v5817
    %v5832 = vmul.f32 %v5682, %v5815
    %v5833 = vmul.f32 %v5693, %v5817
    %v5834 = vmul.f32 %v5704, %v5815
    %v5835 = vmul.f32 %v5715, %v5819
    %v5836 = vmul.f32 %v5726, %v5821
    %v5837 = vmul.f32 %v5737, %v5819
    %v5838 = vmul.f32 %v5748, %v5821
    %v5839 = vmul.f32 %v5759, %v5819
    %v5840 = vmul.f32 %v5770, %v5821
    %v5841 = vmul.f32 %v5781, %v5819
    %v5842 = vmul.f32 %v5792, %v5821
    %v5843 = vmul.f32 %v5803, %v5819
    %v5860 = vcombine.low %v5826, %v5827
    %v5861 = vcombine.low %v5828, %v5829
    %v5862 = vcombine.low %v5830, %v5831
    %v5863 = vcombine.low %v5832, %v5833
    %v5864 = vcombine.low %v5835, %v5836
    %v5865 = vcombine.low %v5837, %v5838
    %v5866 = vcombine.low %v5839, %v5840
    %v5867 = vcombine.low %v5841, %v5842
    %v5876 = vadd.f32 %v5573, %v5860
    %v5877 = vadd.f32 %v5574, %v5861
    %v5878 = vadd.f32 %v5575, %v5862
    %v5879 = vadd.f32 %v5576, %v5863
    %v5880 = vadd.f32 %v5577, %v5834
    %v5881 = vadd.f32 %v5578, %v5864
    %v5882 = vadd.f32 %v5579, %v5865
    %v5883 = vadd.f32 %v5580, %v5866
    %v5884 = vadd.f32 %v5581, %v5867
    %v5885 = vadd.f32 %v5582, %v5843
    %5887 = vrot.lane.b32.xlu0 %v4694, 38
    %v5888 = vpop.permute.xlu0 %5887
    %v5890 = vsel %vm2223, %v4768, %v5888
    %v5891 = vpack.c.bf16 %v5890, %v5890
    %v5893 = vsel %vm2230, %v5891, 0
    %5895 = vmatprep.subr.bf16.mxu0 0
    %5896 = vmatpush1.bf16.msra.mxu0 %v36
    %5897 = vmatprep.subr.bf16.mxu0 0
    %5898 = vmatpush1.bf16.msra.mxu0 %v37
    %5899 = vmatprep.subr.bf16.mxu0 0
    %5900 = vmatpush1.bf16.msra.mxu0 %v2235
    %5901 = vmatprep.subr.bf16.mxu0 0
    %5902 = vmatpush1.bf16.msra.mxu0 0
    %5903 = vmatprep.subr.bf16.mxu0 0
    %5904 = vmatpush1.bf16.msra.mxu0 0
    %5905 = vmatprep.subr.bf16.mxu0 0
    %5906 = vmatpush1.bf16.msra.mxu0 0
    %5907 = vmatprep.subr.bf16.mxu0 0
    %5908 = vmatpush1.bf16.msra.mxu0 0
    %5909 = vmatprep.subr.bf16.mxu0 0
    %5910 = vmatpush1.bf16.msra.mxu0 0
    %5911 = vmatprep.subr.bf16.mxu0 0
    %5912 = vmatpush1.bf16.msra.mxu0 0
    %5913 = vmatprep.subr.bf16.mxu0 0
    %5914 = vmatpush1.bf16.msra.mxu0 0
    %5915 = vmatprep.subr.bf16.mxu0 0
    %5916 = vmatpush1.bf16.msra.mxu0 0
    %5917 = vmatprep.subr.bf16.mxu0 0
    %5918 = vmatpush1.bf16.msra.mxu0 0
    %5919 = vmatprep.subr.bf16.mxu0 0
    %5920 = vmatpush1.bf16.msra.mxu0 0
    %5921 = vmatprep.subr.bf16.mxu0 0
    %5922 = vmatpush1.bf16.msra.mxu0 0
    %5923 = vmatprep.subr.bf16.mxu0 0
    %5924 = vmatpush1.bf16.msra.mxu0 0
    %5925 = vmatprep.subr.bf16.mxu0 0
    %5926 = vmatpush1.bf16.msra.mxu0 0
    %5927 = vmatprep.mubr.bf16.mxu0 0
    %5928 = vmatmul.mubr.bf16.gmra.mrb[0].mxu0 %v5893
    %v5929 = vpop.f32.mrb[0].mxu0
    %v5930 = vadd.f32 %v2229, %v5929
    %v5931 = vpop.f32.mrb[0].mxu0
    %v5932 = vpop.f32.mrb[0].mxu0
    %v5933 = vpop.f32.mrb[0].mxu0
    %5934 = vdwg.mxu0
    %v5935 = vxor.u32 %v5930, 2147483648
    %v5936 = vmul.f32 %v5935, 1.442695
    %v5937 = vpow.pop %v5936
    %v5938 = vadd.f32 %v5937, 1.0
    %v5939 = vrcp.pop %v5938
    %v5940 = vmul.f32 1.0, %v5939
    %v5941 = vtanh.pop %v5930
    %v5942 = vmul.f32 %v5940, %v4688
    %5944 = vrot.lane.b32.xlu0 %v5941, 64
    %v5945 = vpop.permute.xlu0 %5944
    %v5947 = vmul.f32 %v5940, %v5945
    %5949 = vrot.lane.b32.xlu0 %v5947, 32
    %v5950 = vpop.permute.xlu0 %5949
    %v5952 = vadd.f32 %v5942, %v5950
    %v5953 = vtanh.pop %v5952
    %5955 = vrot.lane.b32.xlu0 %v5953, 64
    %v5956 = vpop.permute.xlu0 %5955
    %v5958 = vmul.f32 %v5940, %v5956
    %v5959 = vpack.c.bf16 %v5958, %v5958
    %5961 = vrot.lane.b32.xlu0 %v5959, 32
    %v5962 = vpop.permute.xlu0 %5961
    %v5964 = vsel %vm270, %v5962, 0
    %5966 = vmatprep.subr.bf16.mxu0 0
    %5967 = vmatpush1.bf16.msra.mxu0 %v44
    %5968 = vmatprep.subr.bf16.mxu0 0
    %5969 = vmatpush1.bf16.msra.mxu0 %v45
    %5970 = vmatprep.subr.bf16.mxu0 0
    %5971 = vmatpush1.bf16.msra.mxu0 0
    %5972 = vmatprep.subr.bf16.mxu0 0
    %5973 = vmatpush1.bf16.msra.mxu0 0
    %5974 = vmatprep.subr.bf16.mxu0 0
    %5975 = vmatpush1.bf16.msra.mxu0 0
    %5976 = vmatprep.subr.bf16.mxu0 0
    %5977 = vmatpush1.bf16.msra.mxu0 0
    %5978 = vmatprep.subr.bf16.mxu0 0
    %5979 = vmatpush1.bf16.msra.mxu0 0
    %5980 = vmatprep.subr.bf16.mxu0 0
    %5981 = vmatpush1.bf16.msra.mxu0 0
    %5982 = vmatprep.subr.bf16.mxu0 0
    %5983 = vmatpush1.bf16.msra.mxu0 0
    %5984 = vmatprep.subr.bf16.mxu0 0
    %5985 = vmatpush1.bf16.msra.mxu0 0
    %5986 = vmatprep.subr.bf16.mxu0 0
    %5987 = vmatpush1.bf16.msra.mxu0 0
    %5988 = vmatprep.subr.bf16.mxu0 0
    %5989 = vmatpush1.bf16.msra.mxu0 0
    %5990 = vmatprep.subr.bf16.mxu0 0
    %5991 = vmatpush1.bf16.msra.mxu0 0
    %5992 = vmatprep.subr.bf16.mxu0 0
    %5993 = vmatpush1.bf16.msra.mxu0 0
    %5994 = vmatprep.subr.bf16.mxu0 0
    %5995 = vmatpush1.bf16.msra.mxu0 0
    %5996 = vmatprep.subr.bf16.mxu0 0
    %5997 = vmatpush1.bf16.msra.mxu0 0
    %5998 = vmatprep.mubr.bf16.mxu0 0
    %5999 = vmatmul.mubr.bf16.gmra.mrb[0].mxu0 %v5964
    %v6000 = vpop.f32.mrb[0].mxu0
    %v6001 = vadd.f32 %v2309, %v6000
    %v6002 = vpop.f32.mrb[0].mxu0
    %v6003 = vpop.f32.mrb[0].mxu0
    %v6004 = vpop.f32.mrb[0].mxu0
    %6005 = vdwg.mxu0
    %v6006 = vsel %vm2356, %v6001, -inf
    %6007 = vmax.xlane.f32.xlu0 %v6006
    %v6008 = vpop.xlane.xlu0 %6007
    %v6009 = vsub.f32 %v6001, %v6008
    %v6010 = vmul.f32 %v6009, 1.442695
    %v6011 = vpow.pop %v6010
    %v6012 = vsel %vm2356, %v6011, 0.0
    %6013 = vadd.xlane.f32.xlu0 %v6012
    %v6014 = vpop.xlane.xlu0 %6013
    %v6015 = vrcp.pop %v6014
    %v6016 = vmul.f32 %v6011, %v6015
    %v6017 = vsel %vm2368, %v6001, -inf
    %6018 = vmax.xlane.f32.xlu0 %v6017
    %v6019 = vpop.xlane.xlu0 %6018
    %v6020 = vsub.f32 %v6001, %v6019
    %v6021 = vmul.f32 %v6020, 1.442695
    %v6022 = vpow.pop %v6021
    %6024 = vrot.lane.b32.xlu0 %v6022, 125
    %v6025 = vpop.permute.xlu0 %6024
    %v6027 = vsel %vm2356, %v6025, 0.0
    %6028 = vadd.xlane.f32.xlu0 %v6027
    %v6029 = vpop.xlane.xlu0 %6028
    %v6030 = vrcp.pop %v6029
    %v6031 = vmul.f32 %v6022, %v6030
    %v6032 = vsel %vm2384, %v6016, %v6031
    %v6033 = vxor.u32 %v6001, 2147483648
    %v6034 = vmul.f32 %v6033, 1.442695
    %v6035 = vpow.pop %v6034
    %v6036 = vadd.f32 %v6035, 1.0
    %v6037 = vrcp.pop %v6036
    %v6038 = vmul.f32 1.0, %v6037
    %v6040 = vunpack.c.l.s4 1966171168
    %v6041 = vunpack.c.0.s8 %v6040
    %v6042 = vlaneseq
    %v6043 = vshrl.u32 %v6042, 7
    %v6044 = vsub.s32 %v6041, %v6043
    %v6045 = vrot.slane %v5959, %v6044
    %v6047 = vunpack.c.l.s4 1966171168
    %v6048 = vunpack.c.0.s8 %v6047
    %v6049 = vlaneseq
    %v6050 = vshrl.u32 %v6049, 7
    %v6051 = vsub.s32 %v6048, %v6050
    %v6052 = vrot.slane %v6045, %v6051
    %v6053 = vunpack.i.l.s16 %v6052
    %v6054 = vunpack.i.h.s16 %v6052
    %v6055 = vpack.i.b16 %v6053, %v6053
    %v6056 = vlaneseq
    %v6057 = vshrl.u32 %v6056, 7
    %v6058 = vsub.s32 0, %v6057
    %v6059 = vrot.slane %v6055, %v6058
    %6060 = vrot.lane.b32.xlu0 %v6059, 32
    %v6061 = vpop.permute.xlu0 %6060
    %v6063 = vsel %vm270, %v6061, 0
    %6065 = vmatprep.subr.bf16.mxu0 0
    %6066 = vmatpush1.bf16.xpose.msra.mxu0 %v2419
    %6067 = vmatprep.subr.bf16.mxu0 0
    %6068 = vmatpush1.bf16.xpose.msra.mxu0 0
    %6069 = vmatprep.subr.bf16.mxu0 0
    %6070 = vmatpush1.bf16.xpose.msra.mxu0 0
    %6071 = vmatprep.subr.bf16.mxu0 0
    %6072 = vmatpush1.bf16.xpose.msra.mxu0 0
    %6073 = vmatprep.subr.bf16.mxu0 0
    %6074 = vmatpush1.bf16.xpose.msra.mxu0 0
    %6075 = vmatprep.subr.bf16.mxu0 0
    %6076 = vmatpush1.bf16.xpose.msra.mxu0 0
    %6077 = vmatprep.subr.bf16.mxu0 0
    %6078 = vmatpush1.bf16.xpose.msra.mxu0 0
    %6079 = vmatprep.subr.bf16.mxu0 0
    %6080 = vmatpush1.bf16.xpose.msra.mxu0 0
    %6081 = vmatprep.subr.bf16.mxu0 0
    %6082 = vmatpush1.bf16.xpose.msra.mxu0 0
    %6083 = vmatprep.subr.bf16.mxu0 0
    %6084 = vmatpush1.bf16.xpose.msra.mxu0 0
    %6085 = vmatprep.subr.bf16.mxu0 0
    %6086 = vmatpush1.bf16.xpose.msra.mxu0 0
    %6087 = vmatprep.subr.bf16.mxu0 0
    %6088 = vmatpush1.bf16.xpose.msra.mxu0 0
    %6089 = vmatprep.subr.bf16.mxu0 0
    %6090 = vmatpush1.bf16.xpose.msra.mxu0 0
    %6091 = vmatprep.subr.bf16.mxu0 0
    %6092 = vmatpush1.bf16.xpose.msra.mxu0 0
    %6093 = vmatprep.subr.bf16.mxu0 0
    %6094 = vmatpush1.bf16.xpose.msra.mxu0 0
    %6095 = vmatprep.subr.bf16.mxu0 0
    %6096 = vmatpush1.bf16.xpose.msra.mxu0 0
    %6097 = vmatprep.mubr.bf16.mxu0 0
    %6098 = vmatmul.mubr.bf16.gmra.mrb[0].mxu0 %v6063
    %v6099 = vpop.f32.mrb[0].mxu0
    %v6100 = vadd.f32 0.0, %v6099
    %v6101 = vpop.f32.mrb[0].mxu0
    %v6102 = vpop.f32.mrb[0].mxu0
    %v6103 = vpop.f32.mrb[0].mxu0
    %6104 = vdwg.mxu0
    %v6105 = vpack.i.b16 %v6054, %v6054
    %v6106 = vlaneseq
    %v6107 = vshrl.u32 %v6106, 7
    %v6108 = vsub.s32 0, %v6107
    %v6109 = vrot.slane %v6105, %v6108
    %6110 = vrot.lane.b32.xlu0 %v6109, 32
    %v6111 = vpop.permute.xlu0 %6110
    %v6113 = vsel %vm270, %v6111, 0
    %6115 = vmatprep.subr.bf16.mxu0 0
    %6116 = vmatpush1.bf16.xpose.msra.mxu0 %v2472
    %6117 = vmatprep.subr.bf16.mxu0 0
    %6118 = vmatpush1.bf16.xpose.msra.mxu0 0
    %6119 = vmatprep.subr.bf16.mxu0 0
    %6120 = vmatpush1.bf16.xpose.msra.mxu0 0
    %6121 = vmatprep.subr.bf16.mxu0 0
    %6122 = vmatpush1.bf16.xpose.msra.mxu0 0
    %6123 = vmatprep.subr.bf16.mxu0 0
    %6124 = vmatpush1.bf16.xpose.msra.mxu0 0
    %6125 = vmatprep.subr.bf16.mxu0 0
    %6126 = vmatpush1.bf16.xpose.msra.mxu0 0
    %6127 = vmatprep.subr.bf16.mxu0 0
    %6128 = vmatpush1.bf16.xpose.msra.mxu0 0
    %6129 = vmatprep.subr.bf16.mxu0 0
    %6130 = vmatpush1.bf16.xpose.msra.mxu0 0
    %6131 = vmatprep.subr.bf16.mxu0 0
    %6132 = vmatpush1.bf16.xpose.msra.mxu0 0
    %6133 = vmatprep.subr.bf16.mxu0 0
    %6134 = vmatpush1.bf16.xpose.msra.mxu0 0
    %6135 = vmatprep.subr.bf16.mxu0 0
    %6136 = vmatpush1.bf16.xpose.msra.mxu0 0
    %6137 = vmatprep.subr.bf16.mxu0 0
    %6138 = vmatpush1.bf16.xpose.msra.mxu0 0
    %6139 = vmatprep.subr.bf16.mxu0 0
    %6140 = vmatpush1.bf16.xpose.msra.mxu0 0
    %6141 = vmatprep.subr.bf16.mxu0 0
    %6142 = vmatpush1.bf16.xpose.msra.mxu0 0
    %6143 = vmatprep.subr.bf16.mxu0 0
    %6144 = vmatpush1.bf16.xpose.msra.mxu0 0
    %6145 = vmatprep.subr.bf16.mxu0 0
    %6146 = vmatpush1.bf16.xpose.msra.mxu0 0
    %6147 = vmatprep.mubr.bf16.mxu0 0
    %6148 = vmatmul.mubr.bf16.gmra.mrb[0].mxu0 %v6113
    %v6149 = vpop.f32.mrb[0].mxu0
    %v6150 = vadd.f32 0.0, %v6149
    %v6151 = vpop.f32.mrb[0].mxu0
    %v6152 = vpop.f32.mrb[0].mxu0
    %v6153 = vpop.f32.mrb[0].mxu0
    %6154 = vdwg.mxu0
    %v6155 = vsel %vm2514, %v6100, -inf
    %6156 = vmax.xlane.f32.xlu0 %v6155
    %v6157 = vpop.xlane.xlu0 %6156
    %v6158 = vsel %vm2514, %v6150, -inf
    %6159 = vmax.xlane.f32.xlu0 %v6158
    %v6160 = vpop.xlane.xlu0 %6159
    %v6161 = vsub.f32 %v6100, %v6157
    %v6162 = vsub.f32 %v6150, %v6160
    %v6163 = vmul.f32 %v6161, 1.442695
    %v6164 = vpow.pop %v6163
    %v6165 = vmul.f32 %v6162, 1.442695
    %v6166 = vpow.pop %v6165
    %v6167 = vsel %vm2514, %v6164, 0.0
    %6168 = vadd.xlane.f32.xlu0 %v6167
    %v6169 = vpop.xlane.xlu0 %6168
    %v6170 = vsel %vm2514, %v6166, 0.0
    %6171 = vadd.xlane.f32.xlu0 %v6170
    %v6172 = vpop.xlane.xlu0 %6171
    %v6173 = vrcp.pop %v6169
    %v6174 = vmul.f32 %v6164, %v6173
    %v6175 = vrcp.pop %v6172
    %v6176 = vmul.f32 %v6166, %v6175
    %v6177 = vpack.c.bf16 %v6174, %v6174
    %v6178 = vpack.c.bf16 %v6176, %v6176
    %v6180 = vsel %vm177, %v6177, 0
    %6182 = vmatprep.subr.bf16.mxu0 0
    %6183 = vmatpush1.bf16.msra.mxu0 %v2543
    %6184 = vmatprep.subr.bf16.mxu0 0
    %6185 = vmatpush1.bf16.msra.mxu0 0
    %6186 = vmatprep.subr.bf16.mxu0 0
    %6187 = vmatpush1.bf16.msra.mxu0 0
    %6188 = vmatprep.subr.bf16.mxu0 0
    %6189 = vmatpush1.bf16.msra.mxu0 0
    %6190 = vmatprep.subr.bf16.mxu0 0
    %6191 = vmatpush1.bf16.msra.mxu0 0
    %6192 = vmatprep.subr.bf16.mxu0 0
    %6193 = vmatpush1.bf16.msra.mxu0 0
    %6194 = vmatprep.subr.bf16.mxu0 0
    %6195 = vmatpush1.bf16.msra.mxu0 0
    %6196 = vmatprep.subr.bf16.mxu0 0
    %6197 = vmatpush1.bf16.msra.mxu0 0
    %6198 = vmatprep.subr.bf16.mxu0 0
    %6199 = vmatpush1.bf16.msra.mxu0 0
    %6200 = vmatprep.subr.bf16.mxu0 0
    %6201 = vmatpush1.bf16.msra.mxu0 0
    %6202 = vmatprep.subr.bf16.mxu0 0
    %6203 = vmatpush1.bf16.msra.mxu0 0
    %6204 = vmatprep.subr.bf16.mxu0 0
    %6205 = vmatpush1.bf16.msra.mxu0 0
    %6206 = vmatprep.subr.bf16.mxu0 0
    %6207 = vmatpush1.bf16.msra.mxu0 0
    %6208 = vmatprep.subr.bf16.mxu0 0
    %6209 = vmatpush1.bf16.msra.mxu0 0
    %6210 = vmatprep.subr.bf16.mxu0 0
    %6211 = vmatpush1.bf16.msra.mxu0 0
    %6212 = vmatprep.subr.bf16.mxu0 0
    %6213 = vmatpush1.bf16.msra.mxu0 0
    %6214 = vmatprep.mubr.bf16.mxu0 0
    %6215 = vmatmul.mubr.bf16.gmra.mrb[0].mxu0 %v6180
    %v6216 = vpop.f32.mrb[0].mxu0
    %v6217 = vadd.f32 %v79, %v6216
    %v6218 = vpop.f32.mrb[0].mxu0
    %v6219 = vpop.f32.mrb[0].mxu0
    %v6220 = vpop.f32.mrb[0].mxu0
    %6221 = vdwg.mxu0
    %v6223 = vsel %vm177, %v6178, 0
    %6225 = vmatprep.subr.bf16.mxu0 0
    %6226 = vmatpush1.bf16.msra.mxu0 %v2589
    %6227 = vmatprep.subr.bf16.mxu0 0
    %6228 = vmatpush1.bf16.msra.mxu0 0
    %6229 = vmatprep.subr.bf16.mxu0 0
    %6230 = vmatpush1.bf16.msra.mxu0 0
    %6231 = vmatprep.subr.bf16.mxu0 0
    %6232 = vmatpush1.bf16.msra.mxu0 0
    %6233 = vmatprep.subr.bf16.mxu0 0
    %6234 = vmatpush1.bf16.msra.mxu0 0
    %6235 = vmatprep.subr.bf16.mxu0 0
    %6236 = vmatpush1.bf16.msra.mxu0 0
    %6237 = vmatprep.subr.bf16.mxu0 0
    %6238 = vmatpush1.bf16.msra.mxu0 0
    %6239 = vmatprep.subr.bf16.mxu0 0
    %6240 = vmatpush1.bf16.msra.mxu0 0
    %6241 = vmatprep.subr.bf16.mxu0 0
    %6242 = vmatpush1.bf16.msra.mxu0 0
    %6243 = vmatprep.subr.bf16.mxu0 0
    %6244 = vmatpush1.bf16.msra.mxu0 0
    %6245 = vmatprep.subr.bf16.mxu0 0
    %6246 = vmatpush1.bf16.msra.mxu0 0
    %6247 = vmatprep.subr.bf16.mxu0 0
    %6248 = vmatpush1.bf16.msra.mxu0 0
    %6249 = vmatprep.subr.bf16.mxu0 0
    %6250 = vmatpush1.bf16.msra.mxu0 0
    %6251 = vmatprep.subr.bf16.mxu0 0
    %6252 = vmatpush1.bf16.msra.mxu0 0
    %6253 = vmatprep.subr.bf16.mxu0 0
    %6254 = vmatpush1.bf16.msra.mxu0 0
    %6255 = vmatprep.subr.bf16.mxu0 0
    %6256 = vmatpush1.bf16.msra.mxu0 0
    %6257 = vmatprep.mubr.bf16.mxu0 0
    %6258 = vmatmul.mubr.bf16.gmra.mrb[0].mxu0 %v6223
    %v6259 = vpop.f32.mrb[0].mxu0
    %v6260 = vadd.f32 %v79, %v6259
    %v6261 = vpop.f32.mrb[0].mxu0
    %v6262 = vpop.f32.mrb[0].mxu0
    %v6263 = vpop.f32.mrb[0].mxu0
    %6264 = vdwg.mxu0
    %6266 = vset.pattern.permute.xlu0 2
    %6267 = vperm.xlu0 %6266, %v5876
    %v6268 = vpop.permute.xlu0 %6267
    %6271 = vset.pattern.permute.xlu0 2
    %6272 = vperm.xlu0 %6271, %v5877
    %v6273 = vpop.permute.xlu0 %6272
    %6276 = vset.pattern.permute.xlu0 2
    %6277 = vperm.xlu0 %6276, %v5878
    %v6278 = vpop.permute.xlu0 %6277
    %6281 = vset.pattern.permute.xlu0 2
    %6282 = vperm.xlu0 %6281, %v5879
    %v6283 = vpop.permute.xlu0 %6282
    %6286 = vset.pattern.permute.xlu0 2
    %6287 = vperm.xlu0 %6286, %v5880
    %v6288 = vpop.permute.xlu0 %6287
    %6291 = vset.pattern.permute.xlu0 2
    %6292 = vperm.xlu0 %6291, %v5881
    %v6293 = vpop.permute.xlu0 %6292
    %6296 = vset.pattern.permute.xlu0 2
    %6297 = vperm.xlu0 %6296, %v5882
    %v6298 = vpop.permute.xlu0 %6297
    %6301 = vset.pattern.permute.xlu0 2
    %6302 = vperm.xlu0 %6301, %v5883
    %v6303 = vpop.permute.xlu0 %6302
    %6306 = vset.pattern.permute.xlu0 2
    %6307 = vperm.xlu0 %6306, %v5884
    %v6308 = vpop.permute.xlu0 %6307
    %6311 = vset.pattern.permute.xlu0 2
    %6312 = vperm.xlu0 %6311, %v5885
    %v6313 = vpop.permute.xlu0 %6312
    %v6315 = vmul.f32 %v6268, %v97
    %v6316 = vmul.f32 %v6273, %v98
    %v6317 = vmul.f32 %v6278, %v99
    %v6318 = vmul.f32 %v6283, %v100
    %v6319 = vmul.f32 %v6288, %v101
    %v6320 = vmul.f32 %v6293, %v97
    %v6321 = vmul.f32 %v6298, %v98
    %v6322 = vmul.f32 %v6303, %v99
    %v6323 = vmul.f32 %v6308, %v100
    %v6324 = vmul.f32 %v6313, %v101
    %v6325 = vsel %vm2636, %v6315, 0.0
    %v6326 = vsel %vm2636, %v6316, 0.0
    %v6327 = vadd.f32 %v6325, %v6326
    %v6328 = vsel %vm2636, %v6317, 0.0
    %v6329 = vadd.f32 %v6327, %v6328
    %v6330 = vsel %vm2636, %v6318, 0.0
    %v6331 = vadd.f32 %v6329, %v6330
    %v6332 = vsel %vm2644, %v6319, 0.0
    %v6333 = vadd.f32 %v6331, %v6332
    %v6334 = vrot.slane %v6333, 4
    %v6335 = vadd.f32 %v6333, %v6334
    %v6336 = vrot.slane %v6335, 2
    %v6337 = vadd.f32 %v6335, %v6336
    %v6338 = vrot.slane %v6337, 1
    %v6339 = vadd.f32 %v6337, %v6338
    %v6340 = vsel %vm2636, %v6320, 0.0
    %v6341 = vsel %vm2636, %v6321, 0.0
    %v6342 = vadd.f32 %v6340, %v6341
    %v6343 = vsel %vm2636, %v6322, 0.0
    %v6344 = vadd.f32 %v6342, %v6343
    %v6345 = vsel %vm2636, %v6323, 0.0
    %v6346 = vadd.f32 %v6344, %v6345
    %v6347 = vsel %vm2644, %v6324, 0.0
    %v6348 = vadd.f32 %v6346, %v6347
    %v6349 = vrot.slane %v6348, 4
    %v6350 = vadd.f32 %v6348, %v6349
    %v6351 = vrot.slane %v6350, 2
    %v6352 = vadd.f32 %v6350, %v6351
    %v6353 = vrot.slane %v6352, 1
    %v6354 = vadd.f32 %v6352, %v6353
    %v6355 = vadd.f32 %v6339, %v2656
    %v6356 = vadd.f32 %v6354, %v2656
    %6357 = vrot.lane.b32.xlu0 %v5876, 127
    %v6358 = vpop.permute.xlu0 %6357
    %6359 = vrot.lane.b32.xlu0 %v5877, 127
    %v6360 = vpop.permute.xlu0 %6359
    %6361 = vrot.lane.b32.xlu0 %v5878, 127
    %v6362 = vpop.permute.xlu0 %6361
    %6363 = vrot.lane.b32.xlu0 %v5879, 127
    %v6364 = vpop.permute.xlu0 %6363
    %6365 = vrot.lane.b32.xlu0 %v5880, 127
    %v6366 = vpop.permute.xlu0 %6365
    %6367 = vrot.lane.b32.xlu0 %v5881, 127
    %v6368 = vpop.permute.xlu0 %6367
    %6369 = vrot.lane.b32.xlu0 %v5882, 127
    %v6370 = vpop.permute.xlu0 %6369
    %6371 = vrot.lane.b32.xlu0 %v5883, 127
    %v6372 = vpop.permute.xlu0 %6371
    %6373 = vrot.lane.b32.xlu0 %v5884, 127
    %v6374 = vpop.permute.xlu0 %6373
    %6375 = vrot.lane.b32.xlu0 %v5885, 127
    %v6376 = vpop.permute.xlu0 %6375
    %v6387 = vmin.f32 %v5876, %v6358
    %v6388 = vmin.f32 %v5877, %v6360
    %v6389 = vmin.f32 %v5878, %v6362
    %v6390 = vmin.f32 %v5879, %v6364
    %v6391 = vmin.f32 %v5880, %v6366
    %v6392 = vmin.f32 %v5881, %v6368
    %v6393 = vmin.f32 %v5882, %v6370
    %v6394 = vmin.f32 %v5883, %v6372
    %v6395 = vmin.f32 %v5884, %v6374
    %v6396 = vmin.f32 %v5885, %v6376
    %v6397 = vlaneseq
    %v6398 = vshrl.u32 %v6397, 7
    %v6399 = vsub.s32 0, %v6398
    %v6400 = vrot.slane %v6217, %v6399
    %v6401 = vlaneseq
    %v6402 = vshrl.u32 %v6401, 7
    %v6403 = vsub.s32 0, %v6402
    %v6404 = vrot.slane %v6260, %v6403
    %v6407 = vcombine.high %v6400, %v6400
    %v6408 = vcombine.high %v6404, %v6404
    %v6411 = vmul.f32 %v2201, %v6400
    %v6412 = vmul.f32 %v2202, %v6407
    %v6413 = vmul.f32 %v2203, %v6400
    %v6414 = vmul.f32 %v2204, %v6407
    %v6415 = vmul.f32 %v2205, %v6400
    %v6416 = vmul.f32 %v2206, %v6407
    %v6417 = vmul.f32 %v2207, %v6400
    %v6418 = vmul.f32 %v2208, %v6407
    %v6419 = vmul.f32 %v2209, %v6400
    %v6420 = vmul.f32 %v2210, %v6404
    %v6421 = vmul.f32 %v2211, %v6408
    %v6422 = vmul.f32 %v2212, %v6404
    %v6423 = vmul.f32 %v2213, %v6408
    %v6424 = vmul.f32 %v2214, %v6404
    %v6425 = vmul.f32 %v2215, %v6408
    %v6426 = vmul.f32 %v2216, %v6404
    %v6427 = vmul.f32 %v2217, %v6408
    %v6428 = vmul.f32 %v2218, %v6404
    %v6429 = vmax.f32 %v6411, 0.0
    %v6430 = vmax.f32 %v6412, 0.0
    %v6431 = vmax.f32 %v6413, 0.0
    %v6432 = vmax.f32 %v6414, 0.0
    %v6433 = vmax.f32 %v6415, 0.0
    %v6434 = vmax.f32 %v6416, 0.0
    %v6435 = vmax.f32 %v6417, 0.0
    %v6436 = vmax.f32 %v6418, 0.0
    %v6437 = vmax.f32 %v6419, 0.0
    %v6438 = vmax.f32 %v6420, 0.0
    %v6439 = vmax.f32 %v6421, 0.0
    %v6440 = vmax.f32 %v6422, 0.0
    %v6441 = vmax.f32 %v6423, 0.0
    %v6442 = vmax.f32 %v6424, 0.0
    %v6443 = vmax.f32 %v6425, 0.0
    %v6444 = vmax.f32 %v6426, 0.0
    %v6445 = vmax.f32 %v6427, 0.0
    %v6446 = vmax.f32 %v6428, 0.0
    %v6463 = vcombine.low %v6429, %v6430
    %v6464 = vcombine.low %v6431, %v6432
    %v6465 = vcombine.low %v6433, %v6434
    %v6466 = vcombine.low %v6435, %v6436
    %v6467 = vcombine.low %v6438, %v6439
    %v6468 = vcombine.low %v6440, %v6441
    %v6469 = vcombine.low %v6442, %v6443
    %v6470 = vcombine.low %v6444, %v6445
    %v6479 = vpack.c.bf16 %v6464, %v6463
    %v6480 = vpack.c.bf16 %v6466, %v6465
    %v6481 = vpack.c.bf16 %v6437, %v6437
    %v6482 = vpack.c.bf16 %v6468, %v6467
    %v6483 = vpack.c.bf16 %v6470, %v6469
    %v6484 = vpack.c.bf16 %v6446, %v6446
    %v6491 = vcombine.high %v6479, %v6479
    %v6493 = vunpack.c.l.s4 1983009808
    %v6494 = vunpack.c.0.s8 %v6493
    %v6495 = vlaneseq
    %v6496 = vshrl.u32 %v6495, 7
    %v6497 = vsub.s32 %v6494, %v6496
    %v6498 = vrot.slane %v6479, %v6497
    %v6500 = vunpack.c.l.s4 1983009808
    %v6501 = vunpack.c.0.s8 %v6500
    %v6502 = vlaneseq
    %v6503 = vshrl.u32 %v6502, 7
    %v6504 = vsub.s32 %v6501, %v6503
    %v6505 = vrot.slane %v6491, %v6504
    %v6506 = vcombine.high %v6498, %v6498
    %v6507 = vcombine.high %v6505, %v6505
    %v6508 = vcombine.high %v6480, %v6480
    %v6510 = vunpack.c.l.s4 1983009808
    %v6511 = vunpack.c.0.s8 %v6510
    %v6512 = vlaneseq
    %v6513 = vshrl.u32 %v6512, 7
    %v6514 = vsub.s32 %v6511, %v6513
    %v6515 = vrot.slane %v6480, %v6514
    %v6517 = vunpack.c.l.s4 1983009808
    %v6518 = vunpack.c.0.s8 %v6517
    %v6519 = vlaneseq
    %v6520 = vshrl.u32 %v6519, 7
    %v6521 = vsub.s32 %v6518, %v6520
    %v6522 = vrot.slane %v6508, %v6521
    %v6523 = vcombine.high %v6515, %v6515
    %v6524 = vcombine.high %v6522, %v6522
    %v6526 = vunpack.c.l.s4 1983009808
    %v6527 = vunpack.c.0.s8 %v6526
    %v6528 = vlaneseq
    %v6529 = vshrl.u32 %v6528, 7
    %v6530 = vsub.s32 %v6527, %v6529
    %v6531 = vrot.slane %v6481, %v6530
    %v6532 = vcombine.high %v6482, %v6482
    %v6534 = vunpack.c.l.s4 1983009808
    %v6535 = vunpack.c.0.s8 %v6534
    %v6536 = vlaneseq
    %v6537 = vshrl.u32 %v6536, 7
    %v6538 = vsub.s32 %v6535, %v6537
    %v6539 = vrot.slane %v6482, %v6538
    %v6541 = vunpack.c.l.s4 1983009808
    %v6542 = vunpack.c.0.s8 %v6541
    %v6543 = vlaneseq
    %v6544 = vshrl.u32 %v6543, 7
    %v6545 = vsub.s32 %v6542, %v6544
    %v6546 = vrot.slane %v6532, %v6545
    %v6547 = vcombine.high %v6539, %v6539
    %v6548 = vcombine.high %v6546, %v6546
    %v6549 = vcombine.high %v6483, %v6483
    %v6551 = vunpack.c.l.s4 1983009808
    %v6552 = vunpack.c.0.s8 %v6551
    %v6553 = vlaneseq
    %v6554 = vshrl.u32 %v6553, 7
    %v6555 = vsub.s32 %v6552, %v6554
    %v6556 = vrot.slane %v6483, %v6555
    %v6558 = vunpack.c.l.s4 1983009808
    %v6559 = vunpack.c.0.s8 %v6558
    %v6560 = vlaneseq
    %v6561 = vshrl.u32 %v6560, 7
    %v6562 = vsub.s32 %v6559, %v6561
    %v6563 = vrot.slane %v6549, %v6562
    %v6564 = vcombine.high %v6556, %v6556
    %v6565 = vcombine.high %v6563, %v6563
    %v6567 = vunpack.c.l.s4 1983009808
    %v6568 = vunpack.c.0.s8 %v6567
    %v6569 = vlaneseq
    %v6570 = vshrl.u32 %v6569, 7
    %v6571 = vsub.s32 %v6568, %v6570
    %v6572 = vrot.slane %v6484, %v6571
    %v6573 = vcombine.low %v6498, %v6506
    %v6574 = vcombine.low %v6505, %v6507
    %v6576 = vunpack.c.l.s4 1983009808
    %v6577 = vunpack.c.0.s8 %v6576
    %v6578 = vlaneseq
    %v6579 = vshrl.u32 %v6578, 7
    %v6580 = vsub.s32 %v6577, %v6579
    %v6581 = vrot.slane %v6573, %v6580
    %v6583 = vunpack.c.l.s4 1983009808
    %v6584 = vunpack.c.0.s8 %v6583
    %v6585 = vlaneseq
    %v6586 = vshrl.u32 %v6585, 7
    %v6587 = vsub.s32 %v6584, %v6586
    %v6588 = vrot.slane %v6574, %v6587
    %v6589 = vcombine.low %v6581, %v6588
    %v6590 = vcombine.low %v6515, %v6523
    %v6591 = vcombine.low %v6522, %v6524
    %v6593 = vunpack.c.l.s4 1983009808
    %v6594 = vunpack.c.0.s8 %v6593
    %v6595 = vlaneseq
    %v6596 = vshrl.u32 %v6595, 7
    %v6597 = vsub.s32 %v6594, %v6596
    %v6598 = vrot.slane %v6590, %v6597
    %v6600 = vunpack.c.l.s4 1983009808
    %v6601 = vunpack.c.0.s8 %v6600
    %v6602 = vlaneseq
    %v6603 = vshrl.u32 %v6602, 7
    %v6604 = vsub.s32 %v6601, %v6603
    %v6605 = vrot.slane %v6591, %v6604
    %v6606 = vcombine.low %v6598, %v6605
    %v6607 = vcombine.low %v6531, %v6539
    %v6608 = vcombine.low %v6547, %v6546
    %v6610 = vunpack.c.l.s4 1983009808
    %v6611 = vunpack.c.0.s8 %v6610
    %v6612 = vlaneseq
    %v6613 = vshrl.u32 %v6612, 7
    %v6614 = vsub.s32 %v6611, %v6613
    %v6615 = vrot.slane %v6607, %v6614
    %v6617 = vunpack.c.l.s4 1983009808
    %v6618 = vunpack.c.0.s8 %v6617
    %v6619 = vlaneseq
    %v6620 = vshrl.u32 %v6619, 7
    %v6621 = vsub.s32 %v6618, %v6620
    %v6622 = vrot.slane %v6608, %v6621
    %v6623 = vcombine.low %v6615, %v6622
    %v6624 = vcombine.low %v6548, %v6556
    %v6625 = vcombine.low %v6564, %v6563
    %v6627 = vunpack.c.l.s4 1983009808
    %v6628 = vunpack.c.0.s8 %v6627
    %v6629 = vlaneseq
    %v6630 = vshrl.u32 %v6629, 7
    %v6631 = vsub.s32 %v6628, %v6630
    %v6632 = vrot.slane %v6624, %v6631
    %v6634 = vunpack.c.l.s4 1983009808
    %v6635 = vunpack.c.0.s8 %v6634
    %v6636 = vlaneseq
    %v6637 = vshrl.u32 %v6636, 7
    %v6638 = vsub.s32 %v6635, %v6637
    %v6639 = vrot.slane %v6625, %v6638
    %v6640 = vcombine.low %v6632, %v6639
    %v6641 = vcombine.low %v6565, %v6572
    %v6643 = vunpack.c.l.s4 1983009808
    %v6644 = vunpack.c.0.s8 %v6643
    %v6645 = vlaneseq
    %v6646 = vshrl.u32 %v6645, 7
    %v6647 = vsub.s32 %v6644, %v6646
    %v6648 = vrot.slane %v6641, %v6647
    %v6650 = vsel %vm2914, %v6589, 0
    %v6653 = vsel %vm2914, %v6606, 0
    %v6656 = vsel %vm2914, %v6623, 0
    %v6659 = vsel %vm2914, %v6640, 0
    %v6662 = vsel %vm2914, %v6648, 0
    %6664 = vmatprep.subr.bf16.mxu0 0
    %6665 = vmatpush1.bf16.msra.mxu0 %v95
    %6666 = vmatprep.subr.bf16.mxu0 0
    %6667 = vmatpush1.bf16.msra.mxu0 0
    %6668 = vmatprep.subr.bf16.mxu0 0
    %6669 = vmatpush1.bf16.msra.mxu0 0
    %6670 = vmatprep.subr.bf16.mxu0 0
    %6671 = vmatpush1.bf16.msra.mxu0 0
    %6672 = vmatprep.subr.bf16.mxu0 0
    %6673 = vmatpush1.bf16.msra.mxu0 0
    %6674 = vmatprep.subr.bf16.mxu0 0
    %6675 = vmatpush1.bf16.msra.mxu0 0
    %6676 = vmatprep.subr.bf16.mxu0 0
    %6677 = vmatpush1.bf16.msra.mxu0 0
    %6678 = vmatprep.subr.bf16.mxu0 0
    %6679 = vmatpush1.bf16.msra.mxu0 0
    %6680 = vmatprep.subr.bf16.mxu0 0
    %6681 = vmatpush1.bf16.msra.mxu0 0
    %6682 = vmatprep.subr.bf16.mxu0 0
    %6683 = vmatpush1.bf16.msra.mxu0 0
    %6684 = vmatprep.subr.bf16.mxu0 0
    %6685 = vmatpush1.bf16.msra.mxu0 0
    %6686 = vmatprep.subr.bf16.mxu0 0
    %6687 = vmatpush1.bf16.msra.mxu0 0
    %6688 = vmatprep.subr.bf16.mxu0 0
    %6689 = vmatpush1.bf16.msra.mxu0 0
    %6690 = vmatprep.subr.bf16.mxu0 0
    %6691 = vmatpush1.bf16.msra.mxu0 0
    %6692 = vmatprep.subr.bf16.mxu0 0
    %6693 = vmatpush1.bf16.msra.mxu0 0
    %6694 = vmatprep.subr.bf16.mxu0 0
    %6695 = vmatpush1.bf16.msra.mxu0 0
    %6696 = vmatprep.mubr.bf16.mxu0 0
    %6697 = vmatmul.mubr.bf16.gmra.mrb[0].mxu0 %v6650
    %v6698 = vpop.f32.mrb[0].mxu0
    %v6699 = vadd.f32 %v2837, %v6698
    %v6700 = vpop.f32.mrb[0].mxu0
    %v6701 = vpop.f32.mrb[0].mxu0
    %v6702 = vadd.f32 %v2837, %v6701
    %v6703 = vpop.f32.mrb[0].mxu0
    %6704 = vmatprep.mubr.bf16.mxu0 0
    %6705 = vmatmul.mubr.bf16.gmra.mrb[0].mxu0 %v6653
    %v6706 = vpop.f32.mrb[0].mxu0
    %v6707 = vadd.f32 %v2837, %v6706
    %v6708 = vpop.f32.mrb[0].mxu0
    %v6709 = vpop.f32.mrb[0].mxu0
    %v6710 = vadd.f32 %v2837, %v6709
    %v6711 = vpop.f32.mrb[0].mxu0
    %6712 = vmatprep.mubr.bf16.mxu0 0
    %6713 = vmatmul.mubr.bf16.gmra.mrb[0].mxu0 %v6656
    %v6714 = vpop.f32.mrb[0].mxu0
    %v6715 = vadd.f32 %v2837, %v6714
    %v6716 = vpop.f32.mrb[0].mxu0
    %v6717 = vpop.f32.mrb[0].mxu0
    %v6718 = vadd.f32 %v2837, %v6717
    %v6719 = vpop.f32.mrb[0].mxu0
    %6720 = vmatprep.mubr.bf16.mxu0 0
    %6721 = vmatmul.mubr.bf16.gmra.mrb[0].mxu0 %v6659
    %v6722 = vpop.f32.mrb[0].mxu0
    %v6723 = vadd.f32 %v2837, %v6722
    %v6724 = vpop.f32.mrb[0].mxu0
    %v6725 = vpop.f32.mrb[0].mxu0
    %v6726 = vadd.f32 %v2837, %v6725
    %v6727 = vpop.f32.mrb[0].mxu0
    %6728 = vmatprep.mubr.bf16.mxu0 0
    %6729 = vmatmul.mubr.bf16.gmra.mrb[0].mxu0 %v6662
    %v6730 = vpop.f32.mrb[0].mxu0
    %v6731 = vadd.f32 %v2837, %v6730
    %v6732 = vpop.f32.mrb[0].mxu0
    %v6733 = vpop.f32.mrb[0].mxu0
    %v6734 = vpop.f32.mrb[0].mxu0
    %6735 = vdwg.mxu0
    %v6745 = vcombine.high %v6699, %v6699
    %v6746 = vcombine.high %v6702, %v6702
    %v6747 = vcombine.high %v6707, %v6707
    %v6748 = vcombine.high %v6710, %v6710
    %v6749 = vcombine.high %v6715, %v6715
    %v6750 = vcombine.high %v6718, %v6718
    %v6751 = vcombine.high %v6723, %v6723
    %v6752 = vcombine.high %v6726, %v6726
    %v6753 = vcombine.high %v6731, %v6731
    %v6756 = vunpack.c.l.s4 1966171168
    %v6757 = vunpack.c.0.s8 %v6756
    %v6758 = vlaneseq
    %v6759 = vshrl.u32 %v6758, 7
    %v6760 = vsub.s32 %v6757, %v6759
    %v6761 = vrot.slane %v6016, %v6760
    %v6762 = vcombine.high %v6761, %v6761
    %v6764 = vunpack.c.l.s4 1966171168
    %v6765 = vunpack.c.0.s8 %v6764
    %v6766 = vlaneseq
    %v6767 = vshrl.u32 %v6766, 7
    %v6768 = vsub.s32 %v6765, %v6767
    %v6769 = vrot.slane %v6761, %v6768
    %v6771 = vunpack.c.l.s4 1966171168
    %v6772 = vunpack.c.0.s8 %v6771
    %v6773 = vlaneseq
    %v6774 = vshrl.u32 %v6773, 7
    %v6775 = vsub.s32 %v6772, %v6774
    %v6776 = vrot.slane %v6762, %v6775
    %6778 = vset.pattern.permute.xlu0 0
    %6779 = vperm.xlu0 %6778, %v6387
    %v6780 = vpop.permute.xlu0 %6779
    %6783 = vset.pattern.permute.xlu0 0
    %6784 = vperm.xlu0 %6783, %v6388
    %v6785 = vpop.permute.xlu0 %6784
    %6788 = vset.pattern.permute.xlu0 0
    %6789 = vperm.xlu0 %6788, %v6389
    %v6790 = vpop.permute.xlu0 %6789
    %6793 = vset.pattern.permute.xlu0 0
    %6794 = vperm.xlu0 %6793, %v6390
    %v6795 = vpop.permute.xlu0 %6794
    %6798 = vset.pattern.permute.xlu0 0
    %6799 = vperm.xlu0 %6798, %v6391
    %v6800 = vpop.permute.xlu0 %6799
    %6803 = vset.pattern.permute.xlu0 0
    %6804 = vperm.xlu0 %6803, %v6392
    %v6805 = vpop.permute.xlu0 %6804
    %6808 = vset.pattern.permute.xlu0 0
    %6809 = vperm.xlu0 %6808, %v6393
    %v6810 = vpop.permute.xlu0 %6809
    %6813 = vset.pattern.permute.xlu0 0
    %6814 = vperm.xlu0 %6813, %v6394
    %v6815 = vpop.permute.xlu0 %6814
    %6818 = vset.pattern.permute.xlu0 0
    %6819 = vperm.xlu0 %6818, %v6395
    %v6820 = vpop.permute.xlu0 %6819
    %6823 = vset.pattern.permute.xlu0 0
    %6824 = vperm.xlu0 %6823, %v6396
    %v6825 = vpop.permute.xlu0 %6824
    %v6827 = vlaneseq
    %v6828 = vshrl.u32 %v6827, 7
    %v6829 = vsub.s32 0, %v6828
    %v6830 = vrot.slane %v6769, %v6829
    %v6831 = vlaneseq
    %v6832 = vshrl.u32 %v6831, 7
    %v6833 = vsub.s32 0, %v6832
    %v6834 = vrot.slane %v6776, %v6833
    %v6837 = vmul.f32 %v6780, %v6830
    %v6838 = vmul.f32 %v6785, %v6830
    %v6839 = vmul.f32 %v6790, %v6830
    %v6840 = vmul.f32 %v6795, %v6830
    %v6841 = vmul.f32 %v6800, %v6830
    %v6842 = vmul.f32 %v6805, %v6834
    %v6843 = vmul.f32 %v6810, %v6834
    %v6844 = vmul.f32 %v6815, %v6834
    %v6845 = vmul.f32 %v6820, %v6834
    %v6846 = vmul.f32 %v6825, %v6834
    %v6849 = vunpack.c.l.s4 1966171168
    %v6850 = vunpack.c.0.s8 %v6849
    %v6851 = vlaneseq
    %v6852 = vshrl.u32 %v6851, 7
    %v6853 = vsub.s32 %v6850, %v6852
    %v6854 = vrot.slane %v6031, %v6853
    %v6855 = vcombine.high %v6854, %v6854
    %v6857 = vunpack.c.l.s4 1966171168
    %v6858 = vunpack.c.0.s8 %v6857
    %v6859 = vlaneseq
    %v6860 = vshrl.u32 %v6859, 7
    %v6861 = vsub.s32 %v6858, %v6860
    %v6862 = vrot.slane %v6854, %v6861
    %v6864 = vunpack.c.l.s4 1966171168
    %v6865 = vunpack.c.0.s8 %v6864
    %v6866 = vlaneseq
    %v6867 = vshrl.u32 %v6866, 7
    %v6868 = vsub.s32 %v6865, %v6867
    %v6869 = vrot.slane %v6855, %v6868
    %6870 = vset.pattern.permute.xlu0 0
    %6871 = vperm.xlu0 %6870, %v6699
    %v6872 = vpop.permute.xlu0 %6871
    %v6875 = vunpack.c.l.s4 839922192
    %v6876 = vunpack.c.0.s8 %v6875
    %v6877 = vlaneseq
    %v6878 = vshrl.u32 %v6877, 7
    %v6879 = vsub.s32 %v6876, %v6878
    %v6880 = vrot.slane %v6872, %v6879
    %6881 = vset.pattern.permute.xlu0 0
    %6882 = vperm.xlu0 %6881, %v6745
    %v6883 = vpop.permute.xlu0 %6882
    %v6886 = vunpack.c.l.s4 839922192
    %v6887 = vunpack.c.0.s8 %v6886
    %v6888 = vlaneseq
    %v6889 = vshrl.u32 %v6888, 7
    %v6890 = vsub.s32 %v6887, %v6889
    %v6891 = vrot.slane %v6883, %v6890
    %6892 = vset.pattern.permute.xlu0 0
    %6893 = vperm.xlu0 %6892, %v6702
    %v6894 = vpop.permute.xlu0 %6893
    %v6897 = vunpack.c.l.s4 839922192
    %v6898 = vunpack.c.0.s8 %v6897
    %v6899 = vlaneseq
    %v6900 = vshrl.u32 %v6899, 7
    %v6901 = vsub.s32 %v6898, %v6900
    %v6902 = vrot.slane %v6894, %v6901
    %6903 = vset.pattern.permute.xlu0 0
    %6904 = vperm.xlu0 %6903, %v6746
    %v6905 = vpop.permute.xlu0 %6904
    %v6908 = vunpack.c.l.s4 839922192
    %v6909 = vunpack.c.0.s8 %v6908
    %v6910 = vlaneseq
    %v6911 = vshrl.u32 %v6910, 7
    %v6912 = vsub.s32 %v6909, %v6911
    %v6913 = vrot.slane %v6905, %v6912
    %6914 = vset.pattern.permute.xlu0 0
    %6915 = vperm.xlu0 %6914, %v6707
    %v6916 = vpop.permute.xlu0 %6915
    %v6919 = vunpack.c.l.s4 839922192
    %v6920 = vunpack.c.0.s8 %v6919
    %v6921 = vlaneseq
    %v6922 = vshrl.u32 %v6921, 7
    %v6923 = vsub.s32 %v6920, %v6922
    %v6924 = vrot.slane %v6916, %v6923
    %6925 = vset.pattern.permute.xlu0 0
    %6926 = vperm.xlu0 %6925, %v6747
    %v6927 = vpop.permute.xlu0 %6926
    %v6930 = vunpack.c.l.s4 839922192
    %v6931 = vunpack.c.0.s8 %v6930
    %v6932 = vlaneseq
    %v6933 = vshrl.u32 %v6932, 7
    %v6934 = vsub.s32 %v6931, %v6933
    %v6935 = vrot.slane %v6927, %v6934
    %6936 = vset.pattern.permute.xlu0 0
    %6937 = vperm.xlu0 %6936, %v6710
    %v6938 = vpop.permute.xlu0 %6937
    %v6941 = vunpack.c.l.s4 839922192
    %v6942 = vunpack.c.0.s8 %v6941
    %v6943 = vlaneseq
    %v6944 = vshrl.u32 %v6943, 7
    %v6945 = vsub.s32 %v6942, %v6944
    %v6946 = vrot.slane %v6938, %v6945
    %6947 = vset.pattern.permute.xlu0 0
    %6948 = vperm.xlu0 %6947, %v6748
    %v6949 = vpop.permute.xlu0 %6948
    %v6952 = vunpack.c.l.s4 839922192
    %v6953 = vunpack.c.0.s8 %v6952
    %v6954 = vlaneseq
    %v6955 = vshrl.u32 %v6954, 7
    %v6956 = vsub.s32 %v6953, %v6955
    %v6957 = vrot.slane %v6949, %v6956
    %6958 = vset.pattern.permute.xlu0 0
    %6959 = vperm.xlu0 %6958, %v6715
    %v6960 = vpop.permute.xlu0 %6959
    %v6963 = vunpack.c.l.s4 839922192
    %v6964 = vunpack.c.0.s8 %v6963
    %v6965 = vlaneseq
    %v6966 = vshrl.u32 %v6965, 7
    %v6967 = vsub.s32 %v6964, %v6966
    %v6968 = vrot.slane %v6960, %v6967
    %6969 = vset.pattern.permute.xlu0 0
    %6970 = vperm.xlu0 %6969, %v6749
    %v6971 = vpop.permute.xlu0 %6970
    %v6974 = vunpack.c.l.s4 839922192
    %v6975 = vunpack.c.0.s8 %v6974
    %v6976 = vlaneseq
    %v6977 = vshrl.u32 %v6976, 7
    %v6978 = vsub.s32 %v6975, %v6977
    %v6979 = vrot.slane %v6971, %v6978
    %6980 = vset.pattern.permute.xlu0 0
    %6981 = vperm.xlu0 %6980, %v6718
    %v6982 = vpop.permute.xlu0 %6981
    %v6985 = vunpack.c.l.s4 839922192
    %v6986 = vunpack.c.0.s8 %v6985
    %v6987 = vlaneseq
    %v6988 = vshrl.u32 %v6987, 7
    %v6989 = vsub.s32 %v6986, %v6988
    %v6990 = vrot.slane %v6982, %v6989
    %6991 = vset.pattern.permute.xlu0 0
    %6992 = vperm.xlu0 %6991, %v6750
    %v6993 = vpop.permute.xlu0 %6992
    %v6996 = vunpack.c.l.s4 839922192
    %v6997 = vunpack.c.0.s8 %v6996
    %v6998 = vlaneseq
    %v6999 = vshrl.u32 %v6998, 7
    %v7000 = vsub.s32 %v6997, %v6999
    %v7001 = vrot.slane %v6993, %v7000
    %7002 = vset.pattern.permute.xlu0 0
    %7003 = vperm.xlu0 %7002, %v6723
    %v7004 = vpop.permute.xlu0 %7003
    %v7007 = vunpack.c.l.s4 839922192
    %v7008 = vunpack.c.0.s8 %v7007
    %v7009 = vlaneseq
    %v7010 = vshrl.u32 %v7009, 7
    %v7011 = vsub.s32 %v7008, %v7010
    %v7012 = vrot.slane %v7004, %v7011
    %7013 = vset.pattern.permute.xlu0 0
    %7014 = vperm.xlu0 %7013, %v6751
    %v7015 = vpop.permute.xlu0 %7014
    %v7018 = vunpack.c.l.s4 839922192
    %v7019 = vunpack.c.0.s8 %v7018
    %v7020 = vlaneseq
    %v7021 = vshrl.u32 %v7020, 7
    %v7022 = vsub.s32 %v7019, %v7021
    %v7023 = vrot.slane %v7015, %v7022
    %7024 = vset.pattern.permute.xlu0 0
    %7025 = vperm.xlu0 %7024, %v6726
    %v7026 = vpop.permute.xlu0 %7025
    %v7029 = vunpack.c.l.s4 839922192
    %v7030 = vunpack.c.0.s8 %v7029
    %v7031 = vlaneseq
    %v7032 = vshrl.u32 %v7031, 7
    %v7033 = vsub.s32 %v7030, %v7032
    %v7034 = vrot.slane %v7026, %v7033
    %7035 = vset.pattern.permute.xlu0 0
    %7036 = vperm.xlu0 %7035, %v6752
    %v7037 = vpop.permute.xlu0 %7036
    %v7040 = vunpack.c.l.s4 839922192
    %v7041 = vunpack.c.0.s8 %v7040
    %v7042 = vlaneseq
    %v7043 = vshrl.u32 %v7042, 7
    %v7044 = vsub.s32 %v7041, %v7043
    %v7045 = vrot.slane %v7037, %v7044
    %7046 = vset.pattern.permute.xlu0 0
    %7047 = vperm.xlu0 %7046, %v6731
    %v7048 = vpop.permute.xlu0 %7047
    %v7051 = vunpack.c.l.s4 839922192
    %v7052 = vunpack.c.0.s8 %v7051
    %v7053 = vlaneseq
    %v7054 = vshrl.u32 %v7053, 7
    %v7055 = vsub.s32 %v7052, %v7054
    %v7056 = vrot.slane %v7048, %v7055
    %7057 = vset.pattern.permute.xlu0 0
    %7058 = vperm.xlu0 %7057, %v6753
    %v7059 = vpop.permute.xlu0 %7058
    %v7062 = vunpack.c.l.s4 839922192
    %v7063 = vunpack.c.0.s8 %v7062
    %v7064 = vlaneseq
    %v7065 = vshrl.u32 %v7064, 7
    %v7066 = vsub.s32 %v7063, %v7065
    %v7067 = vrot.slane %v7059, %v7066
    %v7068 = vlaneseq
    %v7069 = vshrl.u32 %v7068, 7
    %v7070 = vsub.s32 0, %v7069
    %v7071 = vrot.slane %v6862, %v7070
    %v7072 = vlaneseq
    %v7073 = vshrl.u32 %v7072, 7
    %v7074 = vsub.s32 0, %v7073
    %v7075 = vrot.slane %v6869, %v7074
    %v7076 = vcombine.high %v7071, %v7071
    %v7077 = vcombine.high %v7075, %v7075
    %7078 = vrot.lane.b32.xlu0 %v7071, 125
    %v7079 = vpop.permute.xlu0 %7078
    %7080 = vrot.lane.b32.xlu0 %v7076, 125
    %v7081 = vpop.permute.xlu0 %7080
    %7082 = vrot.lane.b32.xlu0 %v7075, 125
    %v7083 = vpop.permute.xlu0 %7082
    %7084 = vrot.lane.b32.xlu0 %v7077, 125
    %v7085 = vpop.permute.xlu0 %7084
    %v7090 = vmul.f32 %v6880, %v7079
    %v7091 = vmul.f32 %v6891, %v7081
    %v7092 = vmul.f32 %v6902, %v7079
    %v7093 = vmul.f32 %v6913, %v7081
    %v7094 = vmul.f32 %v6924, %v7079
    %v7095 = vmul.f32 %v6935, %v7081
    %v7096 = vmul.f32 %v6946, %v7079
    %v7097 = vmul.f32 %v6957, %v7081
    %v7098 = vmul.f32 %v6968, %v7079
    %v7099 = vmul.f32 %v6979, %v7083
    %v7100 = vmul.f32 %v6990, %v7085
    %v7101 = vmul.f32 %v7001, %v7083
    %v7102 = vmul.f32 %v7012, %v7085
    %v7103 = vmul.f32 %v7023, %v7083
    %v7104 = vmul.f32 %v7034, %v7085
    %v7105 = vmul.f32 %v7045, %v7083
    %v7106 = vmul.f32 %v7056, %v7085
    %v7107 = vmul.f32 %v7067, %v7083
    %v7124 = vcombine.low %v7090, %v7091
    %v7125 = vcombine.low %v7092, %v7093
    %v7126 = vcombine.low %v7094, %v7095
    %v7127 = vcombine.low %v7096, %v7097
    %v7128 = vcombine.low %v7099, %v7100
    %v7129 = vcombine.low %v7101, %v7102
    %v7130 = vcombine.low %v7103, %v7104
    %v7131 = vcombine.low %v7105, %v7106
    %v7140 = vadd.f32 %v6837, %v7124
    %v7141 = vadd.f32 %v6838, %v7125
    %v7142 = vadd.f32 %v6839, %v7126
    %v7143 = vadd.f32 %v6840, %v7127
    %v7144 = vadd.f32 %v6841, %v7098
    %v7145 = vadd.f32 %v6842, %v7128
    %v7146 = vadd.f32 %v6843, %v7129
    %v7147 = vadd.f32 %v6844, %v7130
    %v7148 = vadd.f32 %v6845, %v7131
    %v7149 = vadd.f32 %v6846, %v7107
    %7151 = vrot.lane.b32.xlu0 %v5958, 38
    %v7152 = vpop.permute.xlu0 %7151
    %v7154 = vsel %vm2223, %v6032, %v7152
    %v7155 = vpack.c.bf16 %v7154, %v7154
    %v7157 = vsel %vm2230, %v7155, 0
    %7159 = vmatprep.subr.bf16.mxu0 0
    %7160 = vmatpush1.bf16.msra.mxu0 %v36
    %7161 = vmatprep.subr.bf16.mxu0 0
    %7162 = vmatpush1.bf16.msra.mxu0 %v37
    %7163 = vmatprep.subr.bf16.mxu0 0
    %7164 = vmatpush1.bf16.msra.mxu0 %v2235
    %7165 = vmatprep.subr.bf16.mxu0 0
    %7166 = vmatpush1.bf16.msra.mxu0 0
    %7167 = vmatprep.subr.bf16.mxu0 0
    %7168 = vmatpush1.bf16.msra.mxu0 0
    %7169 = vmatprep.subr.bf16.mxu0 0
    %7170 = vmatpush1.bf16.msra.mxu0 0
    %7171 = vmatprep.subr.bf16.mxu0 0
    %7172 = vmatpush1.bf16.msra.mxu0 0
    %7173 = vmatprep.subr.bf16.mxu0 0
    %7174 = vmatpush1.bf16.msra.mxu0 0
    %7175 = vmatprep.subr.bf16.mxu0 0
    %7176 = vmatpush1.bf16.msra.mxu0 0
    %7177 = vmatprep.subr.bf16.mxu0 0
    %7178 = vmatpush1.bf16.msra.mxu0 0
    %7179 = vmatprep.subr.bf16.mxu0 0
    %7180 = vmatpush1.bf16.msra.mxu0 0
    %7181 = vmatprep.subr.bf16.mxu0 0
    %7182 = vmatpush1.bf16.msra.mxu0 0
    %7183 = vmatprep.subr.bf16.mxu0 0
    %7184 = vmatpush1.bf16.msra.mxu0 0
    %7185 = vmatprep.subr.bf16.mxu0 0
    %7186 = vmatpush1.bf16.msra.mxu0 0
    %7187 = vmatprep.subr.bf16.mxu0 0
    %7188 = vmatpush1.bf16.msra.mxu0 0
    %7189 = vmatprep.subr.bf16.mxu0 0
    %7190 = vmatpush1.bf16.msra.mxu0 0
    %7191 = vmatprep.mubr.bf16.mxu0 0
    %7192 = vmatmul.mubr.bf16.gmra.mrb[0].mxu0 %v7157
    %v7193 = vpop.f32.mrb[0].mxu0
    %v7194 = vadd.f32 %v2229, %v7193
    %v7195 = vpop.f32.mrb[0].mxu0
    %v7196 = vpop.f32.mrb[0].mxu0
    %v7197 = vpop.f32.mrb[0].mxu0
    %7198 = vdwg.mxu0
    %v7199 = vxor.u32 %v7194, 2147483648
    %v7200 = vmul.f32 %v7199, 1.442695
    %v7201 = vpow.pop %v7200
    %v7202 = vadd.f32 %v7201, 1.0
    %v7203 = vrcp.pop %v7202
    %v7204 = vmul.f32 1.0, %v7203
    %v7205 = vtanh.pop %v7194
    %v7206 = vmul.f32 %v7204, %v5952
    %7208 = vrot.lane.b32.xlu0 %v7205, 64
    %v7209 = vpop.permute.xlu0 %7208
    %v7211 = vmul.f32 %v7204, %v7209
    %7213 = vrot.lane.b32.xlu0 %v7211, 32
    %v7214 = vpop.permute.xlu0 %7213
    %v7216 = vadd.f32 %v7206, %v7214
    %v7217 = vtanh.pop %v7216
    %7219 = vrot.lane.b32.xlu0 %v7217, 64
    %v7220 = vpop.permute.xlu0 %7219
    %v7222 = vmul.f32 %v7204, %v7220
    %v7223 = vpack.c.bf16 %v7222, %v7222
    %7225 = vrot.lane.b32.xlu0 %v7223, 32
    %v7226 = vpop.permute.xlu0 %7225
    %v7228 = vsel %vm270, %v7226, 0
    %7230 = vmatprep.subr.bf16.mxu0 0
    %7231 = vmatpush1.bf16.msra.mxu0 %v44
    %7232 = vmatprep.subr.bf16.mxu0 0
    %7233 = vmatpush1.bf16.msra.mxu0 %v45
    %7234 = vmatprep.subr.bf16.mxu0 0
    %7235 = vmatpush1.bf16.msra.mxu0 0
    %7236 = vmatprep.subr.bf16.mxu0 0
    %7237 = vmatpush1.bf16.msra.mxu0 0
    %7238 = vmatprep.subr.bf16.mxu0 0
    %7239 = vmatpush1.bf16.msra.mxu0 0
    %7240 = vmatprep.subr.bf16.mxu0 0
    %7241 = vmatpush1.bf16.msra.mxu0 0
    %7242 = vmatprep.subr.bf16.mxu0 0
    %7243 = vmatpush1.bf16.msra.mxu0 0
    %7244 = vmatprep.subr.bf16.mxu0 0
    %7245 = vmatpush1.bf16.msra.mxu0 0
    %7246 = vmatprep.subr.bf16.mxu0 0
    %7247 = vmatpush1.bf16.msra.mxu0 0
    %7248 = vmatprep.subr.bf16.mxu0 0
    %7249 = vmatpush1.bf16.msra.mxu0 0
    %7250 = vmatprep.subr.bf16.mxu0 0
    %7251 = vmatpush1.bf16.msra.mxu0 0
    %7252 = vmatprep.subr.bf16.mxu0 0
    %7253 = vmatpush1.bf16.msra.mxu0 0
    %7254 = vmatprep.subr.bf16.mxu0 0
    %7255 = vmatpush1.bf16.msra.mxu0 0
    %7256 = vmatprep.subr.bf16.mxu0 0
    %7257 = vmatpush1.bf16.msra.mxu0 0
    %7258 = vmatprep.subr.bf16.mxu0 0
    %7259 = vmatpush1.bf16.msra.mxu0 0
    %7260 = vmatprep.subr.bf16.mxu0 0
    %7261 = vmatpush1.bf16.msra.mxu0 0
    %7262 = vmatprep.mubr.bf16.mxu0 0
    %7263 = vmatmul.mubr.bf16.gmra.mrb[0].mxu0 %v7228
    %v7264 = vpop.f32.mrb[0].mxu0
    %v7265 = vadd.f32 %v2309, %v7264
    %v7266 = vpop.f32.mrb[0].mxu0
    %v7267 = vpop.f32.mrb[0].mxu0
    %v7268 = vpop.f32.mrb[0].mxu0
    %7269 = vdwg.mxu0
    %v7270 = vxor.u32 %v7265, 2147483648
    %v7271 = vmul.f32 %v7270, 1.442695
    %v7272 = vpow.pop %v7271
    %v7273 = vadd.f32 %v7272, 1.0
    %v7274 = vrcp.pop %v7273
    %v7275 = vmul.f32 1.0, %v7274
    %7277 = vset.pattern.permute.xlu0 2
    %7278 = vperm.xlu0 %7277, %v7140
    %v7279 = vpop.permute.xlu0 %7278
    %7282 = vset.pattern.permute.xlu0 2
    %7283 = vperm.xlu0 %7282, %v7141
    %v7284 = vpop.permute.xlu0 %7283
    %7287 = vset.pattern.permute.xlu0 2
    %7288 = vperm.xlu0 %7287, %v7142
    %v7289 = vpop.permute.xlu0 %7288
    %7292 = vset.pattern.permute.xlu0 2
    %7293 = vperm.xlu0 %7292, %v7143
    %v7294 = vpop.permute.xlu0 %7293
    %7297 = vset.pattern.permute.xlu0 2
    %7298 = vperm.xlu0 %7297, %v7144
    %v7299 = vpop.permute.xlu0 %7298
    %7302 = vset.pattern.permute.xlu0 2
    %7303 = vperm.xlu0 %7302, %v7145
    %v7304 = vpop.permute.xlu0 %7303
    %7307 = vset.pattern.permute.xlu0 2
    %7308 = vperm.xlu0 %7307, %v7146
    %v7309 = vpop.permute.xlu0 %7308
    %7312 = vset.pattern.permute.xlu0 2
    %7313 = vperm.xlu0 %7312, %v7147
    %v7314 = vpop.permute.xlu0 %7313
    %7317 = vset.pattern.permute.xlu0 2
    %7318 = vperm.xlu0 %7317, %v7148
    %v7319 = vpop.permute.xlu0 %7318
    %7322 = vset.pattern.permute.xlu0 2
    %7323 = vperm.xlu0 %7322, %v7149
    %v7324 = vpop.permute.xlu0 %7323
    %v7326 = vmul.f32 %v7279, %v97
    %v7327 = vmul.f32 %v7284, %v98
    %v7328 = vmul.f32 %v7289, %v99
    %v7329 = vmul.f32 %v7294, %v100
    %v7330 = vmul.f32 %v7299, %v101
    %v7331 = vmul.f32 %v7304, %v97
    %v7332 = vmul.f32 %v7309, %v98
    %v7333 = vmul.f32 %v7314, %v99
    %v7334 = vmul.f32 %v7319, %v100
    %v7335 = vmul.f32 %v7324, %v101
    %v7336 = vsel %vm2636, %v7326, 0.0
    %v7337 = vsel %vm2636, %v7327, 0.0
    %v7338 = vadd.f32 %v7336, %v7337
    %v7339 = vsel %vm2636, %v7328, 0.0
    %v7340 = vadd.f32 %v7338, %v7339
    %v7341 = vsel %vm2636, %v7329, 0.0
    %v7342 = vadd.f32 %v7340, %v7341
    %v7343 = vsel %vm2644, %v7330, 0.0
    %v7344 = vadd.f32 %v7342, %v7343
    %v7345 = vrot.slane %v7344, 4
    %v7346 = vadd.f32 %v7344, %v7345
    %v7347 = vrot.slane %v7346, 2
    %v7348 = vadd.f32 %v7346, %v7347
    %v7349 = vrot.slane %v7348, 1
    %v7350 = vadd.f32 %v7348, %v7349
    %v7351 = vsel %vm2636, %v7331, 0.0
    %v7352 = vsel %vm2636, %v7332, 0.0
    %v7353 = vadd.f32 %v7351, %v7352
    %v7354 = vsel %vm2636, %v7333, 0.0
    %v7355 = vadd.f32 %v7353, %v7354
    %v7356 = vsel %vm2636, %v7334, 0.0
    %v7357 = vadd.f32 %v7355, %v7356
    %v7358 = vsel %vm2644, %v7335, 0.0
    %v7359 = vadd.f32 %v7357, %v7358
    %v7360 = vrot.slane %v7359, 4
    %v7361 = vadd.f32 %v7359, %v7360
    %v7362 = vrot.slane %v7361, 2
    %v7363 = vadd.f32 %v7361, %v7362
    %v7364 = vrot.slane %v7363, 1
    %v7365 = vadd.f32 %v7363, %v7364
    %v7366 = vadd.f32 %v7350, %v2656
    %v7367 = vadd.f32 %v7365, %v2656
    %7369 = vrot.lane.b32.xlu0 %v2391, 122
    %v7370 = vpop.permute.xlu0 %7369
    %7373 = vrot.lane.b32.xlu0 %v3510, 123
    %v7374 = vpop.permute.xlu0 %7373
    %7377 = vrot.lane.b32.xlu0 %v4774, 124
    %v7378 = vpop.permute.xlu0 %7377
    %7381 = vrot.lane.b32.xlu0 %v6038, 125
    %v7382 = vpop.permute.xlu0 %7381
    %7385 = vrot.lane.b32.xlu0 %v7275, 126
    %v7386 = vpop.permute.xlu0 %7385
    %vm7388 = vcmask 7168
    %v7389 = vsel %vm7388, %v7370, %v7374
    %v7390 = vsel %vm2636, %v7389, %v7378
    %v7391 = vsel %vm2384, %v7390, %v7382
    %vm7392 = vcmask 31744
    %v7393 = vsel %vm7392, %v7391, %v7386
    %vm7394 = vcmask 33792
    %v7395 = vsel %vm7394, %v7393, -inf
    %7396 = vmax.xlane.f32.xlu0 %v7395
    %v7397 = vpop.xlane.xlu0 %7396
    %v7398 = vsub.f32 %v7393, %v7397
    %v7399 = vmul.f32 %v7398, 1.442695
    %v7400 = vpow.pop %v7399
    %v7401 = vsel %vm7394, %v7400, 0.0
    %7402 = vadd.xlane.f32.xlu0 %v7401
    %v7403 = vpop.xlane.xlu0 %7402
    %v7404 = vrcp.pop %v7403
    %v7405 = vmul.f32 %v7400, %v7404
    %7407 = vset.pattern.permute.xlu0 0
    %7408 = vperm.xlu0 %7407, %v7405
    %v7409 = vpop.permute.xlu0 %7408
    %v7412 = vrot.slane %v2657, 7
    %vm7413 = vcmask 1041409
    %v7414 = vsel %vm7413, %v7412, %v2657
    %v7416 = vmul.f32 %v7409, %v7414
    %v7417 = vadd.f32 %v7416, 0.0
    %7418 = vset.pattern.permute.xlu0 1
    %7419 = vperm.xlu0 %7418, %v7405
    %v7420 = vpop.permute.xlu0 %7419
    %v7424 = vrot.slane %v3828, 7
    %v7425 = vsel %vm7413, %v7424, %v3827
    %v7427 = vmul.f32 %v7420, %v7425
    %v7428 = vadd.f32 %v7417, %v7427
    %7429 = vset.pattern.permute.xlu0 2
    %7430 = vperm.xlu0 %7429, %v7405
    %v7431 = vpop.permute.xlu0 %7430
    %v7435 = vrot.slane %v5092, 7
    %v7436 = vsel %vm7413, %v7435, %v5091
    %v7438 = vmul.f32 %v7431, %v7436
    %v7439 = vadd.f32 %v7428, %v7438
    %7440 = vset.pattern.permute.xlu0 3
    %7441 = vperm.xlu0 %7440, %v7405
    %v7442 = vpop.permute.xlu0 %7441
    %v7446 = vrot.slane %v6356, 7
    %v7447 = vsel %vm7413, %v7446, %v6355
    %v7449 = vmul.f32 %v7442, %v7447
    %v7450 = vadd.f32 %v7439, %v7449
    %7451 = vset.pattern.permute.xlu0 4
    %7452 = vperm.xlu0 %7451, %v7405
    %v7453 = vpop.permute.xlu0 %7452
    %v7457 = vrot.slane %v7367, 7
    %v7458 = vsel %vm7413, %v7457, %v7366
    %v7460 = vmul.f32 %v7453, %v7458
    %v7461 = vadd.f32 %v7450, %v7460
    %vm7462 = vcmask 9216
    %v7463 = vsel %vm7462, %v7461, -inf
    %7464 = vmax.xlane.f32.xlu0 %v7463
    %v7465 = vpop.xlane.xlu0 %7464
    %v7466 = vsub.f32 %v7461, %v7465
    %v7467 = vmul.f32 %v7466, 1.442695
    %v7468 = vpow.pop %v7467
    %v7469 = vsel %vm7462, %v7468, 0.0
    %7470 = vadd.xlane.f32.xlu0 %v7469
    %v7471 = vpop.xlane.xlu0 %7470
    %v7472 = vlog2.pop %v7471
    %v7473 = vmul.f32 %v7472, 0.6931472
    %v7474 = vsub.f32 %v7466, %v7473
    %7475 = vst.msk [vmem:[#allocation2] sm:$0x3] %vm7462, %v7474
    // Predicated region
    $region22: #{rnmn_forward.1} parent=1 // pred_check
      _
    $region23: #{rnmn_forward.1} parent=1 // pred_check_branch
      %7477 = sbr.rel (0) target = $region25
    $region24: #{rnmn_forward.1} parent=1 // pred_region
      %s7479 = ssub.s32 32, 32
      %7480 = vsyncadd [#allocation3], %s7479
      %s7482 = sshll.u32 [#allocation2], 4
      %s7483 = int_to_ptr.vmem [resolvable:$true] %s7482
      %7485 = dma.vmem_to_hbm [thread:$0]  %s7483, 32, %s5, [#allocation3]
    $region25: #{rnmn_forward.1} parent=1 // pred_fallthru
      _
    // Predicated region
    $region26: #{rnmn_forward.1} parent=1 // pred_check
      _
    $region27: #{rnmn_forward.1} parent=1 // pred_check_branch
      %7487 = sbr.rel (0) target = $region29
    $region28: #{rnmn_forward.1} parent=1 // pred_region
      %7488 = dma.done [#allocation3], 32
    $region29: #{rnmn_forward.1} parent=1 // pred_fallthru
      _
    %7489 = vsyncpa [#allocation3], 1

</llo_original>
